<compile_context>
chip_gen: v7x
topology: tpu7x:2x2x1
jax: 0.10.0
libtpu: 0.0.40
codegen_flags: <defaults>
</compile_context>

<pallas_src>
import functools
import math

import jax
import jax.numpy as jnp
import numpy as np
from jax import lax
from jax.experimental import pallas as pl
from jax.experimental.pallas import tpu as pltpu  # noqa: F401  (TPU backend assumed)

LN_EPS = 1e-5          # PyTorch LayerNorm default
NEG_INF = -1e30        # additive mask value for out-of-sample attention entries

LAYER_KEYS = ("ln1_w", "ln1_b", "wq", "bq", "wk", "bk", "wv", "bv",
              "wo", "bo", "ln2_w", "ln2_b", "f1_w", "f1_b", "f2_w", "f2_b")
PER_LAYER = len(LAYER_KEYS)


# ---------------------------------------------------------------------------
# Shared math helpers (used inside the kernel and by the pure-JAX reference)
# ---------------------------------------------------------------------------
def _layer_norm(x, w, b):
    mu = jnp.mean(x, axis=-1, keepdims=True)
    var = jnp.mean((x - mu) ** 2, axis=-1, keepdims=True)
    return (x - mu) * lax.rsqrt(var + LN_EPS) * w + b


def _gelu_exact(x):
    # PyTorch nn.GELU() default (erf-based).
    return 0.5 * x * (1.0 + lax.erf(x * (1.0 / math.sqrt(2.0))))


def _mxu(a, b):
    """bf16 MXU dot with f32 accumulation."""
    return jnp.dot(a.astype(jnp.bfloat16), b.astype(jnp.bfloat16),
                   preferred_element_type=jnp.float32)


# ---------------------------------------------------------------------------
# Fused Pallas kernel: all conv layers + mean pooling + decoder in one call
# ---------------------------------------------------------------------------
def fused_transformer_kernel(num_layers, num_heads, *refs):
    x_ref, bias_ref, pool_ref = refs[0], refs[1], refs[2]
    layer_refs = refs[3:3 + num_layers * PER_LAYER]
    dec_w_ref, dec_b_ref, o_ref = refs[3 + num_layers * PER_LAYER:]

    x = x_ref[...]                        # (B*N, C) f32 (batch*tokens flattened)
    BN, C = x.shape
    hd = C // num_heads
    scale = 1.0 / math.sqrt(hd)
    attn_bias = bias_ref[...]             # (BN, BN) f32: 0 in-sample, -1e30 cross-sample

    for l in range(num_layers):           # static unroll over layers
        (ln1_w, ln1_b, wq, bq, wk, bk, wv, bv, wo, bo,
         ln2_w, ln2_b, f1_w, f1_b, f2_w, f2_b) = \
            layer_refs[l * PER_LAYER:(l + 1) * PER_LAYER]

        # --- LayerNorm 1 + multi-head self-attention ---
        h = _layer_norm(x, ln1_w[0, :], ln1_b[0, :])
        h_b = h.astype(jnp.bfloat16)

        attn = jnp.zeros((BN, C), jnp.float32)
        for hi in range(num_heads):       # static unroll; per-head weight slabs
            qh = _mxu(h_b, wq[hi]) + bq[hi]            # (BN, hd)
            kh = _mxu(h_b, wk[hi]) + bk[hi]            # (BN, hd)
            vh = _mxu(h_b, wv[hi]) + bv[hi]            # (BN, hd)
            # Scores over the whole flattened batch; block-diagonal bias keeps
            # attention strictly within each sample's N tokens.
            s = lax.dot_general(qh.astype(jnp.bfloat16), kh.astype(jnp.bfloat16),
                                (((1,), (1,)), ((), ())),
                                preferred_element_type=jnp.float32)   # (BN, BN)
            s = s * scale + attn_bias
            s = s - jnp.max(s, axis=-1, keepdims=True)
            p = jnp.exp(s)
            p = p * pl.reciprocal(jnp.sum(p, axis=-1, keepdims=True), approx=True)
            oh = _mxu(p, vh)                            # (BN, hd)
            attn = attn + _mxu(oh, wo[hi])              # accumulate via out_proj slab
        attn = attn + bo[0, :]

        x = h + attn     # residual onto LN1 output (torch_frame TabTransformerConv)

        # --- LayerNorm 2 + FFN ---
        h2 = _layer_norm(x, ln2_w[0, :], ln2_b[0, :])
        f = _mxu(h2, f1_w[...]) + f1_b[0, :]
        f = _gelu_exact(f)
        f = _mxu(f, f2_w[...]) + f2_b[0, :]
        x = h2 + f       # residual onto LN2 output

    # --- token-mean per sample (pooling matmul, avoids in-kernel reshape) ---
    m = jnp.dot(pool_ref[...], x, preferred_element_type=jnp.float32)   # (B, C)
    # --- decoder Linear ---
    out = _mxu(m, dec_w_ref[...]) + dec_b_ref[0, :]
    o_ref[...] = out.astype(jnp.float32)


def fused_forward_pallas(x, prepared, num_heads):
    """x: (B, N, C) f32 -> (B, out_channels) f32, one fused pallas_call."""
    B, N, C = x.shape
    x_flat = x.reshape(B * N, C)
    num_layers = len(prepared["layers"])
    flat_weights = []
    for lp in prepared["layers"]:
        flat_weights.extend(lp[k] for k in LAYER_KEYS)
    out_ch = prepared["dec_w_t"].shape[1]

    kernel = functools.partial(fused_transformer_kernel, num_layers, num_heads)
    return pl.pallas_call(
        kernel,
        out_shape=jax.ShapeDtypeStruct((B, out_ch), jnp.float32),
    )(x_flat, prepared["attn_bias"], prepared["pool"],
      *flat_weights, prepared["dec_w_t"], prepared["dec_b"])


# ---------------------------------------------------------------------------
# Feature encoder (glue: tiny gathers + per-column affine, plain jitted JAX)
# ---------------------------------------------------------------------------
def encode_features(x_cat, x_num, emb_tables, lin_w, lin_b):
    cat_enc = jnp.stack(
        [jnp.take(emb_tables[j], x_cat[:, j], axis=0)
         for j in range(x_cat.shape[1])], axis=1)                        # (B, n_cat, C)
    num_enc = x_num[:, :, None] * lin_w[None, :, :] + lin_b[None, :, :]  # (B, n_num, C)
    return jnp.concatenate([cat_enc, num_enc], axis=1)                   # (B, N, C)


@functools.partial(jax.jit, static_argnames=("num_heads",))
def example_transformer_forward(prepared, x_cat, x_num, *, num_heads):
    x = encode_features(x_cat, x_num, prepared["emb_tables"],
                        prepared["lin_w"], prepared["lin_b"])
    return fused_forward_pallas(x, prepared, num_heads)


# ---------------------------------------------------------------------------
# Parameter initialization (PyTorch layout) + host-side kernel-layout prep
# ---------------------------------------------------------------------------
def init_params(key, channels, out_channels, num_layers, num_heads,
                cat_cardinalities, num_numerical):
    C = channels
    ks = iter(jax.random.split(key, 64))
    nrm = lambda shape, s=0.02: (s * jax.random.normal(next(ks), shape)).astype(jnp.float32)

    params = {
        "num_heads": num_heads,
        "emb_tables": [nrm((card, C)) for card in cat_cardinalities],
        "lin_w": nrm((num_numerical, C)),
        "lin_b": nrm((num_numerical, C)),
        "layers": [],
        "dec_w_t": nrm((C, out_channels)),
        "dec_b": jnp.zeros((1, out_channels), jnp.float32),
    }
    for _ in range(num_layers):
        params["layers"].append({
            "ln1_w": jnp.ones((1, C), jnp.float32),
            "ln1_b": jnp.zeros((1, C), jnp.float32),
            "in_w": nrm((3 * C, C)),                    # [Wq; Wk; Wv]
            "in_b": jnp.zeros((1, 3 * C), jnp.float32),
            "out_w": nrm((C, C)),
            "out_b": jnp.zeros((1, C), jnp.float32),
            "ln2_w": jnp.ones((1, C), jnp.float32),
            "ln2_b": jnp.zeros((1, C), jnp.float32),
            "f1_w": nrm((2 * C, C)),
            "f1_b": jnp.zeros((1, 2 * C), jnp.float32),
            "f2_w": nrm((C, 2 * C)),
            "f2_b": jnp.zeros((1, C), jnp.float32),
        })
    return params


def prepare_params(params, num_heads, batch, num_cols):
    """Reorganize PyTorch-layout params into the kernel layout:
       per-head pre-transposed projection slabs, transposed FFN/decoder weights
       (bf16 for the MXU), plus the block-diagonal attention bias and the
       mean-pooling matrix for the flattened (B*N, C) layout."""
    C = params["lin_w"].shape[1]
    H = num_heads
    hd = C // H
    bf16 = lambda a: a.astype(jnp.bfloat16)

    prepared = {
        "emb_tables": params["emb_tables"],
        "lin_w": params["lin_w"],
        "lin_b": params["lin_b"],
        "dec_w_t": bf16(params["dec_w_t"]),
        "dec_b": params["dec_b"],
        "layers": [],
    }
    for lp in params["layers"]:
        in_w, in_b = lp["in_w"], lp["in_b"][0]                 # (3C, C), (3C,)
        Wq, Wk, Wv = in_w[:C], in_w[C:2 * C], in_w[2 * C:]
        bq, bk, bv = in_b[:C], in_b[C:2 * C], in_b[2 * C:]
        out_w = lp["out_w"]                                    # (C, C)

        split_w = lambda W: bf16(jnp.stack(                    # (H, C, hd)
            [W[h * hd:(h + 1) * hd].T for h in range(H)]))
        split_b = lambda b: b.reshape(H, 1, hd)                # (H, 1, hd)
        wo = bf16(jnp.stack(                                   # (H, hd, C)
            [out_w[:, h * hd:(h + 1) * hd].T for h in range(H)]))

        prepared["layers"].append({
            "ln1_w": lp["ln1_w"], "ln1_b": lp["ln1_b"],
            "wq": split_w(Wq), "bq": split_b(bq),
            "wk": split_w(Wk), "bk": split_b(bk),
            "wv": split_w(Wv), "bv": split_b(bv),
            "wo": wo, "bo": lp["out_b"],
            "ln2_w": lp["ln2_w"], "ln2_b": lp["ln2_b"],
            "f1_w": bf16(lp["f1_w"].T), "f1_b": lp["f1_b"],    # (C, 2C)
            "f2_w": bf16(lp["f2_w"].T), "f2_b": lp["f2_b"],    # (2C, C)
        })

    # Block-diagonal attention bias and mean-pooling matrix (static constants).
    sample_id = jnp.repeat(jnp.arange(batch), num_cols)                   # (B*N,)
    same = sample_id[:, None] == sample_id[None, :]
    prepared["attn_bias"] = jnp.where(same, 0.0, NEG_INF).astype(jnp.float32)
    prepared["pool"] = ((jnp.arange(batch)[:, None] == sample_id[None, :])
                        .astype(jnp.float32) / num_cols)                  # (B, B*N)
    return prepared


# ---------------------------------------------------------------------------
# Pure-JAX (f32) reference of the same forward pass, for validation
# ---------------------------------------------------------------------------
def reference_forward(params, x_cat, x_num, num_heads):
    x = encode_features(x_cat, x_num, params["emb_tables"],
                        params["lin_w"], params["lin_b"])
    B, N, C = x.shape
    H = num_heads
    hd = C // H
    scale = 1.0 / math.sqrt(hd)
    for lp in params["layers"]:
        h = _layer_norm(x, lp["ln1_w"][0], lp["ln1_b"][0])
        qkv = jnp.einsum("bnc,dc->bnd", h, lp["in_w"]) + lp["in_b"][0]
        q, k, v = qkv[..., :C], qkv[..., C:2 * C], qkv[..., 2 * C:]
        heads = lambda t: t.reshape(B, N, H, hd).transpose(0, 2, 1, 3)   # (B,H,N,hd)
        q, k, v = heads(q), heads(k), heads(v)
        s = jnp.einsum("bhnd,bhmd->bhnm", q, k) * scale
        p = jax.nn.softmax(s, axis=-1)
        o = jnp.einsum("bhnm,bhmd->bhnd", p, v)
        o = o.transpose(0, 2, 1, 3).reshape(B, N, C)
        attn = jnp.einsum("bnc,dc->bnd", o, lp["out_w"]) + lp["out_b"][0]
        x = h + attn
        h2 = _layer_norm(x, lp["ln2_w"][0], lp["ln2_b"][0])
        f = _gelu_exact(jnp.einsum("bnc,dc->bnd", h2, lp["f1_w"]) + lp["f1_b"][0])
        f = jnp.einsum("bnd,cd->bnc", f, lp["f2_w"]) + lp["f2_b"][0]
        x = h2 + f
    m = x.mean(axis=1)
    return m @ params["dec_w_t"] + params["dec_b"][0]


# ---------------------------------------------------------------------------
if __name__ == "__main__":
    channels = 32
    out_channels = 4
    num_layers = 2
    num_heads = 4
    batch = 8
    cat_cardinalities = [5, 7, 4]   # 3 categorical columns
    num_numerical = 3               # 3 numerical columns
    num_cols = len(cat_cardinalities) + num_numerical

    key = jax.random.PRNGKey(0)
    k_par, k_cat, k_num = jax.random.split(key, 3)

    params = init_params(k_par, channels, out_channels, num_layers, num_heads,
                         cat_cardinalities, num_numerical)
    prepared = prepare_params(params, num_heads, batch, num_cols)

    keys_cat = jax.random.split(k_cat, len(cat_cardinalities))
    x_cat = jnp.stack(
        [jax.random.randint(keys_cat[j], (batch,), 0, cat_cardinalities[j])
         for j in range(len(cat_cardinalities))], axis=1).astype(jnp.int32)   # (B, 3)
    x_num = jax.random.normal(k_num, (batch, num_numerical), jnp.float32)     # (B, 3)

    out = example_transformer_forward(prepared, x_cat, x_num, num_heads=num_heads)
    out = jax.block_until_ready(out)
    assert out.shape == (batch, out_channels), out.shape

    # Validate against the f32 pure-JAX reference (bf16 MXU + approx reciprocal
    # introduce only small numerical differences).
    ref = reference_forward(params, x_cat, x_num, num_heads)
    np.testing.assert_allclose(np.asarray(out), np.asarray(ref), rtol=2e-2, atol=2e-2)

    print("KERNEL_OK")
</pallas_src>

<mosaic_0001>
module attributes {stable_mosaic.version = 11 : i64} {
  func.func @fused_transformer_kernel(%arg0: memref<48x32xf32, #tpu.memory_space<vmem>>, %arg1: memref<48x48xf32, #tpu.memory_space<vmem>>, %arg2: memref<8x48xf32, #tpu.memory_space<vmem>>, %arg3: memref<1x32xf32, #tpu.memory_space<vmem>>, %arg4: memref<1x32xf32, #tpu.memory_space<vmem>>, %arg5: memref<4x32x8xbf16, #tpu.memory_space<vmem>>, %arg6: memref<4x1x8xf32, #tpu.memory_space<vmem>>, %arg7: memref<4x32x8xbf16, #tpu.memory_space<vmem>>, %arg8: memref<4x1x8xf32, #tpu.memory_space<vmem>>, %arg9: memref<4x32x8xbf16, #tpu.memory_space<vmem>>, %arg10: memref<4x1x8xf32, #tpu.memory_space<vmem>>, %arg11: memref<4x8x32xbf16, #tpu.memory_space<vmem>>, %arg12: memref<1x32xf32, #tpu.memory_space<vmem>>, %arg13: memref<1x32xf32, #tpu.memory_space<vmem>>, %arg14: memref<1x32xf32, #tpu.memory_space<vmem>>, %arg15: memref<32x64xbf16, #tpu.memory_space<vmem>>, %arg16: memref<1x64xf32, #tpu.memory_space<vmem>>, %arg17: memref<64x32xbf16, #tpu.memory_space<vmem>>, %arg18: memref<1x32xf32, #tpu.memory_space<vmem>>, %arg19: memref<1x32xf32, #tpu.memory_space<vmem>>, %arg20: memref<1x32xf32, #tpu.memory_space<vmem>>, %arg21: memref<4x32x8xbf16, #tpu.memory_space<vmem>>, %arg22: memref<4x1x8xf32, #tpu.memory_space<vmem>>, %arg23: memref<4x32x8xbf16, #tpu.memory_space<vmem>>, %arg24: memref<4x1x8xf32, #tpu.memory_space<vmem>>, %arg25: memref<4x32x8xbf16, #tpu.memory_space<vmem>>, %arg26: memref<4x1x8xf32, #tpu.memory_space<vmem>>, %arg27: memref<4x8x32xbf16, #tpu.memory_space<vmem>>, %arg28: memref<1x32xf32, #tpu.memory_space<vmem>>, %arg29: memref<1x32xf32, #tpu.memory_space<vmem>>, %arg30: memref<1x32xf32, #tpu.memory_space<vmem>>, %arg31: memref<32x64xbf16, #tpu.memory_space<vmem>>, %arg32: memref<1x64xf32, #tpu.memory_space<vmem>>, %arg33: memref<64x32xbf16, #tpu.memory_space<vmem>>, %arg34: memref<1x32xf32, #tpu.memory_space<vmem>>, %arg35: memref<32x4xbf16, #tpu.memory_space<vmem>>, %arg36: memref<1x4xf32, #tpu.memory_space<vmem>>, %arg37: memref<8x4xf32, #tpu.memory_space<vmem>>) attributes {dimension_semantics = [], scalar_prefetch = 0 : i64, scratch_operands = 0 : i64, tpu.core_type = #tpu.core_type<tc>} {
    %c0 = arith.constant 0 : index
    %c0_0 = arith.constant 0 : index
    %0 = vector.load %arg0[%c0, %c0_0] : memref<48x32xf32, #tpu.memory_space<vmem>>, vector<48x32xf32>
    %c0_1 = arith.constant 0 : index
    %c0_2 = arith.constant 0 : index
    %1 = vector.load %arg1[%c0_1, %c0_2] : memref<48x48xf32, #tpu.memory_space<vmem>>, vector<48x48xf32>
    %c0_3 = arith.constant 0 : index
    %c0_4 = arith.constant 0 : index
    %2 = vector.load %arg3[%c0_3, %c0_4] : memref<1x32xf32, #tpu.memory_space<vmem>>, vector<1x32xf32>
    %3 = vector.shape_cast %2 : vector<1x32xf32> to vector<32xf32>
    %c0_5 = arith.constant 0 : index
    %c0_6 = arith.constant 0 : index
    %4 = vector.load %arg4[%c0_5, %c0_6] : memref<1x32xf32, #tpu.memory_space<vmem>>, vector<1x32xf32>
    %5 = vector.shape_cast %4 : vector<1x32xf32> to vector<32xf32>
    %cst = arith.constant dense<0.000000e+00> : vector<48xf32>
    %6 = vector.multi_reduction <add>, %0, %cst [1] : vector<48x32xf32> to vector<48xf32>
    %7 = vector.shape_cast %6 : vector<48xf32> to vector<48x1xf32>
    %cst_7 = arith.constant 3.200000e+01 : f32
    %8 = vector.broadcast %cst_7 : f32 to vector<48x1xf32>
    %9 = arith.divf %7, %8 : vector<48x1xf32>
    %10 = vector.broadcast %9 : vector<48x1xf32> to vector<48x32xf32>
    %11 = arith.subf %0, %10 : vector<48x32xf32>
    %12 = arith.mulf %11, %11 : vector<48x32xf32>
    %cst_8 = arith.constant dense<0.000000e+00> : vector<48xf32>
    %13 = vector.multi_reduction <add>, %12, %cst_8 [1] : vector<48x32xf32> to vector<48xf32>
    %14 = vector.shape_cast %13 : vector<48xf32> to vector<48x1xf32>
    %cst_9 = arith.constant 3.200000e+01 : f32
    %15 = vector.broadcast %cst_9 : f32 to vector<48x1xf32>
    %16 = arith.divf %14, %15 : vector<48x1xf32>
    %17 = vector.broadcast %9 : vector<48x1xf32> to vector<48x32xf32>
    %18 = arith.subf %0, %17 : vector<48x32xf32>
    %cst_10 = arith.constant 9.99999974E-6 : f32
    %19 = vector.broadcast %cst_10 : f32 to vector<48x1xf32>
    %20 = arith.addf %16, %19 : vector<48x1xf32>
    %21 = math.rsqrt %20 : vector<48x1xf32>
    %22 = vector.broadcast %21 : vector<48x1xf32> to vector<48x32xf32>
    %23 = arith.mulf %18, %22 : vector<48x32xf32>
    %24 = vector.shape_cast %3 : vector<32xf32> to vector<1x32xf32>
    %25 = vector.broadcast %24 : vector<1x32xf32> to vector<48x32xf32>
    %26 = arith.mulf %23, %25 : vector<48x32xf32>
    %27 = vector.shape_cast %5 : vector<32xf32> to vector<1x32xf32>
    %28 = vector.broadcast %27 : vector<1x32xf32> to vector<48x32xf32>
    %29 = arith.addf %26, %28 : vector<48x32xf32>
    %30 = arith.truncf %29 : vector<48x32xf32> to vector<48x32xbf16>
    %cst_11 = arith.constant 0.000000e+00 : f32
    %31 = vector.broadcast %cst_11 : f32 to vector<48x32xf32>
    %c0_12 = arith.constant 0 : index
    %c0_13 = arith.constant 0 : index
    %c0_14 = arith.constant 0 : index
    %32 = vector.load %arg5[%c0_12, %c0_13, %c0_14] : memref<4x32x8xbf16, #tpu.memory_space<vmem>>, vector<1x32x8xbf16>
    %33 = vector.shape_cast %32 : vector<1x32x8xbf16> to vector<32x8xbf16>
    %cst_15 = arith.constant dense<0.000000e+00> : vector<48x8xf32>
    %34 = tpu.matmul %30, %33, %cst_15 {dimension_numbers = #tpu.dot_dimension_numbers<[1], [0], [0], [1], [0, 0, 1, 1], [], []>} : vector<48x32xbf16>, vector<32x8xbf16>, vector<48x8xf32> -> vector<48x8xf32>
    %c0_16 = arith.constant 0 : index
    %c0_17 = arith.constant 0 : index
    %c0_18 = arith.constant 0 : index
    %35 = vector.load %arg6[%c0_16, %c0_17, %c0_18] : memref<4x1x8xf32, #tpu.memory_space<vmem>>, vector<1x1x8xf32>
    %36 = vector.shape_cast %35 : vector<1x1x8xf32> to vector<1x8xf32>
    %37 = vector.broadcast %36 : vector<1x8xf32> to vector<48x8xf32>
    %38 = arith.addf %34, %37 : vector<48x8xf32>
    %c0_19 = arith.constant 0 : index
    %c0_20 = arith.constant 0 : index
    %c0_21 = arith.constant 0 : index
    %39 = vector.load %arg7[%c0_19, %c0_20, %c0_21] : memref<4x32x8xbf16, #tpu.memory_space<vmem>>, vector<1x32x8xbf16>
    %40 = vector.shape_cast %39 : vector<1x32x8xbf16> to vector<32x8xbf16>
    %cst_22 = arith.constant dense<0.000000e+00> : vector<48x8xf32>
    %41 = tpu.matmul %30, %40, %cst_22 {dimension_numbers = #tpu.dot_dimension_numbers<[1], [0], [0], [1], [0, 0, 1, 1], [], []>} : vector<48x32xbf16>, vector<32x8xbf16>, vector<48x8xf32> -> vector<48x8xf32>
    %c0_23 = arith.constant 0 : index
    %c0_24 = arith.constant 0 : index
    %c0_25 = arith.constant 0 : index
    %42 = vector.load %arg8[%c0_23, %c0_24, %c0_25] : memref<4x1x8xf32, #tpu.memory_space<vmem>>, vector<1x1x8xf32>
    %43 = vector.shape_cast %42 : vector<1x1x8xf32> to vector<1x8xf32>
    %44 = vector.broadcast %43 : vector<1x8xf32> to vector<48x8xf32>
    %45 = arith.addf %41, %44 : vector<48x8xf32>
    %c0_26 = arith.constant 0 : index
    %c0_27 = arith.constant 0 : index
    %c0_28 = arith.constant 0 : index
    %46 = vector.load %arg9[%c0_26, %c0_27, %c0_28] : memref<4x32x8xbf16, #tpu.memory_space<vmem>>, vector<1x32x8xbf16>
    %47 = vector.shape_cast %46 : vector<1x32x8xbf16> to vector<32x8xbf16>
    %cst_29 = arith.constant dense<0.000000e+00> : vector<48x8xf32>
    %48 = tpu.matmul %30, %47, %cst_29 {dimension_numbers = #tpu.dot_dimension_numbers<[1], [0], [0], [1], [0, 0, 1, 1], [], []>} : vector<48x32xbf16>, vector<32x8xbf16>, vector<48x8xf32> -> vector<48x8xf32>
    %c0_30 = arith.constant 0 : index
    %c0_31 = arith.constant 0 : index
    %c0_32 = arith.constant 0 : index
    %49 = vector.load %arg10[%c0_30, %c0_31, %c0_32] : memref<4x1x8xf32, #tpu.memory_space<vmem>>, vector<1x1x8xf32>
    %50 = vector.shape_cast %49 : vector<1x1x8xf32> to vector<1x8xf32>
    %51 = vector.broadcast %50 : vector<1x8xf32> to vector<48x8xf32>
    %52 = arith.addf %48, %51 : vector<48x8xf32>
    %53 = arith.truncf %38 : vector<48x8xf32> to vector<48x8xbf16>
    %54 = arith.truncf %45 : vector<48x8xf32> to vector<48x8xbf16>
    %cst_33 = arith.constant dense<0.000000e+00> : vector<48x48xf32>
    %55 = tpu.matmul %53, %54, %cst_33 {dimension_numbers = #tpu.dot_dimension_numbers<[1], [1], [0], [0], [0, 0, 1, 0], [], []>} : vector<48x8xbf16>, vector<48x8xbf16>, vector<48x48xf32> -> vector<48x48xf32>
    %cst_34 = arith.constant 0.353553385 : f32
    %56 = vector.broadcast %cst_34 : f32 to vector<48x48xf32>
    %57 = arith.mulf %55, %56 : vector<48x48xf32>
    %58 = arith.addf %57, %1 : vector<48x48xf32>
    %cst_35 = arith.constant dense<0xFF800000> : vector<48xf32>
    %59 = vector.multi_reduction <maximumf>, %58, %cst_35 [1] : vector<48x48xf32> to vector<48xf32>
    %60 = vector.shape_cast %59 : vector<48xf32> to vector<48x1xf32>
    %61 = vector.broadcast %60 : vector<48x1xf32> to vector<48x48xf32>
    %62 = arith.subf %58, %61 : vector<48x48xf32>
    %63 = math.exp %62 : vector<48x48xf32>
    %cst_36 = arith.constant dense<0.000000e+00> : vector<48xf32>
    %64 = vector.multi_reduction <add>, %63, %cst_36 [1] : vector<48x48xf32> to vector<48xf32>
    %65 = vector.shape_cast %64 : vector<48xf32> to vector<48x1xf32>
    %66 = tpu.reciprocal %65 {approx = true} : vector<48x1xf32> -> vector<48x1xf32>
    %67 = vector.broadcast %66 : vector<48x1xf32> to vector<48x48xf32>
    %68 = arith.mulf %63, %67 : vector<48x48xf32>
    %69 = arith.truncf %68 : vector<48x48xf32> to vector<48x48xbf16>
    %70 = arith.truncf %52 : vector<48x8xf32> to vector<48x8xbf16>
    %cst_37 = arith.constant dense<0.000000e+00> : vector<48x8xf32>
    %71 = tpu.matmul %69, %70, %cst_37 {dimension_numbers = #tpu.dot_dimension_numbers<[1], [0], [0], [1], [0, 0, 1, 1], [], []>} : vector<48x48xbf16>, vector<48x8xbf16>, vector<48x8xf32> -> vector<48x8xf32>
    %c0_38 = arith.constant 0 : index
    %c0_39 = arith.constant 0 : index
    %c0_40 = arith.constant 0 : index
    %72 = vector.load %arg11[%c0_38, %c0_39, %c0_40] : memref<4x8x32xbf16, #tpu.memory_space<vmem>>, vector<1x8x32xbf16>
    %73 = vector.shape_cast %72 : vector<1x8x32xbf16> to vector<8x32xbf16>
    %74 = arith.truncf %71 : vector<48x8xf32> to vector<48x8xbf16>
    %cst_41 = arith.constant dense<0.000000e+00> : vector<48x32xf32>
    %75 = tpu.matmul %74, %73, %cst_41 {dimension_numbers = #tpu.dot_dimension_numbers<[1], [0], [0], [1], [0, 0, 1, 1], [], []>} : vector<48x8xbf16>, vector<8x32xbf16>, vector<48x32xf32> -> vector<48x32xf32>
    %76 = arith.addf %31, %75 : vector<48x32xf32>
    %c1 = arith.constant 1 : index
    %c0_42 = arith.constant 0 : index
    %c0_43 = arith.constant 0 : index
    %77 = vector.load %arg5[%c1, %c0_42, %c0_43] : memref<4x32x8xbf16, #tpu.memory_space<vmem>>, vector<1x32x8xbf16>
    %78 = vector.shape_cast %77 : vector<1x32x8xbf16> to vector<32x8xbf16>
    %cst_44 = arith.constant dense<0.000000e+00> : vector<48x8xf32>
    %79 = tpu.matmul %30, %78, %cst_44 {dimension_numbers = #tpu.dot_dimension_numbers<[1], [0], [0], [1], [0, 0, 1, 1], [], []>} : vector<48x32xbf16>, vector<32x8xbf16>, vector<48x8xf32> -> vector<48x8xf32>
    %c1_45 = arith.constant 1 : index
    %c0_46 = arith.constant 0 : index
    %c0_47 = arith.constant 0 : index
    %80 = vector.load %arg6[%c1_45, %c0_46, %c0_47] : memref<4x1x8xf32, #tpu.memory_space<vmem>>, vector<1x1x8xf32>
    %81 = vector.shape_cast %80 : vector<1x1x8xf32> to vector<1x8xf32>
    %82 = vector.broadcast %81 : vector<1x8xf32> to vector<48x8xf32>
    %83 = arith.addf %79, %82 : vector<48x8xf32>
    %c1_48 = arith.constant 1 : index
    %c0_49 = arith.constant 0 : index
    %c0_50 = arith.constant 0 : index
    %84 = vector.load %arg7[%c1_48, %c0_49, %c0_50] : memref<4x32x8xbf16, #tpu.memory_space<vmem>>, vector<1x32x8xbf16>
    %85 = vector.shape_cast %84 : vector<1x32x8xbf16> to vector<32x8xbf16>
    %cst_51 = arith.constant dense<0.000000e+00> : vector<48x8xf32>
    %86 = tpu.matmul %30, %85, %cst_51 {dimension_numbers = #tpu.dot_dimension_numbers<[1], [0], [0], [1], [0, 0, 1, 1], [], []>} : vector<48x32xbf16>, vector<32x8xbf16>, vector<48x8xf32> -> vector<48x8xf32>
    %c1_52 = arith.constant 1 : index
    %c0_53 = arith.constant 0 : index
    %c0_54 = arith.constant 0 : index
    %87 = vector.load %arg8[%c1_52, %c0_53, %c0_54] : memref<4x1x8xf32, #tpu.memory_space<vmem>>, vector<1x1x8xf32>
    %88 = vector.shape_cast %87 : vector<1x1x8xf32> to vector<1x8xf32>
    %89 = vector.broadcast %88 : vector<1x8xf32> to vector<48x8xf32>
    %90 = arith.addf %86, %89 : vector<48x8xf32>
    %c1_55 = arith.constant 1 : index
    %c0_56 = arith.constant 0 : index
    %c0_57 = arith.constant 0 : index
    %91 = vector.load %arg9[%c1_55, %c0_56, %c0_57] : memref<4x32x8xbf16, #tpu.memory_space<vmem>>, vector<1x32x8xbf16>
    %92 = vector.shape_cast %91 : vector<1x32x8xbf16> to vector<32x8xbf16>
    %cst_58 = arith.constant dense<0.000000e+00> : vector<48x8xf32>
    %93 = tpu.matmul %30, %92, %cst_58 {dimension_numbers = #tpu.dot_dimension_numbers<[1], [0], [0], [1], [0, 0, 1, 1], [], []>} : vector<48x32xbf16>, vector<32x8xbf16>, vector<48x8xf32> -> vector<48x8xf32>
    %c1_59 = arith.constant 1 : index
    %c0_60 = arith.constant 0 : index
    %c0_61 = arith.constant 0 : index
    %94 = vector.load %arg10[%c1_59, %c0_60, %c0_61] : memref<4x1x8xf32, #tpu.memory_space<vmem>>, vector<1x1x8xf32>
    %95 = vector.shape_cast %94 : vector<1x1x8xf32> to vector<1x8xf32>
    %96 = vector.broadcast %95 : vector<1x8xf32> to vector<48x8xf32>
    %97 = arith.addf %93, %96 : vector<48x8xf32>
    %98 = arith.truncf %83 : vector<48x8xf32> to vector<48x8xbf16>
    %99 = arith.truncf %90 : vector<48x8xf32> to vector<48x8xbf16>
    %cst_62 = arith.constant dense<0.000000e+00> : vector<48x48xf32>
    %100 = tpu.matmul %98, %99, %cst_62 {dimension_numbers = #tpu.dot_dimension_numbers<[1], [1], [0], [0], [0, 0, 1, 0], [], []>} : vector<48x8xbf16>, vector<48x8xbf16>, vector<48x48xf32> -> vector<48x48xf32>
    %cst_63 = arith.constant 0.353553385 : f32
    %101 = vector.broadcast %cst_63 : f32 to vector<48x48xf32>
    %102 = arith.mulf %100, %101 : vector<48x48xf32>
    %103 = arith.addf %102, %1 : vector<48x48xf32>
    %cst_64 = arith.constant dense<0xFF800000> : vector<48xf32>
    %104 = vector.multi_reduction <maximumf>, %103, %cst_64 [1] : vector<48x48xf32> to vector<48xf32>
    %105 = vector.shape_cast %104 : vector<48xf32> to vector<48x1xf32>
    %106 = vector.broadcast %105 : vector<48x1xf32> to vector<48x48xf32>
    %107 = arith.subf %103, %106 : vector<48x48xf32>
    %108 = math.exp %107 : vector<48x48xf32>
    %cst_65 = arith.constant dense<0.000000e+00> : vector<48xf32>
    %109 = vector.multi_reduction <add>, %108, %cst_65 [1] : vector<48x48xf32> to vector<48xf32>
    %110 = vector.shape_cast %109 : vector<48xf32> to vector<48x1xf32>
    %111 = tpu.reciprocal %110 {approx = true} : vector<48x1xf32> -> vector<48x1xf32>
    %112 = vector.broadcast %111 : vector<48x1xf32> to vector<48x48xf32>
    %113 = arith.mulf %108, %112 : vector<48x48xf32>
    %114 = arith.truncf %113 : vector<48x48xf32> to vector<48x48xbf16>
    %115 = arith.truncf %97 : vector<48x8xf32> to vector<48x8xbf16>
    %cst_66 = arith.constant dense<0.000000e+00> : vector<48x8xf32>
    %116 = tpu.matmul %114, %115, %cst_66 {dimension_numbers = #tpu.dot_dimension_numbers<[1], [0], [0], [1], [0, 0, 1, 1], [], []>} : vector<48x48xbf16>, vector<48x8xbf16>, vector<48x8xf32> -> vector<48x8xf32>
    %c1_67 = arith.constant 1 : index
    %c0_68 = arith.constant 0 : index
    %c0_69 = arith.constant 0 : index
    %117 = vector.load %arg11[%c1_67, %c0_68, %c0_69] : memref<4x8x32xbf16, #tpu.memory_space<vmem>>, vector<1x8x32xbf16>
    %118 = vector.shape_cast %117 : vector<1x8x32xbf16> to vector<8x32xbf16>
    %119 = arith.truncf %116 : vector<48x8xf32> to vector<48x8xbf16>
    %cst_70 = arith.constant dense<0.000000e+00> : vector<48x32xf32>
    %120 = tpu.matmul %119, %118, %cst_70 {dimension_numbers = #tpu.dot_dimension_numbers<[1], [0], [0], [1], [0, 0, 1, 1], [], []>} : vector<48x8xbf16>, vector<8x32xbf16>, vector<48x32xf32> -> vector<48x32xf32>
    %121 = arith.addf %76, %120 : vector<48x32xf32>
    %c2 = arith.constant 2 : index
    %c0_71 = arith.constant 0 : index
    %c0_72 = arith.constant 0 : index
    %122 = vector.load %arg5[%c2, %c0_71, %c0_72] : memref<4x32x8xbf16, #tpu.memory_space<vmem>>, vector<1x32x8xbf16>
    %123 = vector.shape_cast %122 : vector<1x32x8xbf16> to vector<32x8xbf16>
    %cst_73 = arith.constant dense<0.000000e+00> : vector<48x8xf32>
    %124 = tpu.matmul %30, %123, %cst_73 {dimension_numbers = #tpu.dot_dimension_numbers<[1], [0], [0], [1], [0, 0, 1, 1], [], []>} : vector<48x32xbf16>, vector<32x8xbf16>, vector<48x8xf32> -> vector<48x8xf32>
    %c2_74 = arith.constant 2 : index
    %c0_75 = arith.constant 0 : index
    %c0_76 = arith.constant 0 : index
    %125 = vector.load %arg6[%c2_74, %c0_75, %c0_76] : memref<4x1x8xf32, #tpu.memory_space<vmem>>, vector<1x1x8xf32>
    %126 = vector.shape_cast %125 : vector<1x1x8xf32> to vector<1x8xf32>
    %127 = vector.broadcast %126 : vector<1x8xf32> to vector<48x8xf32>
    %128 = arith.addf %124, %127 : vector<48x8xf32>
    %c2_77 = arith.constant 2 : index
    %c0_78 = arith.constant 0 : index
    %c0_79 = arith.constant 0 : index
    %129 = vector.load %arg7[%c2_77, %c0_78, %c0_79] : memref<4x32x8xbf16, #tpu.memory_space<vmem>>, vector<1x32x8xbf16>
    %130 = vector.shape_cast %129 : vector<1x32x8xbf16> to vector<32x8xbf16>
    %cst_80 = arith.constant dense<0.000000e+00> : vector<48x8xf32>
    %131 = tpu.matmul %30, %130, %cst_80 {dimension_numbers = #tpu.dot_dimension_numbers<[1], [0], [0], [1], [0, 0, 1, 1], [], []>} : vector<48x32xbf16>, vector<32x8xbf16>, vector<48x8xf32> -> vector<48x8xf32>
    %c2_81 = arith.constant 2 : index
    %c0_82 = arith.constant 0 : index
    %c0_83 = arith.constant 0 : index
    %132 = vector.load %arg8[%c2_81, %c0_82, %c0_83] : memref<4x1x8xf32, #tpu.memory_space<vmem>>, vector<1x1x8xf32>
    %133 = vector.shape_cast %132 : vector<1x1x8xf32> to vector<1x8xf32>
    %134 = vector.broadcast %133 : vector<1x8xf32> to vector<48x8xf32>
    %135 = arith.addf %131, %134 : vector<48x8xf32>
    %c2_84 = arith.constant 2 : index
    %c0_85 = arith.constant 0 : index
    %c0_86 = arith.constant 0 : index
    %136 = vector.load %arg9[%c2_84, %c0_85, %c0_86] : memref<4x32x8xbf16, #tpu.memory_space<vmem>>, vector<1x32x8xbf16>
    %137 = vector.shape_cast %136 : vector<1x32x8xbf16> to vector<32x8xbf16>
    %cst_87 = arith.constant dense<0.000000e+00> : vector<48x8xf32>
    %138 = tpu.matmul %30, %137, %cst_87 {dimension_numbers = #tpu.dot_dimension_numbers<[1], [0], [0], [1], [0, 0, 1, 1], [], []>} : vector<48x32xbf16>, vector<32x8xbf16>, vector<48x8xf32> -> vector<48x8xf32>
    %c2_88 = arith.constant 2 : index
    %c0_89 = arith.constant 0 : index
    %c0_90 = arith.constant 0 : index
    %139 = vector.load %arg10[%c2_88, %c0_89, %c0_90] : memref<4x1x8xf32, #tpu.memory_space<vmem>>, vector<1x1x8xf32>
    %140 = vector.shape_cast %139 : vector<1x1x8xf32> to vector<1x8xf32>
    %141 = vector.broadcast %140 : vector<1x8xf32> to vector<48x8xf32>
    %142 = arith.addf %138, %141 : vector<48x8xf32>
    %143 = arith.truncf %128 : vector<48x8xf32> to vector<48x8xbf16>
    %144 = arith.truncf %135 : vector<48x8xf32> to vector<48x8xbf16>
    %cst_91 = arith.constant dense<0.000000e+00> : vector<48x48xf32>
    %145 = tpu.matmul %143, %144, %cst_91 {dimension_numbers = #tpu.dot_dimension_numbers<[1], [1], [0], [0], [0, 0, 1, 0], [], []>} : vector<48x8xbf16>, vector<48x8xbf16>, vector<48x48xf32> -> vector<48x48xf32>
    %cst_92 = arith.constant 0.353553385 : f32
    %146 = vector.broadcast %cst_92 : f32 to vector<48x48xf32>
    %147 = arith.mulf %145, %146 : vector<48x48xf32>
    %148 = arith.addf %147, %1 : vector<48x48xf32>
    %cst_93 = arith.constant dense<0xFF800000> : vector<48xf32>
    %149 = vector.multi_reduction <maximumf>, %148, %cst_93 [1] : vector<48x48xf32> to vector<48xf32>
    %150 = vector.shape_cast %149 : vector<48xf32> to vector<48x1xf32>
    %151 = vector.broadcast %150 : vector<48x1xf32> to vector<48x48xf32>
    %152 = arith.subf %148, %151 : vector<48x48xf32>
    %153 = math.exp %152 : vector<48x48xf32>
    %cst_94 = arith.constant dense<0.000000e+00> : vector<48xf32>
    %154 = vector.multi_reduction <add>, %153, %cst_94 [1] : vector<48x48xf32> to vector<48xf32>
    %155 = vector.shape_cast %154 : vector<48xf32> to vector<48x1xf32>
    %156 = tpu.reciprocal %155 {approx = true} : vector<48x1xf32> -> vector<48x1xf32>
    %157 = vector.broadcast %156 : vector<48x1xf32> to vector<48x48xf32>
    %158 = arith.mulf %153, %157 : vector<48x48xf32>
    %159 = arith.truncf %158 : vector<48x48xf32> to vector<48x48xbf16>
    %160 = arith.truncf %142 : vector<48x8xf32> to vector<48x8xbf16>
    %cst_95 = arith.constant dense<0.000000e+00> : vector<48x8xf32>
    %161 = tpu.matmul %159, %160, %cst_95 {dimension_numbers = #tpu.dot_dimension_numbers<[1], [0], [0], [1], [0, 0, 1, 1], [], []>} : vector<48x48xbf16>, vector<48x8xbf16>, vector<48x8xf32> -> vector<48x8xf32>
    %c2_96 = arith.constant 2 : index
    %c0_97 = arith.constant 0 : index
    %c0_98 = arith.constant 0 : index
    %162 = vector.load %arg11[%c2_96, %c0_97, %c0_98] : memref<4x8x32xbf16, #tpu.memory_space<vmem>>, vector<1x8x32xbf16>
    %163 = vector.shape_cast %162 : vector<1x8x32xbf16> to vector<8x32xbf16>
    %164 = arith.truncf %161 : vector<48x8xf32> to vector<48x8xbf16>
    %cst_99 = arith.constant dense<0.000000e+00> : vector<48x32xf32>
    %165 = tpu.matmul %164, %163, %cst_99 {dimension_numbers = #tpu.dot_dimension_numbers<[1], [0], [0], [1], [0, 0, 1, 1], [], []>} : vector<48x8xbf16>, vector<8x32xbf16>, vector<48x32xf32> -> vector<48x32xf32>
    %166 = arith.addf %121, %165 : vector<48x32xf32>
    %c3 = arith.constant 3 : index
    %c0_100 = arith.constant 0 : index
    %c0_101 = arith.constant 0 : index
    %167 = vector.load %arg5[%c3, %c0_100, %c0_101] : memref<4x32x8xbf16, #tpu.memory_space<vmem>>, vector<1x32x8xbf16>
    %168 = vector.shape_cast %167 : vector<1x32x8xbf16> to vector<32x8xbf16>
    %cst_102 = arith.constant dense<0.000000e+00> : vector<48x8xf32>
    %169 = tpu.matmul %30, %168, %cst_102 {dimension_numbers = #tpu.dot_dimension_numbers<[1], [0], [0], [1], [0, 0, 1, 1], [], []>} : vector<48x32xbf16>, vector<32x8xbf16>, vector<48x8xf32> -> vector<48x8xf32>
    %c3_103 = arith.constant 3 : index
    %c0_104 = arith.constant 0 : index
    %c0_105 = arith.constant 0 : index
    %170 = vector.load %arg6[%c3_103, %c0_104, %c0_105] : memref<4x1x8xf32, #tpu.memory_space<vmem>>, vector<1x1x8xf32>
    %171 = vector.shape_cast %170 : vector<1x1x8xf32> to vector<1x8xf32>
    %172 = vector.broadcast %171 : vector<1x8xf32> to vector<48x8xf32>
    %173 = arith.addf %169, %172 : vector<48x8xf32>
    %c3_106 = arith.constant 3 : index
    %c0_107 = arith.constant 0 : index
    %c0_108 = arith.constant 0 : index
    %174 = vector.load %arg7[%c3_106, %c0_107, %c0_108] : memref<4x32x8xbf16, #tpu.memory_space<vmem>>, vector<1x32x8xbf16>
    %175 = vector.shape_cast %174 : vector<1x32x8xbf16> to vector<32x8xbf16>
    %cst_109 = arith.constant dense<0.000000e+00> : vector<48x8xf32>
    %176 = tpu.matmul %30, %175, %cst_109 {dimension_numbers = #tpu.dot_dimension_numbers<[1], [0], [0], [1], [0, 0, 1, 1], [], []>} : vector<48x32xbf16>, vector<32x8xbf16>, vector<48x8xf32> -> vector<48x8xf32>
    %c3_110 = arith.constant 3 : index
    %c0_111 = arith.constant 0 : index
    %c0_112 = arith.constant 0 : index
    %177 = vector.load %arg8[%c3_110, %c0_111, %c0_112] : memref<4x1x8xf32, #tpu.memory_space<vmem>>, vector<1x1x8xf32>
    %178 = vector.shape_cast %177 : vector<1x1x8xf32> to vector<1x8xf32>
    %179 = vector.broadcast %178 : vector<1x8xf32> to vector<48x8xf32>
    %180 = arith.addf %176, %179 : vector<48x8xf32>
    %c3_113 = arith.constant 3 : index
    %c0_114 = arith.constant 0 : index
    %c0_115 = arith.constant 0 : index
    %181 = vector.load %arg9[%c3_113, %c0_114, %c0_115] : memref<4x32x8xbf16, #tpu.memory_space<vmem>>, vector<1x32x8xbf16>
    %182 = vector.shape_cast %181 : vector<1x32x8xbf16> to vector<32x8xbf16>
    %cst_116 = arith.constant dense<0.000000e+00> : vector<48x8xf32>
    %183 = tpu.matmul %30, %182, %cst_116 {dimension_numbers = #tpu.dot_dimension_numbers<[1], [0], [0], [1], [0, 0, 1, 1], [], []>} : vector<48x32xbf16>, vector<32x8xbf16>, vector<48x8xf32> -> vector<48x8xf32>
    %c3_117 = arith.constant 3 : index
    %c0_118 = arith.constant 0 : index
    %c0_119 = arith.constant 0 : index
    %184 = vector.load %arg10[%c3_117, %c0_118, %c0_119] : memref<4x1x8xf32, #tpu.memory_space<vmem>>, vector<1x1x8xf32>
    %185 = vector.shape_cast %184 : vector<1x1x8xf32> to vector<1x8xf32>
    %186 = vector.broadcast %185 : vector<1x8xf32> to vector<48x8xf32>
    %187 = arith.addf %183, %186 : vector<48x8xf32>
    %188 = arith.truncf %173 : vector<48x8xf32> to vector<48x8xbf16>
    %189 = arith.truncf %180 : vector<48x8xf32> to vector<48x8xbf16>
    %cst_120 = arith.constant dense<0.000000e+00> : vector<48x48xf32>
    %190 = tpu.matmul %188, %189, %cst_120 {dimension_numbers = #tpu.dot_dimension_numbers<[1], [1], [0], [0], [0, 0, 1, 0], [], []>} : vector<48x8xbf16>, vector<48x8xbf16>, vector<48x48xf32> -> vector<48x48xf32>
    %cst_121 = arith.constant 0.353553385 : f32
    %191 = vector.broadcast %cst_121 : f32 to vector<48x48xf32>
    %192 = arith.mulf %190, %191 : vector<48x48xf32>
    %193 = arith.addf %192, %1 : vector<48x48xf32>
    %cst_122 = arith.constant dense<0xFF800000> : vector<48xf32>
    %194 = vector.multi_reduction <maximumf>, %193, %cst_122 [1] : vector<48x48xf32> to vector<48xf32>
    %195 = vector.shape_cast %194 : vector<48xf32> to vector<48x1xf32>
    %196 = vector.broadcast %195 : vector<48x1xf32> to vector<48x48xf32>
    %197 = arith.subf %193, %196 : vector<48x48xf32>
    %198 = math.exp %197 : vector<48x48xf32>
    %cst_123 = arith.constant dense<0.000000e+00> : vector<48xf32>
    %199 = vector.multi_reduction <add>, %198, %cst_123 [1] : vector<48x48xf32> to vector<48xf32>
    %200 = vector.shape_cast %199 : vector<48xf32> to vector<48x1xf32>
    %201 = tpu.reciprocal %200 {approx = true} : vector<48x1xf32> -> vector<48x1xf32>
    %202 = vector.broadcast %201 : vector<48x1xf32> to vector<48x48xf32>
    %203 = arith.mulf %198, %202 : vector<48x48xf32>
    %204 = arith.truncf %203 : vector<48x48xf32> to vector<48x48xbf16>
    %205 = arith.truncf %187 : vector<48x8xf32> to vector<48x8xbf16>
    %cst_124 = arith.constant dense<0.000000e+00> : vector<48x8xf32>
    %206 = tpu.matmul %204, %205, %cst_124 {dimension_numbers = #tpu.dot_dimension_numbers<[1], [0], [0], [1], [0, 0, 1, 1], [], []>} : vector<48x48xbf16>, vector<48x8xbf16>, vector<48x8xf32> -> vector<48x8xf32>
    %c3_125 = arith.constant 3 : index
    %c0_126 = arith.constant 0 : index
    %c0_127 = arith.constant 0 : index
    %207 = vector.load %arg11[%c3_125, %c0_126, %c0_127] : memref<4x8x32xbf16, #tpu.memory_space<vmem>>, vector<1x8x32xbf16>
    %208 = vector.shape_cast %207 : vector<1x8x32xbf16> to vector<8x32xbf16>
    %209 = arith.truncf %206 : vector<48x8xf32> to vector<48x8xbf16>
    %cst_128 = arith.constant dense<0.000000e+00> : vector<48x32xf32>
    %210 = tpu.matmul %209, %208, %cst_128 {dimension_numbers = #tpu.dot_dimension_numbers<[1], [0], [0], [1], [0, 0, 1, 1], [], []>} : vector<48x8xbf16>, vector<8x32xbf16>, vector<48x32xf32> -> vector<48x32xf32>
    %211 = arith.addf %166, %210 : vector<48x32xf32>
    %c0_129 = arith.constant 0 : index
    %c0_130 = arith.constant 0 : index
    %212 = vector.load %arg12[%c0_129, %c0_130] : memref<1x32xf32, #tpu.memory_space<vmem>>, vector<1x32xf32>
    %213 = vector.shape_cast %212 : vector<1x32xf32> to vector<32xf32>
    %214 = vector.shape_cast %213 : vector<32xf32> to vector<1x32xf32>
    %215 = vector.broadcast %214 : vector<1x32xf32> to vector<48x32xf32>
    %216 = arith.addf %211, %215 : vector<48x32xf32>
    %217 = arith.addf %29, %216 : vector<48x32xf32>
    %c0_131 = arith.constant 0 : index
    %c0_132 = arith.constant 0 : index
    %218 = vector.load %arg13[%c0_131, %c0_132] : memref<1x32xf32, #tpu.memory_space<vmem>>, vector<1x32xf32>
    %219 = vector.shape_cast %218 : vector<1x32xf32> to vector<32xf32>
    %c0_133 = arith.constant 0 : index
    %c0_134 = arith.constant 0 : index
    %220 = vector.load %arg14[%c0_133, %c0_134] : memref<1x32xf32, #tpu.memory_space<vmem>>, vector<1x32xf32>
    %221 = vector.shape_cast %220 : vector<1x32xf32> to vector<32xf32>
    %cst_135 = arith.constant dense<0.000000e+00> : vector<48xf32>
    %222 = vector.multi_reduction <add>, %217, %cst_135 [1] : vector<48x32xf32> to vector<48xf32>
    %223 = vector.shape_cast %222 : vector<48xf32> to vector<48x1xf32>
    %cst_136 = arith.constant 3.200000e+01 : f32
    %224 = vector.broadcast %cst_136 : f32 to vector<48x1xf32>
    %225 = arith.divf %223, %224 : vector<48x1xf32>
    %226 = vector.broadcast %225 : vector<48x1xf32> to vector<48x32xf32>
    %227 = arith.subf %217, %226 : vector<48x32xf32>
    %228 = arith.mulf %227, %227 : vector<48x32xf32>
    %cst_137 = arith.constant dense<0.000000e+00> : vector<48xf32>
    %229 = vector.multi_reduction <add>, %228, %cst_137 [1] : vector<48x32xf32> to vector<48xf32>
    %230 = vector.shape_cast %229 : vector<48xf32> to vector<48x1xf32>
    %cst_138 = arith.constant 3.200000e+01 : f32
    %231 = vector.broadcast %cst_138 : f32 to vector<48x1xf32>
    %232 = arith.divf %230, %231 : vector<48x1xf32>
    %233 = vector.broadcast %225 : vector<48x1xf32> to vector<48x32xf32>
    %234 = arith.subf %217, %233 : vector<48x32xf32>
    %cst_139 = arith.constant 9.99999974E-6 : f32
    %235 = vector.broadcast %cst_139 : f32 to vector<48x1xf32>
    %236 = arith.addf %232, %235 : vector<48x1xf32>
    %237 = math.rsqrt %236 : vector<48x1xf32>
    %238 = vector.broadcast %237 : vector<48x1xf32> to vector<48x32xf32>
    %239 = arith.mulf %234, %238 : vector<48x32xf32>
    %240 = vector.shape_cast %219 : vector<32xf32> to vector<1x32xf32>
    %241 = vector.broadcast %240 : vector<1x32xf32> to vector<48x32xf32>
    %242 = arith.mulf %239, %241 : vector<48x32xf32>
    %243 = vector.shape_cast %221 : vector<32xf32> to vector<1x32xf32>
    %244 = vector.broadcast %243 : vector<1x32xf32> to vector<48x32xf32>
    %245 = arith.addf %242, %244 : vector<48x32xf32>
    %c0_140 = arith.constant 0 : index
    %c0_141 = arith.constant 0 : index
    %246 = vector.load %arg15[%c0_140, %c0_141] : memref<32x64xbf16, #tpu.memory_space<vmem>>, vector<32x64xbf16>
    %247 = arith.truncf %245 : vector<48x32xf32> to vector<48x32xbf16>
    %cst_142 = arith.constant dense<0.000000e+00> : vector<48x64xf32>
    %248 = tpu.matmul %247, %246, %cst_142 {dimension_numbers = #tpu.dot_dimension_numbers<[1], [0], [0], [1], [0, 0, 1, 1], [], []>} : vector<48x32xbf16>, vector<32x64xbf16>, vector<48x64xf32> -> vector<48x64xf32>
    %c0_143 = arith.constant 0 : index
    %c0_144 = arith.constant 0 : index
    %249 = vector.load %arg16[%c0_143, %c0_144] : memref<1x64xf32, #tpu.memory_space<vmem>>, vector<1x64xf32>
    %250 = vector.shape_cast %249 : vector<1x64xf32> to vector<64xf32>
    %251 = vector.shape_cast %250 : vector<64xf32> to vector<1x64xf32>
    %252 = vector.broadcast %251 : vector<1x64xf32> to vector<48x64xf32>
    %253 = arith.addf %248, %252 : vector<48x64xf32>
    %cst_145 = arith.constant 5.000000e-01 : f32
    %254 = vector.broadcast %cst_145 : f32 to vector<48x64xf32>
    %255 = arith.mulf %254, %253 : vector<48x64xf32>
    %cst_146 = arith.constant 0.707106769 : f32
    %256 = vector.broadcast %cst_146 : f32 to vector<48x64xf32>
    %257 = arith.mulf %253, %256 : vector<48x64xf32>
    %258 = math.erf %257 : vector<48x64xf32>
    %cst_147 = arith.constant 1.000000e+00 : f32
    %259 = vector.broadcast %cst_147 : f32 to vector<48x64xf32>
    %260 = arith.addf %259, %258 : vector<48x64xf32>
    %261 = arith.mulf %255, %260 : vector<48x64xf32>
    %c0_148 = arith.constant 0 : index
    %c0_149 = arith.constant 0 : index
    %262 = vector.load %arg17[%c0_148, %c0_149] : memref<64x32xbf16, #tpu.memory_space<vmem>>, vector<64x32xbf16>
    %263 = arith.truncf %261 : vector<48x64xf32> to vector<48x64xbf16>
    %cst_150 = arith.constant dense<0.000000e+00> : vector<48x32xf32>
    %264 = tpu.matmul %263, %262, %cst_150 {dimension_numbers = #tpu.dot_dimension_numbers<[1], [0], [0], [1], [0, 0, 1, 1], [], []>} : vector<48x64xbf16>, vector<64x32xbf16>, vector<48x32xf32> -> vector<48x32xf32>
    %c0_151 = arith.constant 0 : index
    %c0_152 = arith.constant 0 : index
    %265 = vector.load %arg18[%c0_151, %c0_152] : memref<1x32xf32, #tpu.memory_space<vmem>>, vector<1x32xf32>
    %266 = vector.shape_cast %265 : vector<1x32xf32> to vector<32xf32>
    %267 = vector.shape_cast %266 : vector<32xf32> to vector<1x32xf32>
    %268 = vector.broadcast %267 : vector<1x32xf32> to vector<48x32xf32>
    %269 = arith.addf %264, %268 : vector<48x32xf32>
    %270 = arith.addf %245, %269 : vector<48x32xf32>
    %c0_153 = arith.constant 0 : index
    %c0_154 = arith.constant 0 : index
    %271 = vector.load %arg19[%c0_153, %c0_154] : memref<1x32xf32, #tpu.memory_space<vmem>>, vector<1x32xf32>
    %272 = vector.shape_cast %271 : vector<1x32xf32> to vector<32xf32>
    %c0_155 = arith.constant 0 : index
    %c0_156 = arith.constant 0 : index
    %273 = vector.load %arg20[%c0_155, %c0_156] : memref<1x32xf32, #tpu.memory_space<vmem>>, vector<1x32xf32>
    %274 = vector.shape_cast %273 : vector<1x32xf32> to vector<32xf32>
    %cst_157 = arith.constant dense<0.000000e+00> : vector<48xf32>
    %275 = vector.multi_reduction <add>, %270, %cst_157 [1] : vector<48x32xf32> to vector<48xf32>
    %276 = vector.shape_cast %275 : vector<48xf32> to vector<48x1xf32>
    %cst_158 = arith.constant 3.200000e+01 : f32
    %277 = vector.broadcast %cst_158 : f32 to vector<48x1xf32>
    %278 = arith.divf %276, %277 : vector<48x1xf32>
    %279 = vector.broadcast %278 : vector<48x1xf32> to vector<48x32xf32>
    %280 = arith.subf %270, %279 : vector<48x32xf32>
    %281 = arith.mulf %280, %280 : vector<48x32xf32>
    %cst_159 = arith.constant dense<0.000000e+00> : vector<48xf32>
    %282 = vector.multi_reduction <add>, %281, %cst_159 [1] : vector<48x32xf32> to vector<48xf32>
    %283 = vector.shape_cast %282 : vector<48xf32> to vector<48x1xf32>
    %cst_160 = arith.constant 3.200000e+01 : f32
    %284 = vector.broadcast %cst_160 : f32 to vector<48x1xf32>
    %285 = arith.divf %283, %284 : vector<48x1xf32>
    %286 = vector.broadcast %278 : vector<48x1xf32> to vector<48x32xf32>
    %287 = arith.subf %270, %286 : vector<48x32xf32>
    %cst_161 = arith.constant 9.99999974E-6 : f32
    %288 = vector.broadcast %cst_161 : f32 to vector<48x1xf32>
    %289 = arith.addf %285, %288 : vector<48x1xf32>
    %290 = math.rsqrt %289 : vector<48x1xf32>
    %291 = vector.broadcast %290 : vector<48x1xf32> to vector<48x32xf32>
    %292 = arith.mulf %287, %291 : vector<48x32xf32>
    %293 = vector.shape_cast %272 : vector<32xf32> to vector<1x32xf32>
    %294 = vector.broadcast %293 : vector<1x32xf32> to vector<48x32xf32>
    %295 = arith.mulf %292, %294 : vector<48x32xf32>
    %296 = vector.shape_cast %274 : vector<32xf32> to vector<1x32xf32>
    %297 = vector.broadcast %296 : vector<1x32xf32> to vector<48x32xf32>
    %298 = arith.addf %295, %297 : vector<48x32xf32>
    %299 = arith.truncf %298 : vector<48x32xf32> to vector<48x32xbf16>
    %cst_162 = arith.constant 0.000000e+00 : f32
    %300 = vector.broadcast %cst_162 : f32 to vector<48x32xf32>
    %c0_163 = arith.constant 0 : index
    %c0_164 = arith.constant 0 : index
    %c0_165 = arith.constant 0 : index
    %301 = vector.load %arg21[%c0_163, %c0_164, %c0_165] : memref<4x32x8xbf16, #tpu.memory_space<vmem>>, vector<1x32x8xbf16>
    %302 = vector.shape_cast %301 : vector<1x32x8xbf16> to vector<32x8xbf16>
    %cst_166 = arith.constant dense<0.000000e+00> : vector<48x8xf32>
    %303 = tpu.matmul %299, %302, %cst_166 {dimension_numbers = #tpu.dot_dimension_numbers<[1], [0], [0], [1], [0, 0, 1, 1], [], []>} : vector<48x32xbf16>, vector<32x8xbf16>, vector<48x8xf32> -> vector<48x8xf32>
    %c0_167 = arith.constant 0 : index
    %c0_168 = arith.constant 0 : index
    %c0_169 = arith.constant 0 : index
    %304 = vector.load %arg22[%c0_167, %c0_168, %c0_169] : memref<4x1x8xf32, #tpu.memory_space<vmem>>, vector<1x1x8xf32>
    %305 = vector.shape_cast %304 : vector<1x1x8xf32> to vector<1x8xf32>
    %306 = vector.broadcast %305 : vector<1x8xf32> to vector<48x8xf32>
    %307 = arith.addf %303, %306 : vector<48x8xf32>
    %c0_170 = arith.constant 0 : index
    %c0_171 = arith.constant 0 : index
    %c0_172 = arith.constant 0 : index
    %308 = vector.load %arg23[%c0_170, %c0_171, %c0_172] : memref<4x32x8xbf16, #tpu.memory_space<vmem>>, vector<1x32x8xbf16>
    %309 = vector.shape_cast %308 : vector<1x32x8xbf16> to vector<32x8xbf16>
    %cst_173 = arith.constant dense<0.000000e+00> : vector<48x8xf32>
    %310 = tpu.matmul %299, %309, %cst_173 {dimension_numbers = #tpu.dot_dimension_numbers<[1], [0], [0], [1], [0, 0, 1, 1], [], []>} : vector<48x32xbf16>, vector<32x8xbf16>, vector<48x8xf32> -> vector<48x8xf32>
    %c0_174 = arith.constant 0 : index
    %c0_175 = arith.constant 0 : index
    %c0_176 = arith.constant 0 : index
    %311 = vector.load %arg24[%c0_174, %c0_175, %c0_176] : memref<4x1x8xf32, #tpu.memory_space<vmem>>, vector<1x1x8xf32>
    %312 = vector.shape_cast %311 : vector<1x1x8xf32> to vector<1x8xf32>
    %313 = vector.broadcast %312 : vector<1x8xf32> to vector<48x8xf32>
    %314 = arith.addf %310, %313 : vector<48x8xf32>
    %c0_177 = arith.constant 0 : index
    %c0_178 = arith.constant 0 : index
    %c0_179 = arith.constant 0 : index
    %315 = vector.load %arg25[%c0_177, %c0_178, %c0_179] : memref<4x32x8xbf16, #tpu.memory_space<vmem>>, vector<1x32x8xbf16>
    %316 = vector.shape_cast %315 : vector<1x32x8xbf16> to vector<32x8xbf16>
    %cst_180 = arith.constant dense<0.000000e+00> : vector<48x8xf32>
    %317 = tpu.matmul %299, %316, %cst_180 {dimension_numbers = #tpu.dot_dimension_numbers<[1], [0], [0], [1], [0, 0, 1, 1], [], []>} : vector<48x32xbf16>, vector<32x8xbf16>, vector<48x8xf32> -> vector<48x8xf32>
    %c0_181 = arith.constant 0 : index
    %c0_182 = arith.constant 0 : index
    %c0_183 = arith.constant 0 : index
    %318 = vector.load %arg26[%c0_181, %c0_182, %c0_183] : memref<4x1x8xf32, #tpu.memory_space<vmem>>, vector<1x1x8xf32>
    %319 = vector.shape_cast %318 : vector<1x1x8xf32> to vector<1x8xf32>
    %320 = vector.broadcast %319 : vector<1x8xf32> to vector<48x8xf32>
    %321 = arith.addf %317, %320 : vector<48x8xf32>
    %322 = arith.truncf %307 : vector<48x8xf32> to vector<48x8xbf16>
    %323 = arith.truncf %314 : vector<48x8xf32> to vector<48x8xbf16>
    %cst_184 = arith.constant dense<0.000000e+00> : vector<48x48xf32>
    %324 = tpu.matmul %322, %323, %cst_184 {dimension_numbers = #tpu.dot_dimension_numbers<[1], [1], [0], [0], [0, 0, 1, 0], [], []>} : vector<48x8xbf16>, vector<48x8xbf16>, vector<48x48xf32> -> vector<48x48xf32>
    %cst_185 = arith.constant 0.353553385 : f32
    %325 = vector.broadcast %cst_185 : f32 to vector<48x48xf32>
    %326 = arith.mulf %324, %325 : vector<48x48xf32>
    %327 = arith.addf %326, %1 : vector<48x48xf32>
    %cst_186 = arith.constant dense<0xFF800000> : vector<48xf32>
    %328 = vector.multi_reduction <maximumf>, %327, %cst_186 [1] : vector<48x48xf32> to vector<48xf32>
    %329 = vector.shape_cast %328 : vector<48xf32> to vector<48x1xf32>
    %330 = vector.broadcast %329 : vector<48x1xf32> to vector<48x48xf32>
    %331 = arith.subf %327, %330 : vector<48x48xf32>
    %332 = math.exp %331 : vector<48x48xf32>
    %cst_187 = arith.constant dense<0.000000e+00> : vector<48xf32>
    %333 = vector.multi_reduction <add>, %332, %cst_187 [1] : vector<48x48xf32> to vector<48xf32>
    %334 = vector.shape_cast %333 : vector<48xf32> to vector<48x1xf32>
    %335 = tpu.reciprocal %334 {approx = true} : vector<48x1xf32> -> vector<48x1xf32>
    %336 = vector.broadcast %335 : vector<48x1xf32> to vector<48x48xf32>
    %337 = arith.mulf %332, %336 : vector<48x48xf32>
    %338 = arith.truncf %337 : vector<48x48xf32> to vector<48x48xbf16>
    %339 = arith.truncf %321 : vector<48x8xf32> to vector<48x8xbf16>
    %cst_188 = arith.constant dense<0.000000e+00> : vector<48x8xf32>
    %340 = tpu.matmul %338, %339, %cst_188 {dimension_numbers = #tpu.dot_dimension_numbers<[1], [0], [0], [1], [0, 0, 1, 1], [], []>} : vector<48x48xbf16>, vector<48x8xbf16>, vector<48x8xf32> -> vector<48x8xf32>
    %c0_189 = arith.constant 0 : index
    %c0_190 = arith.constant 0 : index
    %c0_191 = arith.constant 0 : index
    %341 = vector.load %arg27[%c0_189, %c0_190, %c0_191] : memref<4x8x32xbf16, #tpu.memory_space<vmem>>, vector<1x8x32xbf16>
    %342 = vector.shape_cast %341 : vector<1x8x32xbf16> to vector<8x32xbf16>
    %343 = arith.truncf %340 : vector<48x8xf32> to vector<48x8xbf16>
    %cst_192 = arith.constant dense<0.000000e+00> : vector<48x32xf32>
    %344 = tpu.matmul %343, %342, %cst_192 {dimension_numbers = #tpu.dot_dimension_numbers<[1], [0], [0], [1], [0, 0, 1, 1], [], []>} : vector<48x8xbf16>, vector<8x32xbf16>, vector<48x32xf32> -> vector<48x32xf32>
    %345 = arith.addf %300, %344 : vector<48x32xf32>
    %c1_193 = arith.constant 1 : index
    %c0_194 = arith.constant 0 : index
    %c0_195 = arith.constant 0 : index
    %346 = vector.load %arg21[%c1_193, %c0_194, %c0_195] : memref<4x32x8xbf16, #tpu.memory_space<vmem>>, vector<1x32x8xbf16>
    %347 = vector.shape_cast %346 : vector<1x32x8xbf16> to vector<32x8xbf16>
    %cst_196 = arith.constant dense<0.000000e+00> : vector<48x8xf32>
    %348 = tpu.matmul %299, %347, %cst_196 {dimension_numbers = #tpu.dot_dimension_numbers<[1], [0], [0], [1], [0, 0, 1, 1], [], []>} : vector<48x32xbf16>, vector<32x8xbf16>, vector<48x8xf32> -> vector<48x8xf32>
    %c1_197 = arith.constant 1 : index
    %c0_198 = arith.constant 0 : index
    %c0_199 = arith.constant 0 : index
    %349 = vector.load %arg22[%c1_197, %c0_198, %c0_199] : memref<4x1x8xf32, #tpu.memory_space<vmem>>, vector<1x1x8xf32>
    %350 = vector.shape_cast %349 : vector<1x1x8xf32> to vector<1x8xf32>
    %351 = vector.broadcast %350 : vector<1x8xf32> to vector<48x8xf32>
    %352 = arith.addf %348, %351 : vector<48x8xf32>
    %c1_200 = arith.constant 1 : index
    %c0_201 = arith.constant 0 : index
    %c0_202 = arith.constant 0 : index
    %353 = vector.load %arg23[%c1_200, %c0_201, %c0_202] : memref<4x32x8xbf16, #tpu.memory_space<vmem>>, vector<1x32x8xbf16>
    %354 = vector.shape_cast %353 : vector<1x32x8xbf16> to vector<32x8xbf16>
    %cst_203 = arith.constant dense<0.000000e+00> : vector<48x8xf32>
    %355 = tpu.matmul %299, %354, %cst_203 {dimension_numbers = #tpu.dot_dimension_numbers<[1], [0], [0], [1], [0, 0, 1, 1], [], []>} : vector<48x32xbf16>, vector<32x8xbf16>, vector<48x8xf32> -> vector<48x8xf32>
    %c1_204 = arith.constant 1 : index
    %c0_205 = arith.constant 0 : index
    %c0_206 = arith.constant 0 : index
    %356 = vector.load %arg24[%c1_204, %c0_205, %c0_206] : memref<4x1x8xf32, #tpu.memory_space<vmem>>, vector<1x1x8xf32>
    %357 = vector.shape_cast %356 : vector<1x1x8xf32> to vector<1x8xf32>
    %358 = vector.broadcast %357 : vector<1x8xf32> to vector<48x8xf32>
    %359 = arith.addf %355, %358 : vector<48x8xf32>
    %c1_207 = arith.constant 1 : index
    %c0_208 = arith.constant 0 : index
    %c0_209 = arith.constant 0 : index
    %360 = vector.load %arg25[%c1_207, %c0_208, %c0_209] : memref<4x32x8xbf16, #tpu.memory_space<vmem>>, vector<1x32x8xbf16>
    %361 = vector.shape_cast %360 : vector<1x32x8xbf16> to vector<32x8xbf16>
    %cst_210 = arith.constant dense<0.000000e+00> : vector<48x8xf32>
    %362 = tpu.matmul %299, %361, %cst_210 {dimension_numbers = #tpu.dot_dimension_numbers<[1], [0], [0], [1], [0, 0, 1, 1], [], []>} : vector<48x32xbf16>, vector<32x8xbf16>, vector<48x8xf32> -> vector<48x8xf32>
    %c1_211 = arith.constant 1 : index
    %c0_212 = arith.constant 0 : index
    %c0_213 = arith.constant 0 : index
    %363 = vector.load %arg26[%c1_211, %c0_212, %c0_213] : memref<4x1x8xf32, #tpu.memory_space<vmem>>, vector<1x1x8xf32>
    %364 = vector.shape_cast %363 : vector<1x1x8xf32> to vector<1x8xf32>
    %365 = vector.broadcast %364 : vector<1x8xf32> to vector<48x8xf32>
    %366 = arith.addf %362, %365 : vector<48x8xf32>
    %367 = arith.truncf %352 : vector<48x8xf32> to vector<48x8xbf16>
    %368 = arith.truncf %359 : vector<48x8xf32> to vector<48x8xbf16>
    %cst_214 = arith.constant dense<0.000000e+00> : vector<48x48xf32>
    %369 = tpu.matmul %367, %368, %cst_214 {dimension_numbers = #tpu.dot_dimension_numbers<[1], [1], [0], [0], [0, 0, 1, 0], [], []>} : vector<48x8xbf16>, vector<48x8xbf16>, vector<48x48xf32> -> vector<48x48xf32>
    %cst_215 = arith.constant 0.353553385 : f32
    %370 = vector.broadcast %cst_215 : f32 to vector<48x48xf32>
    %371 = arith.mulf %369, %370 : vector<48x48xf32>
    %372 = arith.addf %371, %1 : vector<48x48xf32>
    %cst_216 = arith.constant dense<0xFF800000> : vector<48xf32>
    %373 = vector.multi_reduction <maximumf>, %372, %cst_216 [1] : vector<48x48xf32> to vector<48xf32>
    %374 = vector.shape_cast %373 : vector<48xf32> to vector<48x1xf32>
    %375 = vector.broadcast %374 : vector<48x1xf32> to vector<48x48xf32>
    %376 = arith.subf %372, %375 : vector<48x48xf32>
    %377 = math.exp %376 : vector<48x48xf32>
    %cst_217 = arith.constant dense<0.000000e+00> : vector<48xf32>
    %378 = vector.multi_reduction <add>, %377, %cst_217 [1] : vector<48x48xf32> to vector<48xf32>
    %379 = vector.shape_cast %378 : vector<48xf32> to vector<48x1xf32>
    %380 = tpu.reciprocal %379 {approx = true} : vector<48x1xf32> -> vector<48x1xf32>
    %381 = vector.broadcast %380 : vector<48x1xf32> to vector<48x48xf32>
    %382 = arith.mulf %377, %381 : vector<48x48xf32>
    %383 = arith.truncf %382 : vector<48x48xf32> to vector<48x48xbf16>
    %384 = arith.truncf %366 : vector<48x8xf32> to vector<48x8xbf16>
    %cst_218 = arith.constant dense<0.000000e+00> : vector<48x8xf32>
    %385 = tpu.matmul %383, %384, %cst_218 {dimension_numbers = #tpu.dot_dimension_numbers<[1], [0], [0], [1], [0, 0, 1, 1], [], []>} : vector<48x48xbf16>, vector<48x8xbf16>, vector<48x8xf32> -> vector<48x8xf32>
    %c1_219 = arith.constant 1 : index
    %c0_220 = arith.constant 0 : index
    %c0_221 = arith.constant 0 : index
    %386 = vector.load %arg27[%c1_219, %c0_220, %c0_221] : memref<4x8x32xbf16, #tpu.memory_space<vmem>>, vector<1x8x32xbf16>
    %387 = vector.shape_cast %386 : vector<1x8x32xbf16> to vector<8x32xbf16>
    %388 = arith.truncf %385 : vector<48x8xf32> to vector<48x8xbf16>
    %cst_222 = arith.constant dense<0.000000e+00> : vector<48x32xf32>
    %389 = tpu.matmul %388, %387, %cst_222 {dimension_numbers = #tpu.dot_dimension_numbers<[1], [0], [0], [1], [0, 0, 1, 1], [], []>} : vector<48x8xbf16>, vector<8x32xbf16>, vector<48x32xf32> -> vector<48x32xf32>
    %390 = arith.addf %345, %389 : vector<48x32xf32>
    %c2_223 = arith.constant 2 : index
    %c0_224 = arith.constant 0 : index
    %c0_225 = arith.constant 0 : index
    %391 = vector.load %arg21[%c2_223, %c0_224, %c0_225] : memref<4x32x8xbf16, #tpu.memory_space<vmem>>, vector<1x32x8xbf16>
    %392 = vector.shape_cast %391 : vector<1x32x8xbf16> to vector<32x8xbf16>
    %cst_226 = arith.constant dense<0.000000e+00> : vector<48x8xf32>
    %393 = tpu.matmul %299, %392, %cst_226 {dimension_numbers = #tpu.dot_dimension_numbers<[1], [0], [0], [1], [0, 0, 1, 1], [], []>} : vector<48x32xbf16>, vector<32x8xbf16>, vector<48x8xf32> -> vector<48x8xf32>
    %c2_227 = arith.constant 2 : index
    %c0_228 = arith.constant 0 : index
    %c0_229 = arith.constant 0 : index
    %394 = vector.load %arg22[%c2_227, %c0_228, %c0_229] : memref<4x1x8xf32, #tpu.memory_space<vmem>>, vector<1x1x8xf32>
    %395 = vector.shape_cast %394 : vector<1x1x8xf32> to vector<1x8xf32>
    %396 = vector.broadcast %395 : vector<1x8xf32> to vector<48x8xf32>
    %397 = arith.addf %393, %396 : vector<48x8xf32>
    %c2_230 = arith.constant 2 : index
    %c0_231 = arith.constant 0 : index
    %c0_232 = arith.constant 0 : index
    %398 = vector.load %arg23[%c2_230, %c0_231, %c0_232] : memref<4x32x8xbf16, #tpu.memory_space<vmem>>, vector<1x32x8xbf16>
    %399 = vector.shape_cast %398 : vector<1x32x8xbf16> to vector<32x8xbf16>
    %cst_233 = arith.constant dense<0.000000e+00> : vector<48x8xf32>
    %400 = tpu.matmul %299, %399, %cst_233 {dimension_numbers = #tpu.dot_dimension_numbers<[1], [0], [0], [1], [0, 0, 1, 1], [], []>} : vector<48x32xbf16>, vector<32x8xbf16>, vector<48x8xf32> -> vector<48x8xf32>
    %c2_234 = arith.constant 2 : index
    %c0_235 = arith.constant 0 : index
    %c0_236 = arith.constant 0 : index
    %401 = vector.load %arg24[%c2_234, %c0_235, %c0_236] : memref<4x1x8xf32, #tpu.memory_space<vmem>>, vector<1x1x8xf32>
    %402 = vector.shape_cast %401 : vector<1x1x8xf32> to vector<1x8xf32>
    %403 = vector.broadcast %402 : vector<1x8xf32> to vector<48x8xf32>
    %404 = arith.addf %400, %403 : vector<48x8xf32>
    %c2_237 = arith.constant 2 : index
    %c0_238 = arith.constant 0 : index
    %c0_239 = arith.constant 0 : index
    %405 = vector.load %arg25[%c2_237, %c0_238, %c0_239] : memref<4x32x8xbf16, #tpu.memory_space<vmem>>, vector<1x32x8xbf16>
    %406 = vector.shape_cast %405 : vector<1x32x8xbf16> to vector<32x8xbf16>
    %cst_240 = arith.constant dense<0.000000e+00> : vector<48x8xf32>
    %407 = tpu.matmul %299, %406, %cst_240 {dimension_numbers = #tpu.dot_dimension_numbers<[1], [0], [0], [1], [0, 0, 1, 1], [], []>} : vector<48x32xbf16>, vector<32x8xbf16>, vector<48x8xf32> -> vector<48x8xf32>
    %c2_241 = arith.constant 2 : index
    %c0_242 = arith.constant 0 : index
    %c0_243 = arith.constant 0 : index
    %408 = vector.load %arg26[%c2_241, %c0_242, %c0_243] : memref<4x1x8xf32, #tpu.memory_space<vmem>>, vector<1x1x8xf32>
    %409 = vector.shape_cast %408 : vector<1x1x8xf32> to vector<1x8xf32>
    %410 = vector.broadcast %409 : vector<1x8xf32> to vector<48x8xf32>
    %411 = arith.addf %407, %410 : vector<48x8xf32>
    %412 = arith.truncf %397 : vector<48x8xf32> to vector<48x8xbf16>
    %413 = arith.truncf %404 : vector<48x8xf32> to vector<48x8xbf16>
    %cst_244 = arith.constant dense<0.000000e+00> : vector<48x48xf32>
    %414 = tpu.matmul %412, %413, %cst_244 {dimension_numbers = #tpu.dot_dimension_numbers<[1], [1], [0], [0], [0, 0, 1, 0], [], []>} : vector<48x8xbf16>, vector<48x8xbf16>, vector<48x48xf32> -> vector<48x48xf32>
    %cst_245 = arith.constant 0.353553385 : f32
    %415 = vector.broadcast %cst_245 : f32 to vector<48x48xf32>
    %416 = arith.mulf %414, %415 : vector<48x48xf32>
    %417 = arith.addf %416, %1 : vector<48x48xf32>
    %cst_246 = arith.constant dense<0xFF800000> : vector<48xf32>
    %418 = vector.multi_reduction <maximumf>, %417, %cst_246 [1] : vector<48x48xf32> to vector<48xf32>
    %419 = vector.shape_cast %418 : vector<48xf32> to vector<48x1xf32>
    %420 = vector.broadcast %419 : vector<48x1xf32> to vector<48x48xf32>
    %421 = arith.subf %417, %420 : vector<48x48xf32>
    %422 = math.exp %421 : vector<48x48xf32>
    %cst_247 = arith.constant dense<0.000000e+00> : vector<48xf32>
    %423 = vector.multi_reduction <add>, %422, %cst_247 [1] : vector<48x48xf32> to vector<48xf32>
    %424 = vector.shape_cast %423 : vector<48xf32> to vector<48x1xf32>
    %425 = tpu.reciprocal %424 {approx = true} : vector<48x1xf32> -> vector<48x1xf32>
    %426 = vector.broadcast %425 : vector<48x1xf32> to vector<48x48xf32>
    %427 = arith.mulf %422, %426 : vector<48x48xf32>
    %428 = arith.truncf %427 : vector<48x48xf32> to vector<48x48xbf16>
    %429 = arith.truncf %411 : vector<48x8xf32> to vector<48x8xbf16>
    %cst_248 = arith.constant dense<0.000000e+00> : vector<48x8xf32>
    %430 = tpu.matmul %428, %429, %cst_248 {dimension_numbers = #tpu.dot_dimension_numbers<[1], [0], [0], [1], [0, 0, 1, 1], [], []>} : vector<48x48xbf16>, vector<48x8xbf16>, vector<48x8xf32> -> vector<48x8xf32>
    %c2_249 = arith.constant 2 : index
    %c0_250 = arith.constant 0 : index
    %c0_251 = arith.constant 0 : index
    %431 = vector.load %arg27[%c2_249, %c0_250, %c0_251] : memref<4x8x32xbf16, #tpu.memory_space<vmem>>, vector<1x8x32xbf16>
    %432 = vector.shape_cast %431 : vector<1x8x32xbf16> to vector<8x32xbf16>
    %433 = arith.truncf %430 : vector<48x8xf32> to vector<48x8xbf16>
    %cst_252 = arith.constant dense<0.000000e+00> : vector<48x32xf32>
    %434 = tpu.matmul %433, %432, %cst_252 {dimension_numbers = #tpu.dot_dimension_numbers<[1], [0], [0], [1], [0, 0, 1, 1], [], []>} : vector<48x8xbf16>, vector<8x32xbf16>, vector<48x32xf32> -> vector<48x32xf32>
    %435 = arith.addf %390, %434 : vector<48x32xf32>
    %c3_253 = arith.constant 3 : index
    %c0_254 = arith.constant 0 : index
    %c0_255 = arith.constant 0 : index
    %436 = vector.load %arg21[%c3_253, %c0_254, %c0_255] : memref<4x32x8xbf16, #tpu.memory_space<vmem>>, vector<1x32x8xbf16>
    %437 = vector.shape_cast %436 : vector<1x32x8xbf16> to vector<32x8xbf16>
    %cst_256 = arith.constant dense<0.000000e+00> : vector<48x8xf32>
    %438 = tpu.matmul %299, %437, %cst_256 {dimension_numbers = #tpu.dot_dimension_numbers<[1], [0], [0], [1], [0, 0, 1, 1], [], []>} : vector<48x32xbf16>, vector<32x8xbf16>, vector<48x8xf32> -> vector<48x8xf32>
    %c3_257 = arith.constant 3 : index
    %c0_258 = arith.constant 0 : index
    %c0_259 = arith.constant 0 : index
    %439 = vector.load %arg22[%c3_257, %c0_258, %c0_259] : memref<4x1x8xf32, #tpu.memory_space<vmem>>, vector<1x1x8xf32>
    %440 = vector.shape_cast %439 : vector<1x1x8xf32> to vector<1x8xf32>
    %441 = vector.broadcast %440 : vector<1x8xf32> to vector<48x8xf32>
    %442 = arith.addf %438, %441 : vector<48x8xf32>
    %c3_260 = arith.constant 3 : index
    %c0_261 = arith.constant 0 : index
    %c0_262 = arith.constant 0 : index
    %443 = vector.load %arg23[%c3_260, %c0_261, %c0_262] : memref<4x32x8xbf16, #tpu.memory_space<vmem>>, vector<1x32x8xbf16>
    %444 = vector.shape_cast %443 : vector<1x32x8xbf16> to vector<32x8xbf16>
    %cst_263 = arith.constant dense<0.000000e+00> : vector<48x8xf32>
    %445 = tpu.matmul %299, %444, %cst_263 {dimension_numbers = #tpu.dot_dimension_numbers<[1], [0], [0], [1], [0, 0, 1, 1], [], []>} : vector<48x32xbf16>, vector<32x8xbf16>, vector<48x8xf32> -> vector<48x8xf32>
    %c3_264 = arith.constant 3 : index
    %c0_265 = arith.constant 0 : index
    %c0_266 = arith.constant 0 : index
    %446 = vector.load %arg24[%c3_264, %c0_265, %c0_266] : memref<4x1x8xf32, #tpu.memory_space<vmem>>, vector<1x1x8xf32>
    %447 = vector.shape_cast %446 : vector<1x1x8xf32> to vector<1x8xf32>
    %448 = vector.broadcast %447 : vector<1x8xf32> to vector<48x8xf32>
    %449 = arith.addf %445, %448 : vector<48x8xf32>
    %c3_267 = arith.constant 3 : index
    %c0_268 = arith.constant 0 : index
    %c0_269 = arith.constant 0 : index
    %450 = vector.load %arg25[%c3_267, %c0_268, %c0_269] : memref<4x32x8xbf16, #tpu.memory_space<vmem>>, vector<1x32x8xbf16>
    %451 = vector.shape_cast %450 : vector<1x32x8xbf16> to vector<32x8xbf16>
    %cst_270 = arith.constant dense<0.000000e+00> : vector<48x8xf32>
    %452 = tpu.matmul %299, %451, %cst_270 {dimension_numbers = #tpu.dot_dimension_numbers<[1], [0], [0], [1], [0, 0, 1, 1], [], []>} : vector<48x32xbf16>, vector<32x8xbf16>, vector<48x8xf32> -> vector<48x8xf32>
    %c3_271 = arith.constant 3 : index
    %c0_272 = arith.constant 0 : index
    %c0_273 = arith.constant 0 : index
    %453 = vector.load %arg26[%c3_271, %c0_272, %c0_273] : memref<4x1x8xf32, #tpu.memory_space<vmem>>, vector<1x1x8xf32>
    %454 = vector.shape_cast %453 : vector<1x1x8xf32> to vector<1x8xf32>
    %455 = vector.broadcast %454 : vector<1x8xf32> to vector<48x8xf32>
    %456 = arith.addf %452, %455 : vector<48x8xf32>
    %457 = arith.truncf %442 : vector<48x8xf32> to vector<48x8xbf16>
    %458 = arith.truncf %449 : vector<48x8xf32> to vector<48x8xbf16>
    %cst_274 = arith.constant dense<0.000000e+00> : vector<48x48xf32>
    %459 = tpu.matmul %457, %458, %cst_274 {dimension_numbers = #tpu.dot_dimension_numbers<[1], [1], [0], [0], [0, 0, 1, 0], [], []>} : vector<48x8xbf16>, vector<48x8xbf16>, vector<48x48xf32> -> vector<48x48xf32>
    %cst_275 = arith.constant 0.353553385 : f32
    %460 = vector.broadcast %cst_275 : f32 to vector<48x48xf32>
    %461 = arith.mulf %459, %460 : vector<48x48xf32>
    %462 = arith.addf %461, %1 : vector<48x48xf32>
    %cst_276 = arith.constant dense<0xFF800000> : vector<48xf32>
    %463 = vector.multi_reduction <maximumf>, %462, %cst_276 [1] : vector<48x48xf32> to vector<48xf32>
    %464 = vector.shape_cast %463 : vector<48xf32> to vector<48x1xf32>
    %465 = vector.broadcast %464 : vector<48x1xf32> to vector<48x48xf32>
    %466 = arith.subf %462, %465 : vector<48x48xf32>
    %467 = math.exp %466 : vector<48x48xf32>
    %cst_277 = arith.constant dense<0.000000e+00> : vector<48xf32>
    %468 = vector.multi_reduction <add>, %467, %cst_277 [1] : vector<48x48xf32> to vector<48xf32>
    %469 = vector.shape_cast %468 : vector<48xf32> to vector<48x1xf32>
    %470 = tpu.reciprocal %469 {approx = true} : vector<48x1xf32> -> vector<48x1xf32>
    %471 = vector.broadcast %470 : vector<48x1xf32> to vector<48x48xf32>
    %472 = arith.mulf %467, %471 : vector<48x48xf32>
    %473 = arith.truncf %472 : vector<48x48xf32> to vector<48x48xbf16>
    %474 = arith.truncf %456 : vector<48x8xf32> to vector<48x8xbf16>
    %cst_278 = arith.constant dense<0.000000e+00> : vector<48x8xf32>
    %475 = tpu.matmul %473, %474, %cst_278 {dimension_numbers = #tpu.dot_dimension_numbers<[1], [0], [0], [1], [0, 0, 1, 1], [], []>} : vector<48x48xbf16>, vector<48x8xbf16>, vector<48x8xf32> -> vector<48x8xf32>
    %c3_279 = arith.constant 3 : index
    %c0_280 = arith.constant 0 : index
    %c0_281 = arith.constant 0 : index
    %476 = vector.load %arg27[%c3_279, %c0_280, %c0_281] : memref<4x8x32xbf16, #tpu.memory_space<vmem>>, vector<1x8x32xbf16>
    %477 = vector.shape_cast %476 : vector<1x8x32xbf16> to vector<8x32xbf16>
    %478 = arith.truncf %475 : vector<48x8xf32> to vector<48x8xbf16>
    %cst_282 = arith.constant dense<0.000000e+00> : vector<48x32xf32>
    %479 = tpu.matmul %478, %477, %cst_282 {dimension_numbers = #tpu.dot_dimension_numbers<[1], [0], [0], [1], [0, 0, 1, 1], [], []>} : vector<48x8xbf16>, vector<8x32xbf16>, vector<48x32xf32> -> vector<48x32xf32>
    %480 = arith.addf %435, %479 : vector<48x32xf32>
    %c0_283 = arith.constant 0 : index
    %c0_284 = arith.constant 0 : index
    %481 = vector.load %arg28[%c0_283, %c0_284] : memref<1x32xf32, #tpu.memory_space<vmem>>, vector<1x32xf32>
    %482 = vector.shape_cast %481 : vector<1x32xf32> to vector<32xf32>
    %483 = vector.shape_cast %482 : vector<32xf32> to vector<1x32xf32>
    %484 = vector.broadcast %483 : vector<1x32xf32> to vector<48x32xf32>
    %485 = arith.addf %480, %484 : vector<48x32xf32>
    %486 = arith.addf %298, %485 : vector<48x32xf32>
    %c0_285 = arith.constant 0 : index
    %c0_286 = arith.constant 0 : index
    %487 = vector.load %arg29[%c0_285, %c0_286] : memref<1x32xf32, #tpu.memory_space<vmem>>, vector<1x32xf32>
    %488 = vector.shape_cast %487 : vector<1x32xf32> to vector<32xf32>
    %c0_287 = arith.constant 0 : index
    %c0_288 = arith.constant 0 : index
    %489 = vector.load %arg30[%c0_287, %c0_288] : memref<1x32xf32, #tpu.memory_space<vmem>>, vector<1x32xf32>
    %490 = vector.shape_cast %489 : vector<1x32xf32> to vector<32xf32>
    %cst_289 = arith.constant dense<0.000000e+00> : vector<48xf32>
    %491 = vector.multi_reduction <add>, %486, %cst_289 [1] : vector<48x32xf32> to vector<48xf32>
    %492 = vector.shape_cast %491 : vector<48xf32> to vector<48x1xf32>
    %cst_290 = arith.constant 3.200000e+01 : f32
    %493 = vector.broadcast %cst_290 : f32 to vector<48x1xf32>
    %494 = arith.divf %492, %493 : vector<48x1xf32>
    %495 = vector.broadcast %494 : vector<48x1xf32> to vector<48x32xf32>
    %496 = arith.subf %486, %495 : vector<48x32xf32>
    %497 = arith.mulf %496, %496 : vector<48x32xf32>
    %cst_291 = arith.constant dense<0.000000e+00> : vector<48xf32>
    %498 = vector.multi_reduction <add>, %497, %cst_291 [1] : vector<48x32xf32> to vector<48xf32>
    %499 = vector.shape_cast %498 : vector<48xf32> to vector<48x1xf32>
    %cst_292 = arith.constant 3.200000e+01 : f32
    %500 = vector.broadcast %cst_292 : f32 to vector<48x1xf32>
    %501 = arith.divf %499, %500 : vector<48x1xf32>
    %502 = vector.broadcast %494 : vector<48x1xf32> to vector<48x32xf32>
    %503 = arith.subf %486, %502 : vector<48x32xf32>
    %cst_293 = arith.constant 9.99999974E-6 : f32
    %504 = vector.broadcast %cst_293 : f32 to vector<48x1xf32>
    %505 = arith.addf %501, %504 : vector<48x1xf32>
    %506 = math.rsqrt %505 : vector<48x1xf32>
    %507 = vector.broadcast %506 : vector<48x1xf32> to vector<48x32xf32>
    %508 = arith.mulf %503, %507 : vector<48x32xf32>
    %509 = vector.shape_cast %488 : vector<32xf32> to vector<1x32xf32>
    %510 = vector.broadcast %509 : vector<1x32xf32> to vector<48x32xf32>
    %511 = arith.mulf %508, %510 : vector<48x32xf32>
    %512 = vector.shape_cast %490 : vector<32xf32> to vector<1x32xf32>
    %513 = vector.broadcast %512 : vector<1x32xf32> to vector<48x32xf32>
    %514 = arith.addf %511, %513 : vector<48x32xf32>
    %c0_294 = arith.constant 0 : index
    %c0_295 = arith.constant 0 : index
    %515 = vector.load %arg31[%c0_294, %c0_295] : memref<32x64xbf16, #tpu.memory_space<vmem>>, vector<32x64xbf16>
    %516 = arith.truncf %514 : vector<48x32xf32> to vector<48x32xbf16>
    %cst_296 = arith.constant dense<0.000000e+00> : vector<48x64xf32>
    %517 = tpu.matmul %516, %515, %cst_296 {dimension_numbers = #tpu.dot_dimension_numbers<[1], [0], [0], [1], [0, 0, 1, 1], [], []>} : vector<48x32xbf16>, vector<32x64xbf16>, vector<48x64xf32> -> vector<48x64xf32>
    %c0_297 = arith.constant 0 : index
    %c0_298 = arith.constant 0 : index
    %518 = vector.load %arg32[%c0_297, %c0_298] : memref<1x64xf32, #tpu.memory_space<vmem>>, vector<1x64xf32>
    %519 = vector.shape_cast %518 : vector<1x64xf32> to vector<64xf32>
    %520 = vector.shape_cast %519 : vector<64xf32> to vector<1x64xf32>
    %521 = vector.broadcast %520 : vector<1x64xf32> to vector<48x64xf32>
    %522 = arith.addf %517, %521 : vector<48x64xf32>
    %cst_299 = arith.constant 5.000000e-01 : f32
    %523 = vector.broadcast %cst_299 : f32 to vector<48x64xf32>
    %524 = arith.mulf %523, %522 : vector<48x64xf32>
    %cst_300 = arith.constant 0.707106769 : f32
    %525 = vector.broadcast %cst_300 : f32 to vector<48x64xf32>
    %526 = arith.mulf %522, %525 : vector<48x64xf32>
    %527 = math.erf %526 : vector<48x64xf32>
    %cst_301 = arith.constant 1.000000e+00 : f32
    %528 = vector.broadcast %cst_301 : f32 to vector<48x64xf32>
    %529 = arith.addf %528, %527 : vector<48x64xf32>
    %530 = arith.mulf %524, %529 : vector<48x64xf32>
    %c0_302 = arith.constant 0 : index
    %c0_303 = arith.constant 0 : index
    %531 = vector.load %arg33[%c0_302, %c0_303] : memref<64x32xbf16, #tpu.memory_space<vmem>>, vector<64x32xbf16>
    %532 = arith.truncf %530 : vector<48x64xf32> to vector<48x64xbf16>
    %cst_304 = arith.constant dense<0.000000e+00> : vector<48x32xf32>
    %533 = tpu.matmul %532, %531, %cst_304 {dimension_numbers = #tpu.dot_dimension_numbers<[1], [0], [0], [1], [0, 0, 1, 1], [], []>} : vector<48x64xbf16>, vector<64x32xbf16>, vector<48x32xf32> -> vector<48x32xf32>
    %c0_305 = arith.constant 0 : index
    %c0_306 = arith.constant 0 : index
    %534 = vector.load %arg34[%c0_305, %c0_306] : memref<1x32xf32, #tpu.memory_space<vmem>>, vector<1x32xf32>
    %535 = vector.shape_cast %534 : vector<1x32xf32> to vector<32xf32>
    %536 = vector.shape_cast %535 : vector<32xf32> to vector<1x32xf32>
    %537 = vector.broadcast %536 : vector<1x32xf32> to vector<48x32xf32>
    %538 = arith.addf %533, %537 : vector<48x32xf32>
    %539 = arith.addf %514, %538 : vector<48x32xf32>
    %c0_307 = arith.constant 0 : index
    %c0_308 = arith.constant 0 : index
    %540 = vector.load %arg2[%c0_307, %c0_308] : memref<8x48xf32, #tpu.memory_space<vmem>>, vector<8x48xf32>
    %cst_309 = arith.constant dense<0.000000e+00> : vector<8x32xf32>
    %541 = tpu.matmul %540, %539, %cst_309 {dimension_numbers = #tpu.dot_dimension_numbers<[1], [0], [0], [1], [0, 0, 1, 1], [], []>} : vector<8x48xf32>, vector<48x32xf32>, vector<8x32xf32> -> vector<8x32xf32>
    %c0_310 = arith.constant 0 : index
    %c0_311 = arith.constant 0 : index
    %542 = vector.load %arg35[%c0_310, %c0_311] : memref<32x4xbf16, #tpu.memory_space<vmem>>, vector<32x4xbf16>
    %543 = arith.truncf %541 : vector<8x32xf32> to vector<8x32xbf16>
    %cst_312 = arith.constant dense<0.000000e+00> : vector<8x4xf32>
    %544 = tpu.matmul %543, %542, %cst_312 {dimension_numbers = #tpu.dot_dimension_numbers<[1], [0], [0], [1], [0, 0, 1, 1], [], []>} : vector<8x32xbf16>, vector<32x4xbf16>, vector<8x4xf32> -> vector<8x4xf32>
    %c0_313 = arith.constant 0 : index
    %c0_314 = arith.constant 0 : index
    %545 = vector.load %arg36[%c0_313, %c0_314] : memref<1x4xf32, #tpu.memory_space<vmem>>, vector<1x4xf32>
    %546 = vector.shape_cast %545 : vector<1x4xf32> to vector<4xf32>
    %547 = vector.shape_cast %546 : vector<4xf32> to vector<1x4xf32>
    %548 = vector.broadcast %547 : vector<1x4xf32> to vector<8x4xf32>
    %549 = arith.addf %544, %548 : vector<8x4xf32>
    %c0_315 = arith.constant 0 : index
    %c0_316 = arith.constant 0 : index
    %550 = vector.load %arg37[%c0_315, %c0_316] : memref<8x4xf32, #tpu.memory_space<vmem>>, vector<8x4xf32>
    tpu.vector_store %arg37[%c0_315, %c0_316], %549 {strides = array<i32>} : memref<8x4xf32, #tpu.memory_space<vmem>>, vector<8x4xf32>,
    return
  }
}

</mosaic_0001>

<llo_original>
// kernel: example_transformer_forward.1
$region0: #{example_transformer_forward.1}
  #allocation0 [shape = 'u32[]', space=smem, size = 0x4, offset = 0x4, fixed_abs, tag = 'smem constant byte address 0x4 - core index']
  #allocation1 [shape = 'u32[144,128]{1,0:T(1,128)}', space=vmem, size = 0x12000, scoped, tag = 'internal scratch']
  %s0 = inlined_call_operand.smem [shape: u32[38], index: -1, kind: input, shape index: {}]
  %s1 = sld [smem:[%s0]]
  %s2 = scalar_lea.smem %s0, 1
  %s3 = sld [smem:[%s2]]
  %s4 = scalar_lea.smem %s0, 2
  %s5 = sld [smem:[%s4]]
  %s6 = scalar_lea.smem %s0, 3
  %s7 = sld [smem:[%s6]]
  %s8 = scalar_lea.smem %s0, 4
  %s9 = sld [smem:[%s8]]
  %s10 = scalar_lea.smem %s0, 5
  %s11 = sld [smem:[%s10]]
  %s12 = scalar_lea.smem %s0, 6
  %s13 = sld [smem:[%s12]]
  %s14 = scalar_lea.smem %s0, 7
  %s15 = sld [smem:[%s14]]
  %s16 = scalar_lea.smem %s0, 8
  %s17 = sld [smem:[%s16]]
  %s18 = scalar_lea.smem %s0, 9
  %s19 = sld [smem:[%s18]]
  %s20 = scalar_lea.smem %s0, 10
  %s21 = sld [smem:[%s20]]
  %s22 = scalar_lea.smem %s0, 11
  %s23 = sld [smem:[%s22]]
  %s24 = scalar_lea.smem %s0, 12
  %s25 = sld [smem:[%s24]]
  %s26 = scalar_lea.smem %s0, 13
  %s27 = sld [smem:[%s26]]
  %s28 = scalar_lea.smem %s0, 14
  %s29 = sld [smem:[%s28]]
  %s30 = scalar_lea.smem %s0, 15
  %s31 = sld [smem:[%s30]]
  %s32 = scalar_lea.smem %s0, 16
  %s33 = sld [smem:[%s32]]
  %s34 = scalar_lea.smem %s0, 17
  %s35 = sld [smem:[%s34]]
  %s36 = scalar_lea.smem %s0, 18
  %s37 = sld [smem:[%s36]]
  %s38 = scalar_lea.smem %s0, 19
  %s39 = sld [smem:[%s38]]
  %s40 = scalar_lea.smem %s0, 20
  %s41 = sld [smem:[%s40]]
  %s42 = scalar_lea.smem %s0, 21
  %s43 = sld [smem:[%s42]]
  %s44 = scalar_lea.smem %s0, 22
  %s45 = sld [smem:[%s44]]
  %s46 = scalar_lea.smem %s0, 23
  %s47 = sld [smem:[%s46]]
  %s48 = scalar_lea.smem %s0, 24
  %s49 = sld [smem:[%s48]]
  %s50 = scalar_lea.smem %s0, 25
  %s51 = sld [smem:[%s50]]
  %s52 = scalar_lea.smem %s0, 26
  %s53 = sld [smem:[%s52]]
  %s54 = scalar_lea.smem %s0, 27
  %s55 = sld [smem:[%s54]]
  %s56 = scalar_lea.smem %s0, 28
  %s57 = sld [smem:[%s56]]
  %s58 = scalar_lea.smem %s0, 29
  %s59 = sld [smem:[%s58]]
  %s60 = scalar_lea.smem %s0, 30
  %s61 = sld [smem:[%s60]]
  %s62 = scalar_lea.smem %s0, 31
  %s63 = sld [smem:[%s62]]
  %s64 = scalar_lea.smem %s0, 32
  %s65 = sld [smem:[%s64]]
  %s66 = scalar_lea.smem %s0, 33
  %s67 = sld [smem:[%s66]]
  %s68 = scalar_lea.smem %s0, 34
  %s69 = sld [smem:[%s68]]
  %s70 = scalar_lea.smem %s0, 35
  %s71 = sld [smem:[%s70]]
  %s72 = scalar_lea.smem %s0, 36
  %s73 = sld [smem:[%s72]]
  %s74 = scalar_lea.smem %s0, 37
  %s75 = sld [smem:[%s74]]
  %s76 = sld [smem:[#allocation0]]
  $region158: #{example_transformer_forward.1} parent=0
    _
  %s78 = ssub.s32 1, %s76
  %s79 = scalar_select 0, %s78, %s76
  // Predicated region
  $region2: #{example_transformer_forward.1} parent=0 // pred_check
    _
  $region3: #{example_transformer_forward.1} parent=0 // pred_check_branch
    %81 = sbr.rel (0) target = $region5
  $region4: #{example_transformer_forward.1} parent=0 // pred_region
    _
  $region5: #{example_transformer_forward.1} parent=0 // pred_fallthru
    _
  // Predicated region
  $region6: #{example_transformer_forward.1} parent=0 // pred_check
    _
  $region7: #{example_transformer_forward.1} parent=0 // pred_check_branch
    %83 = sbr.rel (0) target = $region9
  $region8: #{example_transformer_forward.1} parent=0 // pred_region
    _
  $region9: #{example_transformer_forward.1} parent=0 // pred_fallthru
    _
  // Predicated region
  $region10: #{example_transformer_forward.1} parent=0 // pred_check
    _
  $region11: #{example_transformer_forward.1} parent=0 // pred_check_branch
    %85 = sbr.rel (0) target = $region13
  $region12: #{example_transformer_forward.1} parent=0 // pred_region
    _
  $region13: #{example_transformer_forward.1} parent=0 // pred_fallthru
    _
  // Predicated region
  $region14: #{example_transformer_forward.1} parent=0 // pred_check
    _
  $region15: #{example_transformer_forward.1} parent=0 // pred_check_branch
    %87 = sbr.rel (0) target = $region17
  $region16: #{example_transformer_forward.1} parent=0 // pred_region
    _
  $region17: #{example_transformer_forward.1} parent=0 // pred_fallthru
    _
  // Predicated region
  $region18: #{example_transformer_forward.1} parent=0 // pred_check
    _
  $region19: #{example_transformer_forward.1} parent=0 // pred_check_branch
    %89 = sbr.rel (0) target = $region21
  $region20: #{example_transformer_forward.1} parent=0 // pred_region
    _
  $region21: #{example_transformer_forward.1} parent=0 // pred_fallthru
    _
  // Predicated region
  $region22: #{example_transformer_forward.1} parent=0 // pred_check
    _
  $region23: #{example_transformer_forward.1} parent=0 // pred_check_branch
    %91 = sbr.rel (0) target = $region25
  $region24: #{example_transformer_forward.1} parent=0 // pred_region
    _
  $region25: #{example_transformer_forward.1} parent=0 // pred_fallthru
    _
  // Predicated region
  $region26: #{example_transformer_forward.1} parent=0 // pred_check
    _
  $region27: #{example_transformer_forward.1} parent=0 // pred_check_branch
    %93 = sbr.rel (0) target = $region29
  $region28: #{example_transformer_forward.1} parent=0 // pred_region
    _
  $region29: #{example_transformer_forward.1} parent=0 // pred_fallthru
    _
  // Predicated region
  $region30: #{example_transformer_forward.1} parent=0 // pred_check
    _
  $region31: #{example_transformer_forward.1} parent=0 // pred_check_branch
    %95 = sbr.rel (0) target = $region33
  $region32: #{example_transformer_forward.1} parent=0 // pred_region
    _
  $region33: #{example_transformer_forward.1} parent=0 // pred_fallthru
    _
  // Predicated region
  $region34: #{example_transformer_forward.1} parent=0 // pred_check
    _
  $region35: #{example_transformer_forward.1} parent=0 // pred_check_branch
    %97 = sbr.rel (0) target = $region37
  $region36: #{example_transformer_forward.1} parent=0 // pred_region
    _
  $region37: #{example_transformer_forward.1} parent=0 // pred_fallthru
    _
  // Predicated region
  $region38: #{example_transformer_forward.1} parent=0 // pred_check
    _
  $region39: #{example_transformer_forward.1} parent=0 // pred_check_branch
    %99 = sbr.rel (0) target = $region41
  $region40: #{example_transformer_forward.1} parent=0 // pred_region
    _
  $region41: #{example_transformer_forward.1} parent=0 // pred_fallthru
    _
  // Predicated region
  $region42: #{example_transformer_forward.1} parent=0 // pred_check
    _
  $region43: #{example_transformer_forward.1} parent=0 // pred_check_branch
    %101 = sbr.rel (0) target = $region45
  $region44: #{example_transformer_forward.1} parent=0 // pred_region
    _
  $region45: #{example_transformer_forward.1} parent=0 // pred_fallthru
    _
  // Predicated region
  $region46: #{example_transformer_forward.1} parent=0 // pred_check
    _
  $region47: #{example_transformer_forward.1} parent=0 // pred_check_branch
    %103 = sbr.rel (0) target = $region49
  $region48: #{example_transformer_forward.1} parent=0 // pred_region
    _
  $region49: #{example_transformer_forward.1} parent=0 // pred_fallthru
    _
  // Predicated region
  $region50: #{example_transformer_forward.1} parent=0 // pred_check
    _
  $region51: #{example_transformer_forward.1} parent=0 // pred_check_branch
    %105 = sbr.rel (0) target = $region53
  $region52: #{example_transformer_forward.1} parent=0 // pred_region
    _
  $region53: #{example_transformer_forward.1} parent=0 // pred_fallthru
    _
  // Predicated region
  $region54: #{example_transformer_forward.1} parent=0 // pred_check
    _
  $region55: #{example_transformer_forward.1} parent=0 // pred_check_branch
    %107 = sbr.rel (0) target = $region57
  $region56: #{example_transformer_forward.1} parent=0 // pred_region
    _
  $region57: #{example_transformer_forward.1} parent=0 // pred_fallthru
    _
  // Predicated region
  $region58: #{example_transformer_forward.1} parent=0 // pred_check
    _
  $region59: #{example_transformer_forward.1} parent=0 // pred_check_branch
    %109 = sbr.rel (0) target = $region61
  $region60: #{example_transformer_forward.1} parent=0 // pred_region
    _
  $region61: #{example_transformer_forward.1} parent=0 // pred_fallthru
    _
  // Predicated region
  $region62: #{example_transformer_forward.1} parent=0 // pred_check
    _
  $region63: #{example_transformer_forward.1} parent=0 // pred_check_branch
    %111 = sbr.rel (0) target = $region65
  $region64: #{example_transformer_forward.1} parent=0 // pred_region
    _
  $region65: #{example_transformer_forward.1} parent=0 // pred_fallthru
    _
  // Predicated region
  $region66: #{example_transformer_forward.1} parent=0 // pred_check
    _
  $region67: #{example_transformer_forward.1} parent=0 // pred_check_branch
    %113 = sbr.rel (0) target = $region69
  $region68: #{example_transformer_forward.1} parent=0 // pred_region
    _
  $region69: #{example_transformer_forward.1} parent=0 // pred_fallthru
    _
  // Predicated region
  $region70: #{example_transformer_forward.1} parent=0 // pred_check
    _
  $region71: #{example_transformer_forward.1} parent=0 // pred_check_branch
    %115 = sbr.rel (0) target = $region73
  $region72: #{example_transformer_forward.1} parent=0 // pred_region
    _
  $region73: #{example_transformer_forward.1} parent=0 // pred_fallthru
    _
  // Predicated region
  $region74: #{example_transformer_forward.1} parent=0 // pred_check
    _
  $region75: #{example_transformer_forward.1} parent=0 // pred_check_branch
    %117 = sbr.rel (0) target = $region77
  $region76: #{example_transformer_forward.1} parent=0 // pred_region
    _
  $region77: #{example_transformer_forward.1} parent=0 // pred_fallthru
    _
  // Predicated region
  $region78: #{example_transformer_forward.1} parent=0 // pred_check
    _
  $region79: #{example_transformer_forward.1} parent=0 // pred_check_branch
    %119 = sbr.rel (0) target = $region81
  $region80: #{example_transformer_forward.1} parent=0 // pred_region
    _
  $region81: #{example_transformer_forward.1} parent=0 // pred_fallthru
    _
  // Predicated region
  $region82: #{example_transformer_forward.1} parent=0 // pred_check
    _
  $region83: #{example_transformer_forward.1} parent=0 // pred_check_branch
    %121 = sbr.rel (0) target = $region85
  $region84: #{example_transformer_forward.1} parent=0 // pred_region
    _
  $region85: #{example_transformer_forward.1} parent=0 // pred_fallthru
    _
  // Predicated region
  $region86: #{example_transformer_forward.1} parent=0 // pred_check
    _
  $region87: #{example_transformer_forward.1} parent=0 // pred_check_branch
    %123 = sbr.rel (0) target = $region89
  $region88: #{example_transformer_forward.1} parent=0 // pred_region
    _
  $region89: #{example_transformer_forward.1} parent=0 // pred_fallthru
    _
  // Predicated region
  $region90: #{example_transformer_forward.1} parent=0 // pred_check
    _
  $region91: #{example_transformer_forward.1} parent=0 // pred_check_branch
    %125 = sbr.rel (0) target = $region93
  $region92: #{example_transformer_forward.1} parent=0 // pred_region
    _
  $region93: #{example_transformer_forward.1} parent=0 // pred_fallthru
    _
  // Predicated region
  $region94: #{example_transformer_forward.1} parent=0 // pred_check
    _
  $region95: #{example_transformer_forward.1} parent=0 // pred_check_branch
    %127 = sbr.rel (0) target = $region97
  $region96: #{example_transformer_forward.1} parent=0 // pred_region
    _
  $region97: #{example_transformer_forward.1} parent=0 // pred_fallthru
    _
  // Predicated region
  $region98: #{example_transformer_forward.1} parent=0 // pred_check
    _
  $region99: #{example_transformer_forward.1} parent=0 // pred_check_branch
    %129 = sbr.rel (0) target = $region101
  $region100: #{example_transformer_forward.1} parent=0 // pred_region
    _
  $region101: #{example_transformer_forward.1} parent=0 // pred_fallthru
    _
  // Predicated region
  $region102: #{example_transformer_forward.1} parent=0 // pred_check
    _
  $region103: #{example_transformer_forward.1} parent=0 // pred_check_branch
    %131 = sbr.rel (0) target = $region105
  $region104: #{example_transformer_forward.1} parent=0 // pred_region
    _
  $region105: #{example_transformer_forward.1} parent=0 // pred_fallthru
    _
  // Predicated region
  $region106: #{example_transformer_forward.1} parent=0 // pred_check
    _
  $region107: #{example_transformer_forward.1} parent=0 // pred_check_branch
    %133 = sbr.rel (0) target = $region109
  $region108: #{example_transformer_forward.1} parent=0 // pred_region
    _
  $region109: #{example_transformer_forward.1} parent=0 // pred_fallthru
    _
  // Predicated region
  $region110: #{example_transformer_forward.1} parent=0 // pred_check
    _
  $region111: #{example_transformer_forward.1} parent=0 // pred_check_branch
    %135 = sbr.rel (0) target = $region113
  $region112: #{example_transformer_forward.1} parent=0 // pred_region
    _
  $region113: #{example_transformer_forward.1} parent=0 // pred_fallthru
    _
  // Predicated region
  $region114: #{example_transformer_forward.1} parent=0 // pred_check
    _
  $region115: #{example_transformer_forward.1} parent=0 // pred_check_branch
    %137 = sbr.rel (0) target = $region117
  $region116: #{example_transformer_forward.1} parent=0 // pred_region
    _
  $region117: #{example_transformer_forward.1} parent=0 // pred_fallthru
    _
  // Predicated region
  $region118: #{example_transformer_forward.1} parent=0 // pred_check
    _
  $region119: #{example_transformer_forward.1} parent=0 // pred_check_branch
    %139 = sbr.rel (0) target = $region121
  $region120: #{example_transformer_forward.1} parent=0 // pred_region
    _
  $region121: #{example_transformer_forward.1} parent=0 // pred_fallthru
    _
  // Predicated region
  $region122: #{example_transformer_forward.1} parent=0 // pred_check
    _
  $region123: #{example_transformer_forward.1} parent=0 // pred_check_branch
    %141 = sbr.rel (0) target = $region125
  $region124: #{example_transformer_forward.1} parent=0 // pred_region
    _
  $region125: #{example_transformer_forward.1} parent=0 // pred_fallthru
    _
  // Predicated region
  $region126: #{example_transformer_forward.1} parent=0 // pred_check
    _
  $region127: #{example_transformer_forward.1} parent=0 // pred_check_branch
    %143 = sbr.rel (0) target = $region129
  $region128: #{example_transformer_forward.1} parent=0 // pred_region
    _
  $region129: #{example_transformer_forward.1} parent=0 // pred_fallthru
    _
  // Predicated region
  $region130: #{example_transformer_forward.1} parent=0 // pred_check
    _
  $region131: #{example_transformer_forward.1} parent=0 // pred_check_branch
    %145 = sbr.rel (0) target = $region133
  $region132: #{example_transformer_forward.1} parent=0 // pred_region
    _
  $region133: #{example_transformer_forward.1} parent=0 // pred_fallthru
    _
  // Predicated region
  $region134: #{example_transformer_forward.1} parent=0 // pred_check
    _
  $region135: #{example_transformer_forward.1} parent=0 // pred_check_branch
    %147 = sbr.rel (0) target = $region137
  $region136: #{example_transformer_forward.1} parent=0 // pred_region
    _
  $region137: #{example_transformer_forward.1} parent=0 // pred_fallthru
    _
  // Predicated region
  $region138: #{example_transformer_forward.1} parent=0 // pred_check
    _
  $region139: #{example_transformer_forward.1} parent=0 // pred_check_branch
    %149 = sbr.rel (0) target = $region141
  $region140: #{example_transformer_forward.1} parent=0 // pred_region
    _
  $region141: #{example_transformer_forward.1} parent=0 // pred_fallthru
    _
  // Predicated region
  $region142: #{example_transformer_forward.1} parent=0 // pred_check
    _
  $region143: #{example_transformer_forward.1} parent=0 // pred_check_branch
    %151 = sbr.rel (0) target = $region145
  $region144: #{example_transformer_forward.1} parent=0 // pred_region
    _
  $region145: #{example_transformer_forward.1} parent=0 // pred_fallthru
    _
  // Predicated region
  $region146: #{example_transformer_forward.1} parent=0 // pred_check
    _
  $region147: #{example_transformer_forward.1} parent=0 // pred_check_branch
    %153 = sbr.rel (0) target = $region149
  $region148: #{example_transformer_forward.1} parent=0 // pred_region
    _
  $region149: #{example_transformer_forward.1} parent=0 // pred_fallthru
    _
  %v155 = vld [vmem:[%s1] sm:$0xff]
  %v156 = vld [vmem:[%s1 + $0x8] sm:$0xff]
  %v157 = vld [vmem:[%s1 + $0x10] sm:$0xff]
  %v158 = vld [vmem:[%s1 + $0x18] sm:$0xff]
  %v159 = vld [vmem:[%s1 + $0x20] sm:$0xff]
  %v160 = vld [vmem:[%s1 + $0x28] sm:$0xff]
  %v161 = vld [vmem:[%s3] sm:$0xff]
  %v162 = vld [vmem:[%s3 + $0x8] sm:$0xff]
  %v163 = vld [vmem:[%s3 + $0x10] sm:$0xff]
  %v164 = vld [vmem:[%s3 + $0x18] sm:$0xff]
  %v165 = vld [vmem:[%s3 + $0x20] sm:$0xff]
  %v166 = vld [vmem:[%s3 + $0x28] sm:$0xff]
  %v167 = vld [vmem:[%s7] sm:$0x1]
  %v168 = vld [vmem:[%s9] sm:$0x1]
  %vm169 = vcmask 261120
  %v170 = vsel %vm169, %v155, 0.0
  %171 = vadd.xlane.f32.xlu0 %v170
  %v172 = vpop.xlane.xlu0 %171
  %v173 = vsel %vm169, %v156, 0.0
  %174 = vadd.xlane.f32.xlu0 %v173
  %v175 = vpop.xlane.xlu0 %174
  %v176 = vsel %vm169, %v157, 0.0
  %177 = vadd.xlane.f32.xlu0 %v176
  %v178 = vpop.xlane.xlu0 %177
  %v179 = vsel %vm169, %v158, 0.0
  %180 = vadd.xlane.f32.xlu0 %v179
  %v181 = vpop.xlane.xlu0 %180
  %v182 = vsel %vm169, %v159, 0.0
  %183 = vadd.xlane.f32.xlu0 %v182
  %v184 = vpop.xlane.xlu0 %183
  %v185 = vsel %vm169, %v160, 0.0
  %186 = vadd.xlane.f32.xlu0 %v185
  %v187 = vpop.xlane.xlu0 %186
  %v188 = vrcp.pop 32.0
  %v189 = vmul.f32 %v172, %v188
  %v190 = vmul.f32 %v175, %v188
  %v191 = vmul.f32 %v178, %v188
  %v192 = vmul.f32 %v181, %v188
  %v193 = vmul.f32 %v184, %v188
  %v194 = vmul.f32 %v187, %v188
  %v195 = vsub.f32 %v155, %v189
  %v196 = vsub.f32 %v156, %v190
  %v197 = vsub.f32 %v157, %v191
  %v198 = vsub.f32 %v158, %v192
  %v199 = vsub.f32 %v159, %v193
  %v200 = vsub.f32 %v160, %v194
  %v201 = vmul.f32 %v195, %v195
  %v202 = vmul.f32 %v196, %v196
  %v203 = vmul.f32 %v197, %v197
  %v204 = vmul.f32 %v198, %v198
  %v205 = vmul.f32 %v199, %v199
  %v206 = vmul.f32 %v200, %v200
  %v207 = vsel %vm169, %v201, 0.0
  %208 = vadd.xlane.f32.xlu0 %v207
  %v209 = vpop.xlane.xlu0 %208
  %v210 = vsel %vm169, %v202, 0.0
  %211 = vadd.xlane.f32.xlu0 %v210
  %v212 = vpop.xlane.xlu0 %211
  %v213 = vsel %vm169, %v203, 0.0
  %214 = vadd.xlane.f32.xlu0 %v213
  %v215 = vpop.xlane.xlu0 %214
  %v216 = vsel %vm169, %v204, 0.0
  %217 = vadd.xlane.f32.xlu0 %v216
  %v218 = vpop.xlane.xlu0 %217
  %v219 = vsel %vm169, %v205, 0.0
  %220 = vadd.xlane.f32.xlu0 %v219
  %v221 = vpop.xlane.xlu0 %220
  %v222 = vsel %vm169, %v206, 0.0
  %223 = vadd.xlane.f32.xlu0 %v222
  %v224 = vpop.xlane.xlu0 %223
  %v225 = vmul.f32 %v209, %v188
  %v226 = vmul.f32 %v212, %v188
  %v227 = vmul.f32 %v215, %v188
  %v228 = vmul.f32 %v218, %v188
  %v229 = vmul.f32 %v221, %v188
  %v230 = vmul.f32 %v224, %v188
  %v231 = vadd.f32 %v225, 1e-05
  %v232 = vadd.f32 %v226, 1e-05
  %v233 = vadd.f32 %v227, 1e-05
  %v234 = vadd.f32 %v228, 1e-05
  %v235 = vadd.f32 %v229, 1e-05
  %v236 = vadd.f32 %v230, 1e-05
  %v237 = vrsqrt.pop %v231
  %v238 = vrsqrt.pop %v232
  %v239 = vrsqrt.pop %v233
  %v240 = vrsqrt.pop %v234
  %v241 = vrsqrt.pop %v235
  %v242 = vrsqrt.pop %v236
  %v243 = vmul.f32 %v195, %v237
  %v244 = vmul.f32 %v196, %v238
  %v245 = vmul.f32 %v197, %v239
  %v246 = vmul.f32 %v198, %v240
  %v247 = vmul.f32 %v199, %v241
  %v248 = vmul.f32 %v200, %v242
  %v250 = vlaneseq
  %v251 = vshrl.u32 %v250, 7
  %v252 = vsub.s32 0, %v251
  %v253 = vrot.slane %v167, %v252
  %v255 = vmul.f32 %v243, %v253
  %v256 = vmul.f32 %v244, %v253
  %v257 = vmul.f32 %v245, %v253
  %v258 = vmul.f32 %v246, %v253
  %v259 = vmul.f32 %v247, %v253
  %v260 = vmul.f32 %v248, %v253
  %v262 = vlaneseq
  %v263 = vshrl.u32 %v262, 7
  %v264 = vsub.s32 0, %v263
  %v265 = vrot.slane %v168, %v264
  %v267 = vadd.f32 %v255, %v265
  %v268 = vadd.f32 %v256, %v265
  %v269 = vadd.f32 %v257, %v265
  %v270 = vadd.f32 %v258, %v265
  %v271 = vadd.f32 %v259, %v265
  %v272 = vadd.f32 %v260, %v265
  %v273 = vpack.c.bf16 %v268, %v267
  %v274 = vpack.c.bf16 %v270, %v269
  %v275 = vpack.c.bf16 %v272, %v271
  %v276 = vld [vmem:[%s11] sm:$0xf]
  %v277 = vld [vmem:[%s11 + $0x4] sm:$0xf]
  %v278 = vld [vmem:[%s11 + $0x8] sm:$0xf]
  %v279 = vld [vmem:[%s11 + $0xc] sm:$0xf]
  %v280 = vld [vmem:[%s13] sm:$0x1]
  %v282 = vlaneseq
  %v283 = vshrl.u32 %v282, 7
  %v284 = vsub.s32 0, %v283
  %v285 = vrot.slane %v280, %v284
  %v291 = vunpack.c.l.b16 %v276
  %v292 = vunpack.c.l.b16 %v277
  %v293 = vunpack.c.l.b16 %v278
  %v294 = vunpack.c.l.b16 %v279
  %v295 = vpack.c.b16 %v292, %v291
  %v296 = vpack.c.b16 %v294, %v293
  %v300 = vsel %vm169, %v273, 0
  %v303 = vsel %vm169, %v274, 0
  %v306 = vsel %vm169, %v275, 0
  %308 = vmatprep.subr.bf16.mxu0 0
  %309 = vmatpush1.bf16.msra.mxu0 %v295
  %310 = vmatprep.subr.bf16.mxu0 0
  %311 = vmatpush1.bf16.msra.mxu0 %v296
  %312 = vmatprep.subr.bf16.mxu0 0
  %313 = vmatpush1.bf16.msra.mxu0 0
  %314 = vmatprep.subr.bf16.mxu0 0
  %315 = vmatpush1.bf16.msra.mxu0 0
  %316 = vmatprep.subr.bf16.mxu0 0
  %317 = vmatpush1.bf16.msra.mxu0 0
  %318 = vmatprep.subr.bf16.mxu0 0
  %319 = vmatpush1.bf16.msra.mxu0 0
  %320 = vmatprep.subr.bf16.mxu0 0
  %321 = vmatpush1.bf16.msra.mxu0 0
  %322 = vmatprep.subr.bf16.mxu0 0
  %323 = vmatpush1.bf16.msra.mxu0 0
  %324 = vmatprep.subr.bf16.mxu0 0
  %325 = vmatpush1.bf16.msra.mxu0 0
  %326 = vmatprep.subr.bf16.mxu0 0
  %327 = vmatpush1.bf16.msra.mxu0 0
  %328 = vmatprep.subr.bf16.mxu0 0
  %329 = vmatpush1.bf16.msra.mxu0 0
  %330 = vmatprep.subr.bf16.mxu0 0
  %331 = vmatpush1.bf16.msra.mxu0 0
  %332 = vmatprep.subr.bf16.mxu0 0
  %333 = vmatpush1.bf16.msra.mxu0 0
  %334 = vmatprep.subr.bf16.mxu0 0
  %335 = vmatpush1.bf16.msra.mxu0 0
  %336 = vmatprep.subr.bf16.mxu0 0
  %337 = vmatpush1.bf16.msra.mxu0 0
  %338 = vmatprep.subr.bf16.mxu0 0
  %339 = vmatpush1.bf16.msra.mxu0 0
  %340 = vmatprep.mubr.bf16.mxu0 0
  %341 = vmatmul.mubr.bf16.gmra.mrb[0].mxu0 %v300
  %v342 = vpop.f32.mrb[0].mxu0
  %v343 = vadd.f32 %v285, %v342
  %v344 = vpop.f32.mrb[0].mxu0
  %v345 = vpop.f32.mrb[0].mxu0
  %v346 = vadd.f32 %v285, %v345
  %v347 = vpop.f32.mrb[0].mxu0
  %348 = vmatprep.mubr.bf16.mxu0 0
  %349 = vmatmul.mubr.bf16.gmra.mrb[0].mxu0 %v303
  %v350 = vpop.f32.mrb[0].mxu0
  %v351 = vadd.f32 %v285, %v350
  %v352 = vpop.f32.mrb[0].mxu0
  %v353 = vpop.f32.mrb[0].mxu0
  %v354 = vadd.f32 %v285, %v353
  %v355 = vpop.f32.mrb[0].mxu0
  %356 = vmatprep.mubr.bf16.mxu0 0
  %357 = vmatmul.mubr.bf16.gmra.mrb[0].mxu0 %v306
  %v358 = vpop.f32.mrb[0].mxu0
  %v359 = vadd.f32 %v285, %v358
  %v360 = vpop.f32.mrb[0].mxu0
  %v361 = vpop.f32.mrb[0].mxu0
  %v362 = vadd.f32 %v285, %v361
  %v363 = vpop.f32.mrb[0].mxu0
  %364 = vdwg.mxu0
  %v365 = vld [vmem:[%s15] sm:$0xf]
  %v366 = vld [vmem:[%s15 + $0x4] sm:$0xf]
  %v367 = vld [vmem:[%s15 + $0x8] sm:$0xf]
  %v368 = vld [vmem:[%s15 + $0xc] sm:$0xf]
  %v369 = vld [vmem:[%s17] sm:$0x1]
  %v371 = vlaneseq
  %v372 = vshrl.u32 %v371, 7
  %v373 = vsub.s32 0, %v372
  %v374 = vrot.slane %v369, %v373
  %v380 = vunpack.c.l.b16 %v365
  %v381 = vunpack.c.l.b16 %v366
  %v382 = vunpack.c.l.b16 %v367
  %v383 = vunpack.c.l.b16 %v368
  %v384 = vpack.c.b16 %v381, %v380
  %v385 = vpack.c.b16 %v383, %v382
  %388 = vmatprep.subr.bf16.mxu0 0
  %389 = vmatpush1.bf16.msra.mxu0 %v384
  %390 = vmatprep.subr.bf16.mxu0 0
  %391 = vmatpush1.bf16.msra.mxu0 %v385
  %392 = vmatprep.subr.bf16.mxu0 0
  %393 = vmatpush1.bf16.msra.mxu0 0
  %394 = vmatprep.subr.bf16.mxu0 0
  %395 = vmatpush1.bf16.msra.mxu0 0
  %396 = vmatprep.subr.bf16.mxu0 0
  %397 = vmatpush1.bf16.msra.mxu0 0
  %398 = vmatprep.subr.bf16.mxu0 0
  %399 = vmatpush1.bf16.msra.mxu0 0
  %400 = vmatprep.subr.bf16.mxu0 0
  %401 = vmatpush1.bf16.msra.mxu0 0
  %402 = vmatprep.subr.bf16.mxu0 0
  %403 = vmatpush1.bf16.msra.mxu0 0
  %404 = vmatprep.subr.bf16.mxu0 0
  %405 = vmatpush1.bf16.msra.mxu0 0
  %406 = vmatprep.subr.bf16.mxu0 0
  %407 = vmatpush1.bf16.msra.mxu0 0
  %408 = vmatprep.subr.bf16.mxu0 0
  %409 = vmatpush1.bf16.msra.mxu0 0
  %410 = vmatprep.subr.bf16.mxu0 0
  %411 = vmatpush1.bf16.msra.mxu0 0
  %412 = vmatprep.subr.bf16.mxu0 0
  %413 = vmatpush1.bf16.msra.mxu0 0
  %414 = vmatprep.subr.bf16.mxu0 0
  %415 = vmatpush1.bf16.msra.mxu0 0
  %416 = vmatprep.subr.bf16.mxu0 0
  %417 = vmatpush1.bf16.msra.mxu0 0
  %418 = vmatprep.subr.bf16.mxu0 0
  %419 = vmatpush1.bf16.msra.mxu0 0
  %420 = vmatprep.mubr.bf16.mxu0 0
  %421 = vmatmul.mubr.bf16.gmra.mrb[0].mxu0 %v300
  %v422 = vpop.f32.mrb[0].mxu0
  %v423 = vadd.f32 %v374, %v422
  %v424 = vpop.f32.mrb[0].mxu0
  %v425 = vpop.f32.mrb[0].mxu0
  %v426 = vadd.f32 %v374, %v425
  %v427 = vpop.f32.mrb[0].mxu0
  %428 = vmatprep.mubr.bf16.mxu0 0
  %429 = vmatmul.mubr.bf16.gmra.mrb[0].mxu0 %v303
  %v430 = vpop.f32.mrb[0].mxu0
  %v431 = vadd.f32 %v374, %v430
  %v432 = vpop.f32.mrb[0].mxu0
  %v433 = vpop.f32.mrb[0].mxu0
  %v434 = vadd.f32 %v374, %v433
  %v435 = vpop.f32.mrb[0].mxu0
  %436 = vmatprep.mubr.bf16.mxu0 0
  %437 = vmatmul.mubr.bf16.gmra.mrb[0].mxu0 %v306
  %v438 = vpop.f32.mrb[0].mxu0
  %v439 = vadd.f32 %v374, %v438
  %v440 = vpop.f32.mrb[0].mxu0
  %v441 = vpop.f32.mrb[0].mxu0
  %v442 = vadd.f32 %v374, %v441
  %v443 = vpop.f32.mrb[0].mxu0
  %444 = vdwg.mxu0
  %v445 = vld [vmem:[%s19] sm:$0xf]
  %v446 = vld [vmem:[%s19 + $0x4] sm:$0xf]
  %v447 = vld [vmem:[%s19 + $0x8] sm:$0xf]
  %v448 = vld [vmem:[%s19 + $0xc] sm:$0xf]
  %v449 = vld [vmem:[%s21] sm:$0x1]
  %v451 = vlaneseq
  %v452 = vshrl.u32 %v451, 7
  %v453 = vsub.s32 0, %v452
  %v454 = vrot.slane %v449, %v453
  %v460 = vunpack.c.l.b16 %v445
  %v461 = vunpack.c.l.b16 %v446
  %v462 = vunpack.c.l.b16 %v447
  %v463 = vunpack.c.l.b16 %v448
  %v464 = vpack.c.b16 %v461, %v460
  %v465 = vpack.c.b16 %v463, %v462
  %468 = vmatprep.subr.bf16.mxu0 0
  %469 = vmatpush1.bf16.msra.mxu0 %v464
  %470 = vmatprep.subr.bf16.mxu0 0
  %471 = vmatpush1.bf16.msra.mxu0 %v465
  %472 = vmatprep.subr.bf16.mxu0 0
  %473 = vmatpush1.bf16.msra.mxu0 0
  %474 = vmatprep.subr.bf16.mxu0 0
  %475 = vmatpush1.bf16.msra.mxu0 0
  %476 = vmatprep.subr.bf16.mxu0 0
  %477 = vmatpush1.bf16.msra.mxu0 0
  %478 = vmatprep.subr.bf16.mxu0 0
  %479 = vmatpush1.bf16.msra.mxu0 0
  %480 = vmatprep.subr.bf16.mxu0 0
  %481 = vmatpush1.bf16.msra.mxu0 0
  %482 = vmatprep.subr.bf16.mxu0 0
  %483 = vmatpush1.bf16.msra.mxu0 0
  %484 = vmatprep.subr.bf16.mxu0 0
  %485 = vmatpush1.bf16.msra.mxu0 0
  %486 = vmatprep.subr.bf16.mxu0 0
  %487 = vmatpush1.bf16.msra.mxu0 0
  %488 = vmatprep.subr.bf16.mxu0 0
  %489 = vmatpush1.bf16.msra.mxu0 0
  %490 = vmatprep.subr.bf16.mxu0 0
  %491 = vmatpush1.bf16.msra.mxu0 0
  %492 = vmatprep.subr.bf16.mxu0 0
  %493 = vmatpush1.bf16.msra.mxu0 0
  %494 = vmatprep.subr.bf16.mxu0 0
  %495 = vmatpush1.bf16.msra.mxu0 0
  %496 = vmatprep.subr.bf16.mxu0 0
  %497 = vmatpush1.bf16.msra.mxu0 0
  %498 = vmatprep.subr.bf16.mxu0 0
  %499 = vmatpush1.bf16.msra.mxu0 0
  %500 = vmatprep.mubr.bf16.mxu0 0
  %501 = vmatmul.mubr.bf16.gmra.mrb[0].mxu0 %v300
  %v502 = vpop.f32.mrb[0].mxu0
  %v503 = vadd.f32 %v454, %v502
  %v504 = vpop.f32.mrb[0].mxu0
  %v505 = vpop.f32.mrb[0].mxu0
  %v506 = vadd.f32 %v454, %v505
  %v507 = vpop.f32.mrb[0].mxu0
  %508 = vmatprep.mubr.bf16.mxu0 0
  %509 = vmatmul.mubr.bf16.gmra.mrb[0].mxu0 %v303
  %v510 = vpop.f32.mrb[0].mxu0
  %v511 = vadd.f32 %v454, %v510
  %v512 = vpop.f32.mrb[0].mxu0
  %v513 = vpop.f32.mrb[0].mxu0
  %v514 = vadd.f32 %v454, %v513
  %v515 = vpop.f32.mrb[0].mxu0
  %516 = vmatprep.mubr.bf16.mxu0 0
  %517 = vmatmul.mubr.bf16.gmra.mrb[0].mxu0 %v306
  %v518 = vpop.f32.mrb[0].mxu0
  %v519 = vadd.f32 %v454, %v518
  %v520 = vpop.f32.mrb[0].mxu0
  %v521 = vpop.f32.mrb[0].mxu0
  %v522 = vadd.f32 %v454, %v521
  %v523 = vpop.f32.mrb[0].mxu0
  %524 = vdwg.mxu0
  %v525 = vpack.c.bf16 %v346, %v343
  %v526 = vpack.c.bf16 %v354, %v351
  %v527 = vpack.c.bf16 %v362, %v359
  %v528 = vpack.c.bf16 %v426, %v423
  %v529 = vpack.c.bf16 %v434, %v431
  %v530 = vpack.c.bf16 %v442, %v439
  %vm531 = vcmask 64512
  %v533 = vsel %vm531, %v525, 0
  %v536 = vsel %vm531, %v526, 0
  %v539 = vsel %vm531, %v527, 0
  %v542 = vsel %vm531, %v528, 0
  %v545 = vsel %vm531, %v529, 0
  %v548 = vsel %vm531, %v530, 0
  %550 = vmatprep.subr.bf16.mxu0 0
  %551 = vmatpush1.bf16.xpose.msra.mxu0 %v542
  %552 = vmatprep.subr.bf16.mxu0 0
  %553 = vmatpush1.bf16.xpose.msra.mxu0 %v545
  %554 = vmatprep.subr.bf16.mxu0 0
  %555 = vmatpush1.bf16.xpose.msra.mxu0 %v548
  %556 = vmatprep.subr.bf16.mxu0 0
  %557 = vmatpush1.bf16.xpose.msra.mxu0 0
  %558 = vmatprep.subr.bf16.mxu0 0
  %559 = vmatpush1.bf16.xpose.msra.mxu0 0
  %560 = vmatprep.subr.bf16.mxu0 0
  %561 = vmatpush1.bf16.xpose.msra.mxu0 0
  %562 = vmatprep.subr.bf16.mxu0 0
  %563 = vmatpush1.bf16.xpose.msra.mxu0 0
  %564 = vmatprep.subr.bf16.mxu0 0
  %565 = vmatpush1.bf16.xpose.msra.mxu0 0
  %566 = vmatprep.subr.bf16.mxu0 0
  %567 = vmatpush1.bf16.xpose.msra.mxu0 0
  %568 = vmatprep.subr.bf16.mxu0 0
  %569 = vmatpush1.bf16.xpose.msra.mxu0 0
  %570 = vmatprep.subr.bf16.mxu0 0
  %571 = vmatpush1.bf16.xpose.msra.mxu0 0
  %572 = vmatprep.subr.bf16.mxu0 0
  %573 = vmatpush1.bf16.xpose.msra.mxu0 0
  %574 = vmatprep.subr.bf16.mxu0 0
  %575 = vmatpush1.bf16.xpose.msra.mxu0 0
  %576 = vmatprep.subr.bf16.mxu0 0
  %577 = vmatpush1.bf16.xpose.msra.mxu0 0
  %578 = vmatprep.subr.bf16.mxu0 0
  %579 = vmatpush1.bf16.xpose.msra.mxu0 0
  %580 = vmatprep.subr.bf16.mxu0 0
  %581 = vmatpush1.bf16.xpose.msra.mxu0 0
  %582 = vmatprep.mubr.bf16.mxu0 0
  %583 = vmatmul.mubr.bf16.gmra.mrb[0].mxu0 %v533
  %v584 = vpop.f32.mrb[0].mxu0
  %v585 = vadd.f32 0.0, %v584
  %v586 = vpop.f32.mrb[0].mxu0
  %v587 = vpop.f32.mrb[0].mxu0
  %v588 = vadd.f32 0.0, %v587
  %v589 = vpop.f32.mrb[0].mxu0
  %590 = vmatprep.mubr.bf16.mxu0 0
  %591 = vmatmul.mubr.bf16.gmra.mrb[0].mxu0 %v536
  %v592 = vpop.f32.mrb[0].mxu0
  %v593 = vadd.f32 0.0, %v592
  %v594 = vpop.f32.mrb[0].mxu0
  %v595 = vpop.f32.mrb[0].mxu0
  %v596 = vadd.f32 0.0, %v595
  %v597 = vpop.f32.mrb[0].mxu0
  %598 = vmatprep.mubr.bf16.mxu0 0
  %599 = vmatmul.mubr.bf16.gmra.mrb[0].mxu0 %v539
  %v600 = vpop.f32.mrb[0].mxu0
  %v601 = vadd.f32 0.0, %v600
  %v602 = vpop.f32.mrb[0].mxu0
  %v603 = vpop.f32.mrb[0].mxu0
  %v604 = vadd.f32 0.0, %v603
  %v605 = vpop.f32.mrb[0].mxu0
  %606 = vdwg.mxu0
  %v607 = vmul.f32 %v585, 0.35355338
  %v608 = vmul.f32 %v588, 0.35355338
  %v609 = vmul.f32 %v593, 0.35355338
  %v610 = vmul.f32 %v596, 0.35355338
  %v611 = vmul.f32 %v601, 0.35355338
  %v612 = vmul.f32 %v604, 0.35355338
  %v613 = vadd.f32 %v607, %v161
  %v614 = vadd.f32 %v608, %v162
  %v615 = vadd.f32 %v609, %v163
  %v616 = vadd.f32 %v610, %v164
  %v617 = vadd.f32 %v611, %v165
  %v618 = vadd.f32 %v612, %v166
  %vm619 = vcmask 392192
  %v620 = vsel %vm619, %v613, -inf
  %621 = vmax.xlane.f32.xlu0 %v620
  %v622 = vpop.xlane.xlu0 %621
  %v623 = vsel %vm619, %v614, -inf
  %624 = vmax.xlane.f32.xlu0 %v623
  %v625 = vpop.xlane.xlu0 %624
  %v626 = vsel %vm619, %v615, -inf
  %627 = vmax.xlane.f32.xlu0 %v626
  %v628 = vpop.xlane.xlu0 %627
  %v629 = vsel %vm619, %v616, -inf
  %630 = vmax.xlane.f32.xlu0 %v629
  %v631 = vpop.xlane.xlu0 %630
  %v632 = vsel %vm619, %v617, -inf
  %633 = vmax.xlane.f32.xlu0 %v632
  %v634 = vpop.xlane.xlu0 %633
  %v635 = vsel %vm619, %v618, -inf
  %636 = vmax.xlane.f32.xlu0 %v635
  %v637 = vpop.xlane.xlu0 %636
  %v638 = vsub.f32 %v613, %v622
  %v639 = vsub.f32 %v614, %v625
  %v640 = vsub.f32 %v615, %v628
  %v641 = vsub.f32 %v616, %v631
  %v642 = vsub.f32 %v617, %v634
  %v643 = vsub.f32 %v618, %v637
  %v644 = vmul.f32 %v638, 1.442695
  %v645 = vpow.pop %v644
  %v646 = vmul.f32 %v639, 1.442695
  %v647 = vpow.pop %v646
  %v648 = vmul.f32 %v640, 1.442695
  %v649 = vpow.pop %v648
  %v650 = vmul.f32 %v641, 1.442695
  %v651 = vpow.pop %v650
  %v652 = vmul.f32 %v642, 1.442695
  %v653 = vpow.pop %v652
  %v654 = vmul.f32 %v643, 1.442695
  %v655 = vpow.pop %v654
  %v656 = vsel %vm619, %v645, 0.0
  %657 = vadd.xlane.f32.xlu0 %v656
  %v658 = vpop.xlane.xlu0 %657
  %v659 = vsel %vm619, %v647, 0.0
  %660 = vadd.xlane.f32.xlu0 %v659
  %v661 = vpop.xlane.xlu0 %660
  %v662 = vsel %vm619, %v649, 0.0
  %663 = vadd.xlane.f32.xlu0 %v662
  %v664 = vpop.xlane.xlu0 %663
  %v665 = vsel %vm619, %v651, 0.0
  %666 = vadd.xlane.f32.xlu0 %v665
  %v667 = vpop.xlane.xlu0 %666
  %v668 = vsel %vm619, %v653, 0.0
  %669 = vadd.xlane.f32.xlu0 %v668
  %v670 = vpop.xlane.xlu0 %669
  %v671 = vsel %vm619, %v655, 0.0
  %672 = vadd.xlane.f32.xlu0 %v671
  %v673 = vpop.xlane.xlu0 %672
  %v674 = vrcp.pop %v658
  %v675 = vrcp.pop %v661
  %v676 = vrcp.pop %v664
  %v677 = vrcp.pop %v667
  %v678 = vrcp.pop %v670
  %v679 = vrcp.pop %v673
  %v680 = vmul.f32 %v645, %v674
  %v681 = vmul.f32 %v647, %v675
  %v682 = vmul.f32 %v649, %v676
  %v683 = vmul.f32 %v651, %v677
  %v684 = vmul.f32 %v653, %v678
  %v685 = vmul.f32 %v655, %v679
  %v686 = vpack.c.bf16 %v681, %v680
  %v687 = vpack.c.bf16 %v683, %v682
  %v688 = vpack.c.bf16 %v685, %v684
  %v689 = vpack.c.bf16 %v506, %v503
  %v690 = vpack.c.bf16 %v514, %v511
  %v691 = vpack.c.bf16 %v522, %v519
  %v693 = vsel %vm619, %v686, 0
  %v696 = vsel %vm619, %v687, 0
  %v699 = vsel %vm619, %v688, 0
  %701 = vmatprep.subr.bf16.mxu0 0
  %702 = vmatpush1.bf16.msra.mxu0 %v689
  %703 = vmatprep.subr.bf16.mxu0 0
  %704 = vmatpush1.bf16.msra.mxu0 %v690
  %705 = vmatprep.subr.bf16.mxu0 0
  %706 = vmatpush1.bf16.msra.mxu0 %v691
  %707 = vmatprep.subr.bf16.mxu0 0
  %708 = vmatpush1.bf16.msra.mxu0 0
  %709 = vmatprep.subr.bf16.mxu0 0
  %710 = vmatpush1.bf16.msra.mxu0 0
  %711 = vmatprep.subr.bf16.mxu0 0
  %712 = vmatpush1.bf16.msra.mxu0 0
  %713 = vmatprep.subr.bf16.mxu0 0
  %714 = vmatpush1.bf16.msra.mxu0 0
  %715 = vmatprep.subr.bf16.mxu0 0
  %716 = vmatpush1.bf16.msra.mxu0 0
  %717 = vmatprep.subr.bf16.mxu0 0
  %718 = vmatpush1.bf16.msra.mxu0 0
  %719 = vmatprep.subr.bf16.mxu0 0
  %720 = vmatpush1.bf16.msra.mxu0 0
  %721 = vmatprep.subr.bf16.mxu0 0
  %722 = vmatpush1.bf16.msra.mxu0 0
  %723 = vmatprep.subr.bf16.mxu0 0
  %724 = vmatpush1.bf16.msra.mxu0 0
  %725 = vmatprep.subr.bf16.mxu0 0
  %726 = vmatpush1.bf16.msra.mxu0 0
  %727 = vmatprep.subr.bf16.mxu0 0
  %728 = vmatpush1.bf16.msra.mxu0 0
  %729 = vmatprep.subr.bf16.mxu0 0
  %730 = vmatpush1.bf16.msra.mxu0 0
  %731 = vmatprep.subr.bf16.mxu0 0
  %732 = vmatpush1.bf16.msra.mxu0 0
  %733 = vmatprep.mubr.bf16.mxu0 0
  %734 = vmatmul.mubr.bf16.gmra.mrb[0].mxu0 %v693
  %v735 = vpop.f32.mrb[0].mxu0
  %v736 = vadd.f32 0.0, %v735
  %v737 = vpop.f32.mrb[0].mxu0
  %v738 = vpop.f32.mrb[0].mxu0
  %v739 = vadd.f32 0.0, %v738
  %v740 = vpop.f32.mrb[0].mxu0
  %741 = vmatprep.mubr.bf16.mxu0 0
  %742 = vmatmul.mubr.bf16.gmra.mrb[0].mxu0 %v696
  %v743 = vpop.f32.mrb[0].mxu0
  %v744 = vadd.f32 0.0, %v743
  %v745 = vpop.f32.mrb[0].mxu0
  %v746 = vpop.f32.mrb[0].mxu0
  %v747 = vadd.f32 0.0, %v746
  %v748 = vpop.f32.mrb[0].mxu0
  %749 = vmatprep.mubr.bf16.mxu0 0
  %750 = vmatmul.mubr.bf16.gmra.mrb[0].mxu0 %v699
  %v751 = vpop.f32.mrb[0].mxu0
  %v752 = vadd.f32 0.0, %v751
  %v753 = vpop.f32.mrb[0].mxu0
  %v754 = vpop.f32.mrb[0].mxu0
  %v755 = vadd.f32 0.0, %v754
  %v756 = vpop.f32.mrb[0].mxu0
  %757 = vdwg.mxu0
  %v758 = vld [vmem:[%s23] sm:$0xf]
  %v759 = vpack.c.bf16 %v739, %v736
  %v760 = vpack.c.bf16 %v747, %v744
  %v761 = vpack.c.bf16 %v755, %v752
  %s762 = scalar_lea.vmem %s11, 16
  %v763 = vld [vmem:[%s762] sm:$0xf]
  %v764 = vld [vmem:[%s762 + $0x4] sm:$0xf]
  %v765 = vld [vmem:[%s762 + $0x8] sm:$0xf]
  %v766 = vld [vmem:[%s762 + $0xc] sm:$0xf]
  %s767 = scalar_lea.vmem %s13, 1
  %v768 = vld [vmem:[%s767] sm:$0x1]
  %v770 = vlaneseq
  %v771 = vshrl.u32 %v770, 7
  %v772 = vsub.s32 0, %v771
  %v773 = vrot.slane %v768, %v772
  %v779 = vunpack.c.l.b16 %v763
  %v780 = vunpack.c.l.b16 %v764
  %v781 = vunpack.c.l.b16 %v765
  %v782 = vunpack.c.l.b16 %v766
  %v783 = vpack.c.b16 %v780, %v779
  %v784 = vpack.c.b16 %v782, %v781
  %787 = vmatprep.subr.bf16.mxu0 0
  %788 = vmatpush1.bf16.msra.mxu0 %v783
  %789 = vmatprep.subr.bf16.mxu0 0
  %790 = vmatpush1.bf16.msra.mxu0 %v784
  %791 = vmatprep.subr.bf16.mxu0 0
  %792 = vmatpush1.bf16.msra.mxu0 0
  %793 = vmatprep.subr.bf16.mxu0 0
  %794 = vmatpush1.bf16.msra.mxu0 0
  %795 = vmatprep.subr.bf16.mxu0 0
  %796 = vmatpush1.bf16.msra.mxu0 0
  %797 = vmatprep.subr.bf16.mxu0 0
  %798 = vmatpush1.bf16.msra.mxu0 0
  %799 = vmatprep.subr.bf16.mxu0 0
  %800 = vmatpush1.bf16.msra.mxu0 0
  %801 = vmatprep.subr.bf16.mxu0 0
  %802 = vmatpush1.bf16.msra.mxu0 0
  %803 = vmatprep.subr.bf16.mxu0 0
  %804 = vmatpush1.bf16.msra.mxu0 0
  %805 = vmatprep.subr.bf16.mxu0 0
  %806 = vmatpush1.bf16.msra.mxu0 0
  %807 = vmatprep.subr.bf16.mxu0 0
  %808 = vmatpush1.bf16.msra.mxu0 0
  %809 = vmatprep.subr.bf16.mxu0 0
  %810 = vmatpush1.bf16.msra.mxu0 0
  %811 = vmatprep.subr.bf16.mxu0 0
  %812 = vmatpush1.bf16.msra.mxu0 0
  %813 = vmatprep.subr.bf16.mxu0 0
  %814 = vmatpush1.bf16.msra.mxu0 0
  %815 = vmatprep.subr.bf16.mxu0 0
  %816 = vmatpush1.bf16.msra.mxu0 0
  %817 = vmatprep.subr.bf16.mxu0 0
  %818 = vmatpush1.bf16.msra.mxu0 0
  %819 = vmatprep.mubr.bf16.mxu0 0
  %820 = vmatmul.mubr.bf16.gmra.mrb[0].mxu0 %v300
  %v821 = vpop.f32.mrb[0].mxu0
  %v822 = vadd.f32 %v773, %v821
  %v823 = vpop.f32.mrb[0].mxu0
  %v824 = vpop.f32.mrb[0].mxu0
  %v825 = vadd.f32 %v773, %v824
  %v826 = vpop.f32.mrb[0].mxu0
  %827 = vmatprep.mubr.bf16.mxu0 0
  %828 = vmatmul.mubr.bf16.gmra.mrb[0].mxu0 %v303
  %v829 = vpop.f32.mrb[0].mxu0
  %v830 = vadd.f32 %v773, %v829
  %v831 = vpop.f32.mrb[0].mxu0
  %v832 = vpop.f32.mrb[0].mxu0
  %v833 = vadd.f32 %v773, %v832
  %v834 = vpop.f32.mrb[0].mxu0
  %835 = vmatprep.mubr.bf16.mxu0 0
  %836 = vmatmul.mubr.bf16.gmra.mrb[0].mxu0 %v306
  %v837 = vpop.f32.mrb[0].mxu0
  %v838 = vadd.f32 %v773, %v837
  %v839 = vpop.f32.mrb[0].mxu0
  %v840 = vpop.f32.mrb[0].mxu0
  %v841 = vadd.f32 %v773, %v840
  %v842 = vpop.f32.mrb[0].mxu0
  %843 = vdwg.mxu0
  %s844 = scalar_lea.vmem %s15, 16
  %v845 = vld [vmem:[%s844] sm:$0xf]
  %v846 = vld [vmem:[%s844 + $0x4] sm:$0xf]
  %v847 = vld [vmem:[%s844 + $0x8] sm:$0xf]
  %v848 = vld [vmem:[%s844 + $0xc] sm:$0xf]
  %s849 = scalar_lea.vmem %s17, 1
  %v850 = vld [vmem:[%s849] sm:$0x1]
  %v852 = vlaneseq
  %v853 = vshrl.u32 %v852, 7
  %v854 = vsub.s32 0, %v853
  %v855 = vrot.slane %v850, %v854
  %v861 = vunpack.c.l.b16 %v845
  %v862 = vunpack.c.l.b16 %v846
  %v863 = vunpack.c.l.b16 %v847
  %v864 = vunpack.c.l.b16 %v848
  %v865 = vpack.c.b16 %v862, %v861
  %v866 = vpack.c.b16 %v864, %v863
  %869 = vmatprep.subr.bf16.mxu0 0
  %870 = vmatpush1.bf16.msra.mxu0 %v865
  %871 = vmatprep.subr.bf16.mxu0 0
  %872 = vmatpush1.bf16.msra.mxu0 %v866
  %873 = vmatprep.subr.bf16.mxu0 0
  %874 = vmatpush1.bf16.msra.mxu0 0
  %875 = vmatprep.subr.bf16.mxu0 0
  %876 = vmatpush1.bf16.msra.mxu0 0
  %877 = vmatprep.subr.bf16.mxu0 0
  %878 = vmatpush1.bf16.msra.mxu0 0
  %879 = vmatprep.subr.bf16.mxu0 0
  %880 = vmatpush1.bf16.msra.mxu0 0
  %881 = vmatprep.subr.bf16.mxu0 0
  %882 = vmatpush1.bf16.msra.mxu0 0
  %883 = vmatprep.subr.bf16.mxu0 0
  %884 = vmatpush1.bf16.msra.mxu0 0
  %885 = vmatprep.subr.bf16.mxu0 0
  %886 = vmatpush1.bf16.msra.mxu0 0
  %887 = vmatprep.subr.bf16.mxu0 0
  %888 = vmatpush1.bf16.msra.mxu0 0
  %889 = vmatprep.subr.bf16.mxu0 0
  %890 = vmatpush1.bf16.msra.mxu0 0
  %891 = vmatprep.subr.bf16.mxu0 0
  %892 = vmatpush1.bf16.msra.mxu0 0
  %893 = vmatprep.subr.bf16.mxu0 0
  %894 = vmatpush1.bf16.msra.mxu0 0
  %895 = vmatprep.subr.bf16.mxu0 0
  %896 = vmatpush1.bf16.msra.mxu0 0
  %897 = vmatprep.subr.bf16.mxu0 0
  %898 = vmatpush1.bf16.msra.mxu0 0
  %899 = vmatprep.subr.bf16.mxu0 0
  %900 = vmatpush1.bf16.msra.mxu0 0
  %901 = vmatprep.mubr.bf16.mxu0 0
  %902 = vmatmul.mubr.bf16.gmra.mrb[0].mxu0 %v300
  %v903 = vpop.f32.mrb[0].mxu0
  %v904 = vadd.f32 %v855, %v903
  %v905 = vpop.f32.mrb[0].mxu0
  %v906 = vpop.f32.mrb[0].mxu0
  %v907 = vadd.f32 %v855, %v906
  %v908 = vpop.f32.mrb[0].mxu0
  %909 = vmatprep.mubr.bf16.mxu0 0
  %910 = vmatmul.mubr.bf16.gmra.mrb[0].mxu0 %v303
  %v911 = vpop.f32.mrb[0].mxu0
  %v912 = vadd.f32 %v855, %v911
  %v913 = vpop.f32.mrb[0].mxu0
  %v914 = vpop.f32.mrb[0].mxu0
  %v915 = vadd.f32 %v855, %v914
  %v916 = vpop.f32.mrb[0].mxu0
  %917 = vmatprep.mubr.bf16.mxu0 0
  %918 = vmatmul.mubr.bf16.gmra.mrb[0].mxu0 %v306
  %v919 = vpop.f32.mrb[0].mxu0
  %v920 = vadd.f32 %v855, %v919
  %v921 = vpop.f32.mrb[0].mxu0
  %v922 = vpop.f32.mrb[0].mxu0
  %v923 = vadd.f32 %v855, %v922
  %v924 = vpop.f32.mrb[0].mxu0
  %925 = vdwg.mxu0
  %s926 = scalar_lea.vmem %s19, 16
  %v927 = vld [vmem:[%s926] sm:$0xf]
  %v928 = vld [vmem:[%s926 + $0x4] sm:$0xf]
  %v929 = vld [vmem:[%s926 + $0x8] sm:$0xf]
  %v930 = vld [vmem:[%s926 + $0xc] sm:$0xf]
  %s931 = scalar_lea.vmem %s21, 1
  %v932 = vld [vmem:[%s931] sm:$0x1]
  %v934 = vlaneseq
  %v935 = vshrl.u32 %v934, 7
  %v936 = vsub.s32 0, %v935
  %v937 = vrot.slane %v932, %v936
  %v943 = vunpack.c.l.b16 %v927
  %v944 = vunpack.c.l.b16 %v928
  %v945 = vunpack.c.l.b16 %v929
  %v946 = vunpack.c.l.b16 %v930
  %v947 = vpack.c.b16 %v944, %v943
  %v948 = vpack.c.b16 %v946, %v945
  %951 = vmatprep.subr.bf16.mxu0 0
  %952 = vmatpush1.bf16.msra.mxu0 %v947
  %953 = vmatprep.subr.bf16.mxu0 0
  %954 = vmatpush1.bf16.msra.mxu0 %v948
  %955 = vmatprep.subr.bf16.mxu0 0
  %956 = vmatpush1.bf16.msra.mxu0 0
  %957 = vmatprep.subr.bf16.mxu0 0
  %958 = vmatpush1.bf16.msra.mxu0 0
  %959 = vmatprep.subr.bf16.mxu0 0
  %960 = vmatpush1.bf16.msra.mxu0 0
  %961 = vmatprep.subr.bf16.mxu0 0
  %962 = vmatpush1.bf16.msra.mxu0 0
  %963 = vmatprep.subr.bf16.mxu0 0
  %964 = vmatpush1.bf16.msra.mxu0 0
  %965 = vmatprep.subr.bf16.mxu0 0
  %966 = vmatpush1.bf16.msra.mxu0 0
  %967 = vmatprep.subr.bf16.mxu0 0
  %968 = vmatpush1.bf16.msra.mxu0 0
  %969 = vmatprep.subr.bf16.mxu0 0
  %970 = vmatpush1.bf16.msra.mxu0 0
  %971 = vmatprep.subr.bf16.mxu0 0
  %972 = vmatpush1.bf16.msra.mxu0 0
  %973 = vmatprep.subr.bf16.mxu0 0
  %974 = vmatpush1.bf16.msra.mxu0 0
  %975 = vmatprep.subr.bf16.mxu0 0
  %976 = vmatpush1.bf16.msra.mxu0 0
  %977 = vmatprep.subr.bf16.mxu0 0
  %978 = vmatpush1.bf16.msra.mxu0 0
  %979 = vmatprep.subr.bf16.mxu0 0
  %980 = vmatpush1.bf16.msra.mxu0 0
  %981 = vmatprep.subr.bf16.mxu0 0
  %982 = vmatpush1.bf16.msra.mxu0 0
  %983 = vmatprep.mubr.bf16.mxu0 0
  %984 = vmatmul.mubr.bf16.gmra.mrb[0].mxu0 %v300
  %v985 = vpop.f32.mrb[0].mxu0
  %v986 = vadd.f32 %v937, %v985
  %v987 = vpop.f32.mrb[0].mxu0
  %v988 = vpop.f32.mrb[0].mxu0
  %v989 = vadd.f32 %v937, %v988
  %v990 = vpop.f32.mrb[0].mxu0
  %991 = vmatprep.mubr.bf16.mxu0 0
  %992 = vmatmul.mubr.bf16.gmra.mrb[0].mxu0 %v303
  %v993 = vpop.f32.mrb[0].mxu0
  %v994 = vadd.f32 %v937, %v993
  %v995 = vpop.f32.mrb[0].mxu0
  %v996 = vpop.f32.mrb[0].mxu0
  %v997 = vadd.f32 %v937, %v996
  %v998 = vpop.f32.mrb[0].mxu0
  %999 = vmatprep.mubr.bf16.mxu0 0
  %1000 = vmatmul.mubr.bf16.gmra.mrb[0].mxu0 %v306
  %v1001 = vpop.f32.mrb[0].mxu0
  %v1002 = vadd.f32 %v937, %v1001
  %v1003 = vpop.f32.mrb[0].mxu0
  %v1004 = vpop.f32.mrb[0].mxu0
  %v1005 = vadd.f32 %v937, %v1004
  %v1006 = vpop.f32.mrb[0].mxu0
  %1007 = vdwg.mxu0
  %v1008 = vpack.c.bf16 %v825, %v822
  %v1009 = vpack.c.bf16 %v833, %v830
  %v1010 = vpack.c.bf16 %v841, %v838
  %v1011 = vpack.c.bf16 %v907, %v904
  %v1012 = vpack.c.bf16 %v915, %v912
  %v1013 = vpack.c.bf16 %v923, %v920
  %v1015 = vsel %vm531, %v1008, 0
  %v1018 = vsel %vm531, %v1009, 0
  %v1021 = vsel %vm531, %v1010, 0
  %v1024 = vsel %vm531, %v1011, 0
  %v1027 = vsel %vm531, %v1012, 0
  %v1030 = vsel %vm531, %v1013, 0
  %1032 = vmatprep.subr.bf16.mxu0 0
  %1033 = vmatpush1.bf16.xpose.msra.mxu0 %v1024
  %1034 = vmatprep.subr.bf16.mxu0 0
  %1035 = vmatpush1.bf16.xpose.msra.mxu0 %v1027
  %1036 = vmatprep.subr.bf16.mxu0 0
  %1037 = vmatpush1.bf16.xpose.msra.mxu0 %v1030
  %1038 = vmatprep.subr.bf16.mxu0 0
  %1039 = vmatpush1.bf16.xpose.msra.mxu0 0
  %1040 = vmatprep.subr.bf16.mxu0 0
  %1041 = vmatpush1.bf16.xpose.msra.mxu0 0
  %1042 = vmatprep.subr.bf16.mxu0 0
  %1043 = vmatpush1.bf16.xpose.msra.mxu0 0
  %1044 = vmatprep.subr.bf16.mxu0 0
  %1045 = vmatpush1.bf16.xpose.msra.mxu0 0
  %1046 = vmatprep.subr.bf16.mxu0 0
  %1047 = vmatpush1.bf16.xpose.msra.mxu0 0
  %1048 = vmatprep.subr.bf16.mxu0 0
  %1049 = vmatpush1.bf16.xpose.msra.mxu0 0
  %1050 = vmatprep.subr.bf16.mxu0 0
  %1051 = vmatpush1.bf16.xpose.msra.mxu0 0
  %1052 = vmatprep.subr.bf16.mxu0 0
  %1053 = vmatpush1.bf16.xpose.msra.mxu0 0
  %1054 = vmatprep.subr.bf16.mxu0 0
  %1055 = vmatpush1.bf16.xpose.msra.mxu0 0
  %1056 = vmatprep.subr.bf16.mxu0 0
  %1057 = vmatpush1.bf16.xpose.msra.mxu0 0
  %1058 = vmatprep.subr.bf16.mxu0 0
  %1059 = vmatpush1.bf16.xpose.msra.mxu0 0
  %1060 = vmatprep.subr.bf16.mxu0 0
  %1061 = vmatpush1.bf16.xpose.msra.mxu0 0
  %1062 = vmatprep.subr.bf16.mxu0 0
  %1063 = vmatpush1.bf16.xpose.msra.mxu0 0
  %1064 = vmatprep.mubr.bf16.mxu0 0
  %1065 = vmatmul.mubr.bf16.gmra.mrb[0].mxu0 %v1015
  %v1066 = vpop.f32.mrb[0].mxu0
  %v1067 = vadd.f32 0.0, %v1066
  %v1068 = vpop.f32.mrb[0].mxu0
  %v1069 = vpop.f32.mrb[0].mxu0
  %v1070 = vadd.f32 0.0, %v1069
  %v1071 = vpop.f32.mrb[0].mxu0
  %1072 = vmatprep.mubr.bf16.mxu0 0
  %1073 = vmatmul.mubr.bf16.gmra.mrb[0].mxu0 %v1018
  %v1074 = vpop.f32.mrb[0].mxu0
  %v1075 = vadd.f32 0.0, %v1074
  %v1076 = vpop.f32.mrb[0].mxu0
  %v1077 = vpop.f32.mrb[0].mxu0
  %v1078 = vadd.f32 0.0, %v1077
  %v1079 = vpop.f32.mrb[0].mxu0
  %1080 = vmatprep.mubr.bf16.mxu0 0
  %1081 = vmatmul.mubr.bf16.gmra.mrb[0].mxu0 %v1021
  %v1082 = vpop.f32.mrb[0].mxu0
  %v1083 = vadd.f32 0.0, %v1082
  %v1084 = vpop.f32.mrb[0].mxu0
  %v1085 = vpop.f32.mrb[0].mxu0
  %v1086 = vadd.f32 0.0, %v1085
  %v1087 = vpop.f32.mrb[0].mxu0
  %1088 = vdwg.mxu0
  %v1089 = vmul.f32 %v1067, 0.35355338
  %v1090 = vmul.f32 %v1070, 0.35355338
  %v1091 = vmul.f32 %v1075, 0.35355338
  %v1092 = vmul.f32 %v1078, 0.35355338
  %v1093 = vmul.f32 %v1083, 0.35355338
  %v1094 = vmul.f32 %v1086, 0.35355338
  %v1095 = vadd.f32 %v1089, %v161
  %v1096 = vadd.f32 %v1090, %v162
  %v1097 = vadd.f32 %v1091, %v163
  %v1098 = vadd.f32 %v1092, %v164
  %v1099 = vadd.f32 %v1093, %v165
  %v1100 = vadd.f32 %v1094, %v166
  %v1101 = vsel %vm619, %v1095, -inf
  %1102 = vmax.xlane.f32.xlu0 %v1101
  %v1103 = vpop.xlane.xlu0 %1102
  %v1104 = vsel %vm619, %v1096, -inf
  %1105 = vmax.xlane.f32.xlu0 %v1104
  %v1106 = vpop.xlane.xlu0 %1105
  %v1107 = vsel %vm619, %v1097, -inf
  %1108 = vmax.xlane.f32.xlu0 %v1107
  %v1109 = vpop.xlane.xlu0 %1108
  %v1110 = vsel %vm619, %v1098, -inf
  %1111 = vmax.xlane.f32.xlu0 %v1110
  %v1112 = vpop.xlane.xlu0 %1111
  %v1113 = vsel %vm619, %v1099, -inf
  %1114 = vmax.xlane.f32.xlu0 %v1113
  %v1115 = vpop.xlane.xlu0 %1114
  %v1116 = vsel %vm619, %v1100, -inf
  %1117 = vmax.xlane.f32.xlu0 %v1116
  %v1118 = vpop.xlane.xlu0 %1117
  %v1119 = vsub.f32 %v1095, %v1103
  %v1120 = vsub.f32 %v1096, %v1106
  %v1121 = vsub.f32 %v1097, %v1109
  %v1122 = vsub.f32 %v1098, %v1112
  %v1123 = vsub.f32 %v1099, %v1115
  %v1124 = vsub.f32 %v1100, %v1118
  %v1125 = vmul.f32 %v1119, 1.442695
  %v1126 = vpow.pop %v1125
  %v1127 = vmul.f32 %v1120, 1.442695
  %v1128 = vpow.pop %v1127
  %v1129 = vmul.f32 %v1121, 1.442695
  %v1130 = vpow.pop %v1129
  %v1131 = vmul.f32 %v1122, 1.442695
  %v1132 = vpow.pop %v1131
  %v1133 = vmul.f32 %v1123, 1.442695
  %v1134 = vpow.pop %v1133
  %v1135 = vmul.f32 %v1124, 1.442695
  %v1136 = vpow.pop %v1135
  %v1137 = vsel %vm619, %v1126, 0.0
  %1138 = vadd.xlane.f32.xlu0 %v1137
  %v1139 = vpop.xlane.xlu0 %1138
  %v1140 = vsel %vm619, %v1128, 0.0
  %1141 = vadd.xlane.f32.xlu0 %v1140
  %v1142 = vpop.xlane.xlu0 %1141
  %v1143 = vsel %vm619, %v1130, 0.0
  %1144 = vadd.xlane.f32.xlu0 %v1143
  %v1145 = vpop.xlane.xlu0 %1144
  %v1146 = vsel %vm619, %v1132, 0.0
  %1147 = vadd.xlane.f32.xlu0 %v1146
  %v1148 = vpop.xlane.xlu0 %1147
  %v1149 = vsel %vm619, %v1134, 0.0
  %1150 = vadd.xlane.f32.xlu0 %v1149
  %v1151 = vpop.xlane.xlu0 %1150
  %v1152 = vsel %vm619, %v1136, 0.0
  %1153 = vadd.xlane.f32.xlu0 %v1152
  %v1154 = vpop.xlane.xlu0 %1153
  %v1155 = vrcp.pop %v1139
  %v1156 = vrcp.pop %v1142
  %v1157 = vrcp.pop %v1145
  %v1158 = vrcp.pop %v1148
  %v1159 = vrcp.pop %v1151
  %v1160 = vrcp.pop %v1154
  %v1161 = vmul.f32 %v1126, %v1155
  %v1162 = vmul.f32 %v1128, %v1156
  %v1163 = vmul.f32 %v1130, %v1157
  %v1164 = vmul.f32 %v1132, %v1158
  %v1165 = vmul.f32 %v1134, %v1159
  %v1166 = vmul.f32 %v1136, %v1160
  %v1167 = vpack.c.bf16 %v1162, %v1161
  %v1168 = vpack.c.bf16 %v1164, %v1163
  %v1169 = vpack.c.bf16 %v1166, %v1165
  %v1170 = vpack.c.bf16 %v989, %v986
  %v1171 = vpack.c.bf16 %v997, %v994
  %v1172 = vpack.c.bf16 %v1005, %v1002
  %v1174 = vsel %vm619, %v1167, 0
  %v1177 = vsel %vm619, %v1168, 0
  %v1180 = vsel %vm619, %v1169, 0
  %1182 = vmatprep.subr.bf16.mxu0 0
  %1183 = vmatpush1.bf16.msra.mxu0 %v1170
  %1184 = vmatprep.subr.bf16.mxu0 0
  %1185 = vmatpush1.bf16.msra.mxu0 %v1171
  %1186 = vmatprep.subr.bf16.mxu0 0
  %1187 = vmatpush1.bf16.msra.mxu0 %v1172
  %1188 = vmatprep.subr.bf16.mxu0 0
  %1189 = vmatpush1.bf16.msra.mxu0 0
  %1190 = vmatprep.subr.bf16.mxu0 0
  %1191 = vmatpush1.bf16.msra.mxu0 0
  %1192 = vmatprep.subr.bf16.mxu0 0
  %1193 = vmatpush1.bf16.msra.mxu0 0
  %1194 = vmatprep.subr.bf16.mxu0 0
  %1195 = vmatpush1.bf16.msra.mxu0 0
  %1196 = vmatprep.subr.bf16.mxu0 0
  %1197 = vmatpush1.bf16.msra.mxu0 0
  %1198 = vmatprep.subr.bf16.mxu0 0
  %1199 = vmatpush1.bf16.msra.mxu0 0
  %1200 = vmatprep.subr.bf16.mxu0 0
  %1201 = vmatpush1.bf16.msra.mxu0 0
  %1202 = vmatprep.subr.bf16.mxu0 0
  %1203 = vmatpush1.bf16.msra.mxu0 0
  %1204 = vmatprep.subr.bf16.mxu0 0
  %1205 = vmatpush1.bf16.msra.mxu0 0
  %1206 = vmatprep.subr.bf16.mxu0 0
  %1207 = vmatpush1.bf16.msra.mxu0 0
  %1208 = vmatprep.subr.bf16.mxu0 0
  %1209 = vmatpush1.bf16.msra.mxu0 0
  %1210 = vmatprep.subr.bf16.mxu0 0
  %1211 = vmatpush1.bf16.msra.mxu0 0
  %1212 = vmatprep.subr.bf16.mxu0 0
  %1213 = vmatpush1.bf16.msra.mxu0 0
  %1214 = vmatprep.mubr.bf16.mxu0 0
  %1215 = vmatmul.mubr.bf16.gmra.mrb[0].mxu0 %v1174
  %v1216 = vpop.f32.mrb[0].mxu0
  %v1217 = vadd.f32 0.0, %v1216
  %v1218 = vpop.f32.mrb[0].mxu0
  %v1219 = vpop.f32.mrb[0].mxu0
  %v1220 = vadd.f32 0.0, %v1219
  %v1221 = vpop.f32.mrb[0].mxu0
  %1222 = vmatprep.mubr.bf16.mxu0 0
  %1223 = vmatmul.mubr.bf16.gmra.mrb[0].mxu0 %v1177
  %v1224 = vpop.f32.mrb[0].mxu0
  %v1225 = vadd.f32 0.0, %v1224
  %v1226 = vpop.f32.mrb[0].mxu0
  %v1227 = vpop.f32.mrb[0].mxu0
  %v1228 = vadd.f32 0.0, %v1227
  %v1229 = vpop.f32.mrb[0].mxu0
  %1230 = vmatprep.mubr.bf16.mxu0 0
  %1231 = vmatmul.mubr.bf16.gmra.mrb[0].mxu0 %v1180
  %v1232 = vpop.f32.mrb[0].mxu0
  %v1233 = vadd.f32 0.0, %v1232
  %v1234 = vpop.f32.mrb[0].mxu0
  %v1235 = vpop.f32.mrb[0].mxu0
  %v1236 = vadd.f32 0.0, %v1235
  %v1237 = vpop.f32.mrb[0].mxu0
  %1238 = vdwg.mxu0
  %s1239 = scalar_lea.vmem %s23, 4
  %v1240 = vld [vmem:[%s1239] sm:$0xf]
  %v1241 = vpack.c.bf16 %v1220, %v1217
  %v1242 = vpack.c.bf16 %v1228, %v1225
  %v1243 = vpack.c.bf16 %v1236, %v1233
  %v1245 = vsel %vm531, %v1241, 0
  %v1248 = vsel %vm531, %v1242, 0
  %v1251 = vsel %vm531, %v1243, 0
  %vm1253 = vcmask 1043456
  %v1255 = vsel %vm1253, %v1240, 0
  %1257 = vmatprep.subr.bf16.mxu0 0
  %1258 = vmatpush1.bf16.msra.mxu0 %v1255
  %1259 = vmatprep.subr.bf16.mxu0 0
  %1260 = vmatpush1.bf16.msra.mxu0 0
  %1261 = vmatprep.subr.bf16.mxu0 0
  %1262 = vmatpush1.bf16.msra.mxu0 0
  %1263 = vmatprep.subr.bf16.mxu0 0
  %1264 = vmatpush1.bf16.msra.mxu0 0
  %1265 = vmatprep.subr.bf16.mxu0 0
  %1266 = vmatpush1.bf16.msra.mxu0 0
  %1267 = vmatprep.subr.bf16.mxu0 0
  %1268 = vmatpush1.bf16.msra.mxu0 0
  %1269 = vmatprep.subr.bf16.mxu0 0
  %1270 = vmatpush1.bf16.msra.mxu0 0
  %1271 = vmatprep.subr.bf16.mxu0 0
  %1272 = vmatpush1.bf16.msra.mxu0 0
  %1273 = vmatprep.subr.bf16.mxu0 0
  %1274 = vmatpush1.bf16.msra.mxu0 0
  %1275 = vmatprep.subr.bf16.mxu0 0
  %1276 = vmatpush1.bf16.msra.mxu0 0
  %1277 = vmatprep.subr.bf16.mxu0 0
  %1278 = vmatpush1.bf16.msra.mxu0 0
  %1279 = vmatprep.subr.bf16.mxu0 0
  %1280 = vmatpush1.bf16.msra.mxu0 0
  %1281 = vmatprep.subr.bf16.mxu0 0
  %1282 = vmatpush1.bf16.msra.mxu0 0
  %1283 = vmatprep.subr.bf16.mxu0 0
  %1284 = vmatpush1.bf16.msra.mxu0 0
  %1285 = vmatprep.subr.bf16.mxu0 0
  %1286 = vmatpush1.bf16.msra.mxu0 0
  %1287 = vmatprep.subr.bf16.mxu0 0
  %1288 = vmatpush1.bf16.msra.mxu0 0
  %1289 = vmatprep.mubr.bf16.mxu0 0
  %1290 = vmatmul.mubr.bf16.gmra.mrb[0].mxu0 %v1245
  %v1291 = vpop.f32.mrb[0].mxu0
  %v1292 = vadd.f32 0.0, %v1291
  %v1293 = vpop.f32.mrb[0].mxu0
  %v1294 = vpop.f32.mrb[0].mxu0
  %v1295 = vadd.f32 0.0, %v1294
  %v1296 = vpop.f32.mrb[0].mxu0
  %1297 = vmatprep.mubr.bf16.mxu0 0
  %1298 = vmatmul.mubr.bf16.gmra.mrb[0].mxu0 %v1248
  %v1299 = vpop.f32.mrb[0].mxu0
  %v1300 = vadd.f32 0.0, %v1299
  %v1301 = vpop.f32.mrb[0].mxu0
  %v1302 = vpop.f32.mrb[0].mxu0
  %v1303 = vadd.f32 0.0, %v1302
  %v1304 = vpop.f32.mrb[0].mxu0
  %1305 = vmatprep.mubr.bf16.mxu0 0
  %1306 = vmatmul.mubr.bf16.gmra.mrb[0].mxu0 %v1251
  %v1307 = vpop.f32.mrb[0].mxu0
  %v1308 = vadd.f32 0.0, %v1307
  %v1309 = vpop.f32.mrb[0].mxu0
  %v1310 = vpop.f32.mrb[0].mxu0
  %v1311 = vadd.f32 0.0, %v1310
  %v1312 = vpop.f32.mrb[0].mxu0
  %1313 = vdwg.mxu0
  %v1315 = vsel %vm531, %v759, 0
  %v1318 = vsel %vm531, %v760, 0
  %v1321 = vsel %vm531, %v761, 0
  %v1324 = vsel %vm1253, %v758, 0
  %1326 = vmatprep.subr.bf16.mxu0 0
  %1327 = vmatpush1.bf16.msra.mxu0 %v1324
  %1328 = vmatprep.subr.bf16.mxu0 0
  %1329 = vmatpush1.bf16.msra.mxu0 0
  %1330 = vmatprep.subr.bf16.mxu0 0
  %1331 = vmatpush1.bf16.msra.mxu0 0
  %1332 = vmatprep.subr.bf16.mxu0 0
  %1333 = vmatpush1.bf16.msra.mxu0 0
  %1334 = vmatprep.subr.bf16.mxu0 0
  %1335 = vmatpush1.bf16.msra.mxu0 0
  %1336 = vmatprep.subr.bf16.mxu0 0
  %1337 = vmatpush1.bf16.msra.mxu0 0
  %1338 = vmatprep.subr.bf16.mxu0 0
  %1339 = vmatpush1.bf16.msra.mxu0 0
  %1340 = vmatprep.subr.bf16.mxu0 0
  %1341 = vmatpush1.bf16.msra.mxu0 0
  %1342 = vmatprep.subr.bf16.mxu0 0
  %1343 = vmatpush1.bf16.msra.mxu0 0
  %1344 = vmatprep.subr.bf16.mxu0 0
  %1345 = vmatpush1.bf16.msra.mxu0 0
  %1346 = vmatprep.subr.bf16.mxu0 0
  %1347 = vmatpush1.bf16.msra.mxu0 0
  %1348 = vmatprep.subr.bf16.mxu0 0
  %1349 = vmatpush1.bf16.msra.mxu0 0
  %1350 = vmatprep.subr.bf16.mxu0 0
  %1351 = vmatpush1.bf16.msra.mxu0 0
  %1352 = vmatprep.subr.bf16.mxu0 0
  %1353 = vmatpush1.bf16.msra.mxu0 0
  %1354 = vmatprep.subr.bf16.mxu0 0
  %1355 = vmatpush1.bf16.msra.mxu0 0
  %1356 = vmatprep.subr.bf16.mxu0 0
  %1357 = vmatpush1.bf16.msra.mxu0 0
  %1358 = vmatprep.mubr.bf16.mxu0 0
  %1359 = vmatmul.mubr.bf16.gmra.mrb[0].mxu0 %v1315
  %v1360 = vpop.f32.mrb[0].mxu0
  %v1361 = vadd.f32 %v1292, %v1360
  %v1362 = vpop.f32.mrb[0].mxu0
  %v1363 = vpop.f32.mrb[0].mxu0
  %v1364 = vadd.f32 %v1295, %v1363
  %v1365 = vpop.f32.mrb[0].mxu0
  %1366 = vmatprep.mubr.bf16.mxu0 0
  %1367 = vmatmul.mubr.bf16.gmra.mrb[0].mxu0 %v1318
  %v1368 = vpop.f32.mrb[0].mxu0
  %v1369 = vadd.f32 %v1300, %v1368
  %v1370 = vpop.f32.mrb[0].mxu0
  %v1371 = vpop.f32.mrb[0].mxu0
  %v1372 = vadd.f32 %v1303, %v1371
  %v1373 = vpop.f32.mrb[0].mxu0
  %1374 = vmatprep.mubr.bf16.mxu0 0
  %1375 = vmatmul.mubr.bf16.gmra.mrb[0].mxu0 %v1321
  %v1376 = vpop.f32.mrb[0].mxu0
  %v1377 = vadd.f32 %v1308, %v1376
  %v1378 = vpop.f32.mrb[0].mxu0
  %v1379 = vpop.f32.mrb[0].mxu0
  %v1380 = vadd.f32 %v1311, %v1379
  %v1381 = vpop.f32.mrb[0].mxu0
  %1382 = vdwg.mxu0
  %s1383 = scalar_lea.vmem %s11, 32
  %v1384 = vld [vmem:[%s1383] sm:$0xf]
  %v1385 = vld [vmem:[%s1383 + $0x4] sm:$0xf]
  %v1386 = vld [vmem:[%s1383 + $0x8] sm:$0xf]
  %v1387 = vld [vmem:[%s1383 + $0xc] sm:$0xf]
  %s1388 = scalar_lea.vmem %s13, 2
  %v1389 = vld [vmem:[%s1388] sm:$0x1]
  %v1391 = vlaneseq
  %v1392 = vshrl.u32 %v1391, 7
  %v1393 = vsub.s32 0, %v1392
  %v1394 = vrot.slane %v1389, %v1393
  %v1400 = vunpack.c.l.b16 %v1384
  %v1401 = vunpack.c.l.b16 %v1385
  %v1402 = vunpack.c.l.b16 %v1386
  %v1403 = vunpack.c.l.b16 %v1387
  %v1404 = vpack.c.b16 %v1401, %v1400
  %v1405 = vpack.c.b16 %v1403, %v1402
  %1408 = vmatprep.subr.bf16.mxu0 0
  %1409 = vmatpush1.bf16.msra.mxu0 %v1404
  %1410 = vmatprep.subr.bf16.mxu0 0
  %1411 = vmatpush1.bf16.msra.mxu0 %v1405
  %1412 = vmatprep.subr.bf16.mxu0 0
  %1413 = vmatpush1.bf16.msra.mxu0 0
  %1414 = vmatprep.subr.bf16.mxu0 0
  %1415 = vmatpush1.bf16.msra.mxu0 0
  %1416 = vmatprep.subr.bf16.mxu0 0
  %1417 = vmatpush1.bf16.msra.mxu0 0
  %1418 = vmatprep.subr.bf16.mxu0 0
  %1419 = vmatpush1.bf16.msra.mxu0 0
  %1420 = vmatprep.subr.bf16.mxu0 0
  %1421 = vmatpush1.bf16.msra.mxu0 0
  %1422 = vmatprep.subr.bf16.mxu0 0
  %1423 = vmatpush1.bf16.msra.mxu0 0
  %1424 = vmatprep.subr.bf16.mxu0 0
  %1425 = vmatpush1.bf16.msra.mxu0 0
  %1426 = vmatprep.subr.bf16.mxu0 0
  %1427 = vmatpush1.bf16.msra.mxu0 0
  %1428 = vmatprep.subr.bf16.mxu0 0
  %1429 = vmatpush1.bf16.msra.mxu0 0
  %1430 = vmatprep.subr.bf16.mxu0 0
  %1431 = vmatpush1.bf16.msra.mxu0 0
  %1432 = vmatprep.subr.bf16.mxu0 0
  %1433 = vmatpush1.bf16.msra.mxu0 0
  %1434 = vmatprep.subr.bf16.mxu0 0
  %1435 = vmatpush1.bf16.msra.mxu0 0
  %1436 = vmatprep.subr.bf16.mxu0 0
  %1437 = vmatpush1.bf16.msra.mxu0 0
  %1438 = vmatprep.subr.bf16.mxu0 0
  %1439 = vmatpush1.bf16.msra.mxu0 0
  %1440 = vmatprep.mubr.bf16.mxu0 0
  %1441 = vmatmul.mubr.bf16.gmra.mrb[0].mxu0 %v300
  %v1442 = vpop.f32.mrb[0].mxu0
  %v1443 = vadd.f32 %v1394, %v1442
  %v1444 = vpop.f32.mrb[0].mxu0
  %v1445 = vpop.f32.mrb[0].mxu0
  %v1446 = vadd.f32 %v1394, %v1445
  %v1447 = vpop.f32.mrb[0].mxu0
  %1448 = vmatprep.mubr.bf16.mxu0 0
  %1449 = vmatmul.mubr.bf16.gmra.mrb[0].mxu0 %v303
  %v1450 = vpop.f32.mrb[0].mxu0
  %v1451 = vadd.f32 %v1394, %v1450
  %v1452 = vpop.f32.mrb[0].mxu0
  %v1453 = vpop.f32.mrb[0].mxu0
  %v1454 = vadd.f32 %v1394, %v1453
  %v1455 = vpop.f32.mrb[0].mxu0
  %1456 = vmatprep.mubr.bf16.mxu0 0
  %1457 = vmatmul.mubr.bf16.gmra.mrb[0].mxu0 %v306
  %v1458 = vpop.f32.mrb[0].mxu0
  %v1459 = vadd.f32 %v1394, %v1458
  %v1460 = vpop.f32.mrb[0].mxu0
  %v1461 = vpop.f32.mrb[0].mxu0
  %v1462 = vadd.f32 %v1394, %v1461
  %v1463 = vpop.f32.mrb[0].mxu0
  %1464 = vdwg.mxu0
  %s1465 = scalar_lea.vmem %s15, 32
  %v1466 = vld [vmem:[%s1465] sm:$0xf]
  %v1467 = vld [vmem:[%s1465 + $0x4] sm:$0xf]
  %v1468 = vld [vmem:[%s1465 + $0x8] sm:$0xf]
  %v1469 = vld [vmem:[%s1465 + $0xc] sm:$0xf]
  %s1470 = scalar_lea.vmem %s17, 2
  %v1471 = vld [vmem:[%s1470] sm:$0x1]
  %v1473 = vlaneseq
  %v1474 = vshrl.u32 %v1473, 7
  %v1475 = vsub.s32 0, %v1474
  %v1476 = vrot.slane %v1471, %v1475
  %v1482 = vunpack.c.l.b16 %v1466
  %v1483 = vunpack.c.l.b16 %v1467
  %v1484 = vunpack.c.l.b16 %v1468
  %v1485 = vunpack.c.l.b16 %v1469
  %v1486 = vpack.c.b16 %v1483, %v1482
  %v1487 = vpack.c.b16 %v1485, %v1484
  %1490 = vmatprep.subr.bf16.mxu0 0
  %1491 = vmatpush1.bf16.msra.mxu0 %v1486
  %1492 = vmatprep.subr.bf16.mxu0 0
  %1493 = vmatpush1.bf16.msra.mxu0 %v1487
  %1494 = vmatprep.subr.bf16.mxu0 0
  %1495 = vmatpush1.bf16.msra.mxu0 0
  %1496 = vmatprep.subr.bf16.mxu0 0
  %1497 = vmatpush1.bf16.msra.mxu0 0
  %1498 = vmatprep.subr.bf16.mxu0 0
  %1499 = vmatpush1.bf16.msra.mxu0 0
  %1500 = vmatprep.subr.bf16.mxu0 0
  %1501 = vmatpush1.bf16.msra.mxu0 0
  %1502 = vmatprep.subr.bf16.mxu0 0
  %1503 = vmatpush1.bf16.msra.mxu0 0
  %1504 = vmatprep.subr.bf16.mxu0 0
  %1505 = vmatpush1.bf16.msra.mxu0 0
  %1506 = vmatprep.subr.bf16.mxu0 0
  %1507 = vmatpush1.bf16.msra.mxu0 0
  %1508 = vmatprep.subr.bf16.mxu0 0
  %1509 = vmatpush1.bf16.msra.mxu0 0
  %1510 = vmatprep.subr.bf16.mxu0 0
  %1511 = vmatpush1.bf16.msra.mxu0 0
  %1512 = vmatprep.subr.bf16.mxu0 0
  %1513 = vmatpush1.bf16.msra.mxu0 0
  %1514 = vmatprep.subr.bf16.mxu0 0
  %1515 = vmatpush1.bf16.msra.mxu0 0
  %1516 = vmatprep.subr.bf16.mxu0 0
  %1517 = vmatpush1.bf16.msra.mxu0 0
  %1518 = vmatprep.subr.bf16.mxu0 0
  %1519 = vmatpush1.bf16.msra.mxu0 0
  %1520 = vmatprep.subr.bf16.mxu0 0
  %1521 = vmatpush1.bf16.msra.mxu0 0
  %1522 = vmatprep.mubr.bf16.mxu0 0
  %1523 = vmatmul.mubr.bf16.gmra.mrb[0].mxu0 %v300
  %v1524 = vpop.f32.mrb[0].mxu0
  %v1525 = vadd.f32 %v1476, %v1524
  %v1526 = vpop.f32.mrb[0].mxu0
  %v1527 = vpop.f32.mrb[0].mxu0
  %v1528 = vadd.f32 %v1476, %v1527
  %v1529 = vpop.f32.mrb[0].mxu0
  %1530 = vmatprep.mubr.bf16.mxu0 0
  %1531 = vmatmul.mubr.bf16.gmra.mrb[0].mxu0 %v303
  %v1532 = vpop.f32.mrb[0].mxu0
  %v1533 = vadd.f32 %v1476, %v1532
  %v1534 = vpop.f32.mrb[0].mxu0
  %v1535 = vpop.f32.mrb[0].mxu0
  %v1536 = vadd.f32 %v1476, %v1535
  %v1537 = vpop.f32.mrb[0].mxu0
  %1538 = vmatprep.mubr.bf16.mxu0 0
  %1539 = vmatmul.mubr.bf16.gmra.mrb[0].mxu0 %v306
  %v1540 = vpop.f32.mrb[0].mxu0
  %v1541 = vadd.f32 %v1476, %v1540
  %v1542 = vpop.f32.mrb[0].mxu0
  %v1543 = vpop.f32.mrb[0].mxu0
  %v1544 = vadd.f32 %v1476, %v1543
  %v1545 = vpop.f32.mrb[0].mxu0
  %1546 = vdwg.mxu0
  %s1547 = scalar_lea.vmem %s19, 32
  %v1548 = vld [vmem:[%s1547] sm:$0xf]
  %v1549 = vld [vmem:[%s1547 + $0x4] sm:$0xf]
  %v1550 = vld [vmem:[%s1547 + $0x8] sm:$0xf]
  %v1551 = vld [vmem:[%s1547 + $0xc] sm:$0xf]
  %s1552 = scalar_lea.vmem %s21, 2
  %v1553 = vld [vmem:[%s1552] sm:$0x1]
  %v1555 = vlaneseq
  %v1556 = vshrl.u32 %v1555, 7
  %v1557 = vsub.s32 0, %v1556
  %v1558 = vrot.slane %v1553, %v1557
  %v1564 = vunpack.c.l.b16 %v1548
  %v1565 = vunpack.c.l.b16 %v1549
  %v1566 = vunpack.c.l.b16 %v1550
  %v1567 = vunpack.c.l.b16 %v1551
  %v1568 = vpack.c.b16 %v1565, %v1564
  %v1569 = vpack.c.b16 %v1567, %v1566
  %1572 = vmatprep.subr.bf16.mxu0 0
  %1573 = vmatpush1.bf16.msra.mxu0 %v1568
  %1574 = vmatprep.subr.bf16.mxu0 0
  %1575 = vmatpush1.bf16.msra.mxu0 %v1569
  %1576 = vmatprep.subr.bf16.mxu0 0
  %1577 = vmatpush1.bf16.msra.mxu0 0
  %1578 = vmatprep.subr.bf16.mxu0 0
  %1579 = vmatpush1.bf16.msra.mxu0 0
  %1580 = vmatprep.subr.bf16.mxu0 0
  %1581 = vmatpush1.bf16.msra.mxu0 0
  %1582 = vmatprep.subr.bf16.mxu0 0
  %1583 = vmatpush1.bf16.msra.mxu0 0
  %1584 = vmatprep.subr.bf16.mxu0 0
  %1585 = vmatpush1.bf16.msra.mxu0 0
  %1586 = vmatprep.subr.bf16.mxu0 0
  %1587 = vmatpush1.bf16.msra.mxu0 0
  %1588 = vmatprep.subr.bf16.mxu0 0
  %1589 = vmatpush1.bf16.msra.mxu0 0
  %1590 = vmatprep.subr.bf16.mxu0 0
  %1591 = vmatpush1.bf16.msra.mxu0 0
  %1592 = vmatprep.subr.bf16.mxu0 0
  %1593 = vmatpush1.bf16.msra.mxu0 0
  %1594 = vmatprep.subr.bf16.mxu0 0
  %1595 = vmatpush1.bf16.msra.mxu0 0
  %1596 = vmatprep.subr.bf16.mxu0 0
  %1597 = vmatpush1.bf16.msra.mxu0 0
  %1598 = vmatprep.subr.bf16.mxu0 0
  %1599 = vmatpush1.bf16.msra.mxu0 0
  %1600 = vmatprep.subr.bf16.mxu0 0
  %1601 = vmatpush1.bf16.msra.mxu0 0
  %1602 = vmatprep.subr.bf16.mxu0 0
  %1603 = vmatpush1.bf16.msra.mxu0 0
  %1604 = vmatprep.mubr.bf16.mxu0 0
  %1605 = vmatmul.mubr.bf16.gmra.mrb[0].mxu0 %v300
  %v1606 = vpop.f32.mrb[0].mxu0
  %v1607 = vadd.f32 %v1558, %v1606
  %v1608 = vpop.f32.mrb[0].mxu0
  %v1609 = vpop.f32.mrb[0].mxu0
  %v1610 = vadd.f32 %v1558, %v1609
  %v1611 = vpop.f32.mrb[0].mxu0
  %1612 = vmatprep.mubr.bf16.mxu0 0
  %1613 = vmatmul.mubr.bf16.gmra.mrb[0].mxu0 %v303
  %v1614 = vpop.f32.mrb[0].mxu0
  %v1615 = vadd.f32 %v1558, %v1614
  %v1616 = vpop.f32.mrb[0].mxu0
  %v1617 = vpop.f32.mrb[0].mxu0
  %v1618 = vadd.f32 %v1558, %v1617
  %v1619 = vpop.f32.mrb[0].mxu0
  %1620 = vmatprep.mubr.bf16.mxu0 0
  %1621 = vmatmul.mubr.bf16.gmra.mrb[0].mxu0 %v306
  %v1622 = vpop.f32.mrb[0].mxu0
  %v1623 = vadd.f32 %v1558, %v1622
  %v1624 = vpop.f32.mrb[0].mxu0
  %v1625 = vpop.f32.mrb[0].mxu0
  %v1626 = vadd.f32 %v1558, %v1625
  %v1627 = vpop.f32.mrb[0].mxu0
  %1628 = vdwg.mxu0
  %v1629 = vpack.c.bf16 %v1446, %v1443
  %v1630 = vpack.c.bf16 %v1454, %v1451
  %v1631 = vpack.c.bf16 %v1462, %v1459
  %v1632 = vpack.c.bf16 %v1528, %v1525
  %v1633 = vpack.c.bf16 %v1536, %v1533
  %v1634 = vpack.c.bf16 %v1544, %v1541
  %v1636 = vsel %vm531, %v1629, 0
  %v1639 = vsel %vm531, %v1630, 0
  %v1642 = vsel %vm531, %v1631, 0
  %v1645 = vsel %vm531, %v1632, 0
  %v1648 = vsel %vm531, %v1633, 0
  %v1651 = vsel %vm531, %v1634, 0
  %1653 = vmatprep.subr.bf16.mxu0 0
  %1654 = vmatpush1.bf16.xpose.msra.mxu0 %v1645
  %1655 = vmatprep.subr.bf16.mxu0 0
  %1656 = vmatpush1.bf16.xpose.msra.mxu0 %v1648
  %1657 = vmatprep.subr.bf16.mxu0 0
  %1658 = vmatpush1.bf16.xpose.msra.mxu0 %v1651
  %1659 = vmatprep.subr.bf16.mxu0 0
  %1660 = vmatpush1.bf16.xpose.msra.mxu0 0
  %1661 = vmatprep.subr.bf16.mxu0 0
  %1662 = vmatpush1.bf16.xpose.msra.mxu0 0
  %1663 = vmatprep.subr.bf16.mxu0 0
  %1664 = vmatpush1.bf16.xpose.msra.mxu0 0
  %1665 = vmatprep.subr.bf16.mxu0 0
  %1666 = vmatpush1.bf16.xpose.msra.mxu0 0
  %1667 = vmatprep.subr.bf16.mxu0 0
  %1668 = vmatpush1.bf16.xpose.msra.mxu0 0
  %1669 = vmatprep.subr.bf16.mxu0 0
  %1670 = vmatpush1.bf16.xpose.msra.mxu0 0
  %1671 = vmatprep.subr.bf16.mxu0 0
  %1672 = vmatpush1.bf16.xpose.msra.mxu0 0
  %1673 = vmatprep.subr.bf16.mxu0 0
  %1674 = vmatpush1.bf16.xpose.msra.mxu0 0
  %1675 = vmatprep.subr.bf16.mxu0 0
  %1676 = vmatpush1.bf16.xpose.msra.mxu0 0
  %1677 = vmatprep.subr.bf16.mxu0 0
  %1678 = vmatpush1.bf16.xpose.msra.mxu0 0
  %1679 = vmatprep.subr.bf16.mxu0 0
  %1680 = vmatpush1.bf16.xpose.msra.mxu0 0
  %1681 = vmatprep.subr.bf16.mxu0 0
  %1682 = vmatpush1.bf16.xpose.msra.mxu0 0
  %1683 = vmatprep.subr.bf16.mxu0 0
  %1684 = vmatpush1.bf16.xpose.msra.mxu0 0
  %1685 = vmatprep.mubr.bf16.mxu0 0
  %1686 = vmatmul.mubr.bf16.gmra.mrb[0].mxu0 %v1636
  %v1687 = vpop.f32.mrb[0].mxu0
  %v1688 = vadd.f32 0.0, %v1687
  %v1689 = vpop.f32.mrb[0].mxu0
  %v1690 = vpop.f32.mrb[0].mxu0
  %v1691 = vadd.f32 0.0, %v1690
  %v1692 = vpop.f32.mrb[0].mxu0
  %1693 = vmatprep.mubr.bf16.mxu0 0
  %1694 = vmatmul.mubr.bf16.gmra.mrb[0].mxu0 %v1639
  %v1695 = vpop.f32.mrb[0].mxu0
  %v1696 = vadd.f32 0.0, %v1695
  %v1697 = vpop.f32.mrb[0].mxu0
  %v1698 = vpop.f32.mrb[0].mxu0
  %v1699 = vadd.f32 0.0, %v1698
  %v1700 = vpop.f32.mrb[0].mxu0
  %1701 = vmatprep.mubr.bf16.mxu0 0
  %1702 = vmatmul.mubr.bf16.gmra.mrb[0].mxu0 %v1642
  %v1703 = vpop.f32.mrb[0].mxu0
  %v1704 = vadd.f32 0.0, %v1703
  %v1705 = vpop.f32.mrb[0].mxu0
  %v1706 = vpop.f32.mrb[0].mxu0
  %v1707 = vadd.f32 0.0, %v1706
  %v1708 = vpop.f32.mrb[0].mxu0
  %1709 = vdwg.mxu0
  %v1710 = vmul.f32 %v1688, 0.35355338
  %v1711 = vmul.f32 %v1691, 0.35355338
  %v1712 = vmul.f32 %v1696, 0.35355338
  %v1713 = vmul.f32 %v1699, 0.35355338
  %v1714 = vmul.f32 %v1704, 0.35355338
  %v1715 = vmul.f32 %v1707, 0.35355338
  %v1716 = vadd.f32 %v1710, %v161
  %v1717 = vadd.f32 %v1711, %v162
  %v1718 = vadd.f32 %v1712, %v163
  %v1719 = vadd.f32 %v1713, %v164
  %v1720 = vadd.f32 %v1714, %v165
  %v1721 = vadd.f32 %v1715, %v166
  %v1722 = vsel %vm619, %v1716, -inf
  %1723 = vmax.xlane.f32.xlu0 %v1722
  %v1724 = vpop.xlane.xlu0 %1723
  %v1725 = vsel %vm619, %v1717, -inf
  %1726 = vmax.xlane.f32.xlu0 %v1725
  %v1727 = vpop.xlane.xlu0 %1726
  %v1728 = vsel %vm619, %v1718, -inf
  %1729 = vmax.xlane.f32.xlu0 %v1728
  %v1730 = vpop.xlane.xlu0 %1729
  %v1731 = vsel %vm619, %v1719, -inf
  %1732 = vmax.xlane.f32.xlu0 %v1731
  %v1733 = vpop.xlane.xlu0 %1732
  %v1734 = vsel %vm619, %v1720, -inf
  %1735 = vmax.xlane.f32.xlu0 %v1734
  %v1736 = vpop.xlane.xlu0 %1735
  %v1737 = vsel %vm619, %v1721, -inf
  %1738 = vmax.xlane.f32.xlu0 %v1737
  %v1739 = vpop.xlane.xlu0 %1738
  %v1740 = vsub.f32 %v1716, %v1724
  %v1741 = vsub.f32 %v1717, %v1727
  %v1742 = vsub.f32 %v1718, %v1730
  %v1743 = vsub.f32 %v1719, %v1733
  %v1744 = vsub.f32 %v1720, %v1736
  %v1745 = vsub.f32 %v1721, %v1739
  %v1746 = vmul.f32 %v1740, 1.442695
  %v1747 = vpow.pop %v1746
  %v1748 = vmul.f32 %v1741, 1.442695
  %v1749 = vpow.pop %v1748
  %v1750 = vmul.f32 %v1742, 1.442695
  %v1751 = vpow.pop %v1750
  %v1752 = vmul.f32 %v1743, 1.442695
  %v1753 = vpow.pop %v1752
  %v1754 = vmul.f32 %v1744, 1.442695
  %v1755 = vpow.pop %v1754
  %v1756 = vmul.f32 %v1745, 1.442695
  %v1757 = vpow.pop %v1756
  %v1758 = vsel %vm619, %v1747, 0.0
  %1759 = vadd.xlane.f32.xlu0 %v1758
  %v1760 = vpop.xlane.xlu0 %1759
  %v1761 = vsel %vm619, %v1749, 0.0
  %1762 = vadd.xlane.f32.xlu0 %v1761
  %v1763 = vpop.xlane.xlu0 %1762
  %v1764 = vsel %vm619, %v1751, 0.0
  %1765 = vadd.xlane.f32.xlu0 %v1764
  %v1766 = vpop.xlane.xlu0 %1765
  %v1767 = vsel %vm619, %v1753, 0.0
  %1768 = vadd.xlane.f32.xlu0 %v1767
  %v1769 = vpop.xlane.xlu0 %1768
  %v1770 = vsel %vm619, %v1755, 0.0
  %1771 = vadd.xlane.f32.xlu0 %v1770
  %v1772 = vpop.xlane.xlu0 %1771
  %v1773 = vsel %vm619, %v1757, 0.0
  %1774 = vadd.xlane.f32.xlu0 %v1773
  %v1775 = vpop.xlane.xlu0 %1774
  %v1776 = vrcp.pop %v1760
  %v1777 = vrcp.pop %v1763
  %v1778 = vrcp.pop %v1766
  %v1779 = vrcp.pop %v1769
  %v1780 = vrcp.pop %v1772
  %v1781 = vrcp.pop %v1775
  %v1782 = vmul.f32 %v1747, %v1776
  %v1783 = vmul.f32 %v1749, %v1777
  %v1784 = vmul.f32 %v1751, %v1778
  %v1785 = vmul.f32 %v1753, %v1779
  %v1786 = vmul.f32 %v1755, %v1780
  %v1787 = vmul.f32 %v1757, %v1781
  %v1788 = vpack.c.bf16 %v1783, %v1782
  %v1789 = vpack.c.bf16 %v1785, %v1784
  %v1790 = vpack.c.bf16 %v1787, %v1786
  %v1791 = vpack.c.bf16 %v1610, %v1607
  %v1792 = vpack.c.bf16 %v1618, %v1615
  %v1793 = vpack.c.bf16 %v1626, %v1623
  %v1795 = vsel %vm619, %v1788, 0
  %v1798 = vsel %vm619, %v1789, 0
  %v1801 = vsel %vm619, %v1790, 0
  %1803 = vmatprep.subr.bf16.mxu0 0
  %1804 = vmatpush1.bf16.msra.mxu0 %v1791
  %1805 = vmatprep.subr.bf16.mxu0 0
  %1806 = vmatpush1.bf16.msra.mxu0 %v1792
  %1807 = vmatprep.subr.bf16.mxu0 0
  %1808 = vmatpush1.bf16.msra.mxu0 %v1793
  %1809 = vmatprep.subr.bf16.mxu0 0
  %1810 = vmatpush1.bf16.msra.mxu0 0
  %1811 = vmatprep.subr.bf16.mxu0 0
  %1812 = vmatpush1.bf16.msra.mxu0 0
  %1813 = vmatprep.subr.bf16.mxu0 0
  %1814 = vmatpush1.bf16.msra.mxu0 0
  %1815 = vmatprep.subr.bf16.mxu0 0
  %1816 = vmatpush1.bf16.msra.mxu0 0
  %1817 = vmatprep.subr.bf16.mxu0 0
  %1818 = vmatpush1.bf16.msra.mxu0 0
  %1819 = vmatprep.subr.bf16.mxu0 0
  %1820 = vmatpush1.bf16.msra.mxu0 0
  %1821 = vmatprep.subr.bf16.mxu0 0
  %1822 = vmatpush1.bf16.msra.mxu0 0
  %1823 = vmatprep.subr.bf16.mxu0 0
  %1824 = vmatpush1.bf16.msra.mxu0 0
  %1825 = vmatprep.subr.bf16.mxu0 0
  %1826 = vmatpush1.bf16.msra.mxu0 0
  %1827 = vmatprep.subr.bf16.mxu0 0
  %1828 = vmatpush1.bf16.msra.mxu0 0
  %1829 = vmatprep.subr.bf16.mxu0 0
  %1830 = vmatpush1.bf16.msra.mxu0 0
  %1831 = vmatprep.subr.bf16.mxu0 0
  %1832 = vmatpush1.bf16.msra.mxu0 0
  %1833 = vmatprep.subr.bf16.mxu0 0
  %1834 = vmatpush1.bf16.msra.mxu0 0
  %1835 = vmatprep.mubr.bf16.mxu0 0
  %1836 = vmatmul.mubr.bf16.gmra.mrb[0].mxu0 %v1795
  %v1837 = vpop.f32.mrb[0].mxu0
  %v1838 = vadd.f32 0.0, %v1837
  %v1839 = vpop.f32.mrb[0].mxu0
  %v1840 = vpop.f32.mrb[0].mxu0
  %v1841 = vadd.f32 0.0, %v1840
  %v1842 = vpop.f32.mrb[0].mxu0
  %1843 = vmatprep.mubr.bf16.mxu0 0
  %1844 = vmatmul.mubr.bf16.gmra.mrb[0].mxu0 %v1798
  %v1845 = vpop.f32.mrb[0].mxu0
  %v1846 = vadd.f32 0.0, %v1845
  %v1847 = vpop.f32.mrb[0].mxu0
  %v1848 = vpop.f32.mrb[0].mxu0
  %v1849 = vadd.f32 0.0, %v1848
  %v1850 = vpop.f32.mrb[0].mxu0
  %1851 = vmatprep.mubr.bf16.mxu0 0
  %1852 = vmatmul.mubr.bf16.gmra.mrb[0].mxu0 %v1801
  %v1853 = vpop.f32.mrb[0].mxu0
  %v1854 = vadd.f32 0.0, %v1853
  %v1855 = vpop.f32.mrb[0].mxu0
  %v1856 = vpop.f32.mrb[0].mxu0
  %v1857 = vadd.f32 0.0, %v1856
  %v1858 = vpop.f32.mrb[0].mxu0
  %1859 = vdwg.mxu0
  %s1860 = scalar_lea.vmem %s23, 8
  %v1861 = vld [vmem:[%s1860] sm:$0xf]
  %v1862 = vpack.c.bf16 %v1841, %v1838
  %v1863 = vpack.c.bf16 %v1849, %v1846
  %v1864 = vpack.c.bf16 %v1857, %v1854
  %v1866 = vsel %vm531, %v1862, 0
  %v1869 = vsel %vm531, %v1863, 0
  %v1872 = vsel %vm531, %v1864, 0
  %v1875 = vsel %vm1253, %v1861, 0
  %1877 = vmatprep.subr.bf16.mxu0 0
  %1878 = vmatpush1.bf16.msra.mxu0 %v1875
  %1879 = vmatprep.subr.bf16.mxu0 0
  %1880 = vmatpush1.bf16.msra.mxu0 0
  %1881 = vmatprep.subr.bf16.mxu0 0
  %1882 = vmatpush1.bf16.msra.mxu0 0
  %1883 = vmatprep.subr.bf16.mxu0 0
  %1884 = vmatpush1.bf16.msra.mxu0 0
  %1885 = vmatprep.subr.bf16.mxu0 0
  %1886 = vmatpush1.bf16.msra.mxu0 0
  %1887 = vmatprep.subr.bf16.mxu0 0
  %1888 = vmatpush1.bf16.msra.mxu0 0
  %1889 = vmatprep.subr.bf16.mxu0 0
  %1890 = vmatpush1.bf16.msra.mxu0 0
  %1891 = vmatprep.subr.bf16.mxu0 0
  %1892 = vmatpush1.bf16.msra.mxu0 0
  %1893 = vmatprep.subr.bf16.mxu0 0
  %1894 = vmatpush1.bf16.msra.mxu0 0
  %1895 = vmatprep.subr.bf16.mxu0 0
  %1896 = vmatpush1.bf16.msra.mxu0 0
  %1897 = vmatprep.subr.bf16.mxu0 0
  %1898 = vmatpush1.bf16.msra.mxu0 0
  %1899 = vmatprep.subr.bf16.mxu0 0
  %1900 = vmatpush1.bf16.msra.mxu0 0
  %1901 = vmatprep.subr.bf16.mxu0 0
  %1902 = vmatpush1.bf16.msra.mxu0 0
  %1903 = vmatprep.subr.bf16.mxu0 0
  %1904 = vmatpush1.bf16.msra.mxu0 0
  %1905 = vmatprep.subr.bf16.mxu0 0
  %1906 = vmatpush1.bf16.msra.mxu0 0
  %1907 = vmatprep.subr.bf16.mxu0 0
  %1908 = vmatpush1.bf16.msra.mxu0 0
  %1909 = vmatprep.mubr.bf16.mxu0 0
  %1910 = vmatmul.mubr.bf16.gmra.mrb[0].mxu0 %v1866
  %v1911 = vpop.f32.mrb[0].mxu0
  %v1912 = vadd.f32 0.0, %v1911
  %v1913 = vpop.f32.mrb[0].mxu0
  %v1914 = vpop.f32.mrb[0].mxu0
  %v1915 = vadd.f32 0.0, %v1914
  %v1916 = vpop.f32.mrb[0].mxu0
  %1917 = vmatprep.mubr.bf16.mxu0 0
  %1918 = vmatmul.mubr.bf16.gmra.mrb[0].mxu0 %v1869
  %v1919 = vpop.f32.mrb[0].mxu0
  %v1920 = vadd.f32 0.0, %v1919
  %v1921 = vpop.f32.mrb[0].mxu0
  %v1922 = vpop.f32.mrb[0].mxu0
  %v1923 = vadd.f32 0.0, %v1922
  %v1924 = vpop.f32.mrb[0].mxu0
  %1925 = vmatprep.mubr.bf16.mxu0 0
  %1926 = vmatmul.mubr.bf16.gmra.mrb[0].mxu0 %v1872
  %v1927 = vpop.f32.mrb[0].mxu0
  %v1928 = vadd.f32 0.0, %v1927
  %v1929 = vpop.f32.mrb[0].mxu0
  %v1930 = vpop.f32.mrb[0].mxu0
  %v1931 = vadd.f32 0.0, %v1930
  %v1932 = vpop.f32.mrb[0].mxu0
  %1933 = vdwg.mxu0
  %v1934 = vadd.f32 %v1361, %v1912
  %v1935 = vadd.f32 %v1364, %v1915
  %v1936 = vadd.f32 %v1369, %v1920
  %v1937 = vadd.f32 %v1372, %v1923
  %v1938 = vadd.f32 %v1377, %v1928
  %v1939 = vadd.f32 %v1380, %v1931
  %s1940 = scalar_lea.vmem %s11, 48
  %v1941 = vld [vmem:[%s1940] sm:$0xf]
  %v1942 = vld [vmem:[%s1940 + $0x4] sm:$0xf]
  %v1943 = vld [vmem:[%s1940 + $0x8] sm:$0xf]
  %v1944 = vld [vmem:[%s1940 + $0xc] sm:$0xf]
  %s1945 = scalar_lea.vmem %s13, 3
  %v1946 = vld [vmem:[%s1945] sm:$0x1]
  %v1948 = vlaneseq
  %v1949 = vshrl.u32 %v1948, 7
  %v1950 = vsub.s32 0, %v1949
  %v1951 = vrot.slane %v1946, %v1950
  %v1957 = vunpack.c.l.b16 %v1941
  %v1958 = vunpack.c.l.b16 %v1942
  %v1959 = vunpack.c.l.b16 %v1943
  %v1960 = vunpack.c.l.b16 %v1944
  %v1961 = vpack.c.b16 %v1958, %v1957
  %v1962 = vpack.c.b16 %v1960, %v1959
  %1965 = vmatprep.subr.bf16.mxu0 0
  %1966 = vmatpush1.bf16.msra.mxu0 %v1961
  %1967 = vmatprep.subr.bf16.mxu0 0
  %1968 = vmatpush1.bf16.msra.mxu0 %v1962
  %1969 = vmatprep.subr.bf16.mxu0 0
  %1970 = vmatpush1.bf16.msra.mxu0 0
  %1971 = vmatprep.subr.bf16.mxu0 0
  %1972 = vmatpush1.bf16.msra.mxu0 0
  %1973 = vmatprep.subr.bf16.mxu0 0
  %1974 = vmatpush1.bf16.msra.mxu0 0
  %1975 = vmatprep.subr.bf16.mxu0 0
  %1976 = vmatpush1.bf16.msra.mxu0 0
  %1977 = vmatprep.subr.bf16.mxu0 0
  %1978 = vmatpush1.bf16.msra.mxu0 0
  %1979 = vmatprep.subr.bf16.mxu0 0
  %1980 = vmatpush1.bf16.msra.mxu0 0
  %1981 = vmatprep.subr.bf16.mxu0 0
  %1982 = vmatpush1.bf16.msra.mxu0 0
  %1983 = vmatprep.subr.bf16.mxu0 0
  %1984 = vmatpush1.bf16.msra.mxu0 0
  %1985 = vmatprep.subr.bf16.mxu0 0
  %1986 = vmatpush1.bf16.msra.mxu0 0
  %1987 = vmatprep.subr.bf16.mxu0 0
  %1988 = vmatpush1.bf16.msra.mxu0 0
  %1989 = vmatprep.subr.bf16.mxu0 0
  %1990 = vmatpush1.bf16.msra.mxu0 0
  %1991 = vmatprep.subr.bf16.mxu0 0
  %1992 = vmatpush1.bf16.msra.mxu0 0
  %1993 = vmatprep.subr.bf16.mxu0 0
  %1994 = vmatpush1.bf16.msra.mxu0 0
  %1995 = vmatprep.subr.bf16.mxu0 0
  %1996 = vmatpush1.bf16.msra.mxu0 0
  %1997 = vmatprep.mubr.bf16.mxu0 0
  %1998 = vmatmul.mubr.bf16.gmra.mrb[0].mxu0 %v300
  %v1999 = vpop.f32.mrb[0].mxu0
  %v2000 = vadd.f32 %v1951, %v1999
  %v2001 = vpop.f32.mrb[0].mxu0
  %v2002 = vpop.f32.mrb[0].mxu0
  %v2003 = vadd.f32 %v1951, %v2002
  %v2004 = vpop.f32.mrb[0].mxu0
  %2005 = vmatprep.mubr.bf16.mxu0 0
  %2006 = vmatmul.mubr.bf16.gmra.mrb[0].mxu0 %v303
  %v2007 = vpop.f32.mrb[0].mxu0
  %v2008 = vadd.f32 %v1951, %v2007
  %v2009 = vpop.f32.mrb[0].mxu0
  %v2010 = vpop.f32.mrb[0].mxu0
  %v2011 = vadd.f32 %v1951, %v2010
  %v2012 = vpop.f32.mrb[0].mxu0
  %2013 = vmatprep.mubr.bf16.mxu0 0
  %2014 = vmatmul.mubr.bf16.gmra.mrb[0].mxu0 %v306
  %v2015 = vpop.f32.mrb[0].mxu0
  %v2016 = vadd.f32 %v1951, %v2015
  %v2017 = vpop.f32.mrb[0].mxu0
  %v2018 = vpop.f32.mrb[0].mxu0
  %v2019 = vadd.f32 %v1951, %v2018
  %v2020 = vpop.f32.mrb[0].mxu0
  %2021 = vdwg.mxu0
  %s2022 = scalar_lea.vmem %s15, 48
  %v2023 = vld [vmem:[%s2022] sm:$0xf]
  %v2024 = vld [vmem:[%s2022 + $0x4] sm:$0xf]
  %v2025 = vld [vmem:[%s2022 + $0x8] sm:$0xf]
  %v2026 = vld [vmem:[%s2022 + $0xc] sm:$0xf]
  %s2027 = scalar_lea.vmem %s17, 3
  %v2028 = vld [vmem:[%s2027] sm:$0x1]
  %v2030 = vlaneseq
  %v2031 = vshrl.u32 %v2030, 7
  %v2032 = vsub.s32 0, %v2031
  %v2033 = vrot.slane %v2028, %v2032
  %v2039 = vunpack.c.l.b16 %v2023
  %v2040 = vunpack.c.l.b16 %v2024
  %v2041 = vunpack.c.l.b16 %v2025
  %v2042 = vunpack.c.l.b16 %v2026
  %v2043 = vpack.c.b16 %v2040, %v2039
  %v2044 = vpack.c.b16 %v2042, %v2041
  %2047 = vmatprep.subr.bf16.mxu0 0
  %2048 = vmatpush1.bf16.msra.mxu0 %v2043
  %2049 = vmatprep.subr.bf16.mxu0 0
  %2050 = vmatpush1.bf16.msra.mxu0 %v2044
  %2051 = vmatprep.subr.bf16.mxu0 0
  %2052 = vmatpush1.bf16.msra.mxu0 0
  %2053 = vmatprep.subr.bf16.mxu0 0
  %2054 = vmatpush1.bf16.msra.mxu0 0
  %2055 = vmatprep.subr.bf16.mxu0 0
  %2056 = vmatpush1.bf16.msra.mxu0 0
  %2057 = vmatprep.subr.bf16.mxu0 0
  %2058 = vmatpush1.bf16.msra.mxu0 0
  %2059 = vmatprep.subr.bf16.mxu0 0
  %2060 = vmatpush1.bf16.msra.mxu0 0
  %2061 = vmatprep.subr.bf16.mxu0 0
  %2062 = vmatpush1.bf16.msra.mxu0 0
  %2063 = vmatprep.subr.bf16.mxu0 0
  %2064 = vmatpush1.bf16.msra.mxu0 0
  %2065 = vmatprep.subr.bf16.mxu0 0
  %2066 = vmatpush1.bf16.msra.mxu0 0
  %2067 = vmatprep.subr.bf16.mxu0 0
  %2068 = vmatpush1.bf16.msra.mxu0 0
  %2069 = vmatprep.subr.bf16.mxu0 0
  %2070 = vmatpush1.bf16.msra.mxu0 0
  %2071 = vmatprep.subr.bf16.mxu0 0
  %2072 = vmatpush1.bf16.msra.mxu0 0
  %2073 = vmatprep.subr.bf16.mxu0 0
  %2074 = vmatpush1.bf16.msra.mxu0 0
  %2075 = vmatprep.subr.bf16.mxu0 0
  %2076 = vmatpush1.bf16.msra.mxu0 0
  %2077 = vmatprep.subr.bf16.mxu0 0
  %2078 = vmatpush1.bf16.msra.mxu0 0
  %2079 = vmatprep.mubr.bf16.mxu0 0
  %2080 = vmatmul.mubr.bf16.gmra.mrb[0].mxu0 %v300
  %v2081 = vpop.f32.mrb[0].mxu0
  %v2082 = vadd.f32 %v2033, %v2081
  %v2083 = vpop.f32.mrb[0].mxu0
  %v2084 = vpop.f32.mrb[0].mxu0
  %v2085 = vadd.f32 %v2033, %v2084
  %v2086 = vpop.f32.mrb[0].mxu0
  %2087 = vmatprep.mubr.bf16.mxu0 0
  %2088 = vmatmul.mubr.bf16.gmra.mrb[0].mxu0 %v303
  %v2089 = vpop.f32.mrb[0].mxu0
  %v2090 = vadd.f32 %v2033, %v2089
  %v2091 = vpop.f32.mrb[0].mxu0
  %v2092 = vpop.f32.mrb[0].mxu0
  %v2093 = vadd.f32 %v2033, %v2092
  %v2094 = vpop.f32.mrb[0].mxu0
  %2095 = vmatprep.mubr.bf16.mxu0 0
  %2096 = vmatmul.mubr.bf16.gmra.mrb[0].mxu0 %v306
  %v2097 = vpop.f32.mrb[0].mxu0
  %v2098 = vadd.f32 %v2033, %v2097
  %v2099 = vpop.f32.mrb[0].mxu0
  %v2100 = vpop.f32.mrb[0].mxu0
  %v2101 = vadd.f32 %v2033, %v2100
  %v2102 = vpop.f32.mrb[0].mxu0
  %2103 = vdwg.mxu0
  %s2104 = scalar_lea.vmem %s19, 48
  %v2105 = vld [vmem:[%s2104] sm:$0xf]
  %v2106 = vld [vmem:[%s2104 + $0x4] sm:$0xf]
  %v2107 = vld [vmem:[%s2104 + $0x8] sm:$0xf]
  %v2108 = vld [vmem:[%s2104 + $0xc] sm:$0xf]
  %s2109 = scalar_lea.vmem %s21, 3
  %v2110 = vld [vmem:[%s2109] sm:$0x1]
  %v2112 = vlaneseq
  %v2113 = vshrl.u32 %v2112, 7
  %v2114 = vsub.s32 0, %v2113
  %v2115 = vrot.slane %v2110, %v2114
  %v2121 = vunpack.c.l.b16 %v2105
  %v2122 = vunpack.c.l.b16 %v2106
  %v2123 = vunpack.c.l.b16 %v2107
  %v2124 = vunpack.c.l.b16 %v2108
  %v2125 = vpack.c.b16 %v2122, %v2121
  %v2126 = vpack.c.b16 %v2124, %v2123
  %2129 = vmatprep.subr.bf16.mxu0 0
  %2130 = vmatpush1.bf16.msra.mxu0 %v2125
  %2131 = vmatprep.subr.bf16.mxu0 0
  %2132 = vmatpush1.bf16.msra.mxu0 %v2126
  %2133 = vmatprep.subr.bf16.mxu0 0
  %2134 = vmatpush1.bf16.msra.mxu0 0
  %2135 = vmatprep.subr.bf16.mxu0 0
  %2136 = vmatpush1.bf16.msra.mxu0 0
  %2137 = vmatprep.subr.bf16.mxu0 0
  %2138 = vmatpush1.bf16.msra.mxu0 0
  %2139 = vmatprep.subr.bf16.mxu0 0
  %2140 = vmatpush1.bf16.msra.mxu0 0
  %2141 = vmatprep.subr.bf16.mxu0 0
  %2142 = vmatpush1.bf16.msra.mxu0 0
  %2143 = vmatprep.subr.bf16.mxu0 0
  %2144 = vmatpush1.bf16.msra.mxu0 0
  %2145 = vmatprep.subr.bf16.mxu0 0
  %2146 = vmatpush1.bf16.msra.mxu0 0
  %2147 = vmatprep.subr.bf16.mxu0 0
  %2148 = vmatpush1.bf16.msra.mxu0 0
  %2149 = vmatprep.subr.bf16.mxu0 0
  %2150 = vmatpush1.bf16.msra.mxu0 0
  %2151 = vmatprep.subr.bf16.mxu0 0
  %2152 = vmatpush1.bf16.msra.mxu0 0
  %2153 = vmatprep.subr.bf16.mxu0 0
  %2154 = vmatpush1.bf16.msra.mxu0 0
  %2155 = vmatprep.subr.bf16.mxu0 0
  %2156 = vmatpush1.bf16.msra.mxu0 0
  %2157 = vmatprep.subr.bf16.mxu0 0
  %2158 = vmatpush1.bf16.msra.mxu0 0
  %2159 = vmatprep.subr.bf16.mxu0 0
  %2160 = vmatpush1.bf16.msra.mxu0 0
  %2161 = vmatprep.mubr.bf16.mxu0 0
  %2162 = vmatmul.mubr.bf16.gmra.mrb[0].mxu0 %v300
  %v2163 = vpop.f32.mrb[0].mxu0
  %v2164 = vadd.f32 %v2115, %v2163
  %v2165 = vpop.f32.mrb[0].mxu0
  %v2166 = vpop.f32.mrb[0].mxu0
  %v2167 = vadd.f32 %v2115, %v2166
  %v2168 = vpop.f32.mrb[0].mxu0
  %2169 = vmatprep.mubr.bf16.mxu0 0
  %2170 = vmatmul.mubr.bf16.gmra.mrb[0].mxu0 %v303
  %v2171 = vpop.f32.mrb[0].mxu0
  %v2172 = vadd.f32 %v2115, %v2171
  %v2173 = vpop.f32.mrb[0].mxu0
  %v2174 = vpop.f32.mrb[0].mxu0
  %v2175 = vadd.f32 %v2115, %v2174
  %v2176 = vpop.f32.mrb[0].mxu0
  %2177 = vmatprep.mubr.bf16.mxu0 0
  %2178 = vmatmul.mubr.bf16.gmra.mrb[0].mxu0 %v306
  %v2179 = vpop.f32.mrb[0].mxu0
  %v2180 = vadd.f32 %v2115, %v2179
  %v2181 = vpop.f32.mrb[0].mxu0
  %v2182 = vpop.f32.mrb[0].mxu0
  %v2183 = vadd.f32 %v2115, %v2182
  %v2184 = vpop.f32.mrb[0].mxu0
  %2185 = vdwg.mxu0
  %v2186 = vpack.c.bf16 %v2003, %v2000
  %v2187 = vpack.c.bf16 %v2011, %v2008
  %v2188 = vpack.c.bf16 %v2019, %v2016
  %v2189 = vpack.c.bf16 %v2085, %v2082
  %v2190 = vpack.c.bf16 %v2093, %v2090
  %v2191 = vpack.c.bf16 %v2101, %v2098
  %v2193 = vsel %vm531, %v2186, 0
  %v2196 = vsel %vm531, %v2187, 0
  %v2199 = vsel %vm531, %v2188, 0
  %v2202 = vsel %vm531, %v2189, 0
  %v2205 = vsel %vm531, %v2190, 0
  %v2208 = vsel %vm531, %v2191, 0
  %2210 = vmatprep.subr.bf16.mxu0 0
  %2211 = vmatpush1.bf16.xpose.msra.mxu0 %v2202
  %2212 = vmatprep.subr.bf16.mxu0 0
  %2213 = vmatpush1.bf16.xpose.msra.mxu0 %v2205
  %2214 = vmatprep.subr.bf16.mxu0 0
  %2215 = vmatpush1.bf16.xpose.msra.mxu0 %v2208
  %2216 = vmatprep.subr.bf16.mxu0 0
  %2217 = vmatpush1.bf16.xpose.msra.mxu0 0
  %2218 = vmatprep.subr.bf16.mxu0 0
  %2219 = vmatpush1.bf16.xpose.msra.mxu0 0
  %2220 = vmatprep.subr.bf16.mxu0 0
  %2221 = vmatpush1.bf16.xpose.msra.mxu0 0
  %2222 = vmatprep.subr.bf16.mxu0 0
  %2223 = vmatpush1.bf16.xpose.msra.mxu0 0
  %2224 = vmatprep.subr.bf16.mxu0 0
  %2225 = vmatpush1.bf16.xpose.msra.mxu0 0
  %2226 = vmatprep.subr.bf16.mxu0 0
  %2227 = vmatpush1.bf16.xpose.msra.mxu0 0
  %2228 = vmatprep.subr.bf16.mxu0 0
  %2229 = vmatpush1.bf16.xpose.msra.mxu0 0
  %2230 = vmatprep.subr.bf16.mxu0 0
  %2231 = vmatpush1.bf16.xpose.msra.mxu0 0
  %2232 = vmatprep.subr.bf16.mxu0 0
  %2233 = vmatpush1.bf16.xpose.msra.mxu0 0
  %2234 = vmatprep.subr.bf16.mxu0 0
  %2235 = vmatpush1.bf16.xpose.msra.mxu0 0
  %2236 = vmatprep.subr.bf16.mxu0 0
  %2237 = vmatpush1.bf16.xpose.msra.mxu0 0
  %2238 = vmatprep.subr.bf16.mxu0 0
  %2239 = vmatpush1.bf16.xpose.msra.mxu0 0
  %2240 = vmatprep.subr.bf16.mxu0 0
  %2241 = vmatpush1.bf16.xpose.msra.mxu0 0
  %2242 = vmatprep.mubr.bf16.mxu0 0
  %2243 = vmatmul.mubr.bf16.gmra.mrb[0].mxu0 %v2193
  %v2244 = vpop.f32.mrb[0].mxu0
  %v2245 = vadd.f32 0.0, %v2244
  %v2246 = vpop.f32.mrb[0].mxu0
  %v2247 = vpop.f32.mrb[0].mxu0
  %v2248 = vadd.f32 0.0, %v2247
  %v2249 = vpop.f32.mrb[0].mxu0
  %2250 = vmatprep.mubr.bf16.mxu0 0
  %2251 = vmatmul.mubr.bf16.gmra.mrb[0].mxu0 %v2196
  %v2252 = vpop.f32.mrb[0].mxu0
  %v2253 = vadd.f32 0.0, %v2252
  %v2254 = vpop.f32.mrb[0].mxu0
  %v2255 = vpop.f32.mrb[0].mxu0
  %v2256 = vadd.f32 0.0, %v2255
  %v2257 = vpop.f32.mrb[0].mxu0
  %2258 = vmatprep.mubr.bf16.mxu0 0
  %2259 = vmatmul.mubr.bf16.gmra.mrb[0].mxu0 %v2199
  %v2260 = vpop.f32.mrb[0].mxu0
  %v2261 = vadd.f32 0.0, %v2260
  %v2262 = vpop.f32.mrb[0].mxu0
  %v2263 = vpop.f32.mrb[0].mxu0
  %v2264 = vadd.f32 0.0, %v2263
  %v2265 = vpop.f32.mrb[0].mxu0
  %2266 = vdwg.mxu0
  %v2267 = vmul.f32 %v2245, 0.35355338
  %v2268 = vmul.f32 %v2248, 0.35355338
  %v2269 = vmul.f32 %v2253, 0.35355338
  %v2270 = vmul.f32 %v2256, 0.35355338
  %v2271 = vmul.f32 %v2261, 0.35355338
  %v2272 = vmul.f32 %v2264, 0.35355338
  %v2273 = vadd.f32 %v2267, %v161
  %v2274 = vadd.f32 %v2268, %v162
  %v2275 = vadd.f32 %v2269, %v163
  %v2276 = vadd.f32 %v2270, %v164
  %v2277 = vadd.f32 %v2271, %v165
  %v2278 = vadd.f32 %v2272, %v166
  %v2279 = vsel %vm619, %v2273, -inf
  %2280 = vmax.xlane.f32.xlu0 %v2279
  %v2281 = vpop.xlane.xlu0 %2280
  %v2282 = vsel %vm619, %v2274, -inf
  %2283 = vmax.xlane.f32.xlu0 %v2282
  %v2284 = vpop.xlane.xlu0 %2283
  %v2285 = vsel %vm619, %v2275, -inf
  %2286 = vmax.xlane.f32.xlu0 %v2285
  %v2287 = vpop.xlane.xlu0 %2286
  %v2288 = vsel %vm619, %v2276, -inf
  %2289 = vmax.xlane.f32.xlu0 %v2288
  %v2290 = vpop.xlane.xlu0 %2289
  %v2291 = vsel %vm619, %v2277, -inf
  %2292 = vmax.xlane.f32.xlu0 %v2291
  %v2293 = vpop.xlane.xlu0 %2292
  %v2294 = vsel %vm619, %v2278, -inf
  %2295 = vmax.xlane.f32.xlu0 %v2294
  %v2296 = vpop.xlane.xlu0 %2295
  %v2297 = vsub.f32 %v2273, %v2281
  %v2298 = vsub.f32 %v2274, %v2284
  %v2299 = vsub.f32 %v2275, %v2287
  %v2300 = vsub.f32 %v2276, %v2290
  %v2301 = vsub.f32 %v2277, %v2293
  %v2302 = vsub.f32 %v2278, %v2296
  %v2303 = vmul.f32 %v2297, 1.442695
  %v2304 = vpow.pop %v2303
  %v2305 = vmul.f32 %v2298, 1.442695
  %v2306 = vpow.pop %v2305
  %v2307 = vmul.f32 %v2299, 1.442695
  %v2308 = vpow.pop %v2307
  %v2309 = vmul.f32 %v2300, 1.442695
  %v2310 = vpow.pop %v2309
  %v2311 = vmul.f32 %v2301, 1.442695
  %v2312 = vpow.pop %v2311
  %v2313 = vmul.f32 %v2302, 1.442695
  %v2314 = vpow.pop %v2313
  %v2315 = vsel %vm619, %v2304, 0.0
  %2316 = vadd.xlane.f32.xlu0 %v2315
  %v2317 = vpop.xlane.xlu0 %2316
  %v2318 = vsel %vm619, %v2306, 0.0
  %2319 = vadd.xlane.f32.xlu0 %v2318
  %v2320 = vpop.xlane.xlu0 %2319
  %v2321 = vsel %vm619, %v2308, 0.0
  %2322 = vadd.xlane.f32.xlu0 %v2321
  %v2323 = vpop.xlane.xlu0 %2322
  %v2324 = vsel %vm619, %v2310, 0.0
  %2325 = vadd.xlane.f32.xlu0 %v2324
  %v2326 = vpop.xlane.xlu0 %2325
  %v2327 = vsel %vm619, %v2312, 0.0
  %2328 = vadd.xlane.f32.xlu0 %v2327
  %v2329 = vpop.xlane.xlu0 %2328
  %v2330 = vsel %vm619, %v2314, 0.0
  %2331 = vadd.xlane.f32.xlu0 %v2330
  %v2332 = vpop.xlane.xlu0 %2331
  %v2333 = vrcp.pop %v2317
  %v2334 = vrcp.pop %v2320
  %v2335 = vrcp.pop %v2323
  %v2336 = vrcp.pop %v2326
  %v2337 = vrcp.pop %v2329
  %v2338 = vrcp.pop %v2332
  %v2339 = vmul.f32 %v2304, %v2333
  %v2340 = vmul.f32 %v2306, %v2334
  %v2341 = vmul.f32 %v2308, %v2335
  %v2342 = vmul.f32 %v2310, %v2336
  %v2343 = vmul.f32 %v2312, %v2337
  %v2344 = vmul.f32 %v2314, %v2338
  %v2345 = vpack.c.bf16 %v2340, %v2339
  %v2346 = vpack.c.bf16 %v2342, %v2341
  %v2347 = vpack.c.bf16 %v2344, %v2343
  %v2348 = vpack.c.bf16 %v2167, %v2164
  %v2349 = vpack.c.bf16 %v2175, %v2172
  %v2350 = vpack.c.bf16 %v2183, %v2180
  %v2352 = vsel %vm619, %v2345, 0
  %v2355 = vsel %vm619, %v2346, 0
  %v2358 = vsel %vm619, %v2347, 0
  %2360 = vmatprep.subr.bf16.mxu0 0
  %2361 = vmatpush1.bf16.msra.mxu0 %v2348
  %2362 = vmatprep.subr.bf16.mxu0 0
  %2363 = vmatpush1.bf16.msra.mxu0 %v2349
  %2364 = vmatprep.subr.bf16.mxu0 0
  %2365 = vmatpush1.bf16.msra.mxu0 %v2350
  %2366 = vmatprep.subr.bf16.mxu0 0
  %2367 = vmatpush1.bf16.msra.mxu0 0
  %2368 = vmatprep.subr.bf16.mxu0 0
  %2369 = vmatpush1.bf16.msra.mxu0 0
  %2370 = vmatprep.subr.bf16.mxu0 0
  %2371 = vmatpush1.bf16.msra.mxu0 0
  %2372 = vmatprep.subr.bf16.mxu0 0
  %2373 = vmatpush1.bf16.msra.mxu0 0
  %2374 = vmatprep.subr.bf16.mxu0 0
  %2375 = vmatpush1.bf16.msra.mxu0 0
  %2376 = vmatprep.subr.bf16.mxu0 0
  %2377 = vmatpush1.bf16.msra.mxu0 0
  %2378 = vmatprep.subr.bf16.mxu0 0
  %2379 = vmatpush1.bf16.msra.mxu0 0
  %2380 = vmatprep.subr.bf16.mxu0 0
  %2381 = vmatpush1.bf16.msra.mxu0 0
  %2382 = vmatprep.subr.bf16.mxu0 0
  %2383 = vmatpush1.bf16.msra.mxu0 0
  %2384 = vmatprep.subr.bf16.mxu0 0
  %2385 = vmatpush1.bf16.msra.mxu0 0
  %2386 = vmatprep.subr.bf16.mxu0 0
  %2387 = vmatpush1.bf16.msra.mxu0 0
  %2388 = vmatprep.subr.bf16.mxu0 0
  %2389 = vmatpush1.bf16.msra.mxu0 0
  %2390 = vmatprep.subr.bf16.mxu0 0
  %2391 = vmatpush1.bf16.msra.mxu0 0
  %2392 = vmatprep.mubr.bf16.mxu0 0
  %2393 = vmatmul.mubr.bf16.gmra.mrb[0].mxu0 %v2352
  %v2394 = vpop.f32.mrb[0].mxu0
  %v2395 = vadd.f32 0.0, %v2394
  %v2396 = vpop.f32.mrb[0].mxu0
  %v2397 = vpop.f32.mrb[0].mxu0
  %v2398 = vadd.f32 0.0, %v2397
  %v2399 = vpop.f32.mrb[0].mxu0
  %2400 = vmatprep.mubr.bf16.mxu0 0
  %2401 = vmatmul.mubr.bf16.gmra.mrb[0].mxu0 %v2355
  %v2402 = vpop.f32.mrb[0].mxu0
  %v2403 = vadd.f32 0.0, %v2402
  %v2404 = vpop.f32.mrb[0].mxu0
  %v2405 = vpop.f32.mrb[0].mxu0
  %v2406 = vadd.f32 0.0, %v2405
  %v2407 = vpop.f32.mrb[0].mxu0
  %2408 = vmatprep.mubr.bf16.mxu0 0
  %2409 = vmatmul.mubr.bf16.gmra.mrb[0].mxu0 %v2358
  %v2410 = vpop.f32.mrb[0].mxu0
  %v2411 = vadd.f32 0.0, %v2410
  %v2412 = vpop.f32.mrb[0].mxu0
  %v2413 = vpop.f32.mrb[0].mxu0
  %v2414 = vadd.f32 0.0, %v2413
  %v2415 = vpop.f32.mrb[0].mxu0
  %2416 = vdwg.mxu0
  %s2417 = scalar_lea.vmem %s23, 12
  %v2418 = vld [vmem:[%s2417] sm:$0xf]
  %v2419 = vpack.c.bf16 %v2398, %v2395
  %v2420 = vpack.c.bf16 %v2406, %v2403
  %v2421 = vpack.c.bf16 %v2414, %v2411
  %v2423 = vsel %vm531, %v2419, 0
  %v2426 = vsel %vm531, %v2420, 0
  %v2429 = vsel %vm531, %v2421, 0
  %v2432 = vsel %vm1253, %v2418, 0
  %2434 = vmatprep.subr.bf16.mxu0 0
  %2435 = vmatpush1.bf16.msra.mxu0 %v2432
  %2436 = vmatprep.subr.bf16.mxu0 0
  %2437 = vmatpush1.bf16.msra.mxu0 0
  %2438 = vmatprep.subr.bf16.mxu0 0
  %2439 = vmatpush1.bf16.msra.mxu0 0
  %2440 = vmatprep.subr.bf16.mxu0 0
  %2441 = vmatpush1.bf16.msra.mxu0 0
  %2442 = vmatprep.subr.bf16.mxu0 0
  %2443 = vmatpush1.bf16.msra.mxu0 0
  %2444 = vmatprep.subr.bf16.mxu0 0
  %2445 = vmatpush1.bf16.msra.mxu0 0
  %2446 = vmatprep.subr.bf16.mxu0 0
  %2447 = vmatpush1.bf16.msra.mxu0 0
  %2448 = vmatprep.subr.bf16.mxu0 0
  %2449 = vmatpush1.bf16.msra.mxu0 0
  %2450 = vmatprep.subr.bf16.mxu0 0
  %2451 = vmatpush1.bf16.msra.mxu0 0
  %2452 = vmatprep.subr.bf16.mxu0 0
  %2453 = vmatpush1.bf16.msra.mxu0 0
  %2454 = vmatprep.subr.bf16.mxu0 0
  %2455 = vmatpush1.bf16.msra.mxu0 0
  %2456 = vmatprep.subr.bf16.mxu0 0
  %2457 = vmatpush1.bf16.msra.mxu0 0
  %2458 = vmatprep.subr.bf16.mxu0 0
  %2459 = vmatpush1.bf16.msra.mxu0 0
  %2460 = vmatprep.subr.bf16.mxu0 0
  %2461 = vmatpush1.bf16.msra.mxu0 0
  %2462 = vmatprep.subr.bf16.mxu0 0
  %2463 = vmatpush1.bf16.msra.mxu0 0
  %2464 = vmatprep.subr.bf16.mxu0 0
  %2465 = vmatpush1.bf16.msra.mxu0 0
  %2466 = vmatprep.mubr.bf16.mxu0 0
  %2467 = vmatmul.mubr.bf16.gmra.mrb[0].mxu0 %v2423
  %v2468 = vpop.f32.mrb[0].mxu0
  %v2469 = vadd.f32 0.0, %v2468
  %v2470 = vpop.f32.mrb[0].mxu0
  %v2471 = vpop.f32.mrb[0].mxu0
  %v2472 = vadd.f32 0.0, %v2471
  %v2473 = vpop.f32.mrb[0].mxu0
  %2474 = vmatprep.mubr.bf16.mxu0 0
  %2475 = vmatmul.mubr.bf16.gmra.mrb[0].mxu0 %v2426
  %v2476 = vpop.f32.mrb[0].mxu0
  %v2477 = vadd.f32 0.0, %v2476
  %v2478 = vpop.f32.mrb[0].mxu0
  %v2479 = vpop.f32.mrb[0].mxu0
  %v2480 = vadd.f32 0.0, %v2479
  %v2481 = vpop.f32.mrb[0].mxu0
  %2482 = vmatprep.mubr.bf16.mxu0 0
  %2483 = vmatmul.mubr.bf16.gmra.mrb[0].mxu0 %v2429
  %v2484 = vpop.f32.mrb[0].mxu0
  %v2485 = vadd.f32 0.0, %v2484
  %v2486 = vpop.f32.mrb[0].mxu0
  %v2487 = vpop.f32.mrb[0].mxu0
  %v2488 = vadd.f32 0.0, %v2487
  %v2489 = vpop.f32.mrb[0].mxu0
  %2490 = vdwg.mxu0
  %v2491 = vadd.f32 %v1934, %v2469
  %v2492 = vadd.f32 %v1935, %v2472
  %v2493 = vadd.f32 %v1936, %v2477
  %v2494 = vadd.f32 %v1937, %v2480
  %v2495 = vadd.f32 %v1938, %v2485
  %v2496 = vadd.f32 %v1939, %v2488
  %v2497 = vld [vmem:[%s25] sm:$0x1]
  %v2499 = vlaneseq
  %v2500 = vshrl.u32 %v2499, 7
  %v2501 = vsub.s32 0, %v2500
  %v2502 = vrot.slane %v2497, %v2501
  %v2504 = vadd.f32 %v2491, %v2502
  %v2505 = vadd.f32 %v2492, %v2502
  %v2506 = vadd.f32 %v2493, %v2502
  %v2507 = vadd.f32 %v2494, %v2502
  %v2508 = vadd.f32 %v2495, %v2502
  %v2509 = vadd.f32 %v2496, %v2502
  %v2510 = vadd.f32 %v267, %v2504
  %v2511 = vadd.f32 %v268, %v2505
  %v2512 = vadd.f32 %v269, %v2506
  %v2513 = vadd.f32 %v270, %v2507
  %v2514 = vadd.f32 %v271, %v2508
  %v2515 = vadd.f32 %v272, %v2509
  %v2516 = vld [vmem:[%s27] sm:$0x1]
  %v2517 = vld [vmem:[%s29] sm:$0x1]
  %v2518 = vsel %vm169, %v2510, 0.0
  %2519 = vadd.xlane.f32.xlu0 %v2518
  %v2520 = vpop.xlane.xlu0 %2519
  %v2521 = vsel %vm169, %v2511, 0.0
  %2522 = vadd.xlane.f32.xlu0 %v2521
  %v2523 = vpop.xlane.xlu0 %2522
  %v2524 = vsel %vm169, %v2512, 0.0
  %2525 = vadd.xlane.f32.xlu0 %v2524
  %v2526 = vpop.xlane.xlu0 %2525
  %v2527 = vsel %vm169, %v2513, 0.0
  %2528 = vadd.xlane.f32.xlu0 %v2527
  %v2529 = vpop.xlane.xlu0 %2528
  %v2530 = vsel %vm169, %v2514, 0.0
  %2531 = vadd.xlane.f32.xlu0 %v2530
  %v2532 = vpop.xlane.xlu0 %2531
  %v2533 = vsel %vm169, %v2515, 0.0
  %2534 = vadd.xlane.f32.xlu0 %v2533
  %v2535 = vpop.xlane.xlu0 %2534
  %v2536 = vmul.f32 %v2520, %v188
  %v2537 = vmul.f32 %v2523, %v188
  %v2538 = vmul.f32 %v2526, %v188
  %v2539 = vmul.f32 %v2529, %v188
  %v2540 = vmul.f32 %v2532, %v188
  %v2541 = vmul.f32 %v2535, %v188
  %v2542 = vsub.f32 %v2510, %v2536
  %v2543 = vsub.f32 %v2511, %v2537
  %v2544 = vsub.f32 %v2512, %v2538
  %v2545 = vsub.f32 %v2513, %v2539
  %v2546 = vsub.f32 %v2514, %v2540
  %v2547 = vsub.f32 %v2515, %v2541
  %v2548 = vmul.f32 %v2542, %v2542
  %v2549 = vmul.f32 %v2543, %v2543
  %v2550 = vmul.f32 %v2544, %v2544
  %v2551 = vmul.f32 %v2545, %v2545
  %v2552 = vmul.f32 %v2546, %v2546
  %v2553 = vmul.f32 %v2547, %v2547
  %v2554 = vsel %vm169, %v2548, 0.0
  %2555 = vadd.xlane.f32.xlu0 %v2554
  %v2556 = vpop.xlane.xlu0 %2555
  %v2557 = vsel %vm169, %v2549, 0.0
  %2558 = vadd.xlane.f32.xlu0 %v2557
  %v2559 = vpop.xlane.xlu0 %2558
  %v2560 = vsel %vm169, %v2550, 0.0
  %2561 = vadd.xlane.f32.xlu0 %v2560
  %v2562 = vpop.xlane.xlu0 %2561
  %v2563 = vsel %vm169, %v2551, 0.0
  %2564 = vadd.xlane.f32.xlu0 %v2563
  %v2565 = vpop.xlane.xlu0 %2564
  %v2566 = vsel %vm169, %v2552, 0.0
  %2567 = vadd.xlane.f32.xlu0 %v2566
  %v2568 = vpop.xlane.xlu0 %2567
  %v2569 = vsel %vm169, %v2553, 0.0
  %2570 = vadd.xlane.f32.xlu0 %v2569
  %v2571 = vpop.xlane.xlu0 %2570
  %v2572 = vmul.f32 %v2556, %v188
  %v2573 = vmul.f32 %v2559, %v188
  %v2574 = vmul.f32 %v2562, %v188
  %v2575 = vmul.f32 %v2565, %v188
  %v2576 = vmul.f32 %v2568, %v188
  %v2577 = vmul.f32 %v2571, %v188
  %v2578 = vadd.f32 %v2572, 1e-05
  %v2579 = vadd.f32 %v2573, 1e-05
  %v2580 = vadd.f32 %v2574, 1e-05
  %v2581 = vadd.f32 %v2575, 1e-05
  %v2582 = vadd.f32 %v2576, 1e-05
  %v2583 = vadd.f32 %v2577, 1e-05
  %v2584 = vrsqrt.pop %v2578
  %v2585 = vrsqrt.pop %v2579
  %v2586 = vrsqrt.pop %v2580
  %v2587 = vrsqrt.pop %v2581
  %v2588 = vrsqrt.pop %v2582
  %v2589 = vrsqrt.pop %v2583
  %v2590 = vmul.f32 %v2542, %v2584
  %v2591 = vmul.f32 %v2543, %v2585
  %v2592 = vmul.f32 %v2544, %v2586
  %v2593 = vmul.f32 %v2545, %v2587
  %v2594 = vmul.f32 %v2546, %v2588
  %v2595 = vmul.f32 %v2547, %v2589
  %v2597 = vlaneseq
  %v2598 = vshrl.u32 %v2597, 7
  %v2599 = vsub.s32 0, %v2598
  %v2600 = vrot.slane %v2516, %v2599
  %v2602 = vmul.f32 %v2590, %v2600
  %v2603 = vmul.f32 %v2591, %v2600
  %v2604 = vmul.f32 %v2592, %v2600
  %v2605 = vmul.f32 %v2593, %v2600
  %v2606 = vmul.f32 %v2594, %v2600
  %v2607 = vmul.f32 %v2595, %v2600
  %v2609 = vlaneseq
  %v2610 = vshrl.u32 %v2609, 7
  %v2611 = vsub.s32 0, %v2610
  %v2612 = vrot.slane %v2517, %v2611
  %v2614 = vadd.f32 %v2602, %v2612
  %v2615 = vadd.f32 %v2603, %v2612
  %v2616 = vadd.f32 %v2604, %v2612
  %v2617 = vadd.f32 %v2605, %v2612
  %v2618 = vadd.f32 %v2606, %v2612
  %v2619 = vadd.f32 %v2607, %v2612
  %v2620 = vld [vmem:[%s31] sm:$0xf]
  %v2621 = vld [vmem:[%s31 + $0x4] sm:$0xf]
  %v2622 = vld [vmem:[%s31 + $0x8] sm:$0xf]
  %v2623 = vld [vmem:[%s31 + $0xc] sm:$0xf]
  %v2624 = vpack.c.bf16 %v2615, %v2614
  %v2625 = vpack.c.bf16 %v2617, %v2616
  %v2626 = vpack.c.bf16 %v2619, %v2618
  %v2627 = vld [vmem:[%s33] sm:$0x1]
  %v2629 = vlaneseq
  %v2630 = vshrl.u32 %v2629, 7
  %v2631 = vsub.s32 0, %v2630
  %v2632 = vrot.slane %v2627, %v2631
  %v2638 = vunpack.c.l.b16 %v2620
  %v2639 = vunpack.c.l.b16 %v2621
  %v2640 = vunpack.c.l.b16 %v2622
  %v2641 = vunpack.c.l.b16 %v2623
  %v2642 = vpack.c.b16 %v2639, %v2638
  %v2643 = vpack.c.b16 %v2641, %v2640
  %v2647 = vsel %vm169, %v2624, 0
  %v2650 = vsel %vm169, %v2625, 0
  %v2653 = vsel %vm169, %v2626, 0
  %2655 = vmatprep.subr.bf16.mxu0 0
  %2656 = vmatpush1.bf16.msra.mxu0 %v2642
  %2657 = vmatprep.subr.bf16.mxu0 0
  %2658 = vmatpush1.bf16.msra.mxu0 %v2643
  %2659 = vmatprep.subr.bf16.mxu0 0
  %2660 = vmatpush1.bf16.msra.mxu0 0
  %2661 = vmatprep.subr.bf16.mxu0 0
  %2662 = vmatpush1.bf16.msra.mxu0 0
  %2663 = vmatprep.subr.bf16.mxu0 0
  %2664 = vmatpush1.bf16.msra.mxu0 0
  %2665 = vmatprep.subr.bf16.mxu0 0
  %2666 = vmatpush1.bf16.msra.mxu0 0
  %2667 = vmatprep.subr.bf16.mxu0 0
  %2668 = vmatpush1.bf16.msra.mxu0 0
  %2669 = vmatprep.subr.bf16.mxu0 0
  %2670 = vmatpush1.bf16.msra.mxu0 0
  %2671 = vmatprep.subr.bf16.mxu0 0
  %2672 = vmatpush1.bf16.msra.mxu0 0
  %2673 = vmatprep.subr.bf16.mxu0 0
  %2674 = vmatpush1.bf16.msra.mxu0 0
  %2675 = vmatprep.subr.bf16.mxu0 0
  %2676 = vmatpush1.bf16.msra.mxu0 0
  %2677 = vmatprep.subr.bf16.mxu0 0
  %2678 = vmatpush1.bf16.msra.mxu0 0
  %2679 = vmatprep.subr.bf16.mxu0 0
  %2680 = vmatpush1.bf16.msra.mxu0 0
  %2681 = vmatprep.subr.bf16.mxu0 0
  %2682 = vmatpush1.bf16.msra.mxu0 0
  %2683 = vmatprep.subr.bf16.mxu0 0
  %2684 = vmatpush1.bf16.msra.mxu0 0
  %2685 = vmatprep.subr.bf16.mxu0 0
  %2686 = vmatpush1.bf16.msra.mxu0 0
  %2687 = vmatprep.mubr.bf16.mxu0 0
  %2688 = vmatmul.mubr.bf16.gmra.mrb[0].mxu0 %v2647
  %v2689 = vpop.f32.mrb[0].mxu0
  %v2690 = vadd.f32 %v2632, %v2689
  %v2691 = vpop.f32.mrb[0].mxu0
  %v2692 = vpop.f32.mrb[0].mxu0
  %v2693 = vadd.f32 %v2632, %v2692
  %v2694 = vpop.f32.mrb[0].mxu0
  %2695 = vmatprep.mubr.bf16.mxu0 0
  %2696 = vmatmul.mubr.bf16.gmra.mrb[0].mxu0 %v2650
  %v2697 = vpop.f32.mrb[0].mxu0
  %v2698 = vadd.f32 %v2632, %v2697
  %v2699 = vpop.f32.mrb[0].mxu0
  %v2700 = vpop.f32.mrb[0].mxu0
  %v2701 = vadd.f32 %v2632, %v2700
  %v2702 = vpop.f32.mrb[0].mxu0
  %2703 = vmatprep.mubr.bf16.mxu0 0
  %2704 = vmatmul.mubr.bf16.gmra.mrb[0].mxu0 %v2653
  %v2705 = vpop.f32.mrb[0].mxu0
  %v2706 = vadd.f32 %v2632, %v2705
  %v2707 = vpop.f32.mrb[0].mxu0
  %v2708 = vpop.f32.mrb[0].mxu0
  %v2709 = vadd.f32 %v2632, %v2708
  %v2710 = vpop.f32.mrb[0].mxu0
  %2711 = vdwg.mxu0
  %v2712 = vmul.f32 %v2690, 0.5
  %v2713 = vmul.f32 %v2693, 0.5
  %v2714 = vmul.f32 %v2698, 0.5
  %v2715 = vmul.f32 %v2701, 0.5
  %v2716 = vmul.f32 %v2706, 0.5
  %v2717 = vmul.f32 %v2709, 0.5
  %v2718 = vmul.f32 %v2690, 0.70710677
  %v2719 = vmul.f32 %v2693, 0.70710677
  %v2720 = vmul.f32 %v2698, 0.70710677
  %v2721 = vmul.f32 %v2701, 0.70710677
  %v2722 = vmul.f32 %v2706, 0.70710677
  %v2723 = vmul.f32 %v2709, 0.70710677
  %v2724 = verf.f32.pop %v2718
  %v2725 = verf.f32.pop %v2719
  %v2726 = verf.f32.pop %v2720
  %v2727 = verf.f32.pop %v2721
  %v2728 = verf.f32.pop %v2722
  %v2729 = verf.f32.pop %v2723
  %v2730 = vadd.f32 %v2724, 1.0
  %v2731 = vadd.f32 %v2725, 1.0
  %v2732 = vadd.f32 %v2726, 1.0
  %v2733 = vadd.f32 %v2727, 1.0
  %v2734 = vadd.f32 %v2728, 1.0
  %v2735 = vadd.f32 %v2729, 1.0
  %v2736 = vmul.f32 %v2712, %v2730
  %v2737 = vmul.f32 %v2713, %v2731
  %v2738 = vmul.f32 %v2714, %v2732
  %v2739 = vmul.f32 %v2715, %v2733
  %v2740 = vmul.f32 %v2716, %v2734
  %v2741 = vmul.f32 %v2717, %v2735
  %v2742 = vld [vmem:[%s35] sm:$0xf]
  %v2743 = vld [vmem:[%s35 + $0x4] sm:$0xf]
  %v2744 = vld [vmem:[%s35 + $0x8] sm:$0xf]
  %v2745 = vld [vmem:[%s35 + $0xc] sm:$0xf]
  %v2746 = vld [vmem:[%s35 + $0x10] sm:$0xf]
  %v2747 = vld [vmem:[%s35 + $0x14] sm:$0xf]
  %v2748 = vld [vmem:[%s35 + $0x18] sm:$0xf]
  %v2749 = vld [vmem:[%s35 + $0x1c] sm:$0xf]
  %v2750 = vpack.c.bf16 %v2737, %v2736
  %v2751 = vpack.c.bf16 %v2739, %v2738
  %v2752 = vpack.c.bf16 %v2741, %v2740
  %v2753 = vld [vmem:[%s37] sm:$0x1]
  %v2755 = vlaneseq
  %v2756 = vshrl.u32 %v2755, 7
  %v2757 = vsub.s32 0, %v2756
  %v2758 = vrot.slane %v2753, %v2757
  %v2768 = vunpack.c.l.b16 %v2742
  %v2769 = vunpack.c.l.b16 %v2743
  %v2770 = vunpack.c.l.b16 %v2744
  %v2771 = vunpack.c.l.b16 %v2745
  %v2772 = vunpack.c.l.b16 %v2746
  %v2773 = vunpack.c.l.b16 %v2747
  %v2774 = vunpack.c.l.b16 %v2748
  %v2775 = vunpack.c.l.b16 %v2749
  %v2776 = vpack.c.b16 %v2769, %v2768
  %v2777 = vpack.c.b16 %v2771, %v2770
  %v2778 = vpack.c.b16 %v2773, %v2772
  %v2779 = vpack.c.b16 %v2775, %v2774
  %vm2784 = vcmask 523264
  %v2786 = vsel %vm2784, %v2750, 0
  %v2789 = vsel %vm2784, %v2751, 0
  %v2792 = vsel %vm2784, %v2752, 0
  %2794 = vmatprep.subr.bf16.mxu0 0
  %2795 = vmatpush1.bf16.msra.mxu0 %v2776
  %2796 = vmatprep.subr.bf16.mxu0 0
  %2797 = vmatpush1.bf16.msra.mxu0 %v2777
  %2798 = vmatprep.subr.bf16.mxu0 0
  %2799 = vmatpush1.bf16.msra.mxu0 %v2778
  %2800 = vmatprep.subr.bf16.mxu0 0
  %2801 = vmatpush1.bf16.msra.mxu0 %v2779
  %2802 = vmatprep.subr.bf16.mxu0 0
  %2803 = vmatpush1.bf16.msra.mxu0 0
  %2804 = vmatprep.subr.bf16.mxu0 0
  %2805 = vmatpush1.bf16.msra.mxu0 0
  %2806 = vmatprep.subr.bf16.mxu0 0
  %2807 = vmatpush1.bf16.msra.mxu0 0
  %2808 = vmatprep.subr.bf16.mxu0 0
  %2809 = vmatpush1.bf16.msra.mxu0 0
  %2810 = vmatprep.subr.bf16.mxu0 0
  %2811 = vmatpush1.bf16.msra.mxu0 0
  %2812 = vmatprep.subr.bf16.mxu0 0
  %2813 = vmatpush1.bf16.msra.mxu0 0
  %2814 = vmatprep.subr.bf16.mxu0 0
  %2815 = vmatpush1.bf16.msra.mxu0 0
  %2816 = vmatprep.subr.bf16.mxu0 0
  %2817 = vmatpush1.bf16.msra.mxu0 0
  %2818 = vmatprep.subr.bf16.mxu0 0
  %2819 = vmatpush1.bf16.msra.mxu0 0
  %2820 = vmatprep.subr.bf16.mxu0 0
  %2821 = vmatpush1.bf16.msra.mxu0 0
  %2822 = vmatprep.subr.bf16.mxu0 0
  %2823 = vmatpush1.bf16.msra.mxu0 0
  %2824 = vmatprep.subr.bf16.mxu0 0
  %2825 = vmatpush1.bf16.msra.mxu0 0
  %2826 = vmatprep.mubr.bf16.mxu0 0
  %2827 = vmatmul.mubr.bf16.gmra.mrb[0].mxu0 %v2786
  %v2828 = vpop.f32.mrb[0].mxu0
  %v2829 = vadd.f32 %v2758, %v2828
  %v2830 = vpop.f32.mrb[0].mxu0
  %v2831 = vpop.f32.mrb[0].mxu0
  %v2832 = vadd.f32 %v2758, %v2831
  %v2833 = vpop.f32.mrb[0].mxu0
  %2834 = vmatprep.mubr.bf16.mxu0 0
  %2835 = vmatmul.mubr.bf16.gmra.mrb[0].mxu0 %v2789
  %v2836 = vpop.f32.mrb[0].mxu0
  %v2837 = vadd.f32 %v2758, %v2836
  %v2838 = vpop.f32.mrb[0].mxu0
  %v2839 = vpop.f32.mrb[0].mxu0
  %v2840 = vadd.f32 %v2758, %v2839
  %v2841 = vpop.f32.mrb[0].mxu0
  %2842 = vmatprep.mubr.bf16.mxu0 0
  %2843 = vmatmul.mubr.bf16.gmra.mrb[0].mxu0 %v2792
  %v2844 = vpop.f32.mrb[0].mxu0
  %v2845 = vadd.f32 %v2758, %v2844
  %v2846 = vpop.f32.mrb[0].mxu0
  %v2847 = vpop.f32.mrb[0].mxu0
  %v2848 = vadd.f32 %v2758, %v2847
  %v2849 = vpop.f32.mrb[0].mxu0
  %2850 = vdwg.mxu0
  %v2851 = vadd.f32 %v2614, %v2829
  %v2852 = vadd.f32 %v2615, %v2832
  %v2853 = vadd.f32 %v2616, %v2837
  %v2854 = vadd.f32 %v2617, %v2840
  %v2855 = vadd.f32 %v2618, %v2845
  %v2856 = vadd.f32 %v2619, %v2848
  %v2857 = vld [vmem:[%s39] sm:$0x1]
  %v2858 = vld [vmem:[%s41] sm:$0x1]
  %v2859 = vsel %vm169, %v2851, 0.0
  %2860 = vadd.xlane.f32.xlu0 %v2859
  %v2861 = vpop.xlane.xlu0 %2860
  %v2862 = vsel %vm169, %v2852, 0.0
  %2863 = vadd.xlane.f32.xlu0 %v2862
  %v2864 = vpop.xlane.xlu0 %2863
  %v2865 = vsel %vm169, %v2853, 0.0
  %2866 = vadd.xlane.f32.xlu0 %v2865
  %v2867 = vpop.xlane.xlu0 %2866
  %v2868 = vsel %vm169, %v2854, 0.0
  %2869 = vadd.xlane.f32.xlu0 %v2868
  %v2870 = vpop.xlane.xlu0 %2869
  %v2871 = vsel %vm169, %v2855, 0.0
  %2872 = vadd.xlane.f32.xlu0 %v2871
  %v2873 = vpop.xlane.xlu0 %2872
  %v2874 = vsel %vm169, %v2856, 0.0
  %2875 = vadd.xlane.f32.xlu0 %v2874
  %v2876 = vpop.xlane.xlu0 %2875
  %v2877 = vmul.f32 %v2861, %v188
  %v2878 = vmul.f32 %v2864, %v188
  %v2879 = vmul.f32 %v2867, %v188
  %v2880 = vmul.f32 %v2870, %v188
  %v2881 = vmul.f32 %v2873, %v188
  %v2882 = vmul.f32 %v2876, %v188
  %v2883 = vsub.f32 %v2851, %v2877
  %v2884 = vsub.f32 %v2852, %v2878
  %v2885 = vsub.f32 %v2853, %v2879
  %v2886 = vsub.f32 %v2854, %v2880
  %v2887 = vsub.f32 %v2855, %v2881
  %v2888 = vsub.f32 %v2856, %v2882
  %v2889 = vmul.f32 %v2883, %v2883
  %v2890 = vmul.f32 %v2884, %v2884
  %v2891 = vmul.f32 %v2885, %v2885
  %v2892 = vmul.f32 %v2886, %v2886
  %v2893 = vmul.f32 %v2887, %v2887
  %v2894 = vmul.f32 %v2888, %v2888
  %v2895 = vsel %vm169, %v2889, 0.0
  %2896 = vadd.xlane.f32.xlu0 %v2895
  %v2897 = vpop.xlane.xlu0 %2896
  %v2898 = vsel %vm169, %v2890, 0.0
  %2899 = vadd.xlane.f32.xlu0 %v2898
  %v2900 = vpop.xlane.xlu0 %2899
  %v2901 = vsel %vm169, %v2891, 0.0
  %2902 = vadd.xlane.f32.xlu0 %v2901
  %v2903 = vpop.xlane.xlu0 %2902
  %v2904 = vsel %vm169, %v2892, 0.0
  %2905 = vadd.xlane.f32.xlu0 %v2904
  %v2906 = vpop.xlane.xlu0 %2905
  %v2907 = vsel %vm169, %v2893, 0.0
  %2908 = vadd.xlane.f32.xlu0 %v2907
  %v2909 = vpop.xlane.xlu0 %2908
  %v2910 = vsel %vm169, %v2894, 0.0
  %2911 = vadd.xlane.f32.xlu0 %v2910
  %v2912 = vpop.xlane.xlu0 %2911
  %v2913 = vmul.f32 %v2897, %v188
  %v2914 = vmul.f32 %v2900, %v188
  %v2915 = vmul.f32 %v2903, %v188
  %v2916 = vmul.f32 %v2906, %v188
  %v2917 = vmul.f32 %v2909, %v188
  %v2918 = vmul.f32 %v2912, %v188
  %v2919 = vadd.f32 %v2913, 1e-05
  %v2920 = vadd.f32 %v2914, 1e-05
  %v2921 = vadd.f32 %v2915, 1e-05
  %v2922 = vadd.f32 %v2916, 1e-05
  %v2923 = vadd.f32 %v2917, 1e-05
  %v2924 = vadd.f32 %v2918, 1e-05
  %v2925 = vrsqrt.pop %v2919
  %v2926 = vrsqrt.pop %v2920
  %v2927 = vrsqrt.pop %v2921
  %v2928 = vrsqrt.pop %v2922
  %v2929 = vrsqrt.pop %v2923
  %v2930 = vrsqrt.pop %v2924
  %v2931 = vmul.f32 %v2883, %v2925
  %v2932 = vmul.f32 %v2884, %v2926
  %v2933 = vmul.f32 %v2885, %v2927
  %v2934 = vmul.f32 %v2886, %v2928
  %v2935 = vmul.f32 %v2887, %v2929
  %v2936 = vmul.f32 %v2888, %v2930
  %v2938 = vlaneseq
  %v2939 = vshrl.u32 %v2938, 7
  %v2940 = vsub.s32 0, %v2939
  %v2941 = vrot.slane %v2857, %v2940
  %v2943 = vmul.f32 %v2931, %v2941
  %v2944 = vmul.f32 %v2932, %v2941
  %v2945 = vmul.f32 %v2933, %v2941
  %v2946 = vmul.f32 %v2934, %v2941
  %v2947 = vmul.f32 %v2935, %v2941
  %v2948 = vmul.f32 %v2936, %v2941
  %v2950 = vlaneseq
  %v2951 = vshrl.u32 %v2950, 7
  %v2952 = vsub.s32 0, %v2951
  %v2953 = vrot.slane %v2858, %v2952
  %v2955 = vadd.f32 %v2943, %v2953
  %v2956 = vadd.f32 %v2944, %v2953
  %v2957 = vadd.f32 %v2945, %v2953
  %v2958 = vadd.f32 %v2946, %v2953
  %v2959 = vadd.f32 %v2947, %v2953
  %v2960 = vadd.f32 %v2948, %v2953
  %v2961 = vpack.c.bf16 %v2956, %v2955
  %v2962 = vpack.c.bf16 %v2958, %v2957
  %v2963 = vpack.c.bf16 %v2960, %v2959
  %v2964 = vld [vmem:[%s43] sm:$0xf]
  %v2965 = vld [vmem:[%s43 + $0x4] sm:$0xf]
  %v2966 = vld [vmem:[%s43 + $0x8] sm:$0xf]
  %v2967 = vld [vmem:[%s43 + $0xc] sm:$0xf]
  %v2968 = vld [vmem:[%s45] sm:$0x1]
  %v2970 = vlaneseq
  %v2971 = vshrl.u32 %v2970, 7
  %v2972 = vsub.s32 0, %v2971
  %v2973 = vrot.slane %v2968, %v2972
  %v2979 = vunpack.c.l.b16 %v2964
  %v2980 = vunpack.c.l.b16 %v2965
  %v2981 = vunpack.c.l.b16 %v2966
  %v2982 = vunpack.c.l.b16 %v2967
  %v2983 = vpack.c.b16 %v2980, %v2979
  %v2984 = vpack.c.b16 %v2982, %v2981
  %v2988 = vsel %vm169, %v2961, 0
  %v2991 = vsel %vm169, %v2962, 0
  %v2994 = vsel %vm169, %v2963, 0
  %2996 = vmatprep.subr.bf16.mxu0 0
  %2997 = vmatpush1.bf16.msra.mxu0 %v2983
  %2998 = vmatprep.subr.bf16.mxu0 0
  %2999 = vmatpush1.bf16.msra.mxu0 %v2984
  %3000 = vmatprep.subr.bf16.mxu0 0
  %3001 = vmatpush1.bf16.msra.mxu0 0
  %3002 = vmatprep.subr.bf16.mxu0 0
  %3003 = vmatpush1.bf16.msra.mxu0 0
  %3004 = vmatprep.subr.bf16.mxu0 0
  %3005 = vmatpush1.bf16.msra.mxu0 0
  %3006 = vmatprep.subr.bf16.mxu0 0
  %3007 = vmatpush1.bf16.msra.mxu0 0
  %3008 = vmatprep.subr.bf16.mxu0 0
  %3009 = vmatpush1.bf16.msra.mxu0 0
  %3010 = vmatprep.subr.bf16.mxu0 0
  %3011 = vmatpush1.bf16.msra.mxu0 0
  %3012 = vmatprep.subr.bf16.mxu0 0
  %3013 = vmatpush1.bf16.msra.mxu0 0
  %3014 = vmatprep.subr.bf16.mxu0 0
  %3015 = vmatpush1.bf16.msra.mxu0 0
  %3016 = vmatprep.subr.bf16.mxu0 0
  %3017 = vmatpush1.bf16.msra.mxu0 0
  %3018 = vmatprep.subr.bf16.mxu0 0
  %3019 = vmatpush1.bf16.msra.mxu0 0
  %3020 = vmatprep.subr.bf16.mxu0 0
  %3021 = vmatpush1.bf16.msra.mxu0 0
  %3022 = vmatprep.subr.bf16.mxu0 0
  %3023 = vmatpush1.bf16.msra.mxu0 0
  %3024 = vmatprep.subr.bf16.mxu0 0
  %3025 = vmatpush1.bf16.msra.mxu0 0
  %3026 = vmatprep.subr.bf16.mxu0 0
  %3027 = vmatpush1.bf16.msra.mxu0 0
  %3028 = vmatprep.mubr.bf16.mxu0 0
  %3029 = vmatmul.mubr.bf16.gmra.mrb[0].mxu0 %v2988
  %v3030 = vpop.f32.mrb[0].mxu0
  %v3031 = vadd.f32 %v2973, %v3030
  %v3032 = vpop.f32.mrb[0].mxu0
  %v3033 = vpop.f32.mrb[0].mxu0
  %v3034 = vadd.f32 %v2973, %v3033
  %v3035 = vpop.f32.mrb[0].mxu0
  %3036 = vmatprep.mubr.bf16.mxu0 0
  %3037 = vmatmul.mubr.bf16.gmra.mrb[0].mxu0 %v2991
  %v3038 = vpop.f32.mrb[0].mxu0
  %v3039 = vadd.f32 %v2973, %v3038
  %v3040 = vpop.f32.mrb[0].mxu0
  %v3041 = vpop.f32.mrb[0].mxu0
  %v3042 = vadd.f32 %v2973, %v3041
  %v3043 = vpop.f32.mrb[0].mxu0
  %3044 = vmatprep.mubr.bf16.mxu0 0
  %3045 = vmatmul.mubr.bf16.gmra.mrb[0].mxu0 %v2994
  %v3046 = vpop.f32.mrb[0].mxu0
  %v3047 = vadd.f32 %v2973, %v3046
  %v3048 = vpop.f32.mrb[0].mxu0
  %v3049 = vpop.f32.mrb[0].mxu0
  %v3050 = vadd.f32 %v2973, %v3049
  %v3051 = vpop.f32.mrb[0].mxu0
  %3052 = vdwg.mxu0
  %v3053 = vld [vmem:[%s47] sm:$0xf]
  %v3054 = vld [vmem:[%s47 + $0x4] sm:$0xf]
  %v3055 = vld [vmem:[%s47 + $0x8] sm:$0xf]
  %v3056 = vld [vmem:[%s47 + $0xc] sm:$0xf]
  %v3057 = vld [vmem:[%s49] sm:$0x1]
  %v3059 = vlaneseq
  %v3060 = vshrl.u32 %v3059, 7
  %v3061 = vsub.s32 0, %v3060
  %v3062 = vrot.slane %v3057, %v3061
  %v3068 = vunpack.c.l.b16 %v3053
  %v3069 = vunpack.c.l.b16 %v3054
  %v3070 = vunpack.c.l.b16 %v3055
  %v3071 = vunpack.c.l.b16 %v3056
  %v3072 = vpack.c.b16 %v3069, %v3068
  %v3073 = vpack.c.b16 %v3071, %v3070
  %3076 = vmatprep.subr.bf16.mxu0 0
  %3077 = vmatpush1.bf16.msra.mxu0 %v3072
  %3078 = vmatprep.subr.bf16.mxu0 0
  %3079 = vmatpush1.bf16.msra.mxu0 %v3073
  %3080 = vmatprep.subr.bf16.mxu0 0
  %3081 = vmatpush1.bf16.msra.mxu0 0
  %3082 = vmatprep.subr.bf16.mxu0 0
  %3083 = vmatpush1.bf16.msra.mxu0 0
  %3084 = vmatprep.subr.bf16.mxu0 0
  %3085 = vmatpush1.bf16.msra.mxu0 0
  %3086 = vmatprep.subr.bf16.mxu0 0
  %3087 = vmatpush1.bf16.msra.mxu0 0
  %3088 = vmatprep.subr.bf16.mxu0 0
  %3089 = vmatpush1.bf16.msra.mxu0 0
  %3090 = vmatprep.subr.bf16.mxu0 0
  %3091 = vmatpush1.bf16.msra.mxu0 0
  %3092 = vmatprep.subr.bf16.mxu0 0
  %3093 = vmatpush1.bf16.msra.mxu0 0
  %3094 = vmatprep.subr.bf16.mxu0 0
  %3095 = vmatpush1.bf16.msra.mxu0 0
  %3096 = vmatprep.subr.bf16.mxu0 0
  %3097 = vmatpush1.bf16.msra.mxu0 0
  %3098 = vmatprep.subr.bf16.mxu0 0
  %3099 = vmatpush1.bf16.msra.mxu0 0
  %3100 = vmatprep.subr.bf16.mxu0 0
  %3101 = vmatpush1.bf16.msra.mxu0 0
  %3102 = vmatprep.subr.bf16.mxu0 0
  %3103 = vmatpush1.bf16.msra.mxu0 0
  %3104 = vmatprep.subr.bf16.mxu0 0
  %3105 = vmatpush1.bf16.msra.mxu0 0
  %3106 = vmatprep.subr.bf16.mxu0 0
  %3107 = vmatpush1.bf16.msra.mxu0 0
  %3108 = vmatprep.mubr.bf16.mxu0 0
  %3109 = vmatmul.mubr.bf16.gmra.mrb[0].mxu0 %v2988
  %v3110 = vpop.f32.mrb[0].mxu0
  %v3111 = vadd.f32 %v3062, %v3110
  %v3112 = vpop.f32.mrb[0].mxu0
  %v3113 = vpop.f32.mrb[0].mxu0
  %v3114 = vadd.f32 %v3062, %v3113
  %v3115 = vpop.f32.mrb[0].mxu0
  %3116 = vmatprep.mubr.bf16.mxu0 0
  %3117 = vmatmul.mubr.bf16.gmra.mrb[0].mxu0 %v2991
  %v3118 = vpop.f32.mrb[0].mxu0
  %v3119 = vadd.f32 %v3062, %v3118
  %v3120 = vpop.f32.mrb[0].mxu0
  %v3121 = vpop.f32.mrb[0].mxu0
  %v3122 = vadd.f32 %v3062, %v3121
  %v3123 = vpop.f32.mrb[0].mxu0
  %3124 = vmatprep.mubr.bf16.mxu0 0
  %3125 = vmatmul.mubr.bf16.gmra.mrb[0].mxu0 %v2994
  %v3126 = vpop.f32.mrb[0].mxu0
  %v3127 = vadd.f32 %v3062, %v3126
  %v3128 = vpop.f32.mrb[0].mxu0
  %v3129 = vpop.f32.mrb[0].mxu0
  %v3130 = vadd.f32 %v3062, %v3129
  %v3131 = vpop.f32.mrb[0].mxu0
  %3132 = vdwg.mxu0
  %v3133 = vld [vmem:[%s51] sm:$0xf]
  %v3134 = vld [vmem:[%s51 + $0x4] sm:$0xf]
  %v3135 = vld [vmem:[%s51 + $0x8] sm:$0xf]
  %v3136 = vld [vmem:[%s51 + $0xc] sm:$0xf]
  %v3137 = vld [vmem:[%s53] sm:$0x1]
  %v3139 = vlaneseq
  %v3140 = vshrl.u32 %v3139, 7
  %v3141 = vsub.s32 0, %v3140
  %v3142 = vrot.slane %v3137, %v3141
  %v3148 = vunpack.c.l.b16 %v3133
  %v3149 = vunpack.c.l.b16 %v3134
  %v3150 = vunpack.c.l.b16 %v3135
  %v3151 = vunpack.c.l.b16 %v3136
  %v3152 = vpack.c.b16 %v3149, %v3148
  %v3153 = vpack.c.b16 %v3151, %v3150
  %3156 = vmatprep.subr.bf16.mxu0 0
  %3157 = vmatpush1.bf16.msra.mxu0 %v3152
  %3158 = vmatprep.subr.bf16.mxu0 0
  %3159 = vmatpush1.bf16.msra.mxu0 %v3153
  %3160 = vmatprep.subr.bf16.mxu0 0
  %3161 = vmatpush1.bf16.msra.mxu0 0
  %3162 = vmatprep.subr.bf16.mxu0 0
  %3163 = vmatpush1.bf16.msra.mxu0 0
  %3164 = vmatprep.subr.bf16.mxu0 0
  %3165 = vmatpush1.bf16.msra.mxu0 0
  %3166 = vmatprep.subr.bf16.mxu0 0
  %3167 = vmatpush1.bf16.msra.mxu0 0
  %3168 = vmatprep.subr.bf16.mxu0 0
  %3169 = vmatpush1.bf16.msra.mxu0 0
  %3170 = vmatprep.subr.bf16.mxu0 0
  %3171 = vmatpush1.bf16.msra.mxu0 0
  %3172 = vmatprep.subr.bf16.mxu0 0
  %3173 = vmatpush1.bf16.msra.mxu0 0
  %3174 = vmatprep.subr.bf16.mxu0 0
  %3175 = vmatpush1.bf16.msra.mxu0 0
  %3176 = vmatprep.subr.bf16.mxu0 0
  %3177 = vmatpush1.bf16.msra.mxu0 0
  %3178 = vmatprep.subr.bf16.mxu0 0
  %3179 = vmatpush1.bf16.msra.mxu0 0
  %3180 = vmatprep.subr.bf16.mxu0 0
  %3181 = vmatpush1.bf16.msra.mxu0 0
  %3182 = vmatprep.subr.bf16.mxu0 0
  %3183 = vmatpush1.bf16.msra.mxu0 0
  %3184 = vmatprep.subr.bf16.mxu0 0
  %3185 = vmatpush1.bf16.msra.mxu0 0
  %3186 = vmatprep.subr.bf16.mxu0 0
  %3187 = vmatpush1.bf16.msra.mxu0 0
  %3188 = vmatprep.mubr.bf16.mxu0 0
  %3189 = vmatmul.mubr.bf16.gmra.mrb[0].mxu0 %v2988
  %v3190 = vpop.f32.mrb[0].mxu0
  %v3191 = vadd.f32 %v3142, %v3190
  %v3192 = vpop.f32.mrb[0].mxu0
  %v3193 = vpop.f32.mrb[0].mxu0
  %v3194 = vadd.f32 %v3142, %v3193
  %v3195 = vpop.f32.mrb[0].mxu0
  %3196 = vmatprep.mubr.bf16.mxu0 0
  %3197 = vmatmul.mubr.bf16.gmra.mrb[0].mxu0 %v2991
  %v3198 = vpop.f32.mrb[0].mxu0
  %v3199 = vadd.f32 %v3142, %v3198
  %v3200 = vpop.f32.mrb[0].mxu0
  %v3201 = vpop.f32.mrb[0].mxu0
  %v3202 = vadd.f32 %v3142, %v3201
  %v3203 = vpop.f32.mrb[0].mxu0
  %3204 = vmatprep.mubr.bf16.mxu0 0
  %3205 = vmatmul.mubr.bf16.gmra.mrb[0].mxu0 %v2994
  %v3206 = vpop.f32.mrb[0].mxu0
  %v3207 = vadd.f32 %v3142, %v3206
  %v3208 = vpop.f32.mrb[0].mxu0
  %v3209 = vpop.f32.mrb[0].mxu0
  %v3210 = vadd.f32 %v3142, %v3209
  %v3211 = vpop.f32.mrb[0].mxu0
  %3212 = vdwg.mxu0
  %v3213 = vpack.c.bf16 %v3034, %v3031
  %v3214 = vpack.c.bf16 %v3042, %v3039
  %v3215 = vpack.c.bf16 %v3050, %v3047
  %v3216 = vpack.c.bf16 %v3114, %v3111
  %v3217 = vpack.c.bf16 %v3122, %v3119
  %v3218 = vpack.c.bf16 %v3130, %v3127
  %v3220 = vsel %vm531, %v3213, 0
  %v3223 = vsel %vm531, %v3214, 0
  %v3226 = vsel %vm531, %v3215, 0
  %v3229 = vsel %vm531, %v3216, 0
  %v3232 = vsel %vm531, %v3217, 0
  %v3235 = vsel %vm531, %v3218, 0
  %3237 = vmatprep.subr.bf16.mxu0 0
  %3238 = vmatpush1.bf16.xpose.msra.mxu0 %v3229
  %3239 = vmatprep.subr.bf16.mxu0 0
  %3240 = vmatpush1.bf16.xpose.msra.mxu0 %v3232
  %3241 = vmatprep.subr.bf16.mxu0 0
  %3242 = vmatpush1.bf16.xpose.msra.mxu0 %v3235
  %3243 = vmatprep.subr.bf16.mxu0 0
  %3244 = vmatpush1.bf16.xpose.msra.mxu0 0
  %3245 = vmatprep.subr.bf16.mxu0 0
  %3246 = vmatpush1.bf16.xpose.msra.mxu0 0
  %3247 = vmatprep.subr.bf16.mxu0 0
  %3248 = vmatpush1.bf16.xpose.msra.mxu0 0
  %3249 = vmatprep.subr.bf16.mxu0 0
  %3250 = vmatpush1.bf16.xpose.msra.mxu0 0
  %3251 = vmatprep.subr.bf16.mxu0 0
  %3252 = vmatpush1.bf16.xpose.msra.mxu0 0
  %3253 = vmatprep.subr.bf16.mxu0 0
  %3254 = vmatpush1.bf16.xpose.msra.mxu0 0
  %3255 = vmatprep.subr.bf16.mxu0 0
  %3256 = vmatpush1.bf16.xpose.msra.mxu0 0
  %3257 = vmatprep.subr.bf16.mxu0 0
  %3258 = vmatpush1.bf16.xpose.msra.mxu0 0
  %3259 = vmatprep.subr.bf16.mxu0 0
  %3260 = vmatpush1.bf16.xpose.msra.mxu0 0
  %3261 = vmatprep.subr.bf16.mxu0 0
  %3262 = vmatpush1.bf16.xpose.msra.mxu0 0
  %3263 = vmatprep.subr.bf16.mxu0 0
  %3264 = vmatpush1.bf16.xpose.msra.mxu0 0
  %3265 = vmatprep.subr.bf16.mxu0 0
  %3266 = vmatpush1.bf16.xpose.msra.mxu0 0
  %3267 = vmatprep.subr.bf16.mxu0 0
  %3268 = vmatpush1.bf16.xpose.msra.mxu0 0
  %3269 = vmatprep.mubr.bf16.mxu0 0
  %3270 = vmatmul.mubr.bf16.gmra.mrb[0].mxu0 %v3220
  %v3271 = vpop.f32.mrb[0].mxu0
  %v3272 = vadd.f32 0.0, %v3271
  %v3273 = vpop.f32.mrb[0].mxu0
  %v3274 = vpop.f32.mrb[0].mxu0
  %v3275 = vadd.f32 0.0, %v3274
  %v3276 = vpop.f32.mrb[0].mxu0
  %3277 = vmatprep.mubr.bf16.mxu0 0
  %3278 = vmatmul.mubr.bf16.gmra.mrb[0].mxu0 %v3223
  %v3279 = vpop.f32.mrb[0].mxu0
  %v3280 = vadd.f32 0.0, %v3279
  %v3281 = vpop.f32.mrb[0].mxu0
  %v3282 = vpop.f32.mrb[0].mxu0
  %v3283 = vadd.f32 0.0, %v3282
  %v3284 = vpop.f32.mrb[0].mxu0
  %3285 = vmatprep.mubr.bf16.mxu0 0
  %3286 = vmatmul.mubr.bf16.gmra.mrb[0].mxu0 %v3226
  %v3287 = vpop.f32.mrb[0].mxu0
  %v3288 = vadd.f32 0.0, %v3287
  %v3289 = vpop.f32.mrb[0].mxu0
  %v3290 = vpop.f32.mrb[0].mxu0
  %v3291 = vadd.f32 0.0, %v3290
  %v3292 = vpop.f32.mrb[0].mxu0
  %3293 = vdwg.mxu0
  %v3294 = vmul.f32 %v3272, 0.35355338
  %v3295 = vmul.f32 %v3275, 0.35355338
  %v3296 = vmul.f32 %v3280, 0.35355338
  %v3297 = vmul.f32 %v3283, 0.35355338
  %v3298 = vmul.f32 %v3288, 0.35355338
  %v3299 = vmul.f32 %v3291, 0.35355338
  %v3300 = vadd.f32 %v3294, %v161
  %v3301 = vadd.f32 %v3295, %v162
  %v3302 = vadd.f32 %v3296, %v163
  %v3303 = vadd.f32 %v3297, %v164
  %v3304 = vadd.f32 %v3298, %v165
  %v3305 = vadd.f32 %v3299, %v166
  %v3306 = vsel %vm619, %v3300, -inf
  %3307 = vmax.xlane.f32.xlu0 %v3306
  %v3308 = vpop.xlane.xlu0 %3307
  %v3309 = vsel %vm619, %v3301, -inf
  %3310 = vmax.xlane.f32.xlu0 %v3309
  %v3311 = vpop.xlane.xlu0 %3310
  %v3312 = vsel %vm619, %v3302, -inf
  %3313 = vmax.xlane.f32.xlu0 %v3312
  %v3314 = vpop.xlane.xlu0 %3313
  %v3315 = vsel %vm619, %v3303, -inf
  %3316 = vmax.xlane.f32.xlu0 %v3315
  %v3317 = vpop.xlane.xlu0 %3316
  %v3318 = vsel %vm619, %v3304, -inf
  %3319 = vmax.xlane.f32.xlu0 %v3318
  %v3320 = vpop.xlane.xlu0 %3319
  %v3321 = vsel %vm619, %v3305, -inf
  %3322 = vmax.xlane.f32.xlu0 %v3321
  %v3323 = vpop.xlane.xlu0 %3322
  %v3324 = vsub.f32 %v3300, %v3308
  %v3325 = vsub.f32 %v3301, %v3311
  %v3326 = vsub.f32 %v3302, %v3314
  %v3327 = vsub.f32 %v3303, %v3317
  %v3328 = vsub.f32 %v3304, %v3320
  %v3329 = vsub.f32 %v3305, %v3323
  %v3330 = vmul.f32 %v3324, 1.442695
  %v3331 = vpow.pop %v3330
  %v3332 = vmul.f32 %v3325, 1.442695
  %v3333 = vpow.pop %v3332
  %v3334 = vmul.f32 %v3326, 1.442695
  %v3335 = vpow.pop %v3334
  %v3336 = vmul.f32 %v3327, 1.442695
  %v3337 = vpow.pop %v3336
  %v3338 = vmul.f32 %v3328, 1.442695
  %v3339 = vpow.pop %v3338
  %v3340 = vmul.f32 %v3329, 1.442695
  %v3341 = vpow.pop %v3340
  %v3342 = vsel %vm619, %v3331, 0.0
  %3343 = vadd.xlane.f32.xlu0 %v3342
  %v3344 = vpop.xlane.xlu0 %3343
  %v3345 = vsel %vm619, %v3333, 0.0
  %3346 = vadd.xlane.f32.xlu0 %v3345
  %v3347 = vpop.xlane.xlu0 %3346
  %v3348 = vsel %vm619, %v3335, 0.0
  %3349 = vadd.xlane.f32.xlu0 %v3348
  %v3350 = vpop.xlane.xlu0 %3349
  %v3351 = vsel %vm619, %v3337, 0.0
  %3352 = vadd.xlane.f32.xlu0 %v3351
  %v3353 = vpop.xlane.xlu0 %3352
  %v3354 = vsel %vm619, %v3339, 0.0
  %3355 = vadd.xlane.f32.xlu0 %v3354
  %v3356 = vpop.xlane.xlu0 %3355
  %v3357 = vsel %vm619, %v3341, 0.0
  %3358 = vadd.xlane.f32.xlu0 %v3357
  %v3359 = vpop.xlane.xlu0 %3358
  %v3360 = vrcp.pop %v3344
  %v3361 = vrcp.pop %v3347
  %v3362 = vrcp.pop %v3350
  %v3363 = vrcp.pop %v3353
  %v3364 = vrcp.pop %v3356
  %v3365 = vrcp.pop %v3359
  %v3366 = vmul.f32 %v3331, %v3360
  %v3367 = vmul.f32 %v3333, %v3361
  %v3368 = vmul.f32 %v3335, %v3362
  %v3369 = vmul.f32 %v3337, %v3363
  %v3370 = vmul.f32 %v3339, %v3364
  %v3371 = vmul.f32 %v3341, %v3365
  %v3372 = vpack.c.bf16 %v3367, %v3366
  %v3373 = vpack.c.bf16 %v3369, %v3368
  %v3374 = vpack.c.bf16 %v3371, %v3370
  %v3375 = vpack.c.bf16 %v3194, %v3191
  %v3376 = vpack.c.bf16 %v3202, %v3199
  %v3377 = vpack.c.bf16 %v3210, %v3207
  %v3379 = vsel %vm619, %v3372, 0
  %v3382 = vsel %vm619, %v3373, 0
  %v3385 = vsel %vm619, %v3374, 0
  %3387 = vmatprep.subr.bf16.mxu0 0
  %3388 = vmatpush1.bf16.msra.mxu0 %v3375
  %3389 = vmatprep.subr.bf16.mxu0 0
  %3390 = vmatpush1.bf16.msra.mxu0 %v3376
  %3391 = vmatprep.subr.bf16.mxu0 0
  %3392 = vmatpush1.bf16.msra.mxu0 %v3377
  %3393 = vmatprep.subr.bf16.mxu0 0
  %3394 = vmatpush1.bf16.msra.mxu0 0
  %3395 = vmatprep.subr.bf16.mxu0 0
  %3396 = vmatpush1.bf16.msra.mxu0 0
  %3397 = vmatprep.subr.bf16.mxu0 0
  %3398 = vmatpush1.bf16.msra.mxu0 0
  %3399 = vmatprep.subr.bf16.mxu0 0
  %3400 = vmatpush1.bf16.msra.mxu0 0
  %3401 = vmatprep.subr.bf16.mxu0 0
  %3402 = vmatpush1.bf16.msra.mxu0 0
  %3403 = vmatprep.subr.bf16.mxu0 0
  %3404 = vmatpush1.bf16.msra.mxu0 0
  %3405 = vmatprep.subr.bf16.mxu0 0
  %3406 = vmatpush1.bf16.msra.mxu0 0
  %3407 = vmatprep.subr.bf16.mxu0 0
  %3408 = vmatpush1.bf16.msra.mxu0 0
  %3409 = vmatprep.subr.bf16.mxu0 0
  %3410 = vmatpush1.bf16.msra.mxu0 0
  %3411 = vmatprep.subr.bf16.mxu0 0
  %3412 = vmatpush1.bf16.msra.mxu0 0
  %3413 = vmatprep.subr.bf16.mxu0 0
  %3414 = vmatpush1.bf16.msra.mxu0 0
  %3415 = vmatprep.subr.bf16.mxu0 0
  %3416 = vmatpush1.bf16.msra.mxu0 0
  %3417 = vmatprep.subr.bf16.mxu0 0
  %3418 = vmatpush1.bf16.msra.mxu0 0
  %3419 = vmatprep.mubr.bf16.mxu0 0
  %3420 = vmatmul.mubr.bf16.gmra.mrb[0].mxu0 %v3379
  %v3421 = vpop.f32.mrb[0].mxu0
  %v3422 = vadd.f32 0.0, %v3421
  %v3423 = vpop.f32.mrb[0].mxu0
  %v3424 = vpop.f32.mrb[0].mxu0
  %v3425 = vadd.f32 0.0, %v3424
  %v3426 = vpop.f32.mrb[0].mxu0
  %3427 = vmatprep.mubr.bf16.mxu0 0
  %3428 = vmatmul.mubr.bf16.gmra.mrb[0].mxu0 %v3382
  %v3429 = vpop.f32.mrb[0].mxu0
  %v3430 = vadd.f32 0.0, %v3429
  %v3431 = vpop.f32.mrb[0].mxu0
  %v3432 = vpop.f32.mrb[0].mxu0
  %v3433 = vadd.f32 0.0, %v3432
  %v3434 = vpop.f32.mrb[0].mxu0
  %3435 = vmatprep.mubr.bf16.mxu0 0
  %3436 = vmatmul.mubr.bf16.gmra.mrb[0].mxu0 %v3385
  %v3437 = vpop.f32.mrb[0].mxu0
  %v3438 = vadd.f32 0.0, %v3437
  %v3439 = vpop.f32.mrb[0].mxu0
  %v3440 = vpop.f32.mrb[0].mxu0
  %v3441 = vadd.f32 0.0, %v3440
  %v3442 = vpop.f32.mrb[0].mxu0
  %3443 = vdwg.mxu0
  %v3444 = vld [vmem:[%s55] sm:$0xf]
  %v3445 = vpack.c.bf16 %v3425, %v3422
  %v3446 = vpack.c.bf16 %v3433, %v3430
  %v3447 = vpack.c.bf16 %v3441, %v3438
  %s3448 = scalar_lea.vmem %s43, 16
  %v3449 = vld [vmem:[%s3448] sm:$0xf]
  %v3450 = vld [vmem:[%s3448 + $0x4] sm:$0xf]
  %v3451 = vld [vmem:[%s3448 + $0x8] sm:$0xf]
  %v3452 = vld [vmem:[%s3448 + $0xc] sm:$0xf]
  %s3453 = scalar_lea.vmem %s45, 1
  %v3454 = vld [vmem:[%s3453] sm:$0x1]
  %v3456 = vlaneseq
  %v3457 = vshrl.u32 %v3456, 7
  %v3458 = vsub.s32 0, %v3457
  %v3459 = vrot.slane %v3454, %v3458
  %v3465 = vunpack.c.l.b16 %v3449
  %v3466 = vunpack.c.l.b16 %v3450
  %v3467 = vunpack.c.l.b16 %v3451
  %v3468 = vunpack.c.l.b16 %v3452
  %v3469 = vpack.c.b16 %v3466, %v3465
  %v3470 = vpack.c.b16 %v3468, %v3467
  %3473 = vmatprep.subr.bf16.mxu0 0
  %3474 = vmatpush1.bf16.msra.mxu0 %v3469
  %3475 = vmatprep.subr.bf16.mxu0 0
  %3476 = vmatpush1.bf16.msra.mxu0 %v3470
  %3477 = vmatprep.subr.bf16.mxu0 0
  %3478 = vmatpush1.bf16.msra.mxu0 0
  %3479 = vmatprep.subr.bf16.mxu0 0
  %3480 = vmatpush1.bf16.msra.mxu0 0
  %3481 = vmatprep.subr.bf16.mxu0 0
  %3482 = vmatpush1.bf16.msra.mxu0 0
  %3483 = vmatprep.subr.bf16.mxu0 0
  %3484 = vmatpush1.bf16.msra.mxu0 0
  %3485 = vmatprep.subr.bf16.mxu0 0
  %3486 = vmatpush1.bf16.msra.mxu0 0
  %3487 = vmatprep.subr.bf16.mxu0 0
  %3488 = vmatpush1.bf16.msra.mxu0 0
  %3489 = vmatprep.subr.bf16.mxu0 0
  %3490 = vmatpush1.bf16.msra.mxu0 0
  %3491 = vmatprep.subr.bf16.mxu0 0
  %3492 = vmatpush1.bf16.msra.mxu0 0
  %3493 = vmatprep.subr.bf16.mxu0 0
  %3494 = vmatpush1.bf16.msra.mxu0 0
  %3495 = vmatprep.subr.bf16.mxu0 0
  %3496 = vmatpush1.bf16.msra.mxu0 0
  %3497 = vmatprep.subr.bf16.mxu0 0
  %3498 = vmatpush1.bf16.msra.mxu0 0
  %3499 = vmatprep.subr.bf16.mxu0 0
  %3500 = vmatpush1.bf16.msra.mxu0 0
  %3501 = vmatprep.subr.bf16.mxu0 0
  %3502 = vmatpush1.bf16.msra.mxu0 0
  %3503 = vmatprep.subr.bf16.mxu0 0
  %3504 = vmatpush1.bf16.msra.mxu0 0
  %3505 = vmatprep.mubr.bf16.mxu0 0
  %3506 = vmatmul.mubr.bf16.gmra.mrb[0].mxu0 %v2988
  %v3507 = vpop.f32.mrb[0].mxu0
  %v3508 = vadd.f32 %v3459, %v3507
  %v3509 = vpop.f32.mrb[0].mxu0
  %v3510 = vpop.f32.mrb[0].mxu0
  %v3511 = vadd.f32 %v3459, %v3510
  %v3512 = vpop.f32.mrb[0].mxu0
  %3513 = vmatprep.mubr.bf16.mxu0 0
  %3514 = vmatmul.mubr.bf16.gmra.mrb[0].mxu0 %v2991
  %v3515 = vpop.f32.mrb[0].mxu0
  %v3516 = vadd.f32 %v3459, %v3515
  %v3517 = vpop.f32.mrb[0].mxu0
  %v3518 = vpop.f32.mrb[0].mxu0
  %v3519 = vadd.f32 %v3459, %v3518
  %v3520 = vpop.f32.mrb[0].mxu0
  %3521 = vmatprep.mubr.bf16.mxu0 0
  %3522 = vmatmul.mubr.bf16.gmra.mrb[0].mxu0 %v2994
  %v3523 = vpop.f32.mrb[0].mxu0
  %v3524 = vadd.f32 %v3459, %v3523
  %v3525 = vpop.f32.mrb[0].mxu0
  %v3526 = vpop.f32.mrb[0].mxu0
  %v3527 = vadd.f32 %v3459, %v3526
  %v3528 = vpop.f32.mrb[0].mxu0
  %3529 = vdwg.mxu0
  %s3530 = scalar_lea.vmem %s47, 16
  %v3531 = vld [vmem:[%s3530] sm:$0xf]
  %v3532 = vld [vmem:[%s3530 + $0x4] sm:$0xf]
  %v3533 = vld [vmem:[%s3530 + $0x8] sm:$0xf]
  %v3534 = vld [vmem:[%s3530 + $0xc] sm:$0xf]
  %s3535 = scalar_lea.vmem %s49, 1
  %v3536 = vld [vmem:[%s3535] sm:$0x1]
  %v3538 = vlaneseq
  %v3539 = vshrl.u32 %v3538, 7
  %v3540 = vsub.s32 0, %v3539
  %v3541 = vrot.slane %v3536, %v3540
  %v3547 = vunpack.c.l.b16 %v3531
  %v3548 = vunpack.c.l.b16 %v3532
  %v3549 = vunpack.c.l.b16 %v3533
  %v3550 = vunpack.c.l.b16 %v3534
  %v3551 = vpack.c.b16 %v3548, %v3547
  %v3552 = vpack.c.b16 %v3550, %v3549
  %3555 = vmatprep.subr.bf16.mxu0 0
  %3556 = vmatpush1.bf16.msra.mxu0 %v3551
  %3557 = vmatprep.subr.bf16.mxu0 0
  %3558 = vmatpush1.bf16.msra.mxu0 %v3552
  %3559 = vmatprep.subr.bf16.mxu0 0
  %3560 = vmatpush1.bf16.msra.mxu0 0
  %3561 = vmatprep.subr.bf16.mxu0 0
  %3562 = vmatpush1.bf16.msra.mxu0 0
  %3563 = vmatprep.subr.bf16.mxu0 0
  %3564 = vmatpush1.bf16.msra.mxu0 0
  %3565 = vmatprep.subr.bf16.mxu0 0
  %3566 = vmatpush1.bf16.msra.mxu0 0
  %3567 = vmatprep.subr.bf16.mxu0 0
  %3568 = vmatpush1.bf16.msra.mxu0 0
  %3569 = vmatprep.subr.bf16.mxu0 0
  %3570 = vmatpush1.bf16.msra.mxu0 0
  %3571 = vmatprep.subr.bf16.mxu0 0
  %3572 = vmatpush1.bf16.msra.mxu0 0
  %3573 = vmatprep.subr.bf16.mxu0 0
  %3574 = vmatpush1.bf16.msra.mxu0 0
  %3575 = vmatprep.subr.bf16.mxu0 0
  %3576 = vmatpush1.bf16.msra.mxu0 0
  %3577 = vmatprep.subr.bf16.mxu0 0
  %3578 = vmatpush1.bf16.msra.mxu0 0
  %3579 = vmatprep.subr.bf16.mxu0 0
  %3580 = vmatpush1.bf16.msra.mxu0 0
  %3581 = vmatprep.subr.bf16.mxu0 0
  %3582 = vmatpush1.bf16.msra.mxu0 0
  %3583 = vmatprep.subr.bf16.mxu0 0
  %3584 = vmatpush1.bf16.msra.mxu0 0
  %3585 = vmatprep.subr.bf16.mxu0 0
  %3586 = vmatpush1.bf16.msra.mxu0 0
  %3587 = vmatprep.mubr.bf16.mxu0 0
  %3588 = vmatmul.mubr.bf16.gmra.mrb[0].mxu0 %v2988
  %v3589 = vpop.f32.mrb[0].mxu0
  %v3590 = vadd.f32 %v3541, %v3589
  %v3591 = vpop.f32.mrb[0].mxu0
  %v3592 = vpop.f32.mrb[0].mxu0
  %v3593 = vadd.f32 %v3541, %v3592
  %v3594 = vpop.f32.mrb[0].mxu0
  %3595 = vmatprep.mubr.bf16.mxu0 0
  %3596 = vmatmul.mubr.bf16.gmra.mrb[0].mxu0 %v2991
  %v3597 = vpop.f32.mrb[0].mxu0
  %v3598 = vadd.f32 %v3541, %v3597
  %v3599 = vpop.f32.mrb[0].mxu0
  %v3600 = vpop.f32.mrb[0].mxu0
  %v3601 = vadd.f32 %v3541, %v3600
  %v3602 = vpop.f32.mrb[0].mxu0
  %3603 = vmatprep.mubr.bf16.mxu0 0
  %3604 = vmatmul.mubr.bf16.gmra.mrb[0].mxu0 %v2994
  %v3605 = vpop.f32.mrb[0].mxu0
  %v3606 = vadd.f32 %v3541, %v3605
  %v3607 = vpop.f32.mrb[0].mxu0
  %v3608 = vpop.f32.mrb[0].mxu0
  %v3609 = vadd.f32 %v3541, %v3608
  %v3610 = vpop.f32.mrb[0].mxu0
  %3611 = vdwg.mxu0
  %s3612 = scalar_lea.vmem %s51, 16
  %v3613 = vld [vmem:[%s3612] sm:$0xf]
  %v3614 = vld [vmem:[%s3612 + $0x4] sm:$0xf]
  %v3615 = vld [vmem:[%s3612 + $0x8] sm:$0xf]
  %v3616 = vld [vmem:[%s3612 + $0xc] sm:$0xf]
  %s3617 = scalar_lea.vmem %s53, 1
  %v3618 = vld [vmem:[%s3617] sm:$0x1]
  %v3620 = vlaneseq
  %v3621 = vshrl.u32 %v3620, 7
  %v3622 = vsub.s32 0, %v3621
  %v3623 = vrot.slane %v3618, %v3622
  %v3629 = vunpack.c.l.b16 %v3613
  %v3630 = vunpack.c.l.b16 %v3614
  %v3631 = vunpack.c.l.b16 %v3615
  %v3632 = vunpack.c.l.b16 %v3616
  %v3633 = vpack.c.b16 %v3630, %v3629
  %v3634 = vpack.c.b16 %v3632, %v3631
  %3637 = vmatprep.subr.bf16.mxu0 0
  %3638 = vmatpush1.bf16.msra.mxu0 %v3633
  %3639 = vmatprep.subr.bf16.mxu0 0
  %3640 = vmatpush1.bf16.msra.mxu0 %v3634
  %3641 = vmatprep.subr.bf16.mxu0 0
  %3642 = vmatpush1.bf16.msra.mxu0 0
  %3643 = vmatprep.subr.bf16.mxu0 0
  %3644 = vmatpush1.bf16.msra.mxu0 0
  %3645 = vmatprep.subr.bf16.mxu0 0
  %3646 = vmatpush1.bf16.msra.mxu0 0
  %3647 = vmatprep.subr.bf16.mxu0 0
  %3648 = vmatpush1.bf16.msra.mxu0 0
  %3649 = vmatprep.subr.bf16.mxu0 0
  %3650 = vmatpush1.bf16.msra.mxu0 0
  %3651 = vmatprep.subr.bf16.mxu0 0
  %3652 = vmatpush1.bf16.msra.mxu0 0
  %3653 = vmatprep.subr.bf16.mxu0 0
  %3654 = vmatpush1.bf16.msra.mxu0 0
  %3655 = vmatprep.subr.bf16.mxu0 0
  %3656 = vmatpush1.bf16.msra.mxu0 0
  %3657 = vmatprep.subr.bf16.mxu0 0
  %3658 = vmatpush1.bf16.msra.mxu0 0
  %3659 = vmatprep.subr.bf16.mxu0 0
  %3660 = vmatpush1.bf16.msra.mxu0 0
  %3661 = vmatprep.subr.bf16.mxu0 0
  %3662 = vmatpush1.bf16.msra.mxu0 0
  %3663 = vmatprep.subr.bf16.mxu0 0
  %3664 = vmatpush1.bf16.msra.mxu0 0
  %3665 = vmatprep.subr.bf16.mxu0 0
  %3666 = vmatpush1.bf16.msra.mxu0 0
  %3667 = vmatprep.subr.bf16.mxu0 0
  %3668 = vmatpush1.bf16.msra.mxu0 0
  %3669 = vmatprep.mubr.bf16.mxu0 0
  %3670 = vmatmul.mubr.bf16.gmra.mrb[0].mxu0 %v2988
  %v3671 = vpop.f32.mrb[0].mxu0
  %v3672 = vadd.f32 %v3623, %v3671
  %v3673 = vpop.f32.mrb[0].mxu0
  %v3674 = vpop.f32.mrb[0].mxu0
  %v3675 = vadd.f32 %v3623, %v3674
  %v3676 = vpop.f32.mrb[0].mxu0
  %3677 = vmatprep.mubr.bf16.mxu0 0
  %3678 = vmatmul.mubr.bf16.gmra.mrb[0].mxu0 %v2991
  %v3679 = vpop.f32.mrb[0].mxu0
  %v3680 = vadd.f32 %v3623, %v3679
  %v3681 = vpop.f32.mrb[0].mxu0
  %v3682 = vpop.f32.mrb[0].mxu0
  %v3683 = vadd.f32 %v3623, %v3682
  %v3684 = vpop.f32.mrb[0].mxu0
  %3685 = vmatprep.mubr.bf16.mxu0 0
  %3686 = vmatmul.mubr.bf16.gmra.mrb[0].mxu0 %v2994
  %v3687 = vpop.f32.mrb[0].mxu0
  %v3688 = vadd.f32 %v3623, %v3687
  %v3689 = vpop.f32.mrb[0].mxu0
  %v3690 = vpop.f32.mrb[0].mxu0
  %v3691 = vadd.f32 %v3623, %v3690
  %v3692 = vpop.f32.mrb[0].mxu0
  %3693 = vdwg.mxu0
  %v3694 = vpack.c.bf16 %v3511, %v3508
  %v3695 = vpack.c.bf16 %v3519, %v3516
  %v3696 = vpack.c.bf16 %v3527, %v3524
  %v3697 = vpack.c.bf16 %v3593, %v3590
  %v3698 = vpack.c.bf16 %v3601, %v3598
  %v3699 = vpack.c.bf16 %v3609, %v3606
  %v3701 = vsel %vm531, %v3694, 0
  %v3704 = vsel %vm531, %v3695, 0
  %v3707 = vsel %vm531, %v3696, 0
  %v3710 = vsel %vm531, %v3697, 0
  %v3713 = vsel %vm531, %v3698, 0
  %v3716 = vsel %vm531, %v3699, 0
  %3718 = vmatprep.subr.bf16.mxu0 0
  %3719 = vmatpush1.bf16.xpose.msra.mxu0 %v3710
  %3720 = vmatprep.subr.bf16.mxu0 0
  %3721 = vmatpush1.bf16.xpose.msra.mxu0 %v3713
  %3722 = vmatprep.subr.bf16.mxu0 0
  %3723 = vmatpush1.bf16.xpose.msra.mxu0 %v3716
  %3724 = vmatprep.subr.bf16.mxu0 0
  %3725 = vmatpush1.bf16.xpose.msra.mxu0 0
  %3726 = vmatprep.subr.bf16.mxu0 0
  %3727 = vmatpush1.bf16.xpose.msra.mxu0 0
  %3728 = vmatprep.subr.bf16.mxu0 0
  %3729 = vmatpush1.bf16.xpose.msra.mxu0 0
  %3730 = vmatprep.subr.bf16.mxu0 0
  %3731 = vmatpush1.bf16.xpose.msra.mxu0 0
  %3732 = vmatprep.subr.bf16.mxu0 0
  %3733 = vmatpush1.bf16.xpose.msra.mxu0 0
  %3734 = vmatprep.subr.bf16.mxu0 0
  %3735 = vmatpush1.bf16.xpose.msra.mxu0 0
  %3736 = vmatprep.subr.bf16.mxu0 0
  %3737 = vmatpush1.bf16.xpose.msra.mxu0 0
  %3738 = vmatprep.subr.bf16.mxu0 0
  %3739 = vmatpush1.bf16.xpose.msra.mxu0 0
  %3740 = vmatprep.subr.bf16.mxu0 0
  %3741 = vmatpush1.bf16.xpose.msra.mxu0 0
  %3742 = vmatprep.subr.bf16.mxu0 0
  %3743 = vmatpush1.bf16.xpose.msra.mxu0 0
  %3744 = vmatprep.subr.bf16.mxu0 0
  %3745 = vmatpush1.bf16.xpose.msra.mxu0 0
  %3746 = vmatprep.subr.bf16.mxu0 0
  %3747 = vmatpush1.bf16.xpose.msra.mxu0 0
  %3748 = vmatprep.subr.bf16.mxu0 0
  %3749 = vmatpush1.bf16.xpose.msra.mxu0 0
  %3750 = vmatprep.mubr.bf16.mxu0 0
  %3751 = vmatmul.mubr.bf16.gmra.mrb[0].mxu0 %v3701
  %v3752 = vpop.f32.mrb[0].mxu0
  %v3753 = vadd.f32 0.0, %v3752
  %v3754 = vpop.f32.mrb[0].mxu0
  %v3755 = vpop.f32.mrb[0].mxu0
  %v3756 = vadd.f32 0.0, %v3755
  %v3757 = vpop.f32.mrb[0].mxu0
  %3758 = vmatprep.mubr.bf16.mxu0 0
  %3759 = vmatmul.mubr.bf16.gmra.mrb[0].mxu0 %v3704
  %v3760 = vpop.f32.mrb[0].mxu0
  %v3761 = vadd.f32 0.0, %v3760
  %v3762 = vpop.f32.mrb[0].mxu0
  %v3763 = vpop.f32.mrb[0].mxu0
  %v3764 = vadd.f32 0.0, %v3763
  %v3765 = vpop.f32.mrb[0].mxu0
  %3766 = vmatprep.mubr.bf16.mxu0 0
  %3767 = vmatmul.mubr.bf16.gmra.mrb[0].mxu0 %v3707
  %v3768 = vpop.f32.mrb[0].mxu0
  %v3769 = vadd.f32 0.0, %v3768
  %v3770 = vpop.f32.mrb[0].mxu0
  %v3771 = vpop.f32.mrb[0].mxu0
  %v3772 = vadd.f32 0.0, %v3771
  %v3773 = vpop.f32.mrb[0].mxu0
  %3774 = vdwg.mxu0
  %v3775 = vmul.f32 %v3753, 0.35355338
  %v3776 = vmul.f32 %v3756, 0.35355338
  %v3777 = vmul.f32 %v3761, 0.35355338
  %v3778 = vmul.f32 %v3764, 0.35355338
  %v3779 = vmul.f32 %v3769, 0.35355338
  %v3780 = vmul.f32 %v3772, 0.35355338
  %v3781 = vadd.f32 %v3775, %v161
  %v3782 = vadd.f32 %v3776, %v162
  %v3783 = vadd.f32 %v3777, %v163
  %v3784 = vadd.f32 %v3778, %v164
  %v3785 = vadd.f32 %v3779, %v165
  %v3786 = vadd.f32 %v3780, %v166
  %v3787 = vsel %vm619, %v3781, -inf
  %3788 = vmax.xlane.f32.xlu0 %v3787
  %v3789 = vpop.xlane.xlu0 %3788
  %v3790 = vsel %vm619, %v3782, -inf
  %3791 = vmax.xlane.f32.xlu0 %v3790
  %v3792 = vpop.xlane.xlu0 %3791
  %v3793 = vsel %vm619, %v3783, -inf
  %3794 = vmax.xlane.f32.xlu0 %v3793
  %v3795 = vpop.xlane.xlu0 %3794
  %v3796 = vsel %vm619, %v3784, -inf
  %3797 = vmax.xlane.f32.xlu0 %v3796
  %v3798 = vpop.xlane.xlu0 %3797
  %v3799 = vsel %vm619, %v3785, -inf
  %3800 = vmax.xlane.f32.xlu0 %v3799
  %v3801 = vpop.xlane.xlu0 %3800
  %v3802 = vsel %vm619, %v3786, -inf
  %3803 = vmax.xlane.f32.xlu0 %v3802
  %v3804 = vpop.xlane.xlu0 %3803
  %v3805 = vsub.f32 %v3781, %v3789
  %v3806 = vsub.f32 %v3782, %v3792
  %v3807 = vsub.f32 %v3783, %v3795
  %v3808 = vsub.f32 %v3784, %v3798
  %v3809 = vsub.f32 %v3785, %v3801
  %v3810 = vsub.f32 %v3786, %v3804
  %v3811 = vmul.f32 %v3805, 1.442695
  %v3812 = vpow.pop %v3811
  %v3813 = vmul.f32 %v3806, 1.442695
  %v3814 = vpow.pop %v3813
  %v3815 = vmul.f32 %v3807, 1.442695
  %v3816 = vpow.pop %v3815
  %v3817 = vmul.f32 %v3808, 1.442695
  %v3818 = vpow.pop %v3817
  %v3819 = vmul.f32 %v3809, 1.442695
  %v3820 = vpow.pop %v3819
  %v3821 = vmul.f32 %v3810, 1.442695
  %v3822 = vpow.pop %v3821
  %v3823 = vsel %vm619, %v3812, 0.0
  %3824 = vadd.xlane.f32.xlu0 %v3823
  %v3825 = vpop.xlane.xlu0 %3824
  %v3826 = vsel %vm619, %v3814, 0.0
  %3827 = vadd.xlane.f32.xlu0 %v3826
  %v3828 = vpop.xlane.xlu0 %3827
  %v3829 = vsel %vm619, %v3816, 0.0
  %3830 = vadd.xlane.f32.xlu0 %v3829
  %v3831 = vpop.xlane.xlu0 %3830
  %v3832 = vsel %vm619, %v3818, 0.0
  %3833 = vadd.xlane.f32.xlu0 %v3832
  %v3834 = vpop.xlane.xlu0 %3833
  %v3835 = vsel %vm619, %v3820, 0.0
  %3836 = vadd.xlane.f32.xlu0 %v3835
  %v3837 = vpop.xlane.xlu0 %3836
  %v3838 = vsel %vm619, %v3822, 0.0
  %3839 = vadd.xlane.f32.xlu0 %v3838
  %v3840 = vpop.xlane.xlu0 %3839
  %v3841 = vrcp.pop %v3825
  %v3842 = vrcp.pop %v3828
  %v3843 = vrcp.pop %v3831
  %v3844 = vrcp.pop %v3834
  %v3845 = vrcp.pop %v3837
  %v3846 = vrcp.pop %v3840
  %v3847 = vmul.f32 %v3812, %v3841
  %v3848 = vmul.f32 %v3814, %v3842
  %v3849 = vmul.f32 %v3816, %v3843
  %v3850 = vmul.f32 %v3818, %v3844
  %v3851 = vmul.f32 %v3820, %v3845
  %v3852 = vmul.f32 %v3822, %v3846
  %v3853 = vpack.c.bf16 %v3848, %v3847
  %v3854 = vpack.c.bf16 %v3850, %v3849
  %v3855 = vpack.c.bf16 %v3852, %v3851
  %v3856 = vpack.c.bf16 %v3675, %v3672
  %v3857 = vpack.c.bf16 %v3683, %v3680
  %v3858 = vpack.c.bf16 %v3691, %v3688
  %v3860 = vsel %vm619, %v3853, 0
  %v3863 = vsel %vm619, %v3854, 0
  %v3866 = vsel %vm619, %v3855, 0
  %3868 = vmatprep.subr.bf16.mxu0 0
  %3869 = vmatpush1.bf16.msra.mxu0 %v3856
  %3870 = vmatprep.subr.bf16.mxu0 0
  %3871 = vmatpush1.bf16.msra.mxu0 %v3857
  %3872 = vmatprep.subr.bf16.mxu0 0
  %3873 = vmatpush1.bf16.msra.mxu0 %v3858
  %3874 = vmatprep.subr.bf16.mxu0 0
  %3875 = vmatpush1.bf16.msra.mxu0 0
  %3876 = vmatprep.subr.bf16.mxu0 0
  %3877 = vmatpush1.bf16.msra.mxu0 0
  %3878 = vmatprep.subr.bf16.mxu0 0
  %3879 = vmatpush1.bf16.msra.mxu0 0
  %3880 = vmatprep.subr.bf16.mxu0 0
  %3881 = vmatpush1.bf16.msra.mxu0 0
  %3882 = vmatprep.subr.bf16.mxu0 0
  %3883 = vmatpush1.bf16.msra.mxu0 0
  %3884 = vmatprep.subr.bf16.mxu0 0
  %3885 = vmatpush1.bf16.msra.mxu0 0
  %3886 = vmatprep.subr.bf16.mxu0 0
  %3887 = vmatpush1.bf16.msra.mxu0 0
  %3888 = vmatprep.subr.bf16.mxu0 0
  %3889 = vmatpush1.bf16.msra.mxu0 0
  %3890 = vmatprep.subr.bf16.mxu0 0
  %3891 = vmatpush1.bf16.msra.mxu0 0
  %3892 = vmatprep.subr.bf16.mxu0 0
  %3893 = vmatpush1.bf16.msra.mxu0 0
  %3894 = vmatprep.subr.bf16.mxu0 0
  %3895 = vmatpush1.bf16.msra.mxu0 0
  %3896 = vmatprep.subr.bf16.mxu0 0
  %3897 = vmatpush1.bf16.msra.mxu0 0
  %3898 = vmatprep.subr.bf16.mxu0 0
  %3899 = vmatpush1.bf16.msra.mxu0 0
  %3900 = vmatprep.mubr.bf16.mxu0 0
  %3901 = vmatmul.mubr.bf16.gmra.mrb[0].mxu0 %v3860
  %v3902 = vpop.f32.mrb[0].mxu0
  %v3903 = vadd.f32 0.0, %v3902
  %v3904 = vpop.f32.mrb[0].mxu0
  %v3905 = vpop.f32.mrb[0].mxu0
  %v3906 = vadd.f32 0.0, %v3905
  %v3907 = vpop.f32.mrb[0].mxu0
  %3908 = vmatprep.mubr.bf16.mxu0 0
  %3909 = vmatmul.mubr.bf16.gmra.mrb[0].mxu0 %v3863
  %v3910 = vpop.f32.mrb[0].mxu0
  %v3911 = vadd.f32 0.0, %v3910
  %v3912 = vpop.f32.mrb[0].mxu0
  %v3913 = vpop.f32.mrb[0].mxu0
  %v3914 = vadd.f32 0.0, %v3913
  %v3915 = vpop.f32.mrb[0].mxu0
  %3916 = vmatprep.mubr.bf16.mxu0 0
  %3917 = vmatmul.mubr.bf16.gmra.mrb[0].mxu0 %v3866
  %v3918 = vpop.f32.mrb[0].mxu0
  %v3919 = vadd.f32 0.0, %v3918
  %v3920 = vpop.f32.mrb[0].mxu0
  %v3921 = vpop.f32.mrb[0].mxu0
  %v3922 = vadd.f32 0.0, %v3921
  %v3923 = vpop.f32.mrb[0].mxu0
  %3924 = vdwg.mxu0
  %s3925 = scalar_lea.vmem %s55, 4
  %v3926 = vld [vmem:[%s3925] sm:$0xf]
  %v3927 = vpack.c.bf16 %v3906, %v3903
  %v3928 = vpack.c.bf16 %v3914, %v3911
  %v3929 = vpack.c.bf16 %v3922, %v3919
  %v3931 = vsel %vm531, %v3927, 0
  %v3934 = vsel %vm531, %v3928, 0
  %v3937 = vsel %vm531, %v3929, 0
  %v3940 = vsel %vm1253, %v3926, 0
  %3942 = vmatprep.subr.bf16.mxu0 0
  %3943 = vmatpush1.bf16.msra.mxu0 %v3940
  %3944 = vmatprep.subr.bf16.mxu0 0
  %3945 = vmatpush1.bf16.msra.mxu0 0
  %3946 = vmatprep.subr.bf16.mxu0 0
  %3947 = vmatpush1.bf16.msra.mxu0 0
  %3948 = vmatprep.subr.bf16.mxu0 0
  %3949 = vmatpush1.bf16.msra.mxu0 0
  %3950 = vmatprep.subr.bf16.mxu0 0
  %3951 = vmatpush1.bf16.msra.mxu0 0
  %3952 = vmatprep.subr.bf16.mxu0 0
  %3953 = vmatpush1.bf16.msra.mxu0 0
  %3954 = vmatprep.subr.bf16.mxu0 0
  %3955 = vmatpush1.bf16.msra.mxu0 0
  %3956 = vmatprep.subr.bf16.mxu0 0
  %3957 = vmatpush1.bf16.msra.mxu0 0
  %3958 = vmatprep.subr.bf16.mxu0 0
  %3959 = vmatpush1.bf16.msra.mxu0 0
  %3960 = vmatprep.subr.bf16.mxu0 0
  %3961 = vmatpush1.bf16.msra.mxu0 0
  %3962 = vmatprep.subr.bf16.mxu0 0
  %3963 = vmatpush1.bf16.msra.mxu0 0
  %3964 = vmatprep.subr.bf16.mxu0 0
  %3965 = vmatpush1.bf16.msra.mxu0 0
  %3966 = vmatprep.subr.bf16.mxu0 0
  %3967 = vmatpush1.bf16.msra.mxu0 0
  %3968 = vmatprep.subr.bf16.mxu0 0
  %3969 = vmatpush1.bf16.msra.mxu0 0
  %3970 = vmatprep.subr.bf16.mxu0 0
  %3971 = vmatpush1.bf16.msra.mxu0 0
  %3972 = vmatprep.subr.bf16.mxu0 0
  %3973 = vmatpush1.bf16.msra.mxu0 0
  %3974 = vmatprep.mubr.bf16.mxu0 0
  %3975 = vmatmul.mubr.bf16.gmra.mrb[0].mxu0 %v3931
  %v3976 = vpop.f32.mrb[0].mxu0
  %v3977 = vadd.f32 0.0, %v3976
  %v3978 = vpop.f32.mrb[0].mxu0
  %v3979 = vpop.f32.mrb[0].mxu0
  %v3980 = vadd.f32 0.0, %v3979
  %v3981 = vpop.f32.mrb[0].mxu0
  %3982 = vmatprep.mubr.bf16.mxu0 0
  %3983 = vmatmul.mubr.bf16.gmra.mrb[0].mxu0 %v3934
  %v3984 = vpop.f32.mrb[0].mxu0
  %v3985 = vadd.f32 0.0, %v3984
  %v3986 = vpop.f32.mrb[0].mxu0
  %v3987 = vpop.f32.mrb[0].mxu0
  %v3988 = vadd.f32 0.0, %v3987
  %v3989 = vpop.f32.mrb[0].mxu0
  %3990 = vmatprep.mubr.bf16.mxu0 0
  %3991 = vmatmul.mubr.bf16.gmra.mrb[0].mxu0 %v3937
  %v3992 = vpop.f32.mrb[0].mxu0
  %v3993 = vadd.f32 0.0, %v3992
  %v3994 = vpop.f32.mrb[0].mxu0
  %v3995 = vpop.f32.mrb[0].mxu0
  %v3996 = vadd.f32 0.0, %v3995
  %v3997 = vpop.f32.mrb[0].mxu0
  %3998 = vdwg.mxu0
  %v4000 = vsel %vm531, %v3445, 0
  %v4003 = vsel %vm531, %v3446, 0
  %v4006 = vsel %vm531, %v3447, 0
  %v4009 = vsel %vm1253, %v3444, 0
  %4011 = vmatprep.subr.bf16.mxu0 0
  %4012 = vmatpush1.bf16.msra.mxu0 %v4009
  %4013 = vmatprep.subr.bf16.mxu0 0
  %4014 = vmatpush1.bf16.msra.mxu0 0
  %4015 = vmatprep.subr.bf16.mxu0 0
  %4016 = vmatpush1.bf16.msra.mxu0 0
  %4017 = vmatprep.subr.bf16.mxu0 0
  %4018 = vmatpush1.bf16.msra.mxu0 0
  %4019 = vmatprep.subr.bf16.mxu0 0
  %4020 = vmatpush1.bf16.msra.mxu0 0
  %4021 = vmatprep.subr.bf16.mxu0 0
  %4022 = vmatpush1.bf16.msra.mxu0 0
  %4023 = vmatprep.subr.bf16.mxu0 0
  %4024 = vmatpush1.bf16.msra.mxu0 0
  %4025 = vmatprep.subr.bf16.mxu0 0
  %4026 = vmatpush1.bf16.msra.mxu0 0
  %4027 = vmatprep.subr.bf16.mxu0 0
  %4028 = vmatpush1.bf16.msra.mxu0 0
  %4029 = vmatprep.subr.bf16.mxu0 0
  %4030 = vmatpush1.bf16.msra.mxu0 0
  %4031 = vmatprep.subr.bf16.mxu0 0
  %4032 = vmatpush1.bf16.msra.mxu0 0
  %4033 = vmatprep.subr.bf16.mxu0 0
  %4034 = vmatpush1.bf16.msra.mxu0 0
  %4035 = vmatprep.subr.bf16.mxu0 0
  %4036 = vmatpush1.bf16.msra.mxu0 0
  %4037 = vmatprep.subr.bf16.mxu0 0
  %4038 = vmatpush1.bf16.msra.mxu0 0
  %4039 = vmatprep.subr.bf16.mxu0 0
  %4040 = vmatpush1.bf16.msra.mxu0 0
  %4041 = vmatprep.subr.bf16.mxu0 0
  %4042 = vmatpush1.bf16.msra.mxu0 0
  %4043 = vmatprep.mubr.bf16.mxu0 0
  %4044 = vmatmul.mubr.bf16.gmra.mrb[0].mxu0 %v4000
  %v4045 = vpop.f32.mrb[0].mxu0
  %v4046 = vadd.f32 %v3977, %v4045
  %v4047 = vpop.f32.mrb[0].mxu0
  %v4048 = vpop.f32.mrb[0].mxu0
  %v4049 = vadd.f32 %v3980, %v4048
  %v4050 = vpop.f32.mrb[0].mxu0
  %4051 = vmatprep.mubr.bf16.mxu0 0
  %4052 = vmatmul.mubr.bf16.gmra.mrb[0].mxu0 %v4003
  %v4053 = vpop.f32.mrb[0].mxu0
  %v4054 = vadd.f32 %v3985, %v4053
  %v4055 = vpop.f32.mrb[0].mxu0
  %v4056 = vpop.f32.mrb[0].mxu0
  %v4057 = vadd.f32 %v3988, %v4056
  %v4058 = vpop.f32.mrb[0].mxu0
  %4059 = vmatprep.mubr.bf16.mxu0 0
  %4060 = vmatmul.mubr.bf16.gmra.mrb[0].mxu0 %v4006
  %v4061 = vpop.f32.mrb[0].mxu0
  %v4062 = vadd.f32 %v3993, %v4061
  %v4063 = vpop.f32.mrb[0].mxu0
  %v4064 = vpop.f32.mrb[0].mxu0
  %v4065 = vadd.f32 %v3996, %v4064
  %v4066 = vpop.f32.mrb[0].mxu0
  %4067 = vdwg.mxu0
  %s4068 = scalar_lea.vmem %s43, 32
  %v4069 = vld [vmem:[%s4068] sm:$0xf]
  %v4070 = vld [vmem:[%s4068 + $0x4] sm:$0xf]
  %v4071 = vld [vmem:[%s4068 + $0x8] sm:$0xf]
  %v4072 = vld [vmem:[%s4068 + $0xc] sm:$0xf]
  %s4073 = scalar_lea.vmem %s45, 2
  %v4074 = vld [vmem:[%s4073] sm:$0x1]
  %v4076 = vlaneseq
  %v4077 = vshrl.u32 %v4076, 7
  %v4078 = vsub.s32 0, %v4077
  %v4079 = vrot.slane %v4074, %v4078
  %v4085 = vunpack.c.l.b16 %v4069
  %v4086 = vunpack.c.l.b16 %v4070
  %v4087 = vunpack.c.l.b16 %v4071
  %v4088 = vunpack.c.l.b16 %v4072
  %v4089 = vpack.c.b16 %v4086, %v4085
  %v4090 = vpack.c.b16 %v4088, %v4087
  %4093 = vmatprep.subr.bf16.mxu0 0
  %4094 = vmatpush1.bf16.msra.mxu0 %v4089
  %4095 = vmatprep.subr.bf16.mxu0 0
  %4096 = vmatpush1.bf16.msra.mxu0 %v4090
  %4097 = vmatprep.subr.bf16.mxu0 0
  %4098 = vmatpush1.bf16.msra.mxu0 0
  %4099 = vmatprep.subr.bf16.mxu0 0
  %4100 = vmatpush1.bf16.msra.mxu0 0
  %4101 = vmatprep.subr.bf16.mxu0 0
  %4102 = vmatpush1.bf16.msra.mxu0 0
  %4103 = vmatprep.subr.bf16.mxu0 0
  %4104 = vmatpush1.bf16.msra.mxu0 0
  %4105 = vmatprep.subr.bf16.mxu0 0
  %4106 = vmatpush1.bf16.msra.mxu0 0
  %4107 = vmatprep.subr.bf16.mxu0 0
  %4108 = vmatpush1.bf16.msra.mxu0 0
  %4109 = vmatprep.subr.bf16.mxu0 0
  %4110 = vmatpush1.bf16.msra.mxu0 0
  %4111 = vmatprep.subr.bf16.mxu0 0
  %4112 = vmatpush1.bf16.msra.mxu0 0
  %4113 = vmatprep.subr.bf16.mxu0 0
  %4114 = vmatpush1.bf16.msra.mxu0 0
  %4115 = vmatprep.subr.bf16.mxu0 0
  %4116 = vmatpush1.bf16.msra.mxu0 0
  %4117 = vmatprep.subr.bf16.mxu0 0
  %4118 = vmatpush1.bf16.msra.mxu0 0
  %4119 = vmatprep.subr.bf16.mxu0 0
  %4120 = vmatpush1.bf16.msra.mxu0 0
  %4121 = vmatprep.subr.bf16.mxu0 0
  %4122 = vmatpush1.bf16.msra.mxu0 0
  %4123 = vmatprep.subr.bf16.mxu0 0
  %4124 = vmatpush1.bf16.msra.mxu0 0
  %4125 = vmatprep.mubr.bf16.mxu0 0
  %4126 = vmatmul.mubr.bf16.gmra.mrb[0].mxu0 %v2988
  %v4127 = vpop.f32.mrb[0].mxu0
  %v4128 = vadd.f32 %v4079, %v4127
  %v4129 = vpop.f32.mrb[0].mxu0
  %v4130 = vpop.f32.mrb[0].mxu0
  %v4131 = vadd.f32 %v4079, %v4130
  %v4132 = vpop.f32.mrb[0].mxu0
  %4133 = vmatprep.mubr.bf16.mxu0 0
  %4134 = vmatmul.mubr.bf16.gmra.mrb[0].mxu0 %v2991
  %v4135 = vpop.f32.mrb[0].mxu0
  %v4136 = vadd.f32 %v4079, %v4135
  %v4137 = vpop.f32.mrb[0].mxu0
  %v4138 = vpop.f32.mrb[0].mxu0
  %v4139 = vadd.f32 %v4079, %v4138
  %v4140 = vpop.f32.mrb[0].mxu0
  %4141 = vmatprep.mubr.bf16.mxu0 0
  %4142 = vmatmul.mubr.bf16.gmra.mrb[0].mxu0 %v2994
  %v4143 = vpop.f32.mrb[0].mxu0
  %v4144 = vadd.f32 %v4079, %v4143
  %v4145 = vpop.f32.mrb[0].mxu0
  %v4146 = vpop.f32.mrb[0].mxu0
  %v4147 = vadd.f32 %v4079, %v4146
  %v4148 = vpop.f32.mrb[0].mxu0
  %4149 = vdwg.mxu0
  %s4150 = scalar_lea.vmem %s47, 32
  %v4151 = vld [vmem:[%s4150] sm:$0xf]
  %v4152 = vld [vmem:[%s4150 + $0x4] sm:$0xf]
  %v4153 = vld [vmem:[%s4150 + $0x8] sm:$0xf]
  %v4154 = vld [vmem:[%s4150 + $0xc] sm:$0xf]
  %s4155 = scalar_lea.vmem %s49, 2
  %v4156 = vld [vmem:[%s4155] sm:$0x1]
  %v4158 = vlaneseq
  %v4159 = vshrl.u32 %v4158, 7
  %v4160 = vsub.s32 0, %v4159
  %v4161 = vrot.slane %v4156, %v4160
  %v4167 = vunpack.c.l.b16 %v4151
  %v4168 = vunpack.c.l.b16 %v4152
  %v4169 = vunpack.c.l.b16 %v4153
  %v4170 = vunpack.c.l.b16 %v4154
  %v4171 = vpack.c.b16 %v4168, %v4167
  %v4172 = vpack.c.b16 %v4170, %v4169
  %4175 = vmatprep.subr.bf16.mxu0 0
  %4176 = vmatpush1.bf16.msra.mxu0 %v4171
  %4177 = vmatprep.subr.bf16.mxu0 0
  %4178 = vmatpush1.bf16.msra.mxu0 %v4172
  %4179 = vmatprep.subr.bf16.mxu0 0
  %4180 = vmatpush1.bf16.msra.mxu0 0
  %4181 = vmatprep.subr.bf16.mxu0 0
  %4182 = vmatpush1.bf16.msra.mxu0 0
  %4183 = vmatprep.subr.bf16.mxu0 0
  %4184 = vmatpush1.bf16.msra.mxu0 0
  %4185 = vmatprep.subr.bf16.mxu0 0
  %4186 = vmatpush1.bf16.msra.mxu0 0
  %4187 = vmatprep.subr.bf16.mxu0 0
  %4188 = vmatpush1.bf16.msra.mxu0 0
  %4189 = vmatprep.subr.bf16.mxu0 0
  %4190 = vmatpush1.bf16.msra.mxu0 0
  %4191 = vmatprep.subr.bf16.mxu0 0
  %4192 = vmatpush1.bf16.msra.mxu0 0
  %4193 = vmatprep.subr.bf16.mxu0 0
  %4194 = vmatpush1.bf16.msra.mxu0 0
  %4195 = vmatprep.subr.bf16.mxu0 0
  %4196 = vmatpush1.bf16.msra.mxu0 0
  %4197 = vmatprep.subr.bf16.mxu0 0
  %4198 = vmatpush1.bf16.msra.mxu0 0
  %4199 = vmatprep.subr.bf16.mxu0 0
  %4200 = vmatpush1.bf16.msra.mxu0 0
  %4201 = vmatprep.subr.bf16.mxu0 0
  %4202 = vmatpush1.bf16.msra.mxu0 0
  %4203 = vmatprep.subr.bf16.mxu0 0
  %4204 = vmatpush1.bf16.msra.mxu0 0
  %4205 = vmatprep.subr.bf16.mxu0 0
  %4206 = vmatpush1.bf16.msra.mxu0 0
  %4207 = vmatprep.mubr.bf16.mxu0 0
  %4208 = vmatmul.mubr.bf16.gmra.mrb[0].mxu0 %v2988
  %v4209 = vpop.f32.mrb[0].mxu0
  %v4210 = vadd.f32 %v4161, %v4209
  %v4211 = vpop.f32.mrb[0].mxu0
  %v4212 = vpop.f32.mrb[0].mxu0
  %v4213 = vadd.f32 %v4161, %v4212
  %v4214 = vpop.f32.mrb[0].mxu0
  %4215 = vmatprep.mubr.bf16.mxu0 0
  %4216 = vmatmul.mubr.bf16.gmra.mrb[0].mxu0 %v2991
  %v4217 = vpop.f32.mrb[0].mxu0
  %v4218 = vadd.f32 %v4161, %v4217
  %v4219 = vpop.f32.mrb[0].mxu0
  %v4220 = vpop.f32.mrb[0].mxu0
  %v4221 = vadd.f32 %v4161, %v4220
  %v4222 = vpop.f32.mrb[0].mxu0
  %4223 = vmatprep.mubr.bf16.mxu0 0
  %4224 = vmatmul.mubr.bf16.gmra.mrb[0].mxu0 %v2994
  %v4225 = vpop.f32.mrb[0].mxu0
  %v4226 = vadd.f32 %v4161, %v4225
  %v4227 = vpop.f32.mrb[0].mxu0
  %v4228 = vpop.f32.mrb[0].mxu0
  %v4229 = vadd.f32 %v4161, %v4228
  %v4230 = vpop.f32.mrb[0].mxu0
  %4231 = vdwg.mxu0
  %s4232 = scalar_lea.vmem %s51, 32
  %v4233 = vld [vmem:[%s4232] sm:$0xf]
  %v4234 = vld [vmem:[%s4232 + $0x4] sm:$0xf]
  %v4235 = vld [vmem:[%s4232 + $0x8] sm:$0xf]
  %v4236 = vld [vmem:[%s4232 + $0xc] sm:$0xf]
  %s4237 = scalar_lea.vmem %s53, 2
  %v4238 = vld [vmem:[%s4237] sm:$0x1]
  %v4240 = vlaneseq
  %v4241 = vshrl.u32 %v4240, 7
  %v4242 = vsub.s32 0, %v4241
  %v4243 = vrot.slane %v4238, %v4242
  %v4249 = vunpack.c.l.b16 %v4233
  %v4250 = vunpack.c.l.b16 %v4234
  %v4251 = vunpack.c.l.b16 %v4235
  %v4252 = vunpack.c.l.b16 %v4236
  %v4253 = vpack.c.b16 %v4250, %v4249
  %v4254 = vpack.c.b16 %v4252, %v4251
  %4257 = vmatprep.subr.bf16.mxu0 0
  %4258 = vmatpush1.bf16.msra.mxu0 %v4253
  %4259 = vmatprep.subr.bf16.mxu0 0
  %4260 = vmatpush1.bf16.msra.mxu0 %v4254
  %4261 = vmatprep.subr.bf16.mxu0 0
  %4262 = vmatpush1.bf16.msra.mxu0 0
  %4263 = vmatprep.subr.bf16.mxu0 0
  %4264 = vmatpush1.bf16.msra.mxu0 0
  %4265 = vmatprep.subr.bf16.mxu0 0
  %4266 = vmatpush1.bf16.msra.mxu0 0
  %4267 = vmatprep.subr.bf16.mxu0 0
  %4268 = vmatpush1.bf16.msra.mxu0 0
  %4269 = vmatprep.subr.bf16.mxu0 0
  %4270 = vmatpush1.bf16.msra.mxu0 0
  %4271 = vmatprep.subr.bf16.mxu0 0
  %4272 = vmatpush1.bf16.msra.mxu0 0
  %4273 = vmatprep.subr.bf16.mxu0 0
  %4274 = vmatpush1.bf16.msra.mxu0 0
  %4275 = vmatprep.subr.bf16.mxu0 0
  %4276 = vmatpush1.bf16.msra.mxu0 0
  %4277 = vmatprep.subr.bf16.mxu0 0
  %4278 = vmatpush1.bf16.msra.mxu0 0
  %4279 = vmatprep.subr.bf16.mxu0 0
  %4280 = vmatpush1.bf16.msra.mxu0 0
  %4281 = vmatprep.subr.bf16.mxu0 0
  %4282 = vmatpush1.bf16.msra.mxu0 0
  %4283 = vmatprep.subr.bf16.mxu0 0
  %4284 = vmatpush1.bf16.msra.mxu0 0
  %4285 = vmatprep.subr.bf16.mxu0 0
  %4286 = vmatpush1.bf16.msra.mxu0 0
  %4287 = vmatprep.subr.bf16.mxu0 0
  %4288 = vmatpush1.bf16.msra.mxu0 0
  %4289 = vmatprep.mubr.bf16.mxu0 0
  %4290 = vmatmul.mubr.bf16.gmra.mrb[0].mxu0 %v2988
  %v4291 = vpop.f32.mrb[0].mxu0
  %v4292 = vadd.f32 %v4243, %v4291
  %v4293 = vpop.f32.mrb[0].mxu0
  %v4294 = vpop.f32.mrb[0].mxu0
  %v4295 = vadd.f32 %v4243, %v4294
  %v4296 = vpop.f32.mrb[0].mxu0
  %4297 = vmatprep.mubr.bf16.mxu0 0
  %4298 = vmatmul.mubr.bf16.gmra.mrb[0].mxu0 %v2991
  %v4299 = vpop.f32.mrb[0].mxu0
  %v4300 = vadd.f32 %v4243, %v4299
  %v4301 = vpop.f32.mrb[0].mxu0
  %v4302 = vpop.f32.mrb[0].mxu0
  %v4303 = vadd.f32 %v4243, %v4302
  %v4304 = vpop.f32.mrb[0].mxu0
  %4305 = vmatprep.mubr.bf16.mxu0 0
  %4306 = vmatmul.mubr.bf16.gmra.mrb[0].mxu0 %v2994
  %v4307 = vpop.f32.mrb[0].mxu0
  %v4308 = vadd.f32 %v4243, %v4307
  %v4309 = vpop.f32.mrb[0].mxu0
  %v4310 = vpop.f32.mrb[0].mxu0
  %v4311 = vadd.f32 %v4243, %v4310
  %v4312 = vpop.f32.mrb[0].mxu0
  %4313 = vdwg.mxu0
  %v4314 = vpack.c.bf16 %v4131, %v4128
  %v4315 = vpack.c.bf16 %v4139, %v4136
  %v4316 = vpack.c.bf16 %v4147, %v4144
  %v4317 = vpack.c.bf16 %v4213, %v4210
  %v4318 = vpack.c.bf16 %v4221, %v4218
  %v4319 = vpack.c.bf16 %v4229, %v4226
  %v4321 = vsel %vm531, %v4314, 0
  %v4324 = vsel %vm531, %v4315, 0
  %v4327 = vsel %vm531, %v4316, 0
  %v4330 = vsel %vm531, %v4317, 0
  %v4333 = vsel %vm531, %v4318, 0
  %v4336 = vsel %vm531, %v4319, 0
  %4338 = vmatprep.subr.bf16.mxu0 0
  %4339 = vmatpush1.bf16.xpose.msra.mxu0 %v4330
  %4340 = vmatprep.subr.bf16.mxu0 0
  %4341 = vmatpush1.bf16.xpose.msra.mxu0 %v4333
  %4342 = vmatprep.subr.bf16.mxu0 0
  %4343 = vmatpush1.bf16.xpose.msra.mxu0 %v4336
  %4344 = vmatprep.subr.bf16.mxu0 0
  %4345 = vmatpush1.bf16.xpose.msra.mxu0 0
  %4346 = vmatprep.subr.bf16.mxu0 0
  %4347 = vmatpush1.bf16.xpose.msra.mxu0 0
  %4348 = vmatprep.subr.bf16.mxu0 0
  %4349 = vmatpush1.bf16.xpose.msra.mxu0 0
  %4350 = vmatprep.subr.bf16.mxu0 0
  %4351 = vmatpush1.bf16.xpose.msra.mxu0 0
  %4352 = vmatprep.subr.bf16.mxu0 0
  %4353 = vmatpush1.bf16.xpose.msra.mxu0 0
  %4354 = vmatprep.subr.bf16.mxu0 0
  %4355 = vmatpush1.bf16.xpose.msra.mxu0 0
  %4356 = vmatprep.subr.bf16.mxu0 0
  %4357 = vmatpush1.bf16.xpose.msra.mxu0 0
  %4358 = vmatprep.subr.bf16.mxu0 0
  %4359 = vmatpush1.bf16.xpose.msra.mxu0 0
  %4360 = vmatprep.subr.bf16.mxu0 0
  %4361 = vmatpush1.bf16.xpose.msra.mxu0 0
  %4362 = vmatprep.subr.bf16.mxu0 0
  %4363 = vmatpush1.bf16.xpose.msra.mxu0 0
  %4364 = vmatprep.subr.bf16.mxu0 0
  %4365 = vmatpush1.bf16.xpose.msra.mxu0 0
  %4366 = vmatprep.subr.bf16.mxu0 0
  %4367 = vmatpush1.bf16.xpose.msra.mxu0 0
  %4368 = vmatprep.subr.bf16.mxu0 0
  %4369 = vmatpush1.bf16.xpose.msra.mxu0 0
  %4370 = vmatprep.mubr.bf16.mxu0 0
  %4371 = vmatmul.mubr.bf16.gmra.mrb[0].mxu0 %v4321
  %v4372 = vpop.f32.mrb[0].mxu0
  %v4373 = vadd.f32 0.0, %v4372
  %v4374 = vpop.f32.mrb[0].mxu0
  %v4375 = vpop.f32.mrb[0].mxu0
  %v4376 = vadd.f32 0.0, %v4375
  %v4377 = vpop.f32.mrb[0].mxu0
  %4378 = vmatprep.mubr.bf16.mxu0 0
  %4379 = vmatmul.mubr.bf16.gmra.mrb[0].mxu0 %v4324
  %v4380 = vpop.f32.mrb[0].mxu0
  %v4381 = vadd.f32 0.0, %v4380
  %v4382 = vpop.f32.mrb[0].mxu0
  %v4383 = vpop.f32.mrb[0].mxu0
  %v4384 = vadd.f32 0.0, %v4383
  %v4385 = vpop.f32.mrb[0].mxu0
  %4386 = vmatprep.mubr.bf16.mxu0 0
  %4387 = vmatmul.mubr.bf16.gmra.mrb[0].mxu0 %v4327
  %v4388 = vpop.f32.mrb[0].mxu0
  %v4389 = vadd.f32 0.0, %v4388
  %v4390 = vpop.f32.mrb[0].mxu0
  %v4391 = vpop.f32.mrb[0].mxu0
  %v4392 = vadd.f32 0.0, %v4391
  %v4393 = vpop.f32.mrb[0].mxu0
  %4394 = vdwg.mxu0
  %v4395 = vmul.f32 %v4373, 0.35355338
  %v4396 = vmul.f32 %v4376, 0.35355338
  %v4397 = vmul.f32 %v4381, 0.35355338
  %v4398 = vmul.f32 %v4384, 0.35355338
  %v4399 = vmul.f32 %v4389, 0.35355338
  %v4400 = vmul.f32 %v4392, 0.35355338
  %v4401 = vadd.f32 %v4395, %v161
  %v4402 = vadd.f32 %v4396, %v162
  %v4403 = vadd.f32 %v4397, %v163
  %v4404 = vadd.f32 %v4398, %v164
  %v4405 = vadd.f32 %v4399, %v165
  %v4406 = vadd.f32 %v4400, %v166
  %v4407 = vsel %vm619, %v4401, -inf
  %4408 = vmax.xlane.f32.xlu0 %v4407
  %v4409 = vpop.xlane.xlu0 %4408
  %v4410 = vsel %vm619, %v4402, -inf
  %4411 = vmax.xlane.f32.xlu0 %v4410
  %v4412 = vpop.xlane.xlu0 %4411
  %v4413 = vsel %vm619, %v4403, -inf
  %4414 = vmax.xlane.f32.xlu0 %v4413
  %v4415 = vpop.xlane.xlu0 %4414
  %v4416 = vsel %vm619, %v4404, -inf
  %4417 = vmax.xlane.f32.xlu0 %v4416
  %v4418 = vpop.xlane.xlu0 %4417
  %v4419 = vsel %vm619, %v4405, -inf
  %4420 = vmax.xlane.f32.xlu0 %v4419
  %v4421 = vpop.xlane.xlu0 %4420
  %v4422 = vsel %vm619, %v4406, -inf
  %4423 = vmax.xlane.f32.xlu0 %v4422
  %v4424 = vpop.xlane.xlu0 %4423
  %v4425 = vsub.f32 %v4401, %v4409
  %v4426 = vsub.f32 %v4402, %v4412
  %v4427 = vsub.f32 %v4403, %v4415
  %v4428 = vsub.f32 %v4404, %v4418
  %v4429 = vsub.f32 %v4405, %v4421
  %v4430 = vsub.f32 %v4406, %v4424
  %v4431 = vmul.f32 %v4425, 1.442695
  %v4432 = vpow.pop %v4431
  %v4433 = vmul.f32 %v4426, 1.442695
  %v4434 = vpow.pop %v4433
  %v4435 = vmul.f32 %v4427, 1.442695
  %v4436 = vpow.pop %v4435
  %v4437 = vmul.f32 %v4428, 1.442695
  %v4438 = vpow.pop %v4437
  %v4439 = vmul.f32 %v4429, 1.442695
  %v4440 = vpow.pop %v4439
  %v4441 = vmul.f32 %v4430, 1.442695
  %v4442 = vpow.pop %v4441
  %v4443 = vsel %vm619, %v4432, 0.0
  %4444 = vadd.xlane.f32.xlu0 %v4443
  %v4445 = vpop.xlane.xlu0 %4444
  %v4446 = vsel %vm619, %v4434, 0.0
  %4447 = vadd.xlane.f32.xlu0 %v4446
  %v4448 = vpop.xlane.xlu0 %4447
  %v4449 = vsel %vm619, %v4436, 0.0
  %4450 = vadd.xlane.f32.xlu0 %v4449
  %v4451 = vpop.xlane.xlu0 %4450
  %v4452 = vsel %vm619, %v4438, 0.0
  %4453 = vadd.xlane.f32.xlu0 %v4452
  %v4454 = vpop.xlane.xlu0 %4453
  %v4455 = vsel %vm619, %v4440, 0.0
  %4456 = vadd.xlane.f32.xlu0 %v4455
  %v4457 = vpop.xlane.xlu0 %4456
  %v4458 = vsel %vm619, %v4442, 0.0
  %4459 = vadd.xlane.f32.xlu0 %v4458
  %v4460 = vpop.xlane.xlu0 %4459
  %v4461 = vrcp.pop %v4445
  %v4462 = vrcp.pop %v4448
  %v4463 = vrcp.pop %v4451
  %v4464 = vrcp.pop %v4454
  %v4465 = vrcp.pop %v4457
  %v4466 = vrcp.pop %v4460
  %v4467 = vmul.f32 %v4432, %v4461
  %v4468 = vmul.f32 %v4434, %v4462
  %v4469 = vmul.f32 %v4436, %v4463
  %v4470 = vmul.f32 %v4438, %v4464
  %v4471 = vmul.f32 %v4440, %v4465
  %v4472 = vmul.f32 %v4442, %v4466
  %v4473 = vpack.c.bf16 %v4468, %v4467
  %v4474 = vpack.c.bf16 %v4470, %v4469
  %v4475 = vpack.c.bf16 %v4472, %v4471
  %v4476 = vpack.c.bf16 %v4295, %v4292
  %v4477 = vpack.c.bf16 %v4303, %v4300
  %v4478 = vpack.c.bf16 %v4311, %v4308
  %v4480 = vsel %vm619, %v4473, 0
  %v4483 = vsel %vm619, %v4474, 0
  %v4486 = vsel %vm619, %v4475, 0
  %4488 = vmatprep.subr.bf16.mxu0 0
  %4489 = vmatpush1.bf16.msra.mxu0 %v4476
  %4490 = vmatprep.subr.bf16.mxu0 0
  %4491 = vmatpush1.bf16.msra.mxu0 %v4477
  %4492 = vmatprep.subr.bf16.mxu0 0
  %4493 = vmatpush1.bf16.msra.mxu0 %v4478
  %4494 = vmatprep.subr.bf16.mxu0 0
  %4495 = vmatpush1.bf16.msra.mxu0 0
  %4496 = vmatprep.subr.bf16.mxu0 0
  %4497 = vmatpush1.bf16.msra.mxu0 0
  %4498 = vmatprep.subr.bf16.mxu0 0
  %4499 = vmatpush1.bf16.msra.mxu0 0
  %4500 = vmatprep.subr.bf16.mxu0 0
  %4501 = vmatpush1.bf16.msra.mxu0 0
  %4502 = vmatprep.subr.bf16.mxu0 0
  %4503 = vmatpush1.bf16.msra.mxu0 0
  %4504 = vmatprep.subr.bf16.mxu0 0
  %4505 = vmatpush1.bf16.msra.mxu0 0
  %4506 = vmatprep.subr.bf16.mxu0 0
  %4507 = vmatpush1.bf16.msra.mxu0 0
  %4508 = vmatprep.subr.bf16.mxu0 0
  %4509 = vmatpush1.bf16.msra.mxu0 0
  %4510 = vmatprep.subr.bf16.mxu0 0
  %4511 = vmatpush1.bf16.msra.mxu0 0
  %4512 = vmatprep.subr.bf16.mxu0 0
  %4513 = vmatpush1.bf16.msra.mxu0 0
  %4514 = vmatprep.subr.bf16.mxu0 0
  %4515 = vmatpush1.bf16.msra.mxu0 0
  %4516 = vmatprep.subr.bf16.mxu0 0
  %4517 = vmatpush1.bf16.msra.mxu0 0
  %4518 = vmatprep.subr.bf16.mxu0 0
  %4519 = vmatpush1.bf16.msra.mxu0 0
  %4520 = vmatprep.mubr.bf16.mxu0 0
  %4521 = vmatmul.mubr.bf16.gmra.mrb[0].mxu0 %v4480
  %v4522 = vpop.f32.mrb[0].mxu0
  %v4523 = vadd.f32 0.0, %v4522
  %v4524 = vpop.f32.mrb[0].mxu0
  %v4525 = vpop.f32.mrb[0].mxu0
  %v4526 = vadd.f32 0.0, %v4525
  %v4527 = vpop.f32.mrb[0].mxu0
  %4528 = vmatprep.mubr.bf16.mxu0 0
  %4529 = vmatmul.mubr.bf16.gmra.mrb[0].mxu0 %v4483
  %v4530 = vpop.f32.mrb[0].mxu0
  %v4531 = vadd.f32 0.0, %v4530
  %v4532 = vpop.f32.mrb[0].mxu0
  %v4533 = vpop.f32.mrb[0].mxu0
  %v4534 = vadd.f32 0.0, %v4533
  %v4535 = vpop.f32.mrb[0].mxu0
  %4536 = vmatprep.mubr.bf16.mxu0 0
  %4537 = vmatmul.mubr.bf16.gmra.mrb[0].mxu0 %v4486
  %v4538 = vpop.f32.mrb[0].mxu0
  %v4539 = vadd.f32 0.0, %v4538
  %v4540 = vpop.f32.mrb[0].mxu0
  %v4541 = vpop.f32.mrb[0].mxu0
  %v4542 = vadd.f32 0.0, %v4541
  %v4543 = vpop.f32.mrb[0].mxu0
  %4544 = vdwg.mxu0
  %s4545 = scalar_lea.vmem %s55, 8
  %v4546 = vld [vmem:[%s4545] sm:$0xf]
  %v4547 = vpack.c.bf16 %v4526, %v4523
  %v4548 = vpack.c.bf16 %v4534, %v4531
  %v4549 = vpack.c.bf16 %v4542, %v4539
  %v4551 = vsel %vm531, %v4547, 0
  %v4554 = vsel %vm531, %v4548, 0
  %v4557 = vsel %vm531, %v4549, 0
  %v4560 = vsel %vm1253, %v4546, 0
  %4562 = vmatprep.subr.bf16.mxu0 0
  %4563 = vmatpush1.bf16.msra.mxu0 %v4560
  %4564 = vmatprep.subr.bf16.mxu0 0
  %4565 = vmatpush1.bf16.msra.mxu0 0
  %4566 = vmatprep.subr.bf16.mxu0 0
  %4567 = vmatpush1.bf16.msra.mxu0 0
  %4568 = vmatprep.subr.bf16.mxu0 0
  %4569 = vmatpush1.bf16.msra.mxu0 0
  %4570 = vmatprep.subr.bf16.mxu0 0
  %4571 = vmatpush1.bf16.msra.mxu0 0
  %4572 = vmatprep.subr.bf16.mxu0 0
  %4573 = vmatpush1.bf16.msra.mxu0 0
  %4574 = vmatprep.subr.bf16.mxu0 0
  %4575 = vmatpush1.bf16.msra.mxu0 0
  %4576 = vmatprep.subr.bf16.mxu0 0
  %4577 = vmatpush1.bf16.msra.mxu0 0
  %4578 = vmatprep.subr.bf16.mxu0 0
  %4579 = vmatpush1.bf16.msra.mxu0 0
  %4580 = vmatprep.subr.bf16.mxu0 0
  %4581 = vmatpush1.bf16.msra.mxu0 0
  %4582 = vmatprep.subr.bf16.mxu0 0
  %4583 = vmatpush1.bf16.msra.mxu0 0
  %4584 = vmatprep.subr.bf16.mxu0 0
  %4585 = vmatpush1.bf16.msra.mxu0 0
  %4586 = vmatprep.subr.bf16.mxu0 0
  %4587 = vmatpush1.bf16.msra.mxu0 0
  %4588 = vmatprep.subr.bf16.mxu0 0
  %4589 = vmatpush1.bf16.msra.mxu0 0
  %4590 = vmatprep.subr.bf16.mxu0 0
  %4591 = vmatpush1.bf16.msra.mxu0 0
  %4592 = vmatprep.subr.bf16.mxu0 0
  %4593 = vmatpush1.bf16.msra.mxu0 0
  %4594 = vmatprep.mubr.bf16.mxu0 0
  %4595 = vmatmul.mubr.bf16.gmra.mrb[0].mxu0 %v4551
  %v4596 = vpop.f32.mrb[0].mxu0
  %v4597 = vadd.f32 0.0, %v4596
  %v4598 = vpop.f32.mrb[0].mxu0
  %v4599 = vpop.f32.mrb[0].mxu0
  %v4600 = vadd.f32 0.0, %v4599
  %v4601 = vpop.f32.mrb[0].mxu0
  %4602 = vmatprep.mubr.bf16.mxu0 0
  %4603 = vmatmul.mubr.bf16.gmra.mrb[0].mxu0 %v4554
  %v4604 = vpop.f32.mrb[0].mxu0
  %v4605 = vadd.f32 0.0, %v4604
  %v4606 = vpop.f32.mrb[0].mxu0
  %v4607 = vpop.f32.mrb[0].mxu0
  %v4608 = vadd.f32 0.0, %v4607
  %v4609 = vpop.f32.mrb[0].mxu0
  %4610 = vmatprep.mubr.bf16.mxu0 0
  %4611 = vmatmul.mubr.bf16.gmra.mrb[0].mxu0 %v4557
  %v4612 = vpop.f32.mrb[0].mxu0
  %v4613 = vadd.f32 0.0, %v4612
  %v4614 = vpop.f32.mrb[0].mxu0
  %v4615 = vpop.f32.mrb[0].mxu0
  %v4616 = vadd.f32 0.0, %v4615
  %v4617 = vpop.f32.mrb[0].mxu0
  %4618 = vdwg.mxu0
  %v4619 = vadd.f32 %v4046, %v4597
  %v4620 = vadd.f32 %v4049, %v4600
  %v4621 = vadd.f32 %v4054, %v4605
  %v4622 = vadd.f32 %v4057, %v4608
  %v4623 = vadd.f32 %v4062, %v4613
  %v4624 = vadd.f32 %v4065, %v4616
  %s4625 = scalar_lea.vmem %s43, 48
  %v4626 = vld [vmem:[%s4625] sm:$0xf]
  %v4627 = vld [vmem:[%s4625 + $0x4] sm:$0xf]
  %v4628 = vld [vmem:[%s4625 + $0x8] sm:$0xf]
  %v4629 = vld [vmem:[%s4625 + $0xc] sm:$0xf]
  %s4630 = scalar_lea.vmem %s45, 3
  %v4631 = vld [vmem:[%s4630] sm:$0x1]
  %v4633 = vlaneseq
  %v4634 = vshrl.u32 %v4633, 7
  %v4635 = vsub.s32 0, %v4634
  %v4636 = vrot.slane %v4631, %v4635
  %v4642 = vunpack.c.l.b16 %v4626
  %v4643 = vunpack.c.l.b16 %v4627
  %v4644 = vunpack.c.l.b16 %v4628
  %v4645 = vunpack.c.l.b16 %v4629
  %v4646 = vpack.c.b16 %v4643, %v4642
  %v4647 = vpack.c.b16 %v4645, %v4644
  %4650 = vmatprep.subr.bf16.mxu0 0
  %4651 = vmatpush1.bf16.msra.mxu0 %v4646
  %4652 = vmatprep.subr.bf16.mxu0 0
  %4653 = vmatpush1.bf16.msra.mxu0 %v4647
  %4654 = vmatprep.subr.bf16.mxu0 0
  %4655 = vmatpush1.bf16.msra.mxu0 0
  %4656 = vmatprep.subr.bf16.mxu0 0
  %4657 = vmatpush1.bf16.msra.mxu0 0
  %4658 = vmatprep.subr.bf16.mxu0 0
  %4659 = vmatpush1.bf16.msra.mxu0 0
  %4660 = vmatprep.subr.bf16.mxu0 0
  %4661 = vmatpush1.bf16.msra.mxu0 0
  %4662 = vmatprep.subr.bf16.mxu0 0
  %4663 = vmatpush1.bf16.msra.mxu0 0
  %4664 = vmatprep.subr.bf16.mxu0 0
  %4665 = vmatpush1.bf16.msra.mxu0 0
  %4666 = vmatprep.subr.bf16.mxu0 0
  %4667 = vmatpush1.bf16.msra.mxu0 0
  %4668 = vmatprep.subr.bf16.mxu0 0
  %4669 = vmatpush1.bf16.msra.mxu0 0
  %4670 = vmatprep.subr.bf16.mxu0 0
  %4671 = vmatpush1.bf16.msra.mxu0 0
  %4672 = vmatprep.subr.bf16.mxu0 0
  %4673 = vmatpush1.bf16.msra.mxu0 0
  %4674 = vmatprep.subr.bf16.mxu0 0
  %4675 = vmatpush1.bf16.msra.mxu0 0
  %4676 = vmatprep.subr.bf16.mxu0 0
  %4677 = vmatpush1.bf16.msra.mxu0 0
  %4678 = vmatprep.subr.bf16.mxu0 0
  %4679 = vmatpush1.bf16.msra.mxu0 0
  %4680 = vmatprep.subr.bf16.mxu0 0
  %4681 = vmatpush1.bf16.msra.mxu0 0
  %4682 = vmatprep.mubr.bf16.mxu0 0
  %4683 = vmatmul.mubr.bf16.gmra.mrb[0].mxu0 %v2988
  %v4684 = vpop.f32.mrb[0].mxu0
  %v4685 = vadd.f32 %v4636, %v4684
  %v4686 = vpop.f32.mrb[0].mxu0
  %v4687 = vpop.f32.mrb[0].mxu0
  %v4688 = vadd.f32 %v4636, %v4687
  %v4689 = vpop.f32.mrb[0].mxu0
  %4690 = vmatprep.mubr.bf16.mxu0 0
  %4691 = vmatmul.mubr.bf16.gmra.mrb[0].mxu0 %v2991
  %v4692 = vpop.f32.mrb[0].mxu0
  %v4693 = vadd.f32 %v4636, %v4692
  %v4694 = vpop.f32.mrb[0].mxu0
  %v4695 = vpop.f32.mrb[0].mxu0
  %v4696 = vadd.f32 %v4636, %v4695
  %v4697 = vpop.f32.mrb[0].mxu0
  %4698 = vmatprep.mubr.bf16.mxu0 0
  %4699 = vmatmul.mubr.bf16.gmra.mrb[0].mxu0 %v2994
  %v4700 = vpop.f32.mrb[0].mxu0
  %v4701 = vadd.f32 %v4636, %v4700
  %v4702 = vpop.f32.mrb[0].mxu0
  %v4703 = vpop.f32.mrb[0].mxu0
  %v4704 = vadd.f32 %v4636, %v4703
  %v4705 = vpop.f32.mrb[0].mxu0
  %4706 = vdwg.mxu0
  %s4707 = scalar_lea.vmem %s47, 48
  %v4708 = vld [vmem:[%s4707] sm:$0xf]
  %v4709 = vld [vmem:[%s4707 + $0x4] sm:$0xf]
  %v4710 = vld [vmem:[%s4707 + $0x8] sm:$0xf]
  %v4711 = vld [vmem:[%s4707 + $0xc] sm:$0xf]
  %s4712 = scalar_lea.vmem %s49, 3
  %v4713 = vld [vmem:[%s4712] sm:$0x1]
  %v4715 = vlaneseq
  %v4716 = vshrl.u32 %v4715, 7
  %v4717 = vsub.s32 0, %v4716
  %v4718 = vrot.slane %v4713, %v4717
  %v4724 = vunpack.c.l.b16 %v4708
  %v4725 = vunpack.c.l.b16 %v4709
  %v4726 = vunpack.c.l.b16 %v4710
  %v4727 = vunpack.c.l.b16 %v4711
  %v4728 = vpack.c.b16 %v4725, %v4724
  %v4729 = vpack.c.b16 %v4727, %v4726
  %4732 = vmatprep.subr.bf16.mxu0 0
  %4733 = vmatpush1.bf16.msra.mxu0 %v4728
  %4734 = vmatprep.subr.bf16.mxu0 0
  %4735 = vmatpush1.bf16.msra.mxu0 %v4729
  %4736 = vmatprep.subr.bf16.mxu0 0
  %4737 = vmatpush1.bf16.msra.mxu0 0
  %4738 = vmatprep.subr.bf16.mxu0 0
  %4739 = vmatpush1.bf16.msra.mxu0 0
  %4740 = vmatprep.subr.bf16.mxu0 0
  %4741 = vmatpush1.bf16.msra.mxu0 0
  %4742 = vmatprep.subr.bf16.mxu0 0
  %4743 = vmatpush1.bf16.msra.mxu0 0
  %4744 = vmatprep.subr.bf16.mxu0 0
  %4745 = vmatpush1.bf16.msra.mxu0 0
  %4746 = vmatprep.subr.bf16.mxu0 0
  %4747 = vmatpush1.bf16.msra.mxu0 0
  %4748 = vmatprep.subr.bf16.mxu0 0
  %4749 = vmatpush1.bf16.msra.mxu0 0
  %4750 = vmatprep.subr.bf16.mxu0 0
  %4751 = vmatpush1.bf16.msra.mxu0 0
  %4752 = vmatprep.subr.bf16.mxu0 0
  %4753 = vmatpush1.bf16.msra.mxu0 0
  %4754 = vmatprep.subr.bf16.mxu0 0
  %4755 = vmatpush1.bf16.msra.mxu0 0
  %4756 = vmatprep.subr.bf16.mxu0 0
  %4757 = vmatpush1.bf16.msra.mxu0 0
  %4758 = vmatprep.subr.bf16.mxu0 0
  %4759 = vmatpush1.bf16.msra.mxu0 0
  %4760 = vmatprep.subr.bf16.mxu0 0
  %4761 = vmatpush1.bf16.msra.mxu0 0
  %4762 = vmatprep.subr.bf16.mxu0 0
  %4763 = vmatpush1.bf16.msra.mxu0 0
  %4764 = vmatprep.mubr.bf16.mxu0 0
  %4765 = vmatmul.mubr.bf16.gmra.mrb[0].mxu0 %v2988
  %v4766 = vpop.f32.mrb[0].mxu0
  %v4767 = vadd.f32 %v4718, %v4766
  %v4768 = vpop.f32.mrb[0].mxu0
  %v4769 = vpop.f32.mrb[0].mxu0
  %v4770 = vadd.f32 %v4718, %v4769
  %v4771 = vpop.f32.mrb[0].mxu0
  %4772 = vmatprep.mubr.bf16.mxu0 0
  %4773 = vmatmul.mubr.bf16.gmra.mrb[0].mxu0 %v2991
  %v4774 = vpop.f32.mrb[0].mxu0
  %v4775 = vadd.f32 %v4718, %v4774
  %v4776 = vpop.f32.mrb[0].mxu0
  %v4777 = vpop.f32.mrb[0].mxu0
  %v4778 = vadd.f32 %v4718, %v4777
  %v4779 = vpop.f32.mrb[0].mxu0
  %4780 = vmatprep.mubr.bf16.mxu0 0
  %4781 = vmatmul.mubr.bf16.gmra.mrb[0].mxu0 %v2994
  %v4782 = vpop.f32.mrb[0].mxu0
  %v4783 = vadd.f32 %v4718, %v4782
  %v4784 = vpop.f32.mrb[0].mxu0
  %v4785 = vpop.f32.mrb[0].mxu0
  %v4786 = vadd.f32 %v4718, %v4785
  %v4787 = vpop.f32.mrb[0].mxu0
  %4788 = vdwg.mxu0
  %s4789 = scalar_lea.vmem %s51, 48
  %v4790 = vld [vmem:[%s4789] sm:$0xf]
  %v4791 = vld [vmem:[%s4789 + $0x4] sm:$0xf]
  %v4792 = vld [vmem:[%s4789 + $0x8] sm:$0xf]
  %v4793 = vld [vmem:[%s4789 + $0xc] sm:$0xf]
  %s4794 = scalar_lea.vmem %s53, 3
  %v4795 = vld [vmem:[%s4794] sm:$0x1]
  %v4797 = vlaneseq
  %v4798 = vshrl.u32 %v4797, 7
  %v4799 = vsub.s32 0, %v4798
  %v4800 = vrot.slane %v4795, %v4799
  %v4806 = vunpack.c.l.b16 %v4790
  %v4807 = vunpack.c.l.b16 %v4791
  %v4808 = vunpack.c.l.b16 %v4792
  %v4809 = vunpack.c.l.b16 %v4793
  %v4810 = vpack.c.b16 %v4807, %v4806
  %v4811 = vpack.c.b16 %v4809, %v4808
  %4814 = vmatprep.subr.bf16.mxu0 0
  %4815 = vmatpush1.bf16.msra.mxu0 %v4810
  %4816 = vmatprep.subr.bf16.mxu0 0
  %4817 = vmatpush1.bf16.msra.mxu0 %v4811
  %4818 = vmatprep.subr.bf16.mxu0 0
  %4819 = vmatpush1.bf16.msra.mxu0 0
  %4820 = vmatprep.subr.bf16.mxu0 0
  %4821 = vmatpush1.bf16.msra.mxu0 0
  %4822 = vmatprep.subr.bf16.mxu0 0
  %4823 = vmatpush1.bf16.msra.mxu0 0
  %4824 = vmatprep.subr.bf16.mxu0 0
  %4825 = vmatpush1.bf16.msra.mxu0 0
  %4826 = vmatprep.subr.bf16.mxu0 0
  %4827 = vmatpush1.bf16.msra.mxu0 0
  %4828 = vmatprep.subr.bf16.mxu0 0
  %4829 = vmatpush1.bf16.msra.mxu0 0
  %4830 = vmatprep.subr.bf16.mxu0 0
  %4831 = vmatpush1.bf16.msra.mxu0 0
  %4832 = vmatprep.subr.bf16.mxu0 0
  %4833 = vmatpush1.bf16.msra.mxu0 0
  %4834 = vmatprep.subr.bf16.mxu0 0
  %4835 = vmatpush1.bf16.msra.mxu0 0
  %4836 = vmatprep.subr.bf16.mxu0 0
  %4837 = vmatpush1.bf16.msra.mxu0 0
  %4838 = vmatprep.subr.bf16.mxu0 0
  %4839 = vmatpush1.bf16.msra.mxu0 0
  %4840 = vmatprep.subr.bf16.mxu0 0
  %4841 = vmatpush1.bf16.msra.mxu0 0
  %4842 = vmatprep.subr.bf16.mxu0 0
  %4843 = vmatpush1.bf16.msra.mxu0 0
  %4844 = vmatprep.subr.bf16.mxu0 0
  %4845 = vmatpush1.bf16.msra.mxu0 0
  %4846 = vmatprep.mubr.bf16.mxu0 0
  %4847 = vmatmul.mubr.bf16.gmra.mrb[0].mxu0 %v2988
  %v4848 = vpop.f32.mrb[0].mxu0
  %v4849 = vadd.f32 %v4800, %v4848
  %v4850 = vpop.f32.mrb[0].mxu0
  %v4851 = vpop.f32.mrb[0].mxu0
  %v4852 = vadd.f32 %v4800, %v4851
  %v4853 = vpop.f32.mrb[0].mxu0
  %4854 = vmatprep.mubr.bf16.mxu0 0
  %4855 = vmatmul.mubr.bf16.gmra.mrb[0].mxu0 %v2991
  %v4856 = vpop.f32.mrb[0].mxu0
  %v4857 = vadd.f32 %v4800, %v4856
  %v4858 = vpop.f32.mrb[0].mxu0
  %v4859 = vpop.f32.mrb[0].mxu0
  %v4860 = vadd.f32 %v4800, %v4859
  %v4861 = vpop.f32.mrb[0].mxu0
  %4862 = vmatprep.mubr.bf16.mxu0 0
  %4863 = vmatmul.mubr.bf16.gmra.mrb[0].mxu0 %v2994
  %v4864 = vpop.f32.mrb[0].mxu0
  %v4865 = vadd.f32 %v4800, %v4864
  %v4866 = vpop.f32.mrb[0].mxu0
  %v4867 = vpop.f32.mrb[0].mxu0
  %v4868 = vadd.f32 %v4800, %v4867
  %v4869 = vpop.f32.mrb[0].mxu0
  %4870 = vdwg.mxu0
  %v4871 = vpack.c.bf16 %v4688, %v4685
  %v4872 = vpack.c.bf16 %v4696, %v4693
  %v4873 = vpack.c.bf16 %v4704, %v4701
  %v4874 = vpack.c.bf16 %v4770, %v4767
  %v4875 = vpack.c.bf16 %v4778, %v4775
  %v4876 = vpack.c.bf16 %v4786, %v4783
  %v4878 = vsel %vm531, %v4871, 0
  %v4881 = vsel %vm531, %v4872, 0
  %v4884 = vsel %vm531, %v4873, 0
  %v4887 = vsel %vm531, %v4874, 0
  %v4890 = vsel %vm531, %v4875, 0
  %v4893 = vsel %vm531, %v4876, 0
  %4895 = vmatprep.subr.bf16.mxu0 0
  %4896 = vmatpush1.bf16.xpose.msra.mxu0 %v4887
  %4897 = vmatprep.subr.bf16.mxu0 0
  %4898 = vmatpush1.bf16.xpose.msra.mxu0 %v4890
  %4899 = vmatprep.subr.bf16.mxu0 0
  %4900 = vmatpush1.bf16.xpose.msra.mxu0 %v4893
  %4901 = vmatprep.subr.bf16.mxu0 0
  %4902 = vmatpush1.bf16.xpose.msra.mxu0 0
  %4903 = vmatprep.subr.bf16.mxu0 0
  %4904 = vmatpush1.bf16.xpose.msra.mxu0 0
  %4905 = vmatprep.subr.bf16.mxu0 0
  %4906 = vmatpush1.bf16.xpose.msra.mxu0 0
  %4907 = vmatprep.subr.bf16.mxu0 0
  %4908 = vmatpush1.bf16.xpose.msra.mxu0 0
  %4909 = vmatprep.subr.bf16.mxu0 0
  %4910 = vmatpush1.bf16.xpose.msra.mxu0 0
  %4911 = vmatprep.subr.bf16.mxu0 0
  %4912 = vmatpush1.bf16.xpose.msra.mxu0 0
  %4913 = vmatprep.subr.bf16.mxu0 0
  %4914 = vmatpush1.bf16.xpose.msra.mxu0 0
  %4915 = vmatprep.subr.bf16.mxu0 0
  %4916 = vmatpush1.bf16.xpose.msra.mxu0 0
  %4917 = vmatprep.subr.bf16.mxu0 0
  %4918 = vmatpush1.bf16.xpose.msra.mxu0 0
  %4919 = vmatprep.subr.bf16.mxu0 0
  %4920 = vmatpush1.bf16.xpose.msra.mxu0 0
  %4921 = vmatprep.subr.bf16.mxu0 0
  %4922 = vmatpush1.bf16.xpose.msra.mxu0 0
  %4923 = vmatprep.subr.bf16.mxu0 0
  %4924 = vmatpush1.bf16.xpose.msra.mxu0 0
  %4925 = vmatprep.subr.bf16.mxu0 0
  %4926 = vmatpush1.bf16.xpose.msra.mxu0 0
  %4927 = vmatprep.mubr.bf16.mxu0 0
  %4928 = vmatmul.mubr.bf16.gmra.mrb[0].mxu0 %v4878
  %v4929 = vpop.f32.mrb[0].mxu0
  %v4930 = vadd.f32 0.0, %v4929
  %v4931 = vpop.f32.mrb[0].mxu0
  %v4932 = vpop.f32.mrb[0].mxu0
  %v4933 = vadd.f32 0.0, %v4932
  %v4934 = vpop.f32.mrb[0].mxu0
  %4935 = vmatprep.mubr.bf16.mxu0 0
  %4936 = vmatmul.mubr.bf16.gmra.mrb[0].mxu0 %v4881
  %v4937 = vpop.f32.mrb[0].mxu0
  %v4938 = vadd.f32 0.0, %v4937
  %v4939 = vpop.f32.mrb[0].mxu0
  %v4940 = vpop.f32.mrb[0].mxu0
  %v4941 = vadd.f32 0.0, %v4940
  %v4942 = vpop.f32.mrb[0].mxu0
  %4943 = vmatprep.mubr.bf16.mxu0 0
  %4944 = vmatmul.mubr.bf16.gmra.mrb[0].mxu0 %v4884
  %v4945 = vpop.f32.mrb[0].mxu0
  %v4946 = vadd.f32 0.0, %v4945
  %v4947 = vpop.f32.mrb[0].mxu0
  %v4948 = vpop.f32.mrb[0].mxu0
  %v4949 = vadd.f32 0.0, %v4948
  %v4950 = vpop.f32.mrb[0].mxu0
  %4951 = vdwg.mxu0
  %v4952 = vmul.f32 %v4930, 0.35355338
  %v4953 = vmul.f32 %v4933, 0.35355338
  %v4954 = vmul.f32 %v4938, 0.35355338
  %v4955 = vmul.f32 %v4941, 0.35355338
  %v4956 = vmul.f32 %v4946, 0.35355338
  %v4957 = vmul.f32 %v4949, 0.35355338
  %v4958 = vadd.f32 %v4952, %v161
  %v4959 = vadd.f32 %v4953, %v162
  %v4960 = vadd.f32 %v4954, %v163
  %v4961 = vadd.f32 %v4955, %v164
  %v4962 = vadd.f32 %v4956, %v165
  %v4963 = vadd.f32 %v4957, %v166
  %v4964 = vsel %vm619, %v4958, -inf
  %4965 = vmax.xlane.f32.xlu0 %v4964
  %v4966 = vpop.xlane.xlu0 %4965
  %v4967 = vsel %vm619, %v4959, -inf
  %4968 = vmax.xlane.f32.xlu0 %v4967
  %v4969 = vpop.xlane.xlu0 %4968
  %v4970 = vsel %vm619, %v4960, -inf
  %4971 = vmax.xlane.f32.xlu0 %v4970
  %v4972 = vpop.xlane.xlu0 %4971
  %v4973 = vsel %vm619, %v4961, -inf
  %4974 = vmax.xlane.f32.xlu0 %v4973
  %v4975 = vpop.xlane.xlu0 %4974
  %v4976 = vsel %vm619, %v4962, -inf
  %4977 = vmax.xlane.f32.xlu0 %v4976
  %v4978 = vpop.xlane.xlu0 %4977
  %v4979 = vsel %vm619, %v4963, -inf
  %4980 = vmax.xlane.f32.xlu0 %v4979
  %v4981 = vpop.xlane.xlu0 %4980
  %v4982 = vsub.f32 %v4958, %v4966
  %v4983 = vsub.f32 %v4959, %v4969
  %v4984 = vsub.f32 %v4960, %v4972
  %v4985 = vsub.f32 %v4961, %v4975
  %v4986 = vsub.f32 %v4962, %v4978
  %v4987 = vsub.f32 %v4963, %v4981
  %v4988 = vmul.f32 %v4982, 1.442695
  %v4989 = vpow.pop %v4988
  %v4990 = vmul.f32 %v4983, 1.442695
  %v4991 = vpow.pop %v4990
  %v4992 = vmul.f32 %v4984, 1.442695
  %v4993 = vpow.pop %v4992
  %v4994 = vmul.f32 %v4985, 1.442695
  %v4995 = vpow.pop %v4994
  %v4996 = vmul.f32 %v4986, 1.442695
  %v4997 = vpow.pop %v4996
  %v4998 = vmul.f32 %v4987, 1.442695
  %v4999 = vpow.pop %v4998
  %v5000 = vsel %vm619, %v4989, 0.0
  %5001 = vadd.xlane.f32.xlu0 %v5000
  %v5002 = vpop.xlane.xlu0 %5001
  %v5003 = vsel %vm619, %v4991, 0.0
  %5004 = vadd.xlane.f32.xlu0 %v5003
  %v5005 = vpop.xlane.xlu0 %5004
  %v5006 = vsel %vm619, %v4993, 0.0
  %5007 = vadd.xlane.f32.xlu0 %v5006
  %v5008 = vpop.xlane.xlu0 %5007
  %v5009 = vsel %vm619, %v4995, 0.0
  %5010 = vadd.xlane.f32.xlu0 %v5009
  %v5011 = vpop.xlane.xlu0 %5010
  %v5012 = vsel %vm619, %v4997, 0.0
  %5013 = vadd.xlane.f32.xlu0 %v5012
  %v5014 = vpop.xlane.xlu0 %5013
  %v5015 = vsel %vm619, %v4999, 0.0
  %5016 = vadd.xlane.f32.xlu0 %v5015
  %v5017 = vpop.xlane.xlu0 %5016
  %v5018 = vrcp.pop %v5002
  %v5019 = vrcp.pop %v5005
  %v5020 = vrcp.pop %v5008
  %v5021 = vrcp.pop %v5011
  %v5022 = vrcp.pop %v5014
  %v5023 = vrcp.pop %v5017
  %v5024 = vmul.f32 %v4989, %v5018
  %v5025 = vmul.f32 %v4991, %v5019
  %v5026 = vmul.f32 %v4993, %v5020
  %v5027 = vmul.f32 %v4995, %v5021
  %v5028 = vmul.f32 %v4997, %v5022
  %v5029 = vmul.f32 %v4999, %v5023
  %v5030 = vpack.c.bf16 %v5025, %v5024
  %v5031 = vpack.c.bf16 %v5027, %v5026
  %v5032 = vpack.c.bf16 %v5029, %v5028
  %v5033 = vpack.c.bf16 %v4852, %v4849
  %v5034 = vpack.c.bf16 %v4860, %v4857
  %v5035 = vpack.c.bf16 %v4868, %v4865
  %v5037 = vsel %vm619, %v5030, 0
  %v5040 = vsel %vm619, %v5031, 0
  %v5043 = vsel %vm619, %v5032, 0
  %5045 = vmatprep.subr.bf16.mxu0 0
  %5046 = vmatpush1.bf16.msra.mxu0 %v5033
  %5047 = vmatprep.subr.bf16.mxu0 0
  %5048 = vmatpush1.bf16.msra.mxu0 %v5034
  %5049 = vmatprep.subr.bf16.mxu0 0
  %5050 = vmatpush1.bf16.msra.mxu0 %v5035
  %5051 = vmatprep.subr.bf16.mxu0 0
  %5052 = vmatpush1.bf16.msra.mxu0 0
  %5053 = vmatprep.subr.bf16.mxu0 0
  %5054 = vmatpush1.bf16.msra.mxu0 0
  %5055 = vmatprep.subr.bf16.mxu0 0
  %5056 = vmatpush1.bf16.msra.mxu0 0
  %5057 = vmatprep.subr.bf16.mxu0 0
  %5058 = vmatpush1.bf16.msra.mxu0 0
  %5059 = vmatprep.subr.bf16.mxu0 0
  %5060 = vmatpush1.bf16.msra.mxu0 0
  %5061 = vmatprep.subr.bf16.mxu0 0
  %5062 = vmatpush1.bf16.msra.mxu0 0
  %5063 = vmatprep.subr.bf16.mxu0 0
  %5064 = vmatpush1.bf16.msra.mxu0 0
  %5065 = vmatprep.subr.bf16.mxu0 0
  %5066 = vmatpush1.bf16.msra.mxu0 0
  %5067 = vmatprep.subr.bf16.mxu0 0
  %5068 = vmatpush1.bf16.msra.mxu0 0
  %5069 = vmatprep.subr.bf16.mxu0 0
  %5070 = vmatpush1.bf16.msra.mxu0 0
  %5071 = vmatprep.subr.bf16.mxu0 0
  %5072 = vmatpush1.bf16.msra.mxu0 0
  %5073 = vmatprep.subr.bf16.mxu0 0
  %5074 = vmatpush1.bf16.msra.mxu0 0
  %5075 = vmatprep.subr.bf16.mxu0 0
  %5076 = vmatpush1.bf16.msra.mxu0 0
  %5077 = vmatprep.mubr.bf16.mxu0 0
  %5078 = vmatmul.mubr.bf16.gmra.mrb[0].mxu0 %v5037
  %v5079 = vpop.f32.mrb[0].mxu0
  %v5080 = vadd.f32 0.0, %v5079
  %v5081 = vpop.f32.mrb[0].mxu0
  %v5082 = vpop.f32.mrb[0].mxu0
  %v5083 = vadd.f32 0.0, %v5082
  %v5084 = vpop.f32.mrb[0].mxu0
  %5085 = vmatprep.mubr.bf16.mxu0 0
  %5086 = vmatmul.mubr.bf16.gmra.mrb[0].mxu0 %v5040
  %v5087 = vpop.f32.mrb[0].mxu0
  %v5088 = vadd.f32 0.0, %v5087
  %v5089 = vpop.f32.mrb[0].mxu0
  %v5090 = vpop.f32.mrb[0].mxu0
  %v5091 = vadd.f32 0.0, %v5090
  %v5092 = vpop.f32.mrb[0].mxu0
  %5093 = vmatprep.mubr.bf16.mxu0 0
  %5094 = vmatmul.mubr.bf16.gmra.mrb[0].mxu0 %v5043
  %v5095 = vpop.f32.mrb[0].mxu0
  %v5096 = vadd.f32 0.0, %v5095
  %v5097 = vpop.f32.mrb[0].mxu0
  %v5098 = vpop.f32.mrb[0].mxu0
  %v5099 = vadd.f32 0.0, %v5098
  %v5100 = vpop.f32.mrb[0].mxu0
  %5101 = vdwg.mxu0
  %s5102 = scalar_lea.vmem %s55, 12
  %v5103 = vld [vmem:[%s5102] sm:$0xf]
  %v5104 = vpack.c.bf16 %v5083, %v5080
  %v5105 = vpack.c.bf16 %v5091, %v5088
  %v5106 = vpack.c.bf16 %v5099, %v5096
  %v5108 = vsel %vm531, %v5104, 0
  %v5111 = vsel %vm531, %v5105, 0
  %v5114 = vsel %vm531, %v5106, 0
  %v5117 = vsel %vm1253, %v5103, 0
  %5119 = vmatprep.subr.bf16.mxu0 0
  %5120 = vmatpush1.bf16.msra.mxu0 %v5117
  %5121 = vmatprep.subr.bf16.mxu0 0
  %5122 = vmatpush1.bf16.msra.mxu0 0
  %5123 = vmatprep.subr.bf16.mxu0 0
  %5124 = vmatpush1.bf16.msra.mxu0 0
  %5125 = vmatprep.subr.bf16.mxu0 0
  %5126 = vmatpush1.bf16.msra.mxu0 0
  %5127 = vmatprep.subr.bf16.mxu0 0
  %5128 = vmatpush1.bf16.msra.mxu0 0
  %5129 = vmatprep.subr.bf16.mxu0 0
  %5130 = vmatpush1.bf16.msra.mxu0 0
  %5131 = vmatprep.subr.bf16.mxu0 0
  %5132 = vmatpush1.bf16.msra.mxu0 0
  %5133 = vmatprep.subr.bf16.mxu0 0
  %5134 = vmatpush1.bf16.msra.mxu0 0
  %5135 = vmatprep.subr.bf16.mxu0 0
  %5136 = vmatpush1.bf16.msra.mxu0 0
  %5137 = vmatprep.subr.bf16.mxu0 0
  %5138 = vmatpush1.bf16.msra.mxu0 0
  %5139 = vmatprep.subr.bf16.mxu0 0
  %5140 = vmatpush1.bf16.msra.mxu0 0
  %5141 = vmatprep.subr.bf16.mxu0 0
  %5142 = vmatpush1.bf16.msra.mxu0 0
  %5143 = vmatprep.subr.bf16.mxu0 0
  %5144 = vmatpush1.bf16.msra.mxu0 0
  %5145 = vmatprep.subr.bf16.mxu0 0
  %5146 = vmatpush1.bf16.msra.mxu0 0
  %5147 = vmatprep.subr.bf16.mxu0 0
  %5148 = vmatpush1.bf16.msra.mxu0 0
  %5149 = vmatprep.subr.bf16.mxu0 0
  %5150 = vmatpush1.bf16.msra.mxu0 0
  %5151 = vmatprep.mubr.bf16.mxu0 0
  %5152 = vmatmul.mubr.bf16.gmra.mrb[0].mxu0 %v5108
  %v5153 = vpop.f32.mrb[0].mxu0
  %v5154 = vadd.f32 0.0, %v5153
  %v5155 = vpop.f32.mrb[0].mxu0
  %v5156 = vpop.f32.mrb[0].mxu0
  %v5157 = vadd.f32 0.0, %v5156
  %v5158 = vpop.f32.mrb[0].mxu0
  %5159 = vmatprep.mubr.bf16.mxu0 0
  %5160 = vmatmul.mubr.bf16.gmra.mrb[0].mxu0 %v5111
  %v5161 = vpop.f32.mrb[0].mxu0
  %v5162 = vadd.f32 0.0, %v5161
  %v5163 = vpop.f32.mrb[0].mxu0
  %v5164 = vpop.f32.mrb[0].mxu0
  %v5165 = vadd.f32 0.0, %v5164
  %v5166 = vpop.f32.mrb[0].mxu0
  %5167 = vmatprep.mubr.bf16.mxu0 0
  %5168 = vmatmul.mubr.bf16.gmra.mrb[0].mxu0 %v5114
  %v5169 = vpop.f32.mrb[0].mxu0
  %v5170 = vadd.f32 0.0, %v5169
  %v5171 = vpop.f32.mrb[0].mxu0
  %v5172 = vpop.f32.mrb[0].mxu0
  %v5173 = vadd.f32 0.0, %v5172
  %v5174 = vpop.f32.mrb[0].mxu0
  %5175 = vdwg.mxu0
  %v5176 = vadd.f32 %v4619, %v5154
  %v5177 = vadd.f32 %v4620, %v5157
  %v5178 = vadd.f32 %v4621, %v5162
  %v5179 = vadd.f32 %v4622, %v5165
  %v5180 = vadd.f32 %v4623, %v5170
  %v5181 = vadd.f32 %v4624, %v5173
  %v5182 = vld [vmem:[%s57] sm:$0x1]
  %v5184 = vlaneseq
  %v5185 = vshrl.u32 %v5184, 7
  %v5186 = vsub.s32 0, %v5185
  %v5187 = vrot.slane %v5182, %v5186
  %v5189 = vadd.f32 %v5176, %v5187
  %v5190 = vadd.f32 %v5177, %v5187
  %v5191 = vadd.f32 %v5178, %v5187
  %v5192 = vadd.f32 %v5179, %v5187
  %v5193 = vadd.f32 %v5180, %v5187
  %v5194 = vadd.f32 %v5181, %v5187
  %v5195 = vadd.f32 %v2955, %v5189
  %v5196 = vadd.f32 %v2956, %v5190
  %v5197 = vadd.f32 %v2957, %v5191
  %v5198 = vadd.f32 %v2958, %v5192
  %v5199 = vadd.f32 %v2959, %v5193
  %v5200 = vadd.f32 %v2960, %v5194
  %v5201 = vld [vmem:[%s59] sm:$0x1]
  %v5202 = vld [vmem:[%s61] sm:$0x1]
  %v5203 = vsel %vm169, %v5195, 0.0
  %5204 = vadd.xlane.f32.xlu0 %v5203
  %v5205 = vpop.xlane.xlu0 %5204
  %v5206 = vsel %vm169, %v5196, 0.0
  %5207 = vadd.xlane.f32.xlu0 %v5206
  %v5208 = vpop.xlane.xlu0 %5207
  %v5209 = vsel %vm169, %v5197, 0.0
  %5210 = vadd.xlane.f32.xlu0 %v5209
  %v5211 = vpop.xlane.xlu0 %5210
  %v5212 = vsel %vm169, %v5198, 0.0
  %5213 = vadd.xlane.f32.xlu0 %v5212
  %v5214 = vpop.xlane.xlu0 %5213
  %v5215 = vsel %vm169, %v5199, 0.0
  %5216 = vadd.xlane.f32.xlu0 %v5215
  %v5217 = vpop.xlane.xlu0 %5216
  %v5218 = vsel %vm169, %v5200, 0.0
  %5219 = vadd.xlane.f32.xlu0 %v5218
  %v5220 = vpop.xlane.xlu0 %5219
  %v5221 = vmul.f32 %v5205, %v188
  %v5222 = vmul.f32 %v5208, %v188
  %v5223 = vmul.f32 %v5211, %v188
  %v5224 = vmul.f32 %v5214, %v188
  %v5225 = vmul.f32 %v5217, %v188
  %v5226 = vmul.f32 %v5220, %v188
  %v5227 = vsub.f32 %v5195, %v5221
  %v5228 = vsub.f32 %v5196, %v5222
  %v5229 = vsub.f32 %v5197, %v5223
  %v5230 = vsub.f32 %v5198, %v5224
  %v5231 = vsub.f32 %v5199, %v5225
  %v5232 = vsub.f32 %v5200, %v5226
  %v5233 = vmul.f32 %v5227, %v5227
  %v5234 = vmul.f32 %v5228, %v5228
  %v5235 = vmul.f32 %v5229, %v5229
  %v5236 = vmul.f32 %v5230, %v5230
  %v5237 = vmul.f32 %v5231, %v5231
  %v5238 = vmul.f32 %v5232, %v5232
  %v5239 = vsel %vm169, %v5233, 0.0
  %5240 = vadd.xlane.f32.xlu0 %v5239
  %v5241 = vpop.xlane.xlu0 %5240
  %v5242 = vsel %vm169, %v5234, 0.0
  %5243 = vadd.xlane.f32.xlu0 %v5242
  %v5244 = vpop.xlane.xlu0 %5243
  %v5245 = vsel %vm169, %v5235, 0.0
  %5246 = vadd.xlane.f32.xlu0 %v5245
  %v5247 = vpop.xlane.xlu0 %5246
  %v5248 = vsel %vm169, %v5236, 0.0
  %5249 = vadd.xlane.f32.xlu0 %v5248
  %v5250 = vpop.xlane.xlu0 %5249
  %v5251 = vsel %vm169, %v5237, 0.0
  %5252 = vadd.xlane.f32.xlu0 %v5251
  %v5253 = vpop.xlane.xlu0 %5252
  %v5254 = vsel %vm169, %v5238, 0.0
  %5255 = vadd.xlane.f32.xlu0 %v5254
  %v5256 = vpop.xlane.xlu0 %5255
  %v5257 = vmul.f32 %v5241, %v188
  %v5258 = vmul.f32 %v5244, %v188
  %v5259 = vmul.f32 %v5247, %v188
  %v5260 = vmul.f32 %v5250, %v188
  %v5261 = vmul.f32 %v5253, %v188
  %v5262 = vmul.f32 %v5256, %v188
  %v5263 = vadd.f32 %v5257, 1e-05
  %v5264 = vadd.f32 %v5258, 1e-05
  %v5265 = vadd.f32 %v5259, 1e-05
  %v5266 = vadd.f32 %v5260, 1e-05
  %v5267 = vadd.f32 %v5261, 1e-05
  %v5268 = vadd.f32 %v5262, 1e-05
  %v5269 = vrsqrt.pop %v5263
  %v5270 = vrsqrt.pop %v5264
  %v5271 = vrsqrt.pop %v5265
  %v5272 = vrsqrt.pop %v5266
  %v5273 = vrsqrt.pop %v5267
  %v5274 = vrsqrt.pop %v5268
  %v5275 = vmul.f32 %v5227, %v5269
  %v5276 = vmul.f32 %v5228, %v5270
  %v5277 = vmul.f32 %v5229, %v5271
  %v5278 = vmul.f32 %v5230, %v5272
  %v5279 = vmul.f32 %v5231, %v5273
  %v5280 = vmul.f32 %v5232, %v5274
  %v5282 = vlaneseq
  %v5283 = vshrl.u32 %v5282, 7
  %v5284 = vsub.s32 0, %v5283
  %v5285 = vrot.slane %v5201, %v5284
  %v5287 = vmul.f32 %v5275, %v5285
  %v5288 = vmul.f32 %v5276, %v5285
  %v5289 = vmul.f32 %v5277, %v5285
  %v5290 = vmul.f32 %v5278, %v5285
  %v5291 = vmul.f32 %v5279, %v5285
  %v5292 = vmul.f32 %v5280, %v5285
  %v5294 = vlaneseq
  %v5295 = vshrl.u32 %v5294, 7
  %v5296 = vsub.s32 0, %v5295
  %v5297 = vrot.slane %v5202, %v5296
  %v5299 = vadd.f32 %v5287, %v5297
  %v5300 = vadd.f32 %v5288, %v5297
  %v5301 = vadd.f32 %v5289, %v5297
  %v5302 = vadd.f32 %v5290, %v5297
  %v5303 = vadd.f32 %v5291, %v5297
  %v5304 = vadd.f32 %v5292, %v5297
  %v5305 = vld [vmem:[%s63] sm:$0xf]
  %v5306 = vld [vmem:[%s63 + $0x4] sm:$0xf]
  %v5307 = vld [vmem:[%s63 + $0x8] sm:$0xf]
  %v5308 = vld [vmem:[%s63 + $0xc] sm:$0xf]
  %v5309 = vpack.c.bf16 %v5300, %v5299
  %v5310 = vpack.c.bf16 %v5302, %v5301
  %v5311 = vpack.c.bf16 %v5304, %v5303
  %v5312 = vld [vmem:[%s65] sm:$0x1]
  %v5314 = vlaneseq
  %v5315 = vshrl.u32 %v5314, 7
  %v5316 = vsub.s32 0, %v5315
  %v5317 = vrot.slane %v5312, %v5316
  %v5323 = vunpack.c.l.b16 %v5305
  %v5324 = vunpack.c.l.b16 %v5306
  %v5325 = vunpack.c.l.b16 %v5307
  %v5326 = vunpack.c.l.b16 %v5308
  %v5327 = vpack.c.b16 %v5324, %v5323
  %v5328 = vpack.c.b16 %v5326, %v5325
  %v5332 = vsel %vm169, %v5309, 0
  %v5335 = vsel %vm169, %v5310, 0
  %v5338 = vsel %vm169, %v5311, 0
  %5340 = vmatprep.subr.bf16.mxu0 0
  %5341 = vmatpush1.bf16.msra.mxu0 %v5327
  %5342 = vmatprep.subr.bf16.mxu0 0
  %5343 = vmatpush1.bf16.msra.mxu0 %v5328
  %5344 = vmatprep.subr.bf16.mxu0 0
  %5345 = vmatpush1.bf16.msra.mxu0 0
  %5346 = vmatprep.subr.bf16.mxu0 0
  %5347 = vmatpush1.bf16.msra.mxu0 0
  %5348 = vmatprep.subr.bf16.mxu0 0
  %5349 = vmatpush1.bf16.msra.mxu0 0
  %5350 = vmatprep.subr.bf16.mxu0 0
  %5351 = vmatpush1.bf16.msra.mxu0 0
  %5352 = vmatprep.subr.bf16.mxu0 0
  %5353 = vmatpush1.bf16.msra.mxu0 0
  %5354 = vmatprep.subr.bf16.mxu0 0
  %5355 = vmatpush1.bf16.msra.mxu0 0
  %5356 = vmatprep.subr.bf16.mxu0 0
  %5357 = vmatpush1.bf16.msra.mxu0 0
  %5358 = vmatprep.subr.bf16.mxu0 0
  %5359 = vmatpush1.bf16.msra.mxu0 0
  %5360 = vmatprep.subr.bf16.mxu0 0
  %5361 = vmatpush1.bf16.msra.mxu0 0
  %5362 = vmatprep.subr.bf16.mxu0 0
  %5363 = vmatpush1.bf16.msra.mxu0 0
  %5364 = vmatprep.subr.bf16.mxu0 0
  %5365 = vmatpush1.bf16.msra.mxu0 0
  %5366 = vmatprep.subr.bf16.mxu0 0
  %5367 = vmatpush1.bf16.msra.mxu0 0
  %5368 = vmatprep.subr.bf16.mxu0 0
  %5369 = vmatpush1.bf16.msra.mxu0 0
  %5370 = vmatprep.subr.bf16.mxu0 0
  %5371 = vmatpush1.bf16.msra.mxu0 0
  %5372 = vmatprep.mubr.bf16.mxu0 0
  %5373 = vmatmul.mubr.bf16.gmra.mrb[0].mxu0 %v5332
  %v5374 = vpop.f32.mrb[0].mxu0
  %v5375 = vadd.f32 %v5317, %v5374
  %v5376 = vpop.f32.mrb[0].mxu0
  %v5377 = vpop.f32.mrb[0].mxu0
  %v5378 = vadd.f32 %v5317, %v5377
  %v5379 = vpop.f32.mrb[0].mxu0
  %5380 = vmatprep.mubr.bf16.mxu0 0
  %5381 = vmatmul.mubr.bf16.gmra.mrb[0].mxu0 %v5335
  %v5382 = vpop.f32.mrb[0].mxu0
  %v5383 = vadd.f32 %v5317, %v5382
  %v5384 = vpop.f32.mrb[0].mxu0
  %v5385 = vpop.f32.mrb[0].mxu0
  %v5386 = vadd.f32 %v5317, %v5385
  %v5387 = vpop.f32.mrb[0].mxu0
  %5388 = vmatprep.mubr.bf16.mxu0 0
  %5389 = vmatmul.mubr.bf16.gmra.mrb[0].mxu0 %v5338
  %v5390 = vpop.f32.mrb[0].mxu0
  %v5391 = vadd.f32 %v5317, %v5390
  %v5392 = vpop.f32.mrb[0].mxu0
  %v5393 = vpop.f32.mrb[0].mxu0
  %v5394 = vadd.f32 %v5317, %v5393
  %v5395 = vpop.f32.mrb[0].mxu0
  %5396 = vdwg.mxu0
  %v5397 = vmul.f32 %v5375, 0.5
  %v5398 = vmul.f32 %v5378, 0.5
  %v5399 = vmul.f32 %v5383, 0.5
  %v5400 = vmul.f32 %v5386, 0.5
  %v5401 = vmul.f32 %v5391, 0.5
  %v5402 = vmul.f32 %v5394, 0.5
  %v5403 = vmul.f32 %v5375, 0.70710677
  %v5404 = vmul.f32 %v5378, 0.70710677
  %v5405 = vmul.f32 %v5383, 0.70710677
  %v5406 = vmul.f32 %v5386, 0.70710677
  %v5407 = vmul.f32 %v5391, 0.70710677
  %v5408 = vmul.f32 %v5394, 0.70710677
  %v5409 = verf.f32.pop %v5403
  %v5410 = verf.f32.pop %v5404
  %v5411 = verf.f32.pop %v5405
  %v5412 = verf.f32.pop %v5406
  %v5413 = verf.f32.pop %v5407
  %v5414 = verf.f32.pop %v5408
  %v5415 = vadd.f32 %v5409, 1.0
  %v5416 = vadd.f32 %v5410, 1.0
  %v5417 = vadd.f32 %v5411, 1.0
  %v5418 = vadd.f32 %v5412, 1.0
  %v5419 = vadd.f32 %v5413, 1.0
  %v5420 = vadd.f32 %v5414, 1.0
  %v5421 = vmul.f32 %v5397, %v5415
  %v5422 = vmul.f32 %v5398, %v5416
  %v5423 = vmul.f32 %v5399, %v5417
  %v5424 = vmul.f32 %v5400, %v5418
  %v5425 = vmul.f32 %v5401, %v5419
  %v5426 = vmul.f32 %v5402, %v5420
  %v5427 = vld [vmem:[%s67] sm:$0xf]
  %v5428 = vld [vmem:[%s67 + $0x4] sm:$0xf]
  %v5429 = vld [vmem:[%s67 + $0x8] sm:$0xf]
  %v5430 = vld [vmem:[%s67 + $0xc] sm:$0xf]
  %v5431 = vld [vmem:[%s67 + $0x10] sm:$0xf]
  %v5432 = vld [vmem:[%s67 + $0x14] sm:$0xf]
  %v5433 = vld [vmem:[%s67 + $0x18] sm:$0xf]
  %v5434 = vld [vmem:[%s67 + $0x1c] sm:$0xf]
  %v5435 = vpack.c.bf16 %v5422, %v5421
  %v5436 = vpack.c.bf16 %v5424, %v5423
  %v5437 = vpack.c.bf16 %v5426, %v5425
  %v5438 = vld [vmem:[%s69] sm:$0x1]
  %v5440 = vlaneseq
  %v5441 = vshrl.u32 %v5440, 7
  %v5442 = vsub.s32 0, %v5441
  %v5443 = vrot.slane %v5438, %v5442
  %v5453 = vunpack.c.l.b16 %v5427
  %v5454 = vunpack.c.l.b16 %v5428
  %v5455 = vunpack.c.l.b16 %v5429
  %v5456 = vunpack.c.l.b16 %v5430
  %v5457 = vunpack.c.l.b16 %v5431
  %v5458 = vunpack.c.l.b16 %v5432
  %v5459 = vunpack.c.l.b16 %v5433
  %v5460 = vunpack.c.l.b16 %v5434
  %v5461 = vpack.c.b16 %v5454, %v5453
  %v5462 = vpack.c.b16 %v5456, %v5455
  %v5463 = vpack.c.b16 %v5458, %v5457
  %v5464 = vpack.c.b16 %v5460, %v5459
  %v5470 = vsel %vm2784, %v5435, 0
  %v5473 = vsel %vm2784, %v5436, 0
  %v5476 = vsel %vm2784, %v5437, 0
  %5478 = vmatprep.subr.bf16.mxu0 0
  %5479 = vmatpush1.bf16.msra.mxu0 %v5461
  %5480 = vmatprep.subr.bf16.mxu0 0
  %5481 = vmatpush1.bf16.msra.mxu0 %v5462
  %5482 = vmatprep.subr.bf16.mxu0 0
  %5483 = vmatpush1.bf16.msra.mxu0 %v5463
  %5484 = vmatprep.subr.bf16.mxu0 0
  %5485 = vmatpush1.bf16.msra.mxu0 %v5464
  %5486 = vmatprep.subr.bf16.mxu0 0
  %5487 = vmatpush1.bf16.msra.mxu0 0
  %5488 = vmatprep.subr.bf16.mxu0 0
  %5489 = vmatpush1.bf16.msra.mxu0 0
  %5490 = vmatprep.subr.bf16.mxu0 0
  %5491 = vmatpush1.bf16.msra.mxu0 0
  %5492 = vmatprep.subr.bf16.mxu0 0
  %5493 = vmatpush1.bf16.msra.mxu0 0
  %5494 = vmatprep.subr.bf16.mxu0 0
  %5495 = vmatpush1.bf16.msra.mxu0 0
  %5496 = vmatprep.subr.bf16.mxu0 0
  %5497 = vmatpush1.bf16.msra.mxu0 0
  %5498 = vmatprep.subr.bf16.mxu0 0
  %5499 = vmatpush1.bf16.msra.mxu0 0
  %5500 = vmatprep.subr.bf16.mxu0 0
  %5501 = vmatpush1.bf16.msra.mxu0 0
  %5502 = vmatprep.subr.bf16.mxu0 0
  %5503 = vmatpush1.bf16.msra.mxu0 0
  %5504 = vmatprep.subr.bf16.mxu0 0
  %5505 = vmatpush1.bf16.msra.mxu0 0
  %5506 = vmatprep.subr.bf16.mxu0 0
  %5507 = vmatpush1.bf16.msra.mxu0 0
  %5508 = vmatprep.subr.bf16.mxu0 0
  %5509 = vmatpush1.bf16.msra.mxu0 0
  %5510 = vmatprep.mubr.bf16.mxu0 0
  %5511 = vmatmul.mubr.bf16.gmra.mrb[0].mxu0 %v5470
  %v5512 = vpop.f32.mrb[0].mxu0
  %v5513 = vadd.f32 %v5443, %v5512
  %v5514 = vpop.f32.mrb[0].mxu0
  %v5515 = vpop.f32.mrb[0].mxu0
  %v5516 = vadd.f32 %v5443, %v5515
  %v5517 = vpop.f32.mrb[0].mxu0
  %5518 = vmatprep.mubr.bf16.mxu0 0
  %5519 = vmatmul.mubr.bf16.gmra.mrb[0].mxu0 %v5473
  %v5520 = vpop.f32.mrb[0].mxu0
  %v5521 = vadd.f32 %v5443, %v5520
  %v5522 = vpop.f32.mrb[0].mxu0
  %v5523 = vpop.f32.mrb[0].mxu0
  %v5524 = vadd.f32 %v5443, %v5523
  %v5525 = vpop.f32.mrb[0].mxu0
  %5526 = vmatprep.mubr.bf16.mxu0 0
  %5527 = vmatmul.mubr.bf16.gmra.mrb[0].mxu0 %v5476
  %v5528 = vpop.f32.mrb[0].mxu0
  %v5529 = vadd.f32 %v5443, %v5528
  %v5530 = vpop.f32.mrb[0].mxu0
  %v5531 = vpop.f32.mrb[0].mxu0
  %v5532 = vadd.f32 %v5443, %v5531
  %v5533 = vpop.f32.mrb[0].mxu0
  %5534 = vdwg.mxu0
  %v5535 = vadd.f32 %v5299, %v5513
  %v5536 = vadd.f32 %v5300, %v5516
  %v5537 = vadd.f32 %v5301, %v5521
  %v5538 = vadd.f32 %v5302, %v5524
  %v5539 = vadd.f32 %v5303, %v5529
  %v5540 = vadd.f32 %v5304, %v5532
  %v5541 = vld [vmem:[%s5] sm:$0xff]
  %v5543 = vsel %vm619, %v5541, 0
  %5545 = vmatprep.subr.mxu0 0.0
  %5546 = vmatpush1.msra.mxu0 %v5535
  %5547 = vmatprep.subr.mxu0 0.0
  %5548 = vmatpush1.msra.mxu0 %v5536
  %5549 = vmatprep.subr.mxu0 0.0
  %5550 = vmatpush1.msra.mxu0 %v5537
  %5551 = vmatprep.subr.mxu0 0.0
  %5552 = vmatpush1.msra.mxu0 %v5538
  %5553 = vmatprep.subr.mxu0 0.0
  %5554 = vmatpush1.msra.mxu0 %v5539
  %5555 = vmatprep.subr.mxu0 0.0
  %5556 = vmatpush1.msra.mxu0 %v5540
  %5557 = vmatprep.subr.mxu0 0.0
  %5558 = vmatpush1.msra.mxu0 0.0
  %5559 = vmatprep.subr.mxu0 0.0
  %5560 = vmatpush1.msra.mxu0 0.0
  %5561 = vmatprep.subr.mxu0 0.0
  %5562 = vmatpush1.msra.mxu0 0.0
  %5563 = vmatprep.subr.mxu0 0.0
  %5564 = vmatpush1.msra.mxu0 0.0
  %5565 = vmatprep.subr.mxu0 0.0
  %5566 = vmatpush1.msra.mxu0 0.0
  %5567 = vmatprep.subr.mxu0 0.0
  %5568 = vmatpush1.msra.mxu0 0.0
  %5569 = vmatprep.subr.mxu0 0.0
  %5570 = vmatpush1.msra.mxu0 0.0
  %5571 = vmatprep.subr.mxu0 0.0
  %5572 = vmatpush1.msra.mxu0 0.0
  %5573 = vmatprep.subr.mxu0 0.0
  %5574 = vmatpush1.msra.mxu0 0.0
  %5575 = vmatprep.subr.mxu0 0.0
  %5576 = vmatpush1.msra.mxu0 0.0
  %5577 = vmatprep.subr.mxu0 0.0
  %5578 = vmatpush1.msra.mxu0 0.0
  %5579 = vmatprep.subr.mxu0 0.0
  %5580 = vmatpush1.msra.mxu0 0.0
  %5581 = vmatprep.subr.mxu0 0.0
  %5582 = vmatpush1.msra.mxu0 0.0
  %5583 = vmatprep.subr.mxu0 0.0
  %5584 = vmatpush1.msra.mxu0 0.0
  %5585 = vmatprep.subr.mxu0 0.0
  %5586 = vmatpush1.msra.mxu0 0.0
  %5587 = vmatprep.subr.mxu0 0.0
  %5588 = vmatpush1.msra.mxu0 0.0
  %5589 = vmatprep.subr.mxu0 0.0
  %5590 = vmatpush1.msra.mxu0 0.0
  %5591 = vmatprep.subr.mxu0 0.0
  %5592 = vmatpush1.msra.mxu0 0.0
  %5593 = vmatprep.subr.mxu0 0.0
  %5594 = vmatpush1.msra.mxu0 0.0
  %5595 = vmatprep.subr.mxu0 0.0
  %5596 = vmatpush1.msra.mxu0 0.0
  %5597 = vmatprep.subr.mxu0 0.0
  %5598 = vmatpush1.msra.mxu0 0.0
  %5599 = vmatprep.subr.mxu0 0.0
  %5600 = vmatpush1.msra.mxu0 0.0
  %5601 = vmatprep.subr.mxu0 0.0
  %5602 = vmatpush1.msra.mxu0 0.0
  %5603 = vmatprep.subr.mxu0 0.0
  %5604 = vmatpush1.msra.mxu0 0.0
  %5605 = vmatprep.subr.mxu0 0.0
  %5606 = vmatpush1.msra.mxu0 0.0
  %5607 = vmatprep.subr.mxu0 0.0
  %5608 = vmatpush1.msra.mxu0 0.0
  %5609 = vmatprep.mubr.f32.mxu0 0.0
  %5610 = vmatmul.mubr.f32.gmra.mrb[0].mxu0 %v5543
  %v5611 = vpop.f32.mrb[0].mxu0
  %v5612 = vadd.f32 0.0, %v5611
  %v5613 = vpop.f32.mrb[0].mxu0
  %5614 = vdwg.mxu0
  %v5615 = vld [vmem:[%s71] sm:$0xf]
  %v5616 = vld [vmem:[%s71 + $0x4] sm:$0xf]
  %v5617 = vld [vmem:[%s71 + $0x8] sm:$0xf]
  %v5618 = vld [vmem:[%s71 + $0xc] sm:$0xf]
  %v5619 = vpack.c.bf16 %v5612, %v5612
  %v5620 = vld [vmem:[%s73] sm:$0x1]
  %v5622 = vlaneseq
  %v5623 = vshrl.u32 %v5622, 7
  %v5624 = vsub.s32 0, %v5623
  %v5625 = vrot.slane %v5620, %v5624
  %v5631 = vunpack.c.l.b16 %v5615
  %v5632 = vunpack.c.l.b16 %v5616
  %v5633 = vunpack.c.l.b16 %v5617
  %v5634 = vunpack.c.l.b16 %v5618
  %v5635 = vpack.c.b16 %v5632, %v5631
  %v5636 = vpack.c.b16 %v5634, %v5633
  %v5640 = vsel %vm169, %v5619, 0
  %5642 = vmatprep.subr.bf16.mxu0 0
  %5643 = vmatpush1.bf16.msra.mxu0 %v5635
  %5644 = vmatprep.subr.bf16.mxu0 0
  %5645 = vmatpush1.bf16.msra.mxu0 %v5636
  %5646 = vmatprep.subr.bf16.mxu0 0
  %5647 = vmatpush1.bf16.msra.mxu0 0
  %5648 = vmatprep.subr.bf16.mxu0 0
  %5649 = vmatpush1.bf16.msra.mxu0 0
  %5650 = vmatprep.subr.bf16.mxu0 0
  %5651 = vmatpush1.bf16.msra.mxu0 0
  %5652 = vmatprep.subr.bf16.mxu0 0
  %5653 = vmatpush1.bf16.msra.mxu0 0
  %5654 = vmatprep.subr.bf16.mxu0 0
  %5655 = vmatpush1.bf16.msra.mxu0 0
  %5656 = vmatprep.subr.bf16.mxu0 0
  %5657 = vmatpush1.bf16.msra.mxu0 0
  %5658 = vmatprep.subr.bf16.mxu0 0
  %5659 = vmatpush1.bf16.msra.mxu0 0
  %5660 = vmatprep.subr.bf16.mxu0 0
  %5661 = vmatpush1.bf16.msra.mxu0 0
  %5662 = vmatprep.subr.bf16.mxu0 0
  %5663 = vmatpush1.bf16.msra.mxu0 0
  %5664 = vmatprep.subr.bf16.mxu0 0
  %5665 = vmatpush1.bf16.msra.mxu0 0
  %5666 = vmatprep.subr.bf16.mxu0 0
  %5667 = vmatpush1.bf16.msra.mxu0 0
  %5668 = vmatprep.subr.bf16.mxu0 0
  %5669 = vmatpush1.bf16.msra.mxu0 0
  %5670 = vmatprep.subr.bf16.mxu0 0
  %5671 = vmatpush1.bf16.msra.mxu0 0
  %5672 = vmatprep.subr.bf16.mxu0 0
  %5673 = vmatpush1.bf16.msra.mxu0 0
  %5674 = vmatprep.mubr.bf16.mxu0 0
  %5675 = vmatmul.mubr.bf16.gmra.mrb[0].mxu0 %v5640
  %v5676 = vpop.f32.mrb[0].mxu0
  %v5677 = vadd.f32 %v5625, %v5676
  %v5678 = vpop.f32.mrb[0].mxu0
  %v5679 = vpop.f32.mrb[0].mxu0
  %v5680 = vpop.f32.mrb[0].mxu0
  %5681 = vdwg.mxu0
  %vm5682 = vcmask 31744
  %5683 = vst.msk [vmem:[%s75] sm:$0xff] %vm5682, %v5677
  // Predicated region
  $region150: #{example_transformer_forward.1} parent=0 // pred_check
    _
  $region151: #{example_transformer_forward.1} parent=0 // pred_check_branch
    %5685 = sbr.rel (0) target = $region153
  $region152: #{example_transformer_forward.1} parent=0 // pred_region
    _
  $region153: #{example_transformer_forward.1} parent=0 // pred_fallthru
    _
  // Predicated region
  $region154: #{example_transformer_forward.1} parent=0 // pred_check
    _
  $region155: #{example_transformer_forward.1} parent=0 // pred_check_branch
    %5687 = sbr.rel (0) target = $region157
  $region156: #{example_transformer_forward.1} parent=0 // pred_region
    _
  $region157: #{example_transformer_forward.1} parent=0 // pred_fallthru
    _

</llo_original>
